<compile_context>
chip_gen: v6e
topology: v6e:2x2x1
jax: 0.10.0
libtpu: 0.0.40
codegen_flags: <defaults>
</compile_context>

<pallas_src>
import math

import jax
import jax.numpy as jnp
from jax import lax
from jax.experimental import pallas as pl
from jax.experimental.pallas import tpu as pltpu

# ---------------- configuration (small, consistent with the module) ----------------
BATCH = 2
ENC_LEN = 16            # encoder sequence length
NUM_Q = 16              # num_generated_triples (== ENC_LEN so the 3-D mask broadcast is valid)
HIDDEN = 32             # config.hidden_size
NUM_HEADS = 4           # config.num_attention_heads
HEAD_DIM = HIDDEN // NUM_HEADS
INTERMEDIATE = 64       # config.intermediate_size
NUM_CLASSES = 5
CLS_PAD = 128           # classifier columns padded to a full lane tile (lane-dense stores)
NUM_LAYERS = 2
LN_EPS = 1e-12
METRIC_OUT = 8          # metric_3 output channels (only 0..5 are returned by forward)
SLAB_LANES = 8 * HIDDEN  # 256 lanes: width of both parameter slabs

_ATTN_SCALE = 1.0 / math.sqrt(HEAD_DIM)
_SQRT_HALF = 0.7071067811865476


# ---------------- packed-parameter slab layouts (static, shared by packer & kernel) ----------------
def _round_up(x, m):
    return (x + m - 1) // m * m


def _build_w_layout():
    """Row layout of the single weight slab [W_ROWS, 256]."""
    layout, off = {}, 0

    def add(name, rows, cols):
        nonlocal off
        layout[name] = (off, rows, cols)
        off += rows

    for li in range(NUM_LAYERS):
        for si in range(2):                      # 0 = self-attn, 1 = cross-attn
            add(f"wqkv_{li}_{si}", HIDDEN, 3 * HIDDEN)     # fused [32, 96] Q|K|V
    for li in range(NUM_LAYERS):
        for si in range(2):
            add(f"wo_{li}_{si}", HIDDEN, HIDDEN)           # attn output dense [32, 32]
    for li in range(NUM_LAYERS):
        add(f"fwi_{li}", HIDDEN, INTERMEDIATE)             # intermediate dense [32, 64]
    for li in range(NUM_LAYERS):
        add(f"fwo_{li}", INTERMEDIATE, HIDDEN)             # FFN output dense [64, 32]
    add("cls_w", HIDDEN, CLS_PAD)                          # classifier W, zero-padded to 128 cols
    add("m1_w", HIDDEN, 8 * HIDDEN)
    add("m2_w", HIDDEN, 8 * HIDDEN)
    add("m3_t", METRIC_OUT, 8 * HIDDEN)                    # metric_3 weight, [out, in]
    return layout, _round_up(off, 8)


def _build_v_layout():
    """Row layout of the single vector slab [V_ROWS, 256] (biases / LN params / query embed)."""
    layout, off = {}, 0

    def add(name, rows, cols):
        nonlocal off
        layout[name] = (off, rows, cols)
        off += rows

    add("query_embed", NUM_Q, HIDDEN)
    add("q_ln_g", 1, HIDDEN)
    add("q_ln_b", 1, HIDDEN)
    for li in range(NUM_LAYERS):
        for si in range(2):
            add(f"bqkv_{li}_{si}", 1, 3 * HIDDEN)
            add(f"bo_{li}_{si}", 1, HIDDEN)
            add(f"a_ln_g_{li}_{si}", 1, HIDDEN)
            add(f"a_ln_b_{li}_{si}", 1, HIDDEN)
    for li in range(NUM_LAYERS):
        add(f"fbi_{li}", 1, INTERMEDIATE)
        add(f"fbo_{li}", 1, HIDDEN)
        add(f"f_ln_g_{li}", 1, HIDDEN)
        add(f"f_ln_b_{li}", 1, HIDDEN)
    add("cls_b", 1, CLS_PAD)
    add("m1_b", 1, 8 * HIDDEN)
    add("m2_b", 1, 8 * HIDDEN)
    return layout, _round_up(off, 8)


W_LAYOUT, W_ROWS = _build_w_layout()
V_LAYOUT, V_ROWS = _build_v_layout()


# ---------------- in-kernel helpers (traced into the single Pallas kernel) ----------------
def _w(ref, name):
    off, rows, cols = W_LAYOUT[name]
    return ref[off:off + rows, :cols]


def _v(ref, name):
    off, rows, cols = V_LAYOUT[name]
    return ref[off:off + rows, :cols]


def _erf(x):
    # Abramowitz & Stegun 7.1.26, max abs error ~1.5e-7 (float32-accurate).
    # TODO(synk): lax.erf has no guaranteed Mosaic lowering; this polynomial keeps exact-GELU
    # semantics to within float32 rounding while using only exp / mul-add (VPU + EUP).
    p = 0.3275911
    a1, a2, a3, a4, a5 = 0.254829592, -0.284496736, 1.421413741, -1.453152027, 1.061405429
    ax = jnp.abs(x)
    t = 1.0 / (1.0 + p * ax)
    poly = t * (a1 + t * (a2 + t * (a3 + t * (a4 + t * a5))))
    y = 1.0 - poly * jnp.exp(-ax * ax)
    return jnp.where(x < 0.0, -y, y)


def _gelu(x):
    return 0.5 * x * (1.0 + _erf(x * _SQRT_HALF))


def _layer_norm(x, g, b):
    mean = jnp.mean(x, axis=-1, keepdims=True)
    var = jnp.mean(jnp.square(x - mean), axis=-1, keepdims=True)
    return (x - mean) * lax.rsqrt(var + LN_EPS) * g + b


def _softmax(s):
    s = s - jnp.max(s, axis=-1, keepdims=True)
    e = jnp.exp(s)
    return e / jnp.sum(e, axis=-1, keepdims=True)


def _attention_block(x, kv, mask, li, si, is_self, wslab, vslab):
    """BertAttention (self or cross) for one batch element, fused QKV / fused output proj."""
    w_qkv = _w(wslab, f"wqkv_{li}_{si}")        # [H, 3H]  columns: Q | K | V
    b_qkv = _v(vslab, f"bqkv_{li}_{si}")        # [1, 3H]

    if is_self:
        # one [T,32]x[32,96] matmul for all heads & all of Q/K/V
        qkv = jnp.dot(x, w_qkv, preferred_element_type=jnp.float32) + b_qkv
        q_all = qkv[:, :HIDDEN]
        k_all = qkv[:, HIDDEN:2 * HIDDEN]
        v_all = qkv[:, 2 * HIDDEN:3 * HIDDEN]
    else:
        # Q from the decoder stream, fused K/V from the encoder stream
        q_all = jnp.dot(x, w_qkv[:, :HIDDEN],
                        preferred_element_type=jnp.float32) + b_qkv[:, :HIDDEN]
        kvp = jnp.dot(kv, w_qkv[:, HIDDEN:],
                      preferred_element_type=jnp.float32) + b_qkv[:, HIDDEN:]
        k_all = kvp[:, :HIDDEN]
        v_all = kvp[:, HIDDEN:]

    ctx = []
    for hd in range(NUM_HEADS):
        sl = slice(hd * HEAD_DIM, (hd + 1) * HEAD_DIM)
        # contraction expressed directly -> no k.T materialization / XLU transpose
        s = lax.dot_general(q_all[:, sl], k_all[:, sl], (((1,), (1,)), ((), ())),
                            preferred_element_type=jnp.float32) * _ATTN_SCALE
        if mask is not None:                     # self-attn: no mask (statically skipped)
            s = s + mask
        p = _softmax(s)                          # attention dropout == identity
        ctx.append(jnp.dot(p, v_all[:, sl], preferred_element_type=jnp.float32))
    ctx_all = jnp.concatenate(ctx, axis=-1)      # lane concat -> [T, H]

    out = jnp.dot(ctx_all, _w(wslab, f"wo_{li}_{si}"),
                  preferred_element_type=jnp.float32) + _v(vslab, f"bo_{li}_{si}")
    # BertSelfOutput: dense + residual + LayerNorm (dropout == identity)
    return _layer_norm(out + x,
                       _v(vslab, f"a_ln_g_{li}_{si}"),
                       _v(vslab, f"a_ln_b_{li}_{si}"))


# ---------------- the single fused kernel (one grid step == one batch element) ----------------
def _set_decoder_kernel(mask_ref, enc_ref, wslab_ref, vslab_ref, hid_ref, cls_ref, met_ref):
    enc = enc_ref[0]                              # [L, H]
    mask = mask_ref[0]                            # [Q, L] additive mask (precomputed in wrapper)

    # query embedding + LayerNorm (dropout == identity at inference).
    h = _layer_norm(_v(vslab_ref, "query_embed"),
                    _v(vslab_ref, "q_ln_g"), _v(vslab_ref, "q_ln_b"))   # [Q, H]

    for li in range(NUM_LAYERS):
        # self attention (no mask), then cross attention with the encoder mask
        h = _attention_block(h, h, None, li, 0, True, wslab_ref, vslab_ref)
        h = _attention_block(h, enc, mask, li, 1, False, wslab_ref, vslab_ref)
        # BertIntermediate (dense + exact GELU) + BertOutput (dense + residual + LN)
        inter = _gelu(jnp.dot(h, _w(wslab_ref, f"fwi_{li}"),
                              preferred_element_type=jnp.float32) + _v(vslab_ref, f"fbi_{li}"))
        ffo = jnp.dot(inter, _w(wslab_ref, f"fwo_{li}"),
                      preferred_element_type=jnp.float32) + _v(vslab_ref, f"fbo_{li}")
        h = _layer_norm(ffo + h, _v(vslab_ref, f"f_ln_g_{li}"), _v(vslab_ref, f"f_ln_b_{li}"))

    hid_ref[0] = h.astype(hid_ref.dtype)

    # classifier: weights/bias zero-padded to 128 columns -> unmasked lane-dense store.
    cls_ref[0] = (jnp.dot(h, _w(wslab_ref, "cls_w"), preferred_element_type=jnp.float32)
                  + _v(vslab_ref, "cls_b")).astype(cls_ref.dtype)

    # pairwise span metric (single shot): logits[q, l, o] = sum_d tanh(m1[q,d]+m2[l,d]) * W3[o,d]
    m1 = jnp.dot(h, _w(wslab_ref, "m1_w"),
                 preferred_element_type=jnp.float32) + _v(vslab_ref, "m1_b")      # [Q, 8H]
    m2 = jnp.dot(enc, _w(wslab_ref, "m2_w"),
                 preferred_element_type=jnp.float32) + _v(vslab_ref, "m2_b")      # [L, 8H]
    t = jnp.tanh(m1[:, None, :] + m2[None, :, :])                                 # [Q, L, 8H]
    t2 = t.reshape(NUM_Q * ENC_LEN, 8 * HIDDEN)                                   # [Q*L, 8H]
    met = lax.dot_general(_w(wslab_ref, "m3_t"), t2, (((1,), (1,)), ((), ())),
                          preferred_element_type=jnp.float32)                     # [8, Q*L]
    met_ref[0] = met.astype(met_ref.dtype)                                        # lane-dense store


# ---------------- wrapper: one pallas_call for the whole forward ----------------
def set_decoder_forward(packed, encoder_hidden_states, encoder_attention_mask):
    B, L, H = encoder_hidden_states.shape
    assert L == ENC_LEN and H == HIDDEN

    # Precompute the additive extended mask once in the wrapper (exactly as DecoderLayer does).
    m = encoder_attention_mask.astype(jnp.float32)
    if m.ndim == 3:
        # torch broadcasts [B,1,L,L] against [B,nh,Q,L]; valid only when Q == L.
        assert NUM_Q == L and m.shape == (B, L, L), "3-D mask requires num_queries == enc_len"
        add_mask = (1.0 - m) * -10000.0
    elif m.ndim == 2:
        assert m.shape == (B, L)
        add_mask = jnp.broadcast_to(((1.0 - m) * -10000.0)[:, None, :], (B, NUM_Q, L))
    else:
        raise ValueError("Wrong shape for encoder_attention_mask")

    in_specs = [
        pl.BlockSpec((1, NUM_Q, L), lambda b: (b, 0, 0)),            # additive mask
        pl.BlockSpec((1, L, H), lambda b: (b, 0, 0)),                # encoder hidden states
        pl.BlockSpec((W_ROWS, SLAB_LANES), lambda b: (0, 0)),        # packed weight slab
        pl.BlockSpec((V_ROWS, SLAB_LANES), lambda b: (0, 0)),        # packed vector slab
    ]
    out_specs = (
        pl.BlockSpec((1, NUM_Q, HIDDEN), lambda b: (b, 0, 0)),
        pl.BlockSpec((1, NUM_Q, CLS_PAD), lambda b: (b, 0, 0)),
        pl.BlockSpec((1, METRIC_OUT, NUM_Q * L), lambda b: (b, 0, 0)),
    )
    out_shape = (
        jax.ShapeDtypeStruct((B, NUM_Q, HIDDEN), jnp.float32),
        jax.ShapeDtypeStruct((B, NUM_Q, CLS_PAD), jnp.float32),
        jax.ShapeDtypeStruct((B, METRIC_OUT, NUM_Q * L), jnp.float32),
    )

    hidden, cls_pad, met = pl.pallas_call(
        _set_decoder_kernel,
        out_shape=out_shape,
        grid=(B,),
        in_specs=in_specs,
        out_specs=out_specs,
        compiler_params=pltpu.CompilerParams(dimension_semantics=("parallel",)),
    )(add_mask, encoder_hidden_states.astype(jnp.float32),
      packed["wslab"], packed["vslab"])

    compare_logits = cls_pad[..., :NUM_CLASSES]
    logits = met.reshape(B, METRIC_OUT, NUM_Q, L)   # [b, o, q, l] == torch logits[b, q, l, o]
    return (
        hidden,              # final decoder hidden states
        compare_logits,      # [B, Q, num_classes]
        logits[:, 0],        # sub_start_logits
        logits[:, 1],        # sub_end_logits
        logits[:, 2],        # obj_start_logits
        logits[:, 3],        # obj_end_logits
        logits[:, 4],        # aspect_start_logits
        logits[:, 5],        # aspect_end_logits
    )


# ---------------- parameter initialization (natural layout) + packing into 2 slabs ----------------
def init_params(key):
    keys = iter(jax.random.split(key, 128))

    def nk():
        return next(keys)

    def dense(fan_in, fan_out):
        w = jax.random.normal(nk(), (fan_in, fan_out), jnp.float32) * 0.02
        b = jax.random.normal(nk(), (fan_out,), jnp.float32) * 0.02
        return w, b

    orth = jax.nn.initializers.orthogonal()

    def attn_params():
        q_w, q_b = dense(HIDDEN, HIDDEN)
        k_w, k_b = dense(HIDDEN, HIDDEN)
        v_w, v_b = dense(HIDDEN, HIDDEN)
        o_w, o_b = dense(HIDDEN, HIDDEN)
        return dict(q_w=q_w, q_b=q_b, k_w=k_w, k_b=k_b, v_w=v_w, v_b=v_b,
                    o_w=o_w, o_b=o_b,
                    ln_g=jnp.ones((HIDDEN,), jnp.float32),
                    ln_b=jnp.zeros((HIDDEN,), jnp.float32))

    layers = []
    for _ in range(NUM_LAYERS):
        i_w, i_b = dense(HIDDEN, INTERMEDIATE)
        out_w, out_b = dense(INTERMEDIATE, HIDDEN)
        layers.append(dict(self=attn_params(), cross=attn_params(),
                           i_w=i_w, i_b=i_b, out_w=out_w, out_b=out_b,
                           out_ln_g=jnp.ones((HIDDEN,), jnp.float32),
                           out_ln_b=jnp.zeros((HIDDEN,), jnp.float32)))

    cls_w, cls_b = dense(HIDDEN, NUM_CLASSES)
    # NOTE: decoder2span exists in the torch module but is never used in forward -> omitted.
    return dict(
        query_embed=orth(nk(), (NUM_Q, HIDDEN), jnp.float32),
        ln_g=jnp.ones((HIDDEN,), jnp.float32),
        ln_b=jnp.zeros((HIDDEN,), jnp.float32),
        layers=layers,
        cls_w=cls_w, cls_b=cls_b,
        m1_w=orth(nk(), (HIDDEN, 8 * HIDDEN), jnp.float32),
        m1_b=jax.random.normal(nk(), (8 * HIDDEN,), jnp.float32) * 0.02,
        m2_w=orth(nk(), (HIDDEN, 8 * HIDDEN), jnp.float32),
        m2_b=jax.random.normal(nk(), (8 * HIDDEN,), jnp.float32) * 0.02,
        m3_t=orth(nk(), (METRIC_OUT, 8 * HIDDEN), jnp.float32),  # metric_3.weight (no bias)
    )


def pack_params(p):
    """Pack all parameters into two dense slabs consumed by the kernel (2 DMAs total)."""
    wslab = jnp.zeros((W_ROWS, SLAB_LANES), jnp.float32)
    vslab = jnp.zeros((V_ROWS, SLAB_LANES), jnp.float32)

    def _set(slab, layout, name, val):
        off, rows, cols = layout[name]
        val = jnp.asarray(val, jnp.float32).reshape(rows, -1)
        assert val.shape[1] <= cols
        return slab.at[off:off + rows, :val.shape[1]].set(val)

    def wset(slab, name, val):
        return _set(slab, W_LAYOUT, name, val)

    def vset(slab, name, val):
        return _set(slab, V_LAYOUT, name, val)

    for li, lp in enumerate(p["layers"]):
        for si, name in enumerate(("self", "cross")):
            ap = lp[name]
            wslab = wset(wslab, f"wqkv_{li}_{si}",
                         jnp.concatenate([ap["q_w"], ap["k_w"], ap["v_w"]], axis=1))
            wslab = wset(wslab, f"wo_{li}_{si}", ap["o_w"])
            vslab = vset(vslab, f"bqkv_{li}_{si}",
                         jnp.concatenate([ap["q_b"], ap["k_b"], ap["v_b"]]))
            vslab = vset(vslab, f"bo_{li}_{si}", ap["o_b"])
            vslab = vset(vslab, f"a_ln_g_{li}_{si}", ap["ln_g"])
            vslab = vset(vslab, f"a_ln_b_{li}_{si}", ap["ln_b"])
        wslab = wset(wslab, f"fwi_{li}", lp["i_w"])
        wslab = wset(wslab, f"fwo_{li}", lp["out_w"])
        vslab = vset(vslab, f"fbi_{li}", lp["i_b"])
        vslab = vset(vslab, f"fbo_{li}", lp["out_b"])
        vslab = vset(vslab, f"f_ln_g_{li}", lp["out_ln_g"])
        vslab = vset(vslab, f"f_ln_b_{li}", lp["out_ln_b"])

    wslab = wset(wslab, "cls_w", p["cls_w"])      # remaining 123 columns stay zero (lane padding)
    wslab = wset(wslab, "m1_w", p["m1_w"])
    wslab = wset(wslab, "m2_w", p["m2_w"])
    wslab = wset(wslab, "m3_t", p["m3_t"])

    vslab = vset(vslab, "query_embed", p["query_embed"])
    vslab = vset(vslab, "q_ln_g", p["ln_g"])
    vslab = vset(vslab, "q_ln_b", p["ln_b"])
    vslab = vset(vslab, "cls_b", p["cls_b"])
    vslab = vset(vslab, "m1_b", p["m1_b"])
    vslab = vset(vslab, "m2_b", p["m2_b"])

    return dict(wslab=wslab, vslab=vslab)


# ---------------- demo ----------------
if __name__ == "__main__":
    key = jax.random.PRNGKey(0)
    pkey, hkey, mkey = jax.random.split(key, 3)

    params = init_params(pkey)
    packed = pack_params(params)

    encoder_hidden_states = jax.random.normal(hkey, (BATCH, ENC_LEN, HIDDEN), jnp.float32)
    encoder_attention_mask = (
        jax.random.uniform(mkey, (BATCH, ENC_LEN, ENC_LEN)) > 0.2
    ).astype(jnp.float32)

    fwd = jax.jit(set_decoder_forward)
    outs = fwd(packed, encoder_hidden_states, encoder_attention_mask)
    outs = jax.block_until_ready(outs)

    hidden, compare_logits, *span_logits = outs
    assert hidden.shape == (BATCH, NUM_Q, HIDDEN)
    assert compare_logits.shape == (BATCH, NUM_Q, NUM_CLASSES)
    assert len(span_logits) == 6
    for o in span_logits:
        assert o.shape == (BATCH, NUM_Q, ENC_LEN)
    assert all(bool(jnp.all(jnp.isfinite(o))) for o in outs)

    print("KERNEL_OK")
</pallas_src>

<mosaic_0001>
module attributes {stable_mosaic.version = 11 : i64} {
  func.func @_set_decoder_kernel(%arg0: i32, %arg1: memref<1x16x16xf32, #tpu.memory_space<vmem>>, %arg2: memref<1x16x32xf32, #tpu.memory_space<vmem>>, %arg3: memref<552x256xf32, #tpu.memory_space<vmem>>, %arg4: memref<48x256xf32, #tpu.memory_space<vmem>>, %arg5: memref<1x16x32xf32, #tpu.memory_space<vmem>>, %arg6: memref<1x16x128xf32, #tpu.memory_space<vmem>>, %arg7: memref<1x8x256xf32, #tpu.memory_space<vmem>>) attributes {dimension_semantics = [#tpu.dimension_semantics<parallel>], iteration_bounds = array<i64: 2>, scalar_prefetch = 0 : i64, scratch_operands = 0 : i64, tpu.core_type = #tpu.core_type<tc>, window_params = [{transform_indices = @transform_0, window_bounds = array<i64: 1, 16, 16>}, {transform_indices = @transform_1, window_bounds = array<i64: 1, 16, 32>}, {pipeline_mode = #tpu.pipeline_mode<synchronous>, transform_indices = @transform_2, window_bounds = array<i64: 552, 256>}, {pipeline_mode = #tpu.pipeline_mode<synchronous>, transform_indices = @transform_3, window_bounds = array<i64: 48, 256>}, {transform_indices = @transform_4, window_bounds = array<i64: 1, 16, 32>}, {transform_indices = @transform_5, window_bounds = array<i64: 1, 16, 128>}, {transform_indices = @transform_6, window_bounds = array<i64: 1, 8, 256>}]} {
    %c0 = arith.constant 0 : index
    %c0_0 = arith.constant 0 : index
    %c0_1 = arith.constant 0 : index
    %0 = vector.load %arg2[%c0, %c0_0, %c0_1] : memref<1x16x32xf32, #tpu.memory_space<vmem>>, vector<1x16x32xf32>
    %1 = vector.shape_cast %0 : vector<1x16x32xf32> to vector<16x32xf32>
    %c0_2 = arith.constant 0 : index
    %c0_3 = arith.constant 0 : index
    %c0_4 = arith.constant 0 : index
    %2 = vector.load %arg1[%c0_2, %c0_3, %c0_4] : memref<1x16x16xf32, #tpu.memory_space<vmem>>, vector<1x16x16xf32>
    %3 = vector.shape_cast %2 : vector<1x16x16xf32> to vector<16x16xf32>
    %c0_5 = arith.constant 0 : index
    %c0_6 = arith.constant 0 : index
    %4 = vector.load %arg4[%c0_5, %c0_6] : memref<48x256xf32, #tpu.memory_space<vmem>>, vector<16x32xf32>
    %c16 = arith.constant 16 : index
    %c0_7 = arith.constant 0 : index
    %5 = vector.load %arg4[%c16, %c0_7] : memref<48x256xf32, #tpu.memory_space<vmem>>, vector<1x32xf32>
    %c17 = arith.constant 17 : index
    %c0_8 = arith.constant 0 : index
    %6 = vector.load %arg4[%c17, %c0_8] : memref<48x256xf32, #tpu.memory_space<vmem>>, vector<1x32xf32>
    %cst = arith.constant dense<0.000000e+00> : vector<16xf32>
    %7 = vector.multi_reduction <add>, %4, %cst [1] : vector<16x32xf32> to vector<16xf32>
    %8 = vector.shape_cast %7 : vector<16xf32> to vector<16x1xf32>
    %cst_9 = arith.constant 3.200000e+01 : f32
    %9 = vector.broadcast %cst_9 : f32 to vector<16x1xf32>
    %10 = arith.divf %8, %9 : vector<16x1xf32>
    %11 = vector.broadcast %10 : vector<16x1xf32> to vector<16x32xf32>
    %12 = arith.subf %4, %11 : vector<16x32xf32>
    %13 = arith.mulf %12, %12 : vector<16x32xf32>
    %cst_10 = arith.constant dense<0.000000e+00> : vector<16xf32>
    %14 = vector.multi_reduction <add>, %13, %cst_10 [1] : vector<16x32xf32> to vector<16xf32>
    %15 = vector.shape_cast %14 : vector<16xf32> to vector<16x1xf32>
    %cst_11 = arith.constant 3.200000e+01 : f32
    %16 = vector.broadcast %cst_11 : f32 to vector<16x1xf32>
    %17 = arith.divf %15, %16 : vector<16x1xf32>
    %18 = vector.broadcast %10 : vector<16x1xf32> to vector<16x32xf32>
    %19 = arith.subf %4, %18 : vector<16x32xf32>
    %cst_12 = arith.constant 9.99999996E-13 : f32
    %20 = vector.broadcast %cst_12 : f32 to vector<16x1xf32>
    %21 = arith.addf %17, %20 : vector<16x1xf32>
    %22 = math.rsqrt %21 : vector<16x1xf32>
    %23 = vector.broadcast %22 : vector<16x1xf32> to vector<16x32xf32>
    %24 = arith.mulf %19, %23 : vector<16x32xf32>
    %25 = vector.broadcast %5 : vector<1x32xf32> to vector<16x32xf32>
    %26 = arith.mulf %24, %25 : vector<16x32xf32>
    %27 = vector.broadcast %6 : vector<1x32xf32> to vector<16x32xf32>
    %28 = arith.addf %26, %27 : vector<16x32xf32>
    %c0_13 = arith.constant 0 : index
    %c0_14 = arith.constant 0 : index
    %29 = vector.load %arg3[%c0_13, %c0_14] : memref<552x256xf32, #tpu.memory_space<vmem>>, vector<32x96xf32>
    %c18 = arith.constant 18 : index
    %c0_15 = arith.constant 0 : index
    %30 = vector.load %arg4[%c18, %c0_15] : memref<48x256xf32, #tpu.memory_space<vmem>>, vector<1x96xf32>
    %cst_16 = arith.constant dense<0.000000e+00> : vector<16x96xf32>
    %31 = tpu.matmul %28, %29, %cst_16 {dimension_numbers = #tpu.dot_dimension_numbers<[1], [0], [0], [1], [0, 0, 1, 1], [], []>} : vector<16x32xf32>, vector<32x96xf32>, vector<16x96xf32> -> vector<16x96xf32>
    %32 = vector.broadcast %30 : vector<1x96xf32> to vector<16x96xf32>
    %33 = arith.addf %31, %32 : vector<16x96xf32>
    %34 = vector.extract_strided_slice %33 {offsets = [0, 0], sizes = [16, 32], strides = [1, 1]} : vector<16x96xf32> to vector<16x32xf32>
    %35 = vector.extract_strided_slice %33 {offsets = [0, 32], sizes = [16, 32], strides = [1, 1]} : vector<16x96xf32> to vector<16x32xf32>
    %36 = vector.extract_strided_slice %33 {offsets = [0, 64], sizes = [16, 32], strides = [1, 1]} : vector<16x96xf32> to vector<16x32xf32>
    %37 = vector.extract_strided_slice %34 {offsets = [0, 0], sizes = [16, 8], strides = [1, 1]} : vector<16x32xf32> to vector<16x8xf32>
    %38 = vector.extract_strided_slice %35 {offsets = [0, 0], sizes = [16, 8], strides = [1, 1]} : vector<16x32xf32> to vector<16x8xf32>
    %cst_17 = arith.constant dense<0.000000e+00> : vector<16x16xf32>
    %39 = tpu.matmul %37, %38, %cst_17 {dimension_numbers = #tpu.dot_dimension_numbers<[1], [1], [0], [0], [0, 0, 1, 0], [], []>} : vector<16x8xf32>, vector<16x8xf32>, vector<16x16xf32> -> vector<16x16xf32>
    %cst_18 = arith.constant 0.353553385 : f32
    %40 = vector.broadcast %cst_18 : f32 to vector<16x16xf32>
    %41 = arith.mulf %39, %40 : vector<16x16xf32>
    %cst_19 = arith.constant dense<0xFF800000> : vector<16xf32>
    %42 = vector.multi_reduction <maximumf>, %41, %cst_19 [1] : vector<16x16xf32> to vector<16xf32>
    %43 = vector.shape_cast %42 : vector<16xf32> to vector<16x1xf32>
    %44 = vector.broadcast %43 : vector<16x1xf32> to vector<16x16xf32>
    %45 = arith.subf %41, %44 : vector<16x16xf32>
    %46 = math.exp %45 : vector<16x16xf32>
    %cst_20 = arith.constant dense<0.000000e+00> : vector<16xf32>
    %47 = vector.multi_reduction <add>, %46, %cst_20 [1] : vector<16x16xf32> to vector<16xf32>
    %48 = vector.shape_cast %47 : vector<16xf32> to vector<16x1xf32>
    %49 = vector.broadcast %48 : vector<16x1xf32> to vector<16x16xf32>
    %50 = arith.divf %46, %49 : vector<16x16xf32>
    %51 = vector.extract_strided_slice %36 {offsets = [0, 0], sizes = [16, 8], strides = [1, 1]} : vector<16x32xf32> to vector<16x8xf32>
    %cst_21 = arith.constant dense<0.000000e+00> : vector<16x8xf32>
    %52 = tpu.matmul %50, %51, %cst_21 {dimension_numbers = #tpu.dot_dimension_numbers<[1], [0], [0], [1], [0, 0, 1, 1], [], []>} : vector<16x16xf32>, vector<16x8xf32>, vector<16x8xf32> -> vector<16x8xf32>
    %53 = vector.extract_strided_slice %34 {offsets = [0, 8], sizes = [16, 8], strides = [1, 1]} : vector<16x32xf32> to vector<16x8xf32>
    %54 = vector.extract_strided_slice %35 {offsets = [0, 8], sizes = [16, 8], strides = [1, 1]} : vector<16x32xf32> to vector<16x8xf32>
    %cst_22 = arith.constant dense<0.000000e+00> : vector<16x16xf32>
    %55 = tpu.matmul %53, %54, %cst_22 {dimension_numbers = #tpu.dot_dimension_numbers<[1], [1], [0], [0], [0, 0, 1, 0], [], []>} : vector<16x8xf32>, vector<16x8xf32>, vector<16x16xf32> -> vector<16x16xf32>
    %cst_23 = arith.constant 0.353553385 : f32
    %56 = vector.broadcast %cst_23 : f32 to vector<16x16xf32>
    %57 = arith.mulf %55, %56 : vector<16x16xf32>
    %cst_24 = arith.constant dense<0xFF800000> : vector<16xf32>
    %58 = vector.multi_reduction <maximumf>, %57, %cst_24 [1] : vector<16x16xf32> to vector<16xf32>
    %59 = vector.shape_cast %58 : vector<16xf32> to vector<16x1xf32>
    %60 = vector.broadcast %59 : vector<16x1xf32> to vector<16x16xf32>
    %61 = arith.subf %57, %60 : vector<16x16xf32>
    %62 = math.exp %61 : vector<16x16xf32>
    %cst_25 = arith.constant dense<0.000000e+00> : vector<16xf32>
    %63 = vector.multi_reduction <add>, %62, %cst_25 [1] : vector<16x16xf32> to vector<16xf32>
    %64 = vector.shape_cast %63 : vector<16xf32> to vector<16x1xf32>
    %65 = vector.broadcast %64 : vector<16x1xf32> to vector<16x16xf32>
    %66 = arith.divf %62, %65 : vector<16x16xf32>
    %67 = vector.extract_strided_slice %36 {offsets = [0, 8], sizes = [16, 8], strides = [1, 1]} : vector<16x32xf32> to vector<16x8xf32>
    %cst_26 = arith.constant dense<0.000000e+00> : vector<16x8xf32>
    %68 = tpu.matmul %66, %67, %cst_26 {dimension_numbers = #tpu.dot_dimension_numbers<[1], [0], [0], [1], [0, 0, 1, 1], [], []>} : vector<16x16xf32>, vector<16x8xf32>, vector<16x8xf32> -> vector<16x8xf32>
    %69 = vector.extract_strided_slice %34 {offsets = [0, 16], sizes = [16, 8], strides = [1, 1]} : vector<16x32xf32> to vector<16x8xf32>
    %70 = vector.extract_strided_slice %35 {offsets = [0, 16], sizes = [16, 8], strides = [1, 1]} : vector<16x32xf32> to vector<16x8xf32>
    %cst_27 = arith.constant dense<0.000000e+00> : vector<16x16xf32>
    %71 = tpu.matmul %69, %70, %cst_27 {dimension_numbers = #tpu.dot_dimension_numbers<[1], [1], [0], [0], [0, 0, 1, 0], [], []>} : vector<16x8xf32>, vector<16x8xf32>, vector<16x16xf32> -> vector<16x16xf32>
    %cst_28 = arith.constant 0.353553385 : f32
    %72 = vector.broadcast %cst_28 : f32 to vector<16x16xf32>
    %73 = arith.mulf %71, %72 : vector<16x16xf32>
    %cst_29 = arith.constant dense<0xFF800000> : vector<16xf32>
    %74 = vector.multi_reduction <maximumf>, %73, %cst_29 [1] : vector<16x16xf32> to vector<16xf32>
    %75 = vector.shape_cast %74 : vector<16xf32> to vector<16x1xf32>
    %76 = vector.broadcast %75 : vector<16x1xf32> to vector<16x16xf32>
    %77 = arith.subf %73, %76 : vector<16x16xf32>
    %78 = math.exp %77 : vector<16x16xf32>
    %cst_30 = arith.constant dense<0.000000e+00> : vector<16xf32>
    %79 = vector.multi_reduction <add>, %78, %cst_30 [1] : vector<16x16xf32> to vector<16xf32>
    %80 = vector.shape_cast %79 : vector<16xf32> to vector<16x1xf32>
    %81 = vector.broadcast %80 : vector<16x1xf32> to vector<16x16xf32>
    %82 = arith.divf %78, %81 : vector<16x16xf32>
    %83 = vector.extract_strided_slice %36 {offsets = [0, 16], sizes = [16, 8], strides = [1, 1]} : vector<16x32xf32> to vector<16x8xf32>
    %cst_31 = arith.constant dense<0.000000e+00> : vector<16x8xf32>
    %84 = tpu.matmul %82, %83, %cst_31 {dimension_numbers = #tpu.dot_dimension_numbers<[1], [0], [0], [1], [0, 0, 1, 1], [], []>} : vector<16x16xf32>, vector<16x8xf32>, vector<16x8xf32> -> vector<16x8xf32>
    %85 = vector.extract_strided_slice %34 {offsets = [0, 24], sizes = [16, 8], strides = [1, 1]} : vector<16x32xf32> to vector<16x8xf32>
    %86 = vector.extract_strided_slice %35 {offsets = [0, 24], sizes = [16, 8], strides = [1, 1]} : vector<16x32xf32> to vector<16x8xf32>
    %cst_32 = arith.constant dense<0.000000e+00> : vector<16x16xf32>
    %87 = tpu.matmul %85, %86, %cst_32 {dimension_numbers = #tpu.dot_dimension_numbers<[1], [1], [0], [0], [0, 0, 1, 0], [], []>} : vector<16x8xf32>, vector<16x8xf32>, vector<16x16xf32> -> vector<16x16xf32>
    %cst_33 = arith.constant 0.353553385 : f32
    %88 = vector.broadcast %cst_33 : f32 to vector<16x16xf32>
    %89 = arith.mulf %87, %88 : vector<16x16xf32>
    %cst_34 = arith.constant dense<0xFF800000> : vector<16xf32>
    %90 = vector.multi_reduction <maximumf>, %89, %cst_34 [1] : vector<16x16xf32> to vector<16xf32>
    %91 = vector.shape_cast %90 : vector<16xf32> to vector<16x1xf32>
    %92 = vector.broadcast %91 : vector<16x1xf32> to vector<16x16xf32>
    %93 = arith.subf %89, %92 : vector<16x16xf32>
    %94 = math.exp %93 : vector<16x16xf32>
    %cst_35 = arith.constant dense<0.000000e+00> : vector<16xf32>
    %95 = vector.multi_reduction <add>, %94, %cst_35 [1] : vector<16x16xf32> to vector<16xf32>
    %96 = vector.shape_cast %95 : vector<16xf32> to vector<16x1xf32>
    %97 = vector.broadcast %96 : vector<16x1xf32> to vector<16x16xf32>
    %98 = arith.divf %94, %97 : vector<16x16xf32>
    %99 = vector.extract_strided_slice %36 {offsets = [0, 24], sizes = [16, 8], strides = [1, 1]} : vector<16x32xf32> to vector<16x8xf32>
    %cst_36 = arith.constant dense<0.000000e+00> : vector<16x8xf32>
    %100 = tpu.matmul %98, %99, %cst_36 {dimension_numbers = #tpu.dot_dimension_numbers<[1], [0], [0], [1], [0, 0, 1, 1], [], []>} : vector<16x16xf32>, vector<16x8xf32>, vector<16x8xf32> -> vector<16x8xf32>
    %101 = tpu.concatenate %52, %68, %84, %100 in 1 : vector<16x8xf32>, vector<16x8xf32>, vector<16x8xf32>, vector<16x8xf32> -> vector<16x32xf32>
    %c128 = arith.constant 128 : index
    %c0_37 = arith.constant 0 : index
    %102 = vector.load %arg3[%c128, %c0_37] : memref<552x256xf32, #tpu.memory_space<vmem>>, vector<32x32xf32>
    %cst_38 = arith.constant dense<0.000000e+00> : vector<16x32xf32>
    %103 = tpu.matmul %101, %102, %cst_38 {dimension_numbers = #tpu.dot_dimension_numbers<[1], [0], [0], [1], [0, 0, 1, 1], [], []>} : vector<16x32xf32>, vector<32x32xf32>, vector<16x32xf32> -> vector<16x32xf32>
    %c19 = arith.constant 19 : index
    %c0_39 = arith.constant 0 : index
    %104 = vector.load %arg4[%c19, %c0_39] : memref<48x256xf32, #tpu.memory_space<vmem>>, vector<1x32xf32>
    %105 = vector.broadcast %104 : vector<1x32xf32> to vector<16x32xf32>
    %106 = arith.addf %103, %105 : vector<16x32xf32>
    %107 = arith.addf %106, %28 : vector<16x32xf32>
    %c20 = arith.constant 20 : index
    %c0_40 = arith.constant 0 : index
    %108 = vector.load %arg4[%c20, %c0_40] : memref<48x256xf32, #tpu.memory_space<vmem>>, vector<1x32xf32>
    %c21 = arith.constant 21 : index
    %c0_41 = arith.constant 0 : index
    %109 = vector.load %arg4[%c21, %c0_41] : memref<48x256xf32, #tpu.memory_space<vmem>>, vector<1x32xf32>
    %cst_42 = arith.constant dense<0.000000e+00> : vector<16xf32>
    %110 = vector.multi_reduction <add>, %107, %cst_42 [1] : vector<16x32xf32> to vector<16xf32>
    %111 = vector.shape_cast %110 : vector<16xf32> to vector<16x1xf32>
    %cst_43 = arith.constant 3.200000e+01 : f32
    %112 = vector.broadcast %cst_43 : f32 to vector<16x1xf32>
    %113 = arith.divf %111, %112 : vector<16x1xf32>
    %114 = vector.broadcast %113 : vector<16x1xf32> to vector<16x32xf32>
    %115 = arith.subf %107, %114 : vector<16x32xf32>
    %116 = arith.mulf %115, %115 : vector<16x32xf32>
    %cst_44 = arith.constant dense<0.000000e+00> : vector<16xf32>
    %117 = vector.multi_reduction <add>, %116, %cst_44 [1] : vector<16x32xf32> to vector<16xf32>
    %118 = vector.shape_cast %117 : vector<16xf32> to vector<16x1xf32>
    %cst_45 = arith.constant 3.200000e+01 : f32
    %119 = vector.broadcast %cst_45 : f32 to vector<16x1xf32>
    %120 = arith.divf %118, %119 : vector<16x1xf32>
    %121 = vector.broadcast %113 : vector<16x1xf32> to vector<16x32xf32>
    %122 = arith.subf %107, %121 : vector<16x32xf32>
    %cst_46 = arith.constant 9.99999996E-13 : f32
    %123 = vector.broadcast %cst_46 : f32 to vector<16x1xf32>
    %124 = arith.addf %120, %123 : vector<16x1xf32>
    %125 = math.rsqrt %124 : vector<16x1xf32>
    %126 = vector.broadcast %125 : vector<16x1xf32> to vector<16x32xf32>
    %127 = arith.mulf %122, %126 : vector<16x32xf32>
    %128 = vector.broadcast %108 : vector<1x32xf32> to vector<16x32xf32>
    %129 = arith.mulf %127, %128 : vector<16x32xf32>
    %130 = vector.broadcast %109 : vector<1x32xf32> to vector<16x32xf32>
    %131 = arith.addf %129, %130 : vector<16x32xf32>
    %c32 = arith.constant 32 : index
    %c0_47 = arith.constant 0 : index
    %132 = vector.load %arg3[%c32, %c0_47] : memref<552x256xf32, #tpu.memory_space<vmem>>, vector<32x96xf32>
    %c22 = arith.constant 22 : index
    %c0_48 = arith.constant 0 : index
    %133 = vector.load %arg4[%c22, %c0_48] : memref<48x256xf32, #tpu.memory_space<vmem>>, vector<1x96xf32>
    %134 = vector.extract_strided_slice %132 {offsets = [0, 0], sizes = [32, 32], strides = [1, 1]} : vector<32x96xf32> to vector<32x32xf32>
    %cst_49 = arith.constant dense<0.000000e+00> : vector<16x32xf32>
    %135 = tpu.matmul %131, %134, %cst_49 {dimension_numbers = #tpu.dot_dimension_numbers<[1], [0], [0], [1], [0, 0, 1, 1], [], []>} : vector<16x32xf32>, vector<32x32xf32>, vector<16x32xf32> -> vector<16x32xf32>
    %136 = vector.extract_strided_slice %133 {offsets = [0, 0], sizes = [1, 32], strides = [1, 1]} : vector<1x96xf32> to vector<1x32xf32>
    %137 = vector.broadcast %136 : vector<1x32xf32> to vector<16x32xf32>
    %138 = arith.addf %135, %137 : vector<16x32xf32>
    %139 = vector.extract_strided_slice %132 {offsets = [0, 32], sizes = [32, 64], strides = [1, 1]} : vector<32x96xf32> to vector<32x64xf32>
    %cst_50 = arith.constant dense<0.000000e+00> : vector<16x64xf32>
    %140 = tpu.matmul %1, %139, %cst_50 {dimension_numbers = #tpu.dot_dimension_numbers<[1], [0], [0], [1], [0, 0, 1, 1], [], []>} : vector<16x32xf32>, vector<32x64xf32>, vector<16x64xf32> -> vector<16x64xf32>
    %141 = vector.extract_strided_slice %133 {offsets = [0, 32], sizes = [1, 64], strides = [1, 1]} : vector<1x96xf32> to vector<1x64xf32>
    %142 = vector.broadcast %141 : vector<1x64xf32> to vector<16x64xf32>
    %143 = arith.addf %140, %142 : vector<16x64xf32>
    %144 = vector.extract_strided_slice %143 {offsets = [0, 0], sizes = [16, 32], strides = [1, 1]} : vector<16x64xf32> to vector<16x32xf32>
    %145 = vector.extract_strided_slice %143 {offsets = [0, 32], sizes = [16, 32], strides = [1, 1]} : vector<16x64xf32> to vector<16x32xf32>
    %146 = vector.extract_strided_slice %138 {offsets = [0, 0], sizes = [16, 8], strides = [1, 1]} : vector<16x32xf32> to vector<16x8xf32>
    %147 = vector.extract_strided_slice %144 {offsets = [0, 0], sizes = [16, 8], strides = [1, 1]} : vector<16x32xf32> to vector<16x8xf32>
    %cst_51 = arith.constant dense<0.000000e+00> : vector<16x16xf32>
    %148 = tpu.matmul %146, %147, %cst_51 {dimension_numbers = #tpu.dot_dimension_numbers<[1], [1], [0], [0], [0, 0, 1, 0], [], []>} : vector<16x8xf32>, vector<16x8xf32>, vector<16x16xf32> -> vector<16x16xf32>
    %cst_52 = arith.constant 0.353553385 : f32
    %149 = vector.broadcast %cst_52 : f32 to vector<16x16xf32>
    %150 = arith.mulf %148, %149 : vector<16x16xf32>
    %151 = arith.addf %150, %3 : vector<16x16xf32>
    %cst_53 = arith.constant dense<0xFF800000> : vector<16xf32>
    %152 = vector.multi_reduction <maximumf>, %151, %cst_53 [1] : vector<16x16xf32> to vector<16xf32>
    %153 = vector.shape_cast %152 : vector<16xf32> to vector<16x1xf32>
    %154 = vector.broadcast %153 : vector<16x1xf32> to vector<16x16xf32>
    %155 = arith.subf %151, %154 : vector<16x16xf32>
    %156 = math.exp %155 : vector<16x16xf32>
    %cst_54 = arith.constant dense<0.000000e+00> : vector<16xf32>
    %157 = vector.multi_reduction <add>, %156, %cst_54 [1] : vector<16x16xf32> to vector<16xf32>
    %158 = vector.shape_cast %157 : vector<16xf32> to vector<16x1xf32>
    %159 = vector.broadcast %158 : vector<16x1xf32> to vector<16x16xf32>
    %160 = arith.divf %156, %159 : vector<16x16xf32>
    %161 = vector.extract_strided_slice %145 {offsets = [0, 0], sizes = [16, 8], strides = [1, 1]} : vector<16x32xf32> to vector<16x8xf32>
    %cst_55 = arith.constant dense<0.000000e+00> : vector<16x8xf32>
    %162 = tpu.matmul %160, %161, %cst_55 {dimension_numbers = #tpu.dot_dimension_numbers<[1], [0], [0], [1], [0, 0, 1, 1], [], []>} : vector<16x16xf32>, vector<16x8xf32>, vector<16x8xf32> -> vector<16x8xf32>
    %163 = vector.extract_strided_slice %138 {offsets = [0, 8], sizes = [16, 8], strides = [1, 1]} : vector<16x32xf32> to vector<16x8xf32>
    %164 = vector.extract_strided_slice %144 {offsets = [0, 8], sizes = [16, 8], strides = [1, 1]} : vector<16x32xf32> to vector<16x8xf32>
    %cst_56 = arith.constant dense<0.000000e+00> : vector<16x16xf32>
    %165 = tpu.matmul %163, %164, %cst_56 {dimension_numbers = #tpu.dot_dimension_numbers<[1], [1], [0], [0], [0, 0, 1, 0], [], []>} : vector<16x8xf32>, vector<16x8xf32>, vector<16x16xf32> -> vector<16x16xf32>
    %cst_57 = arith.constant 0.353553385 : f32
    %166 = vector.broadcast %cst_57 : f32 to vector<16x16xf32>
    %167 = arith.mulf %165, %166 : vector<16x16xf32>
    %168 = arith.addf %167, %3 : vector<16x16xf32>
    %cst_58 = arith.constant dense<0xFF800000> : vector<16xf32>
    %169 = vector.multi_reduction <maximumf>, %168, %cst_58 [1] : vector<16x16xf32> to vector<16xf32>
    %170 = vector.shape_cast %169 : vector<16xf32> to vector<16x1xf32>
    %171 = vector.broadcast %170 : vector<16x1xf32> to vector<16x16xf32>
    %172 = arith.subf %168, %171 : vector<16x16xf32>
    %173 = math.exp %172 : vector<16x16xf32>
    %cst_59 = arith.constant dense<0.000000e+00> : vector<16xf32>
    %174 = vector.multi_reduction <add>, %173, %cst_59 [1] : vector<16x16xf32> to vector<16xf32>
    %175 = vector.shape_cast %174 : vector<16xf32> to vector<16x1xf32>
    %176 = vector.broadcast %175 : vector<16x1xf32> to vector<16x16xf32>
    %177 = arith.divf %173, %176 : vector<16x16xf32>
    %178 = vector.extract_strided_slice %145 {offsets = [0, 8], sizes = [16, 8], strides = [1, 1]} : vector<16x32xf32> to vector<16x8xf32>
    %cst_60 = arith.constant dense<0.000000e+00> : vector<16x8xf32>
    %179 = tpu.matmul %177, %178, %cst_60 {dimension_numbers = #tpu.dot_dimension_numbers<[1], [0], [0], [1], [0, 0, 1, 1], [], []>} : vector<16x16xf32>, vector<16x8xf32>, vector<16x8xf32> -> vector<16x8xf32>
    %180 = vector.extract_strided_slice %138 {offsets = [0, 16], sizes = [16, 8], strides = [1, 1]} : vector<16x32xf32> to vector<16x8xf32>
    %181 = vector.extract_strided_slice %144 {offsets = [0, 16], sizes = [16, 8], strides = [1, 1]} : vector<16x32xf32> to vector<16x8xf32>
    %cst_61 = arith.constant dense<0.000000e+00> : vector<16x16xf32>
    %182 = tpu.matmul %180, %181, %cst_61 {dimension_numbers = #tpu.dot_dimension_numbers<[1], [1], [0], [0], [0, 0, 1, 0], [], []>} : vector<16x8xf32>, vector<16x8xf32>, vector<16x16xf32> -> vector<16x16xf32>
    %cst_62 = arith.constant 0.353553385 : f32
    %183 = vector.broadcast %cst_62 : f32 to vector<16x16xf32>
    %184 = arith.mulf %182, %183 : vector<16x16xf32>
    %185 = arith.addf %184, %3 : vector<16x16xf32>
    %cst_63 = arith.constant dense<0xFF800000> : vector<16xf32>
    %186 = vector.multi_reduction <maximumf>, %185, %cst_63 [1] : vector<16x16xf32> to vector<16xf32>
    %187 = vector.shape_cast %186 : vector<16xf32> to vector<16x1xf32>
    %188 = vector.broadcast %187 : vector<16x1xf32> to vector<16x16xf32>
    %189 = arith.subf %185, %188 : vector<16x16xf32>
    %190 = math.exp %189 : vector<16x16xf32>
    %cst_64 = arith.constant dense<0.000000e+00> : vector<16xf32>
    %191 = vector.multi_reduction <add>, %190, %cst_64 [1] : vector<16x16xf32> to vector<16xf32>
    %192 = vector.shape_cast %191 : vector<16xf32> to vector<16x1xf32>
    %193 = vector.broadcast %192 : vector<16x1xf32> to vector<16x16xf32>
    %194 = arith.divf %190, %193 : vector<16x16xf32>
    %195 = vector.extract_strided_slice %145 {offsets = [0, 16], sizes = [16, 8], strides = [1, 1]} : vector<16x32xf32> to vector<16x8xf32>
    %cst_65 = arith.constant dense<0.000000e+00> : vector<16x8xf32>
    %196 = tpu.matmul %194, %195, %cst_65 {dimension_numbers = #tpu.dot_dimension_numbers<[1], [0], [0], [1], [0, 0, 1, 1], [], []>} : vector<16x16xf32>, vector<16x8xf32>, vector<16x8xf32> -> vector<16x8xf32>
    %197 = vector.extract_strided_slice %138 {offsets = [0, 24], sizes = [16, 8], strides = [1, 1]} : vector<16x32xf32> to vector<16x8xf32>
    %198 = vector.extract_strided_slice %144 {offsets = [0, 24], sizes = [16, 8], strides = [1, 1]} : vector<16x32xf32> to vector<16x8xf32>
    %cst_66 = arith.constant dense<0.000000e+00> : vector<16x16xf32>
    %199 = tpu.matmul %197, %198, %cst_66 {dimension_numbers = #tpu.dot_dimension_numbers<[1], [1], [0], [0], [0, 0, 1, 0], [], []>} : vector<16x8xf32>, vector<16x8xf32>, vector<16x16xf32> -> vector<16x16xf32>
    %cst_67 = arith.constant 0.353553385 : f32
    %200 = vector.broadcast %cst_67 : f32 to vector<16x16xf32>
    %201 = arith.mulf %199, %200 : vector<16x16xf32>
    %202 = arith.addf %201, %3 : vector<16x16xf32>
    %cst_68 = arith.constant dense<0xFF800000> : vector<16xf32>
    %203 = vector.multi_reduction <maximumf>, %202, %cst_68 [1] : vector<16x16xf32> to vector<16xf32>
    %204 = vector.shape_cast %203 : vector<16xf32> to vector<16x1xf32>
    %205 = vector.broadcast %204 : vector<16x1xf32> to vector<16x16xf32>
    %206 = arith.subf %202, %205 : vector<16x16xf32>
    %207 = math.exp %206 : vector<16x16xf32>
    %cst_69 = arith.constant dense<0.000000e+00> : vector<16xf32>
    %208 = vector.multi_reduction <add>, %207, %cst_69 [1] : vector<16x16xf32> to vector<16xf32>
    %209 = vector.shape_cast %208 : vector<16xf32> to vector<16x1xf32>
    %210 = vector.broadcast %209 : vector<16x1xf32> to vector<16x16xf32>
    %211 = arith.divf %207, %210 : vector<16x16xf32>
    %212 = vector.extract_strided_slice %145 {offsets = [0, 24], sizes = [16, 8], strides = [1, 1]} : vector<16x32xf32> to vector<16x8xf32>
    %cst_70 = arith.constant dense<0.000000e+00> : vector<16x8xf32>
    %213 = tpu.matmul %211, %212, %cst_70 {dimension_numbers = #tpu.dot_dimension_numbers<[1], [0], [0], [1], [0, 0, 1, 1], [], []>} : vector<16x16xf32>, vector<16x8xf32>, vector<16x8xf32> -> vector<16x8xf32>
    %214 = tpu.concatenate %162, %179, %196, %213 in 1 : vector<16x8xf32>, vector<16x8xf32>, vector<16x8xf32>, vector<16x8xf32> -> vector<16x32xf32>
    %c160 = arith.constant 160 : index
    %c0_71 = arith.constant 0 : index
    %215 = vector.load %arg3[%c160, %c0_71] : memref<552x256xf32, #tpu.memory_space<vmem>>, vector<32x32xf32>
    %cst_72 = arith.constant dense<0.000000e+00> : vector<16x32xf32>
    %216 = tpu.matmul %214, %215, %cst_72 {dimension_numbers = #tpu.dot_dimension_numbers<[1], [0], [0], [1], [0, 0, 1, 1], [], []>} : vector<16x32xf32>, vector<32x32xf32>, vector<16x32xf32> -> vector<16x32xf32>
    %c23 = arith.constant 23 : index
    %c0_73 = arith.constant 0 : index
    %217 = vector.load %arg4[%c23, %c0_73] : memref<48x256xf32, #tpu.memory_space<vmem>>, vector<1x32xf32>
    %218 = vector.broadcast %217 : vector<1x32xf32> to vector<16x32xf32>
    %219 = arith.addf %216, %218 : vector<16x32xf32>
    %220 = arith.addf %219, %131 : vector<16x32xf32>
    %c24 = arith.constant 24 : index
    %c0_74 = arith.constant 0 : index
    %221 = vector.load %arg4[%c24, %c0_74] : memref<48x256xf32, #tpu.memory_space<vmem>>, vector<1x32xf32>
    %c25 = arith.constant 25 : index
    %c0_75 = arith.constant 0 : index
    %222 = vector.load %arg4[%c25, %c0_75] : memref<48x256xf32, #tpu.memory_space<vmem>>, vector<1x32xf32>
    %cst_76 = arith.constant dense<0.000000e+00> : vector<16xf32>
    %223 = vector.multi_reduction <add>, %220, %cst_76 [1] : vector<16x32xf32> to vector<16xf32>
    %224 = vector.shape_cast %223 : vector<16xf32> to vector<16x1xf32>
    %cst_77 = arith.constant 3.200000e+01 : f32
    %225 = vector.broadcast %cst_77 : f32 to vector<16x1xf32>
    %226 = arith.divf %224, %225 : vector<16x1xf32>
    %227 = vector.broadcast %226 : vector<16x1xf32> to vector<16x32xf32>
    %228 = arith.subf %220, %227 : vector<16x32xf32>
    %229 = arith.mulf %228, %228 : vector<16x32xf32>
    %cst_78 = arith.constant dense<0.000000e+00> : vector<16xf32>
    %230 = vector.multi_reduction <add>, %229, %cst_78 [1] : vector<16x32xf32> to vector<16xf32>
    %231 = vector.shape_cast %230 : vector<16xf32> to vector<16x1xf32>
    %cst_79 = arith.constant 3.200000e+01 : f32
    %232 = vector.broadcast %cst_79 : f32 to vector<16x1xf32>
    %233 = arith.divf %231, %232 : vector<16x1xf32>
    %234 = vector.broadcast %226 : vector<16x1xf32> to vector<16x32xf32>
    %235 = arith.subf %220, %234 : vector<16x32xf32>
    %cst_80 = arith.constant 9.99999996E-13 : f32
    %236 = vector.broadcast %cst_80 : f32 to vector<16x1xf32>
    %237 = arith.addf %233, %236 : vector<16x1xf32>
    %238 = math.rsqrt %237 : vector<16x1xf32>
    %239 = vector.broadcast %238 : vector<16x1xf32> to vector<16x32xf32>
    %240 = arith.mulf %235, %239 : vector<16x32xf32>
    %241 = vector.broadcast %221 : vector<1x32xf32> to vector<16x32xf32>
    %242 = arith.mulf %240, %241 : vector<16x32xf32>
    %243 = vector.broadcast %222 : vector<1x32xf32> to vector<16x32xf32>
    %244 = arith.addf %242, %243 : vector<16x32xf32>
    %c256 = arith.constant 256 : index
    %c0_81 = arith.constant 0 : index
    %245 = vector.load %arg3[%c256, %c0_81] : memref<552x256xf32, #tpu.memory_space<vmem>>, vector<32x64xf32>
    %cst_82 = arith.constant dense<0.000000e+00> : vector<16x64xf32>
    %246 = tpu.matmul %244, %245, %cst_82 {dimension_numbers = #tpu.dot_dimension_numbers<[1], [0], [0], [1], [0, 0, 1, 1], [], []>} : vector<16x32xf32>, vector<32x64xf32>, vector<16x64xf32> -> vector<16x64xf32>
    %c34 = arith.constant 34 : index
    %c0_83 = arith.constant 0 : index
    %247 = vector.load %arg4[%c34, %c0_83] : memref<48x256xf32, #tpu.memory_space<vmem>>, vector<1x64xf32>
    %248 = vector.broadcast %247 : vector<1x64xf32> to vector<16x64xf32>
    %249 = arith.addf %246, %248 : vector<16x64xf32>
    %cst_84 = arith.constant 5.000000e-01 : f32
    %250 = vector.broadcast %cst_84 : f32 to vector<16x64xf32>
    %251 = arith.mulf %250, %249 : vector<16x64xf32>
    %cst_85 = arith.constant 0.707106769 : f32
    %252 = vector.broadcast %cst_85 : f32 to vector<16x64xf32>
    %253 = arith.mulf %249, %252 : vector<16x64xf32>
    %254 = math.absf %253 : vector<16x64xf32>
    %cst_86 = arith.constant 0.327591091 : f32
    %255 = vector.broadcast %cst_86 : f32 to vector<16x64xf32>
    %256 = arith.mulf %255, %254 : vector<16x64xf32>
    %cst_87 = arith.constant 1.000000e+00 : f32
    %257 = vector.broadcast %cst_87 : f32 to vector<16x64xf32>
    %258 = arith.addf %257, %256 : vector<16x64xf32>
    %cst_88 = arith.constant 1.000000e+00 : f32
    %259 = vector.broadcast %cst_88 : f32 to vector<16x64xf32>
    %260 = arith.divf %259, %258 : vector<16x64xf32>
    %cst_89 = arith.constant 1.06140542 : f32
    %261 = vector.broadcast %cst_89 : f32 to vector<16x64xf32>
    %262 = arith.mulf %260, %261 : vector<16x64xf32>
    %cst_90 = arith.constant -1.45315206 : f32
    %263 = vector.broadcast %cst_90 : f32 to vector<16x64xf32>
    %264 = arith.addf %263, %262 : vector<16x64xf32>
    %265 = arith.mulf %260, %264 : vector<16x64xf32>
    %cst_91 = arith.constant 1.42141378 : f32
    %266 = vector.broadcast %cst_91 : f32 to vector<16x64xf32>
    %267 = arith.addf %266, %265 : vector<16x64xf32>
    %268 = arith.mulf %260, %267 : vector<16x64xf32>
    %cst_92 = arith.constant -0.284496725 : f32
    %269 = vector.broadcast %cst_92 : f32 to vector<16x64xf32>
    %270 = arith.addf %269, %268 : vector<16x64xf32>
    %271 = arith.mulf %260, %270 : vector<16x64xf32>
    %cst_93 = arith.constant 0.254829586 : f32
    %272 = vector.broadcast %cst_93 : f32 to vector<16x64xf32>
    %273 = arith.addf %272, %271 : vector<16x64xf32>
    %274 = arith.mulf %260, %273 : vector<16x64xf32>
    %cst_94 = arith.constant 0.000000e+00 : f32
    %275 = vector.broadcast %cst_94 : f32 to vector<16x64xf32>
    %276 = arith.subf %275, %254 : vector<16x64xf32>
    %277 = arith.mulf %276, %254 : vector<16x64xf32>
    %278 = math.exp %277 : vector<16x64xf32>
    %279 = arith.mulf %274, %278 : vector<16x64xf32>
    %cst_95 = arith.constant 1.000000e+00 : f32
    %280 = vector.broadcast %cst_95 : f32 to vector<16x64xf32>
    %281 = arith.subf %280, %279 : vector<16x64xf32>
    %cst_96 = arith.constant 0.000000e+00 : f32
    %282 = vector.broadcast %cst_96 : f32 to vector<16x64xf32>
    %283 = arith.cmpf olt, %253, %282 : vector<16x64xf32>
    %cst_97 = arith.constant 0.000000e+00 : f32
    %284 = vector.broadcast %cst_97 : f32 to vector<16x64xf32>
    %285 = arith.subf %284, %281 : vector<16x64xf32>
    %286 = arith.select %283, %285, %281 : vector<16x64xi1>, vector<16x64xf32>
    %cst_98 = arith.constant 1.000000e+00 : f32
    %287 = vector.broadcast %cst_98 : f32 to vector<16x64xf32>
    %288 = arith.addf %287, %286 : vector<16x64xf32>
    %289 = arith.mulf %251, %288 : vector<16x64xf32>
    %c320 = arith.constant 320 : index
    %c0_99 = arith.constant 0 : index
    %290 = vector.load %arg3[%c320, %c0_99] : memref<552x256xf32, #tpu.memory_space<vmem>>, vector<64x32xf32>
    %cst_100 = arith.constant dense<0.000000e+00> : vector<16x32xf32>
    %291 = tpu.matmul %289, %290, %cst_100 {dimension_numbers = #tpu.dot_dimension_numbers<[1], [0], [0], [1], [0, 0, 1, 1], [], []>} : vector<16x64xf32>, vector<64x32xf32>, vector<16x32xf32> -> vector<16x32xf32>
    %c35 = arith.constant 35 : index
    %c0_101 = arith.constant 0 : index
    %292 = vector.load %arg4[%c35, %c0_101] : memref<48x256xf32, #tpu.memory_space<vmem>>, vector<1x32xf32>
    %293 = vector.broadcast %292 : vector<1x32xf32> to vector<16x32xf32>
    %294 = arith.addf %291, %293 : vector<16x32xf32>
    %295 = arith.addf %294, %244 : vector<16x32xf32>
    %c36 = arith.constant 36 : index
    %c0_102 = arith.constant 0 : index
    %296 = vector.load %arg4[%c36, %c0_102] : memref<48x256xf32, #tpu.memory_space<vmem>>, vector<1x32xf32>
    %c37 = arith.constant 37 : index
    %c0_103 = arith.constant 0 : index
    %297 = vector.load %arg4[%c37, %c0_103] : memref<48x256xf32, #tpu.memory_space<vmem>>, vector<1x32xf32>
    %cst_104 = arith.constant dense<0.000000e+00> : vector<16xf32>
    %298 = vector.multi_reduction <add>, %295, %cst_104 [1] : vector<16x32xf32> to vector<16xf32>
    %299 = vector.shape_cast %298 : vector<16xf32> to vector<16x1xf32>
    %cst_105 = arith.constant 3.200000e+01 : f32
    %300 = vector.broadcast %cst_105 : f32 to vector<16x1xf32>
    %301 = arith.divf %299, %300 : vector<16x1xf32>
    %302 = vector.broadcast %301 : vector<16x1xf32> to vector<16x32xf32>
    %303 = arith.subf %295, %302 : vector<16x32xf32>
    %304 = arith.mulf %303, %303 : vector<16x32xf32>
    %cst_106 = arith.constant dense<0.000000e+00> : vector<16xf32>
    %305 = vector.multi_reduction <add>, %304, %cst_106 [1] : vector<16x32xf32> to vector<16xf32>
    %306 = vector.shape_cast %305 : vector<16xf32> to vector<16x1xf32>
    %cst_107 = arith.constant 3.200000e+01 : f32
    %307 = vector.broadcast %cst_107 : f32 to vector<16x1xf32>
    %308 = arith.divf %306, %307 : vector<16x1xf32>
    %309 = vector.broadcast %301 : vector<16x1xf32> to vector<16x32xf32>
    %310 = arith.subf %295, %309 : vector<16x32xf32>
    %cst_108 = arith.constant 9.99999996E-13 : f32
    %311 = vector.broadcast %cst_108 : f32 to vector<16x1xf32>
    %312 = arith.addf %308, %311 : vector<16x1xf32>
    %313 = math.rsqrt %312 : vector<16x1xf32>
    %314 = vector.broadcast %313 : vector<16x1xf32> to vector<16x32xf32>
    %315 = arith.mulf %310, %314 : vector<16x32xf32>
    %316 = vector.broadcast %296 : vector<1x32xf32> to vector<16x32xf32>
    %317 = arith.mulf %315, %316 : vector<16x32xf32>
    %318 = vector.broadcast %297 : vector<1x32xf32> to vector<16x32xf32>
    %319 = arith.addf %317, %318 : vector<16x32xf32>
    %c64 = arith.constant 64 : index
    %c0_109 = arith.constant 0 : index
    %320 = vector.load %arg3[%c64, %c0_109] : memref<552x256xf32, #tpu.memory_space<vmem>>, vector<32x96xf32>
    %c26 = arith.constant 26 : index
    %c0_110 = arith.constant 0 : index
    %321 = vector.load %arg4[%c26, %c0_110] : memref<48x256xf32, #tpu.memory_space<vmem>>, vector<1x96xf32>
    %cst_111 = arith.constant dense<0.000000e+00> : vector<16x96xf32>
    %322 = tpu.matmul %319, %320, %cst_111 {dimension_numbers = #tpu.dot_dimension_numbers<[1], [0], [0], [1], [0, 0, 1, 1], [], []>} : vector<16x32xf32>, vector<32x96xf32>, vector<16x96xf32> -> vector<16x96xf32>
    %323 = vector.broadcast %321 : vector<1x96xf32> to vector<16x96xf32>
    %324 = arith.addf %322, %323 : vector<16x96xf32>
    %325 = vector.extract_strided_slice %324 {offsets = [0, 0], sizes = [16, 32], strides = [1, 1]} : vector<16x96xf32> to vector<16x32xf32>
    %326 = vector.extract_strided_slice %324 {offsets = [0, 32], sizes = [16, 32], strides = [1, 1]} : vector<16x96xf32> to vector<16x32xf32>
    %327 = vector.extract_strided_slice %324 {offsets = [0, 64], sizes = [16, 32], strides = [1, 1]} : vector<16x96xf32> to vector<16x32xf32>
    %328 = vector.extract_strided_slice %325 {offsets = [0, 0], sizes = [16, 8], strides = [1, 1]} : vector<16x32xf32> to vector<16x8xf32>
    %329 = vector.extract_strided_slice %326 {offsets = [0, 0], sizes = [16, 8], strides = [1, 1]} : vector<16x32xf32> to vector<16x8xf32>
    %cst_112 = arith.constant dense<0.000000e+00> : vector<16x16xf32>
    %330 = tpu.matmul %328, %329, %cst_112 {dimension_numbers = #tpu.dot_dimension_numbers<[1], [1], [0], [0], [0, 0, 1, 0], [], []>} : vector<16x8xf32>, vector<16x8xf32>, vector<16x16xf32> -> vector<16x16xf32>
    %cst_113 = arith.constant 0.353553385 : f32
    %331 = vector.broadcast %cst_113 : f32 to vector<16x16xf32>
    %332 = arith.mulf %330, %331 : vector<16x16xf32>
    %cst_114 = arith.constant dense<0xFF800000> : vector<16xf32>
    %333 = vector.multi_reduction <maximumf>, %332, %cst_114 [1] : vector<16x16xf32> to vector<16xf32>
    %334 = vector.shape_cast %333 : vector<16xf32> to vector<16x1xf32>
    %335 = vector.broadcast %334 : vector<16x1xf32> to vector<16x16xf32>
    %336 = arith.subf %332, %335 : vector<16x16xf32>
    %337 = math.exp %336 : vector<16x16xf32>
    %cst_115 = arith.constant dense<0.000000e+00> : vector<16xf32>
    %338 = vector.multi_reduction <add>, %337, %cst_115 [1] : vector<16x16xf32> to vector<16xf32>
    %339 = vector.shape_cast %338 : vector<16xf32> to vector<16x1xf32>
    %340 = vector.broadcast %339 : vector<16x1xf32> to vector<16x16xf32>
    %341 = arith.divf %337, %340 : vector<16x16xf32>
    %342 = vector.extract_strided_slice %327 {offsets = [0, 0], sizes = [16, 8], strides = [1, 1]} : vector<16x32xf32> to vector<16x8xf32>
    %cst_116 = arith.constant dense<0.000000e+00> : vector<16x8xf32>
    %343 = tpu.matmul %341, %342, %cst_116 {dimension_numbers = #tpu.dot_dimension_numbers<[1], [0], [0], [1], [0, 0, 1, 1], [], []>} : vector<16x16xf32>, vector<16x8xf32>, vector<16x8xf32> -> vector<16x8xf32>
    %344 = vector.extract_strided_slice %325 {offsets = [0, 8], sizes = [16, 8], strides = [1, 1]} : vector<16x32xf32> to vector<16x8xf32>
    %345 = vector.extract_strided_slice %326 {offsets = [0, 8], sizes = [16, 8], strides = [1, 1]} : vector<16x32xf32> to vector<16x8xf32>
    %cst_117 = arith.constant dense<0.000000e+00> : vector<16x16xf32>
    %346 = tpu.matmul %344, %345, %cst_117 {dimension_numbers = #tpu.dot_dimension_numbers<[1], [1], [0], [0], [0, 0, 1, 0], [], []>} : vector<16x8xf32>, vector<16x8xf32>, vector<16x16xf32> -> vector<16x16xf32>
    %cst_118 = arith.constant 0.353553385 : f32
    %347 = vector.broadcast %cst_118 : f32 to vector<16x16xf32>
    %348 = arith.mulf %346, %347 : vector<16x16xf32>
    %cst_119 = arith.constant dense<0xFF800000> : vector<16xf32>
    %349 = vector.multi_reduction <maximumf>, %348, %cst_119 [1] : vector<16x16xf32> to vector<16xf32>
    %350 = vector.shape_cast %349 : vector<16xf32> to vector<16x1xf32>
    %351 = vector.broadcast %350 : vector<16x1xf32> to vector<16x16xf32>
    %352 = arith.subf %348, %351 : vector<16x16xf32>
    %353 = math.exp %352 : vector<16x16xf32>
    %cst_120 = arith.constant dense<0.000000e+00> : vector<16xf32>
    %354 = vector.multi_reduction <add>, %353, %cst_120 [1] : vector<16x16xf32> to vector<16xf32>
    %355 = vector.shape_cast %354 : vector<16xf32> to vector<16x1xf32>
    %356 = vector.broadcast %355 : vector<16x1xf32> to vector<16x16xf32>
    %357 = arith.divf %353, %356 : vector<16x16xf32>
    %358 = vector.extract_strided_slice %327 {offsets = [0, 8], sizes = [16, 8], strides = [1, 1]} : vector<16x32xf32> to vector<16x8xf32>
    %cst_121 = arith.constant dense<0.000000e+00> : vector<16x8xf32>
    %359 = tpu.matmul %357, %358, %cst_121 {dimension_numbers = #tpu.dot_dimension_numbers<[1], [0], [0], [1], [0, 0, 1, 1], [], []>} : vector<16x16xf32>, vector<16x8xf32>, vector<16x8xf32> -> vector<16x8xf32>
    %360 = vector.extract_strided_slice %325 {offsets = [0, 16], sizes = [16, 8], strides = [1, 1]} : vector<16x32xf32> to vector<16x8xf32>
    %361 = vector.extract_strided_slice %326 {offsets = [0, 16], sizes = [16, 8], strides = [1, 1]} : vector<16x32xf32> to vector<16x8xf32>
    %cst_122 = arith.constant dense<0.000000e+00> : vector<16x16xf32>
    %362 = tpu.matmul %360, %361, %cst_122 {dimension_numbers = #tpu.dot_dimension_numbers<[1], [1], [0], [0], [0, 0, 1, 0], [], []>} : vector<16x8xf32>, vector<16x8xf32>, vector<16x16xf32> -> vector<16x16xf32>
    %cst_123 = arith.constant 0.353553385 : f32
    %363 = vector.broadcast %cst_123 : f32 to vector<16x16xf32>
    %364 = arith.mulf %362, %363 : vector<16x16xf32>
    %cst_124 = arith.constant dense<0xFF800000> : vector<16xf32>
    %365 = vector.multi_reduction <maximumf>, %364, %cst_124 [1] : vector<16x16xf32> to vector<16xf32>
    %366 = vector.shape_cast %365 : vector<16xf32> to vector<16x1xf32>
    %367 = vector.broadcast %366 : vector<16x1xf32> to vector<16x16xf32>
    %368 = arith.subf %364, %367 : vector<16x16xf32>
    %369 = math.exp %368 : vector<16x16xf32>
    %cst_125 = arith.constant dense<0.000000e+00> : vector<16xf32>
    %370 = vector.multi_reduction <add>, %369, %cst_125 [1] : vector<16x16xf32> to vector<16xf32>
    %371 = vector.shape_cast %370 : vector<16xf32> to vector<16x1xf32>
    %372 = vector.broadcast %371 : vector<16x1xf32> to vector<16x16xf32>
    %373 = arith.divf %369, %372 : vector<16x16xf32>
    %374 = vector.extract_strided_slice %327 {offsets = [0, 16], sizes = [16, 8], strides = [1, 1]} : vector<16x32xf32> to vector<16x8xf32>
    %cst_126 = arith.constant dense<0.000000e+00> : vector<16x8xf32>
    %375 = tpu.matmul %373, %374, %cst_126 {dimension_numbers = #tpu.dot_dimension_numbers<[1], [0], [0], [1], [0, 0, 1, 1], [], []>} : vector<16x16xf32>, vector<16x8xf32>, vector<16x8xf32> -> vector<16x8xf32>
    %376 = vector.extract_strided_slice %325 {offsets = [0, 24], sizes = [16, 8], strides = [1, 1]} : vector<16x32xf32> to vector<16x8xf32>
    %377 = vector.extract_strided_slice %326 {offsets = [0, 24], sizes = [16, 8], strides = [1, 1]} : vector<16x32xf32> to vector<16x8xf32>
    %cst_127 = arith.constant dense<0.000000e+00> : vector<16x16xf32>
    %378 = tpu.matmul %376, %377, %cst_127 {dimension_numbers = #tpu.dot_dimension_numbers<[1], [1], [0], [0], [0, 0, 1, 0], [], []>} : vector<16x8xf32>, vector<16x8xf32>, vector<16x16xf32> -> vector<16x16xf32>
    %cst_128 = arith.constant 0.353553385 : f32
    %379 = vector.broadcast %cst_128 : f32 to vector<16x16xf32>
    %380 = arith.mulf %378, %379 : vector<16x16xf32>
    %cst_129 = arith.constant dense<0xFF800000> : vector<16xf32>
    %381 = vector.multi_reduction <maximumf>, %380, %cst_129 [1] : vector<16x16xf32> to vector<16xf32>
    %382 = vector.shape_cast %381 : vector<16xf32> to vector<16x1xf32>
    %383 = vector.broadcast %382 : vector<16x1xf32> to vector<16x16xf32>
    %384 = arith.subf %380, %383 : vector<16x16xf32>
    %385 = math.exp %384 : vector<16x16xf32>
    %cst_130 = arith.constant dense<0.000000e+00> : vector<16xf32>
    %386 = vector.multi_reduction <add>, %385, %cst_130 [1] : vector<16x16xf32> to vector<16xf32>
    %387 = vector.shape_cast %386 : vector<16xf32> to vector<16x1xf32>
    %388 = vector.broadcast %387 : vector<16x1xf32> to vector<16x16xf32>
    %389 = arith.divf %385, %388 : vector<16x16xf32>
    %390 = vector.extract_strided_slice %327 {offsets = [0, 24], sizes = [16, 8], strides = [1, 1]} : vector<16x32xf32> to vector<16x8xf32>
    %cst_131 = arith.constant dense<0.000000e+00> : vector<16x8xf32>
    %391 = tpu.matmul %389, %390, %cst_131 {dimension_numbers = #tpu.dot_dimension_numbers<[1], [0], [0], [1], [0, 0, 1, 1], [], []>} : vector<16x16xf32>, vector<16x8xf32>, vector<16x8xf32> -> vector<16x8xf32>
    %392 = tpu.concatenate %343, %359, %375, %391 in 1 : vector<16x8xf32>, vector<16x8xf32>, vector<16x8xf32>, vector<16x8xf32> -> vector<16x32xf32>
    %c192 = arith.constant 192 : index
    %c0_132 = arith.constant 0 : index
    %393 = vector.load %arg3[%c192, %c0_132] : memref<552x256xf32, #tpu.memory_space<vmem>>, vector<32x32xf32>
    %cst_133 = arith.constant dense<0.000000e+00> : vector<16x32xf32>
    %394 = tpu.matmul %392, %393, %cst_133 {dimension_numbers = #tpu.dot_dimension_numbers<[1], [0], [0], [1], [0, 0, 1, 1], [], []>} : vector<16x32xf32>, vector<32x32xf32>, vector<16x32xf32> -> vector<16x32xf32>
    %c27 = arith.constant 27 : index
    %c0_134 = arith.constant 0 : index
    %395 = vector.load %arg4[%c27, %c0_134] : memref<48x256xf32, #tpu.memory_space<vmem>>, vector<1x32xf32>
    %396 = vector.broadcast %395 : vector<1x32xf32> to vector<16x32xf32>
    %397 = arith.addf %394, %396 : vector<16x32xf32>
    %398 = arith.addf %397, %319 : vector<16x32xf32>
    %c28 = arith.constant 28 : index
    %c0_135 = arith.constant 0 : index
    %399 = vector.load %arg4[%c28, %c0_135] : memref<48x256xf32, #tpu.memory_space<vmem>>, vector<1x32xf32>
    %c29 = arith.constant 29 : index
    %c0_136 = arith.constant 0 : index
    %400 = vector.load %arg4[%c29, %c0_136] : memref<48x256xf32, #tpu.memory_space<vmem>>, vector<1x32xf32>
    %cst_137 = arith.constant dense<0.000000e+00> : vector<16xf32>
    %401 = vector.multi_reduction <add>, %398, %cst_137 [1] : vector<16x32xf32> to vector<16xf32>
    %402 = vector.shape_cast %401 : vector<16xf32> to vector<16x1xf32>
    %cst_138 = arith.constant 3.200000e+01 : f32
    %403 = vector.broadcast %cst_138 : f32 to vector<16x1xf32>
    %404 = arith.divf %402, %403 : vector<16x1xf32>
    %405 = vector.broadcast %404 : vector<16x1xf32> to vector<16x32xf32>
    %406 = arith.subf %398, %405 : vector<16x32xf32>
    %407 = arith.mulf %406, %406 : vector<16x32xf32>
    %cst_139 = arith.constant dense<0.000000e+00> : vector<16xf32>
    %408 = vector.multi_reduction <add>, %407, %cst_139 [1] : vector<16x32xf32> to vector<16xf32>
    %409 = vector.shape_cast %408 : vector<16xf32> to vector<16x1xf32>
    %cst_140 = arith.constant 3.200000e+01 : f32
    %410 = vector.broadcast %cst_140 : f32 to vector<16x1xf32>
    %411 = arith.divf %409, %410 : vector<16x1xf32>
    %412 = vector.broadcast %404 : vector<16x1xf32> to vector<16x32xf32>
    %413 = arith.subf %398, %412 : vector<16x32xf32>
    %cst_141 = arith.constant 9.99999996E-13 : f32
    %414 = vector.broadcast %cst_141 : f32 to vector<16x1xf32>
    %415 = arith.addf %411, %414 : vector<16x1xf32>
    %416 = math.rsqrt %415 : vector<16x1xf32>
    %417 = vector.broadcast %416 : vector<16x1xf32> to vector<16x32xf32>
    %418 = arith.mulf %413, %417 : vector<16x32xf32>
    %419 = vector.broadcast %399 : vector<1x32xf32> to vector<16x32xf32>
    %420 = arith.mulf %418, %419 : vector<16x32xf32>
    %421 = vector.broadcast %400 : vector<1x32xf32> to vector<16x32xf32>
    %422 = arith.addf %420, %421 : vector<16x32xf32>
    %c96 = arith.constant 96 : index
    %c0_142 = arith.constant 0 : index
    %423 = vector.load %arg3[%c96, %c0_142] : memref<552x256xf32, #tpu.memory_space<vmem>>, vector<32x96xf32>
    %c30 = arith.constant 30 : index
    %c0_143 = arith.constant 0 : index
    %424 = vector.load %arg4[%c30, %c0_143] : memref<48x256xf32, #tpu.memory_space<vmem>>, vector<1x96xf32>
    %425 = vector.extract_strided_slice %423 {offsets = [0, 0], sizes = [32, 32], strides = [1, 1]} : vector<32x96xf32> to vector<32x32xf32>
    %cst_144 = arith.constant dense<0.000000e+00> : vector<16x32xf32>
    %426 = tpu.matmul %422, %425, %cst_144 {dimension_numbers = #tpu.dot_dimension_numbers<[1], [0], [0], [1], [0, 0, 1, 1], [], []>} : vector<16x32xf32>, vector<32x32xf32>, vector<16x32xf32> -> vector<16x32xf32>
    %427 = vector.extract_strided_slice %424 {offsets = [0, 0], sizes = [1, 32], strides = [1, 1]} : vector<1x96xf32> to vector<1x32xf32>
    %428 = vector.broadcast %427 : vector<1x32xf32> to vector<16x32xf32>
    %429 = arith.addf %426, %428 : vector<16x32xf32>
    %430 = vector.extract_strided_slice %423 {offsets = [0, 32], sizes = [32, 64], strides = [1, 1]} : vector<32x96xf32> to vector<32x64xf32>
    %cst_145 = arith.constant dense<0.000000e+00> : vector<16x64xf32>
    %431 = tpu.matmul %1, %430, %cst_145 {dimension_numbers = #tpu.dot_dimension_numbers<[1], [0], [0], [1], [0, 0, 1, 1], [], []>} : vector<16x32xf32>, vector<32x64xf32>, vector<16x64xf32> -> vector<16x64xf32>
    %432 = vector.extract_strided_slice %424 {offsets = [0, 32], sizes = [1, 64], strides = [1, 1]} : vector<1x96xf32> to vector<1x64xf32>
    %433 = vector.broadcast %432 : vector<1x64xf32> to vector<16x64xf32>
    %434 = arith.addf %431, %433 : vector<16x64xf32>
    %435 = vector.extract_strided_slice %434 {offsets = [0, 0], sizes = [16, 32], strides = [1, 1]} : vector<16x64xf32> to vector<16x32xf32>
    %436 = vector.extract_strided_slice %434 {offsets = [0, 32], sizes = [16, 32], strides = [1, 1]} : vector<16x64xf32> to vector<16x32xf32>
    %437 = vector.extract_strided_slice %429 {offsets = [0, 0], sizes = [16, 8], strides = [1, 1]} : vector<16x32xf32> to vector<16x8xf32>
    %438 = vector.extract_strided_slice %435 {offsets = [0, 0], sizes = [16, 8], strides = [1, 1]} : vector<16x32xf32> to vector<16x8xf32>
    %cst_146 = arith.constant dense<0.000000e+00> : vector<16x16xf32>
    %439 = tpu.matmul %437, %438, %cst_146 {dimension_numbers = #tpu.dot_dimension_numbers<[1], [1], [0], [0], [0, 0, 1, 0], [], []>} : vector<16x8xf32>, vector<16x8xf32>, vector<16x16xf32> -> vector<16x16xf32>
    %cst_147 = arith.constant 0.353553385 : f32
    %440 = vector.broadcast %cst_147 : f32 to vector<16x16xf32>
    %441 = arith.mulf %439, %440 : vector<16x16xf32>
    %442 = arith.addf %441, %3 : vector<16x16xf32>
    %cst_148 = arith.constant dense<0xFF800000> : vector<16xf32>
    %443 = vector.multi_reduction <maximumf>, %442, %cst_148 [1] : vector<16x16xf32> to vector<16xf32>
    %444 = vector.shape_cast %443 : vector<16xf32> to vector<16x1xf32>
    %445 = vector.broadcast %444 : vector<16x1xf32> to vector<16x16xf32>
    %446 = arith.subf %442, %445 : vector<16x16xf32>
    %447 = math.exp %446 : vector<16x16xf32>
    %cst_149 = arith.constant dense<0.000000e+00> : vector<16xf32>
    %448 = vector.multi_reduction <add>, %447, %cst_149 [1] : vector<16x16xf32> to vector<16xf32>
    %449 = vector.shape_cast %448 : vector<16xf32> to vector<16x1xf32>
    %450 = vector.broadcast %449 : vector<16x1xf32> to vector<16x16xf32>
    %451 = arith.divf %447, %450 : vector<16x16xf32>
    %452 = vector.extract_strided_slice %436 {offsets = [0, 0], sizes = [16, 8], strides = [1, 1]} : vector<16x32xf32> to vector<16x8xf32>
    %cst_150 = arith.constant dense<0.000000e+00> : vector<16x8xf32>
    %453 = tpu.matmul %451, %452, %cst_150 {dimension_numbers = #tpu.dot_dimension_numbers<[1], [0], [0], [1], [0, 0, 1, 1], [], []>} : vector<16x16xf32>, vector<16x8xf32>, vector<16x8xf32> -> vector<16x8xf32>
    %454 = vector.extract_strided_slice %429 {offsets = [0, 8], sizes = [16, 8], strides = [1, 1]} : vector<16x32xf32> to vector<16x8xf32>
    %455 = vector.extract_strided_slice %435 {offsets = [0, 8], sizes = [16, 8], strides = [1, 1]} : vector<16x32xf32> to vector<16x8xf32>
    %cst_151 = arith.constant dense<0.000000e+00> : vector<16x16xf32>
    %456 = tpu.matmul %454, %455, %cst_151 {dimension_numbers = #tpu.dot_dimension_numbers<[1], [1], [0], [0], [0, 0, 1, 0], [], []>} : vector<16x8xf32>, vector<16x8xf32>, vector<16x16xf32> -> vector<16x16xf32>
    %cst_152 = arith.constant 0.353553385 : f32
    %457 = vector.broadcast %cst_152 : f32 to vector<16x16xf32>
    %458 = arith.mulf %456, %457 : vector<16x16xf32>
    %459 = arith.addf %458, %3 : vector<16x16xf32>
    %cst_153 = arith.constant dense<0xFF800000> : vector<16xf32>
    %460 = vector.multi_reduction <maximumf>, %459, %cst_153 [1] : vector<16x16xf32> to vector<16xf32>
    %461 = vector.shape_cast %460 : vector<16xf32> to vector<16x1xf32>
    %462 = vector.broadcast %461 : vector<16x1xf32> to vector<16x16xf32>
    %463 = arith.subf %459, %462 : vector<16x16xf32>
    %464 = math.exp %463 : vector<16x16xf32>
    %cst_154 = arith.constant dense<0.000000e+00> : vector<16xf32>
    %465 = vector.multi_reduction <add>, %464, %cst_154 [1] : vector<16x16xf32> to vector<16xf32>
    %466 = vector.shape_cast %465 : vector<16xf32> to vector<16x1xf32>
    %467 = vector.broadcast %466 : vector<16x1xf32> to vector<16x16xf32>
    %468 = arith.divf %464, %467 : vector<16x16xf32>
    %469 = vector.extract_strided_slice %436 {offsets = [0, 8], sizes = [16, 8], strides = [1, 1]} : vector<16x32xf32> to vector<16x8xf32>
    %cst_155 = arith.constant dense<0.000000e+00> : vector<16x8xf32>
    %470 = tpu.matmul %468, %469, %cst_155 {dimension_numbers = #tpu.dot_dimension_numbers<[1], [0], [0], [1], [0, 0, 1, 1], [], []>} : vector<16x16xf32>, vector<16x8xf32>, vector<16x8xf32> -> vector<16x8xf32>
    %471 = vector.extract_strided_slice %429 {offsets = [0, 16], sizes = [16, 8], strides = [1, 1]} : vector<16x32xf32> to vector<16x8xf32>
    %472 = vector.extract_strided_slice %435 {offsets = [0, 16], sizes = [16, 8], strides = [1, 1]} : vector<16x32xf32> to vector<16x8xf32>
    %cst_156 = arith.constant dense<0.000000e+00> : vector<16x16xf32>
    %473 = tpu.matmul %471, %472, %cst_156 {dimension_numbers = #tpu.dot_dimension_numbers<[1], [1], [0], [0], [0, 0, 1, 0], [], []>} : vector<16x8xf32>, vector<16x8xf32>, vector<16x16xf32> -> vector<16x16xf32>
    %cst_157 = arith.constant 0.353553385 : f32
    %474 = vector.broadcast %cst_157 : f32 to vector<16x16xf32>
    %475 = arith.mulf %473, %474 : vector<16x16xf32>
    %476 = arith.addf %475, %3 : vector<16x16xf32>
    %cst_158 = arith.constant dense<0xFF800000> : vector<16xf32>
    %477 = vector.multi_reduction <maximumf>, %476, %cst_158 [1] : vector<16x16xf32> to vector<16xf32>
    %478 = vector.shape_cast %477 : vector<16xf32> to vector<16x1xf32>
    %479 = vector.broadcast %478 : vector<16x1xf32> to vector<16x16xf32>
    %480 = arith.subf %476, %479 : vector<16x16xf32>
    %481 = math.exp %480 : vector<16x16xf32>
    %cst_159 = arith.constant dense<0.000000e+00> : vector<16xf32>
    %482 = vector.multi_reduction <add>, %481, %cst_159 [1] : vector<16x16xf32> to vector<16xf32>
    %483 = vector.shape_cast %482 : vector<16xf32> to vector<16x1xf32>
    %484 = vector.broadcast %483 : vector<16x1xf32> to vector<16x16xf32>
    %485 = arith.divf %481, %484 : vector<16x16xf32>
    %486 = vector.extract_strided_slice %436 {offsets = [0, 16], sizes = [16, 8], strides = [1, 1]} : vector<16x32xf32> to vector<16x8xf32>
    %cst_160 = arith.constant dense<0.000000e+00> : vector<16x8xf32>
    %487 = tpu.matmul %485, %486, %cst_160 {dimension_numbers = #tpu.dot_dimension_numbers<[1], [0], [0], [1], [0, 0, 1, 1], [], []>} : vector<16x16xf32>, vector<16x8xf32>, vector<16x8xf32> -> vector<16x8xf32>
    %488 = vector.extract_strided_slice %429 {offsets = [0, 24], sizes = [16, 8], strides = [1, 1]} : vector<16x32xf32> to vector<16x8xf32>
    %489 = vector.extract_strided_slice %435 {offsets = [0, 24], sizes = [16, 8], strides = [1, 1]} : vector<16x32xf32> to vector<16x8xf32>
    %cst_161 = arith.constant dense<0.000000e+00> : vector<16x16xf32>
    %490 = tpu.matmul %488, %489, %cst_161 {dimension_numbers = #tpu.dot_dimension_numbers<[1], [1], [0], [0], [0, 0, 1, 0], [], []>} : vector<16x8xf32>, vector<16x8xf32>, vector<16x16xf32> -> vector<16x16xf32>
    %cst_162 = arith.constant 0.353553385 : f32
    %491 = vector.broadcast %cst_162 : f32 to vector<16x16xf32>
    %492 = arith.mulf %490, %491 : vector<16x16xf32>
    %493 = arith.addf %492, %3 : vector<16x16xf32>
    %cst_163 = arith.constant dense<0xFF800000> : vector<16xf32>
    %494 = vector.multi_reduction <maximumf>, %493, %cst_163 [1] : vector<16x16xf32> to vector<16xf32>
    %495 = vector.shape_cast %494 : vector<16xf32> to vector<16x1xf32>
    %496 = vector.broadcast %495 : vector<16x1xf32> to vector<16x16xf32>
    %497 = arith.subf %493, %496 : vector<16x16xf32>
    %498 = math.exp %497 : vector<16x16xf32>
    %cst_164 = arith.constant dense<0.000000e+00> : vector<16xf32>
    %499 = vector.multi_reduction <add>, %498, %cst_164 [1] : vector<16x16xf32> to vector<16xf32>
    %500 = vector.shape_cast %499 : vector<16xf32> to vector<16x1xf32>
    %501 = vector.broadcast %500 : vector<16x1xf32> to vector<16x16xf32>
    %502 = arith.divf %498, %501 : vector<16x16xf32>
    %503 = vector.extract_strided_slice %436 {offsets = [0, 24], sizes = [16, 8], strides = [1, 1]} : vector<16x32xf32> to vector<16x8xf32>
    %cst_165 = arith.constant dense<0.000000e+00> : vector<16x8xf32>
    %504 = tpu.matmul %502, %503, %cst_165 {dimension_numbers = #tpu.dot_dimension_numbers<[1], [0], [0], [1], [0, 0, 1, 1], [], []>} : vector<16x16xf32>, vector<16x8xf32>, vector<16x8xf32> -> vector<16x8xf32>
    %505 = tpu.concatenate %453, %470, %487, %504 in 1 : vector<16x8xf32>, vector<16x8xf32>, vector<16x8xf32>, vector<16x8xf32> -> vector<16x32xf32>
    %c224 = arith.constant 224 : index
    %c0_166 = arith.constant 0 : index
    %506 = vector.load %arg3[%c224, %c0_166] : memref<552x256xf32, #tpu.memory_space<vmem>>, vector<32x32xf32>
    %cst_167 = arith.constant dense<0.000000e+00> : vector<16x32xf32>
    %507 = tpu.matmul %505, %506, %cst_167 {dimension_numbers = #tpu.dot_dimension_numbers<[1], [0], [0], [1], [0, 0, 1, 1], [], []>} : vector<16x32xf32>, vector<32x32xf32>, vector<16x32xf32> -> vector<16x32xf32>
    %c31 = arith.constant 31 : index
    %c0_168 = arith.constant 0 : index
    %508 = vector.load %arg4[%c31, %c0_168] : memref<48x256xf32, #tpu.memory_space<vmem>>, vector<1x32xf32>
    %509 = vector.broadcast %508 : vector<1x32xf32> to vector<16x32xf32>
    %510 = arith.addf %507, %509 : vector<16x32xf32>
    %511 = arith.addf %510, %422 : vector<16x32xf32>
    %c32_169 = arith.constant 32 : index
    %c0_170 = arith.constant 0 : index
    %512 = vector.load %arg4[%c32_169, %c0_170] : memref<48x256xf32, #tpu.memory_space<vmem>>, vector<1x32xf32>
    %c33 = arith.constant 33 : index
    %c0_171 = arith.constant 0 : index
    %513 = vector.load %arg4[%c33, %c0_171] : memref<48x256xf32, #tpu.memory_space<vmem>>, vector<1x32xf32>
    %cst_172 = arith.constant dense<0.000000e+00> : vector<16xf32>
    %514 = vector.multi_reduction <add>, %511, %cst_172 [1] : vector<16x32xf32> to vector<16xf32>
    %515 = vector.shape_cast %514 : vector<16xf32> to vector<16x1xf32>
    %cst_173 = arith.constant 3.200000e+01 : f32
    %516 = vector.broadcast %cst_173 : f32 to vector<16x1xf32>
    %517 = arith.divf %515, %516 : vector<16x1xf32>
    %518 = vector.broadcast %517 : vector<16x1xf32> to vector<16x32xf32>
    %519 = arith.subf %511, %518 : vector<16x32xf32>
    %520 = arith.mulf %519, %519 : vector<16x32xf32>
    %cst_174 = arith.constant dense<0.000000e+00> : vector<16xf32>
    %521 = vector.multi_reduction <add>, %520, %cst_174 [1] : vector<16x32xf32> to vector<16xf32>
    %522 = vector.shape_cast %521 : vector<16xf32> to vector<16x1xf32>
    %cst_175 = arith.constant 3.200000e+01 : f32
    %523 = vector.broadcast %cst_175 : f32 to vector<16x1xf32>
    %524 = arith.divf %522, %523 : vector<16x1xf32>
    %525 = vector.broadcast %517 : vector<16x1xf32> to vector<16x32xf32>
    %526 = arith.subf %511, %525 : vector<16x32xf32>
    %cst_176 = arith.constant 9.99999996E-13 : f32
    %527 = vector.broadcast %cst_176 : f32 to vector<16x1xf32>
    %528 = arith.addf %524, %527 : vector<16x1xf32>
    %529 = math.rsqrt %528 : vector<16x1xf32>
    %530 = vector.broadcast %529 : vector<16x1xf32> to vector<16x32xf32>
    %531 = arith.mulf %526, %530 : vector<16x32xf32>
    %532 = vector.broadcast %512 : vector<1x32xf32> to vector<16x32xf32>
    %533 = arith.mulf %531, %532 : vector<16x32xf32>
    %534 = vector.broadcast %513 : vector<1x32xf32> to vector<16x32xf32>
    %535 = arith.addf %533, %534 : vector<16x32xf32>
    %c288 = arith.constant 288 : index
    %c0_177 = arith.constant 0 : index
    %536 = vector.load %arg3[%c288, %c0_177] : memref<552x256xf32, #tpu.memory_space<vmem>>, vector<32x64xf32>
    %cst_178 = arith.constant dense<0.000000e+00> : vector<16x64xf32>
    %537 = tpu.matmul %535, %536, %cst_178 {dimension_numbers = #tpu.dot_dimension_numbers<[1], [0], [0], [1], [0, 0, 1, 1], [], []>} : vector<16x32xf32>, vector<32x64xf32>, vector<16x64xf32> -> vector<16x64xf32>
    %c38 = arith.constant 38 : index
    %c0_179 = arith.constant 0 : index
    %538 = vector.load %arg4[%c38, %c0_179] : memref<48x256xf32, #tpu.memory_space<vmem>>, vector<1x64xf32>
    %539 = vector.broadcast %538 : vector<1x64xf32> to vector<16x64xf32>
    %540 = arith.addf %537, %539 : vector<16x64xf32>
    %cst_180 = arith.constant 5.000000e-01 : f32
    %541 = vector.broadcast %cst_180 : f32 to vector<16x64xf32>
    %542 = arith.mulf %541, %540 : vector<16x64xf32>
    %cst_181 = arith.constant 0.707106769 : f32
    %543 = vector.broadcast %cst_181 : f32 to vector<16x64xf32>
    %544 = arith.mulf %540, %543 : vector<16x64xf32>
    %545 = math.absf %544 : vector<16x64xf32>
    %cst_182 = arith.constant 0.327591091 : f32
    %546 = vector.broadcast %cst_182 : f32 to vector<16x64xf32>
    %547 = arith.mulf %546, %545 : vector<16x64xf32>
    %cst_183 = arith.constant 1.000000e+00 : f32
    %548 = vector.broadcast %cst_183 : f32 to vector<16x64xf32>
    %549 = arith.addf %548, %547 : vector<16x64xf32>
    %cst_184 = arith.constant 1.000000e+00 : f32
    %550 = vector.broadcast %cst_184 : f32 to vector<16x64xf32>
    %551 = arith.divf %550, %549 : vector<16x64xf32>
    %cst_185 = arith.constant 1.06140542 : f32
    %552 = vector.broadcast %cst_185 : f32 to vector<16x64xf32>
    %553 = arith.mulf %551, %552 : vector<16x64xf32>
    %cst_186 = arith.constant -1.45315206 : f32
    %554 = vector.broadcast %cst_186 : f32 to vector<16x64xf32>
    %555 = arith.addf %554, %553 : vector<16x64xf32>
    %556 = arith.mulf %551, %555 : vector<16x64xf32>
    %cst_187 = arith.constant 1.42141378 : f32
    %557 = vector.broadcast %cst_187 : f32 to vector<16x64xf32>
    %558 = arith.addf %557, %556 : vector<16x64xf32>
    %559 = arith.mulf %551, %558 : vector<16x64xf32>
    %cst_188 = arith.constant -0.284496725 : f32
    %560 = vector.broadcast %cst_188 : f32 to vector<16x64xf32>
    %561 = arith.addf %560, %559 : vector<16x64xf32>
    %562 = arith.mulf %551, %561 : vector<16x64xf32>
    %cst_189 = arith.constant 0.254829586 : f32
    %563 = vector.broadcast %cst_189 : f32 to vector<16x64xf32>
    %564 = arith.addf %563, %562 : vector<16x64xf32>
    %565 = arith.mulf %551, %564 : vector<16x64xf32>
    %cst_190 = arith.constant 0.000000e+00 : f32
    %566 = vector.broadcast %cst_190 : f32 to vector<16x64xf32>
    %567 = arith.subf %566, %545 : vector<16x64xf32>
    %568 = arith.mulf %567, %545 : vector<16x64xf32>
    %569 = math.exp %568 : vector<16x64xf32>
    %570 = arith.mulf %565, %569 : vector<16x64xf32>
    %cst_191 = arith.constant 1.000000e+00 : f32
    %571 = vector.broadcast %cst_191 : f32 to vector<16x64xf32>
    %572 = arith.subf %571, %570 : vector<16x64xf32>
    %cst_192 = arith.constant 0.000000e+00 : f32
    %573 = vector.broadcast %cst_192 : f32 to vector<16x64xf32>
    %574 = arith.cmpf olt, %544, %573 : vector<16x64xf32>
    %cst_193 = arith.constant 0.000000e+00 : f32
    %575 = vector.broadcast %cst_193 : f32 to vector<16x64xf32>
    %576 = arith.subf %575, %572 : vector<16x64xf32>
    %577 = arith.select %574, %576, %572 : vector<16x64xi1>, vector<16x64xf32>
    %cst_194 = arith.constant 1.000000e+00 : f32
    %578 = vector.broadcast %cst_194 : f32 to vector<16x64xf32>
    %579 = arith.addf %578, %577 : vector<16x64xf32>
    %580 = arith.mulf %542, %579 : vector<16x64xf32>
    %c384 = arith.constant 384 : index
    %c0_195 = arith.constant 0 : index
    %581 = vector.load %arg3[%c384, %c0_195] : memref<552x256xf32, #tpu.memory_space<vmem>>, vector<64x32xf32>
    %cst_196 = arith.constant dense<0.000000e+00> : vector<16x32xf32>
    %582 = tpu.matmul %580, %581, %cst_196 {dimension_numbers = #tpu.dot_dimension_numbers<[1], [0], [0], [1], [0, 0, 1, 1], [], []>} : vector<16x64xf32>, vector<64x32xf32>, vector<16x32xf32> -> vector<16x32xf32>
    %c39 = arith.constant 39 : index
    %c0_197 = arith.constant 0 : index
    %583 = vector.load %arg4[%c39, %c0_197] : memref<48x256xf32, #tpu.memory_space<vmem>>, vector<1x32xf32>
    %584 = vector.broadcast %583 : vector<1x32xf32> to vector<16x32xf32>
    %585 = arith.addf %582, %584 : vector<16x32xf32>
    %586 = arith.addf %585, %535 : vector<16x32xf32>
    %c40 = arith.constant 40 : index
    %c0_198 = arith.constant 0 : index
    %587 = vector.load %arg4[%c40, %c0_198] : memref<48x256xf32, #tpu.memory_space<vmem>>, vector<1x32xf32>
    %c41 = arith.constant 41 : index
    %c0_199 = arith.constant 0 : index
    %588 = vector.load %arg4[%c41, %c0_199] : memref<48x256xf32, #tpu.memory_space<vmem>>, vector<1x32xf32>
    %cst_200 = arith.constant dense<0.000000e+00> : vector<16xf32>
    %589 = vector.multi_reduction <add>, %586, %cst_200 [1] : vector<16x32xf32> to vector<16xf32>
    %590 = vector.shape_cast %589 : vector<16xf32> to vector<16x1xf32>
    %cst_201 = arith.constant 3.200000e+01 : f32
    %591 = vector.broadcast %cst_201 : f32 to vector<16x1xf32>
    %592 = arith.divf %590, %591 : vector<16x1xf32>
    %593 = vector.broadcast %592 : vector<16x1xf32> to vector<16x32xf32>
    %594 = arith.subf %586, %593 : vector<16x32xf32>
    %595 = arith.mulf %594, %594 : vector<16x32xf32>
    %cst_202 = arith.constant dense<0.000000e+00> : vector<16xf32>
    %596 = vector.multi_reduction <add>, %595, %cst_202 [1] : vector<16x32xf32> to vector<16xf32>
    %597 = vector.shape_cast %596 : vector<16xf32> to vector<16x1xf32>
    %cst_203 = arith.constant 3.200000e+01 : f32
    %598 = vector.broadcast %cst_203 : f32 to vector<16x1xf32>
    %599 = arith.divf %597, %598 : vector<16x1xf32>
    %600 = vector.broadcast %592 : vector<16x1xf32> to vector<16x32xf32>
    %601 = arith.subf %586, %600 : vector<16x32xf32>
    %cst_204 = arith.constant 9.99999996E-13 : f32
    %602 = vector.broadcast %cst_204 : f32 to vector<16x1xf32>
    %603 = arith.addf %599, %602 : vector<16x1xf32>
    %604 = math.rsqrt %603 : vector<16x1xf32>
    %605 = vector.broadcast %604 : vector<16x1xf32> to vector<16x32xf32>
    %606 = arith.mulf %601, %605 : vector<16x32xf32>
    %607 = vector.broadcast %587 : vector<1x32xf32> to vector<16x32xf32>
    %608 = arith.mulf %606, %607 : vector<16x32xf32>
    %609 = vector.broadcast %588 : vector<1x32xf32> to vector<16x32xf32>
    %610 = arith.addf %608, %609 : vector<16x32xf32>
    %c0_205 = arith.constant 0 : index
    %c0_206 = arith.constant 0 : index
    %c0_207 = arith.constant 0 : index
    %611 = vector.load %arg5[%c0_205, %c0_206, %c0_207] : memref<1x16x32xf32, #tpu.memory_space<vmem>>, vector<1x16x32xf32>
    %612 = vector.shape_cast %611 : vector<1x16x32xf32> to vector<16x32xf32>
    %613 = vector.shape_cast %610 : vector<16x32xf32> to vector<1x16x32xf32>
    tpu.vector_store %arg5[%c0_205, %c0_206, %c0_207], %613 {strides = array<i32>} : memref<1x16x32xf32, #tpu.memory_space<vmem>>, vector<1x16x32xf32>,
    %c448 = arith.constant 448 : index
    %c0_208 = arith.constant 0 : index
    %614 = vector.load %arg3[%c448, %c0_208] : memref<552x256xf32, #tpu.memory_space<vmem>>, vector<32x128xf32>
    %cst_209 = arith.constant dense<0.000000e+00> : vector<16x128xf32>
    %615 = tpu.matmul %610, %614, %cst_209 {dimension_numbers = #tpu.dot_dimension_numbers<[1], [0], [0], [1], [0, 0, 1, 1], [], []>} : vector<16x32xf32>, vector<32x128xf32>, vector<16x128xf32> -> vector<16x128xf32>
    %c42 = arith.constant 42 : index
    %c0_210 = arith.constant 0 : index
    %616 = vector.load %arg4[%c42, %c0_210] : memref<48x256xf32, #tpu.memory_space<vmem>>, vector<1x128xf32>
    %617 = vector.broadcast %616 : vector<1x128xf32> to vector<16x128xf32>
    %618 = arith.addf %615, %617 : vector<16x128xf32>
    %c0_211 = arith.constant 0 : index
    %c0_212 = arith.constant 0 : index
    %c0_213 = arith.constant 0 : index
    %619 = vector.load %arg6[%c0_211, %c0_212, %c0_213] : memref<1x16x128xf32, #tpu.memory_space<vmem>>, vector<1x16x128xf32>
    %620 = vector.shape_cast %619 : vector<1x16x128xf32> to vector<16x128xf32>
    %621 = vector.shape_cast %618 : vector<16x128xf32> to vector<1x16x128xf32>
    tpu.vector_store %arg6[%c0_211, %c0_212, %c0_213], %621 {strides = array<i32>} : memref<1x16x128xf32, #tpu.memory_space<vmem>>, vector<1x16x128xf32>,
    %c480 = arith.constant 480 : index
    %c0_214 = arith.constant 0 : index
    %622 = vector.load %arg3[%c480, %c0_214] : memref<552x256xf32, #tpu.memory_space<vmem>>, vector<32x256xf32>
    %cst_215 = arith.constant dense<0.000000e+00> : vector<16x256xf32>
    %623 = tpu.matmul %610, %622, %cst_215 {dimension_numbers = #tpu.dot_dimension_numbers<[1], [0], [0], [1], [0, 0, 1, 1], [], []>} : vector<16x32xf32>, vector<32x256xf32>, vector<16x256xf32> -> vector<16x256xf32>
    %c43 = arith.constant 43 : index
    %c0_216 = arith.constant 0 : index
    %624 = vector.load %arg4[%c43, %c0_216] : memref<48x256xf32, #tpu.memory_space<vmem>>, vector<1x256xf32>
    %625 = vector.broadcast %624 : vector<1x256xf32> to vector<16x256xf32>
    %626 = arith.addf %623, %625 : vector<16x256xf32>
    %c512 = arith.constant 512 : index
    %c0_217 = arith.constant 0 : index
    %627 = vector.load %arg3[%c512, %c0_217] : memref<552x256xf32, #tpu.memory_space<vmem>>, vector<32x256xf32>
    %cst_218 = arith.constant dense<0.000000e+00> : vector<16x256xf32>
    %628 = tpu.matmul %1, %627, %cst_218 {dimension_numbers = #tpu.dot_dimension_numbers<[1], [0], [0], [1], [0, 0, 1, 1], [], []>} : vector<16x32xf32>, vector<32x256xf32>, vector<16x256xf32> -> vector<16x256xf32>
    %c44 = arith.constant 44 : index
    %c0_219 = arith.constant 0 : index
    %629 = vector.load %arg4[%c44, %c0_219] : memref<48x256xf32, #tpu.memory_space<vmem>>, vector<1x256xf32>
    %630 = vector.broadcast %629 : vector<1x256xf32> to vector<16x256xf32>
    %631 = arith.addf %628, %630 : vector<16x256xf32>
    %632 = vector.shape_cast %626 : vector<16x256xf32> to vector<16x1x256xf32>
    %633 = vector.shape_cast %631 : vector<16x256xf32> to vector<1x16x256xf32>
    %634 = vector.broadcast %632 : vector<16x1x256xf32> to vector<16x16x256xf32>
    %635 = vector.broadcast %633 : vector<1x16x256xf32> to vector<16x16x256xf32>
    %636 = arith.addf %634, %635 : vector<16x16x256xf32>
    %637 = math.tanh %636 : vector<16x16x256xf32>
    %638 = vector.shape_cast %637 : vector<16x16x256xf32> to vector<256x256xf32>
    %c544 = arith.constant 544 : index
    %c0_220 = arith.constant 0 : index
    %639 = vector.load %arg3[%c544, %c0_220] : memref<552x256xf32, #tpu.memory_space<vmem>>, vector<8x256xf32>
    %cst_221 = arith.constant dense<0.000000e+00> : vector<8x256xf32>
    %640 = tpu.matmul %639, %638, %cst_221 {dimension_numbers = #tpu.dot_dimension_numbers<[1], [1], [0], [0], [0, 0, 1, 0], [], []>} : vector<8x256xf32>, vector<256x256xf32>, vector<8x256xf32> -> vector<8x256xf32>
    %c0_222 = arith.constant 0 : index
    %c0_223 = arith.constant 0 : index
    %c0_224 = arith.constant 0 : index
    %641 = vector.load %arg7[%c0_222, %c0_223, %c0_224] : memref<1x8x256xf32, #tpu.memory_space<vmem>>, vector<1x8x256xf32>
    %642 = vector.shape_cast %641 : vector<1x8x256xf32> to vector<8x256xf32>
    %643 = vector.shape_cast %640 : vector<8x256xf32> to vector<1x8x256xf32>
    tpu.vector_store %arg7[%c0_222, %c0_223, %c0_224], %643 {strides = array<i32>} : memref<1x8x256xf32, #tpu.memory_space<vmem>>, vector<1x8x256xf32>,
    return
  }
  func.func @transform_0(%arg0: i32) -> (i32, i32, i32) {
    %c0_i32 = arith.constant 0 : i32
    %c0_i32_0 = arith.constant 0 : i32
    %c0_i32_1 = arith.constant 0 : i32
    return %arg0, %c0_i32, %c0_i32_0 : i32, i32, i32
  }
  func.func @transform_1(%arg0: i32) -> (i32, i32, i32) {
    %c0_i32 = arith.constant 0 : i32
    %c0_i32_0 = arith.constant 0 : i32
    %c0_i32_1 = arith.constant 0 : i32
    return %arg0, %c0_i32, %c0_i32_0 : i32, i32, i32
  }
  func.func @transform_2(%arg0: i32) -> (i32, i32) {
    %c0_i32 = arith.constant 0 : i32
    %c0_i32_0 = arith.constant 0 : i32
    %c0_i32_1 = arith.constant 0 : i32
    return %c0_i32, %c0_i32_0 : i32, i32
  }
  func.func @transform_3(%arg0: i32) -> (i32, i32) {
    %c0_i32 = arith.constant 0 : i32
    %c0_i32_0 = arith.constant 0 : i32
    %c0_i32_1 = arith.constant 0 : i32
    return %c0_i32, %c0_i32_0 : i32, i32
  }
  func.func @transform_4(%arg0: i32) -> (i32, i32, i32) {
    %c0_i32 = arith.constant 0 : i32
    %c0_i32_0 = arith.constant 0 : i32
    %c0_i32_1 = arith.constant 0 : i32
    return %arg0, %c0_i32, %c0_i32_0 : i32, i32, i32
  }
  func.func @transform_5(%arg0: i32) -> (i32, i32, i32) {
    %c0_i32 = arith.constant 0 : i32
    %c0_i32_0 = arith.constant 0 : i32
    %c0_i32_1 = arith.constant 0 : i32
    return %arg0, %c0_i32, %c0_i32_0 : i32, i32, i32
  }
  func.func @transform_6(%arg0: i32) -> (i32, i32, i32) {
    %c0_i32 = arith.constant 0 : i32
    %c0_i32_0 = arith.constant 0 : i32
    %c0_i32_1 = arith.constant 0 : i32
    return %arg0, %c0_i32, %c0_i32_0 : i32, i32, i32
  }
}

</mosaic_0001>

<llo_original>
// kernel: set_decoder_forward.1
$region0: #{set_decoder_forward.1}
  #allocation0 [shape = 'u32[]', space=smem, size = 0x4, offset = 0x4, fixed_abs, tag = 'smem constant byte address 0x4 - core index']
  #allocation1 [shape = 'u32[144,128]{1,0:T(1,128)}', space=vmem, size = 0x12000, scoped, tag = 'internal scratch']
  %s0 = inlined_call_operand.vmem [shape: f32[2,16,16], index: 0, kind: input, shape index: {}]
  %s1 = inlined_call_operand.vmem [shape: f32[2,16,32], index: 1, kind: input, shape index: {}]
  %s2 = inlined_call_operand.hbm [shape: f32[552,256], index: 2, kind: input, shape index: {}]
  %s3 = inlined_call_operand.hbm [shape: f32[48,256], index: 3, kind: input, shape index: {}]
  %s4 = inlined_call_operand.hbm [shape: f32[2,16,32], index: 4, kind: output, shape index: {0}]
  %s5 = inlined_call_operand.vmem [shape: f32[2,16,128], index: 5, kind: output, shape index: {1}]
  %s6 = inlined_call_operand.vmem [shape: f32[2,8,256], index: 6, kind: output, shape index: {2}]
  %7 = xla_tuple %s4, %s5, %s6
  %s8 = sld [smem:[#allocation0]]
  $region73: #{set_decoder_forward.1} parent=0
    _
  %s10 = ssub.s32 1, %s8
  %s11 = scalar_select 0, %s10, %s8
  $region1: #{set_decoder_forward.1} parent=0
    #allocation2 [shape = 'u8[565248]{0}', space=vmem, size = 0x8a000, scoped, tag = 'input window, operand 2, single buffered']
    #allocation3 [shape = 's32[2]{0}', space=sflag, size = 0x8, scoped, tag = 'scoped memory for set_decoder_forward.1']
    #allocation4 [shape = 's32[2]{0}', space=sflag, size = 0x8, scoped, tag = 'scoped memory for set_decoder_forward.1']
    #allocation5 [shape = 'u8[49152]{0}', space=vmem, size = 0xc000, scoped, tag = 'input window, operand 3, single buffered']
    #allocation6 [shape = 's32[1]{0}', space=sflag, size = 0x4, scoped, tag = 'scoped memory for set_decoder_forward.1']
    #allocation7 [shape = 'u8[16384]{0}', space=vmem, size = 0x4000, scoped, tag = 'output window, operand 0']
    %12 = vsyncpa [#allocation3], 0
    %13 = vsyncpa [#allocation6], 0
    %14 = vsyncpa [#allocation4], 0
    %s15 = scalar_lea.sflag [#allocation4], 1
    %16 = vsyncpa %s15, 0
    loop: start=0, step=1, limit=4
    $region2: #{set_decoder_forward.1} parent=1 // loop_pre_header
      _
    $region3: #{set_decoder_forward.1} parent=1 // loop_header
      %s18 = sphi 0, %s22
      %p19 = scmp.ge.s32.totalorder %s18, 4
      %s28 = sphi 0, %s30
      %s31 = sphi 0, %s28
      %s32 = sphi 0, %s31
      %s48 = sphi 0, %s32
      %s54 = sphi 0, %s56
      %s57 = sphi 0, %s54
      %s58 = sphi 0, %s57
      %s74 = sphi 0, %s58
      %s78 = sphi 0, %s78
      %s80 = sphi 0, %s78
      %s81 = sphi 0, %s80
      %s95 = sphi 0, %s81
      %s99 = sphi 0, %s99
      %s101 = sphi 0, %s99
      %s102 = sphi 0, %s101
      %s116 = sphi 0, %s102
      %s122 = sphi 0, %s124
      %s125 = sphi 0, %s122
      %s126 = sphi 0, %s125
      %s142 = sphi 0, %s126
      %s148 = sphi 0, %s150
      %s151 = sphi 0, %s148
      %s152 = sphi 0, %s151
      %s168 = sphi 0, %s152
      %s174 = sphi 0, %s176
      %s177 = sphi 0, %s174
      %s178 = sphi 0, %s177
      %s194 = sphi 0, %s178
    $region4: #{set_decoder_forward.1} parent=1 // loop_header_branch
      %21 = sbr.rel (%p19) target = $region8
    $region5: #{set_decoder_forward.1} parent=1 // loop_body
      %s23 = ssub.s32 %s18, 1
      %s24 = ssub.s32 %s18, 2
      %s25 = sadd.s32 %s18, 1
      %s26 = ssub.s32 %s18, %s25
      %p27 = scmp.eq.s32.totalorder %s26, 0
      %s29 = sadd.s32 %s28, 1
      %s30 = scalar_select %p27, %s28, %s29
      %p33 = pneg %p27
      %p34 = scmp.eq.s32.totalorder %s18, 1
      %p35 = por %p33, %p34
      %p36 = scmp.ne.s32.totalorder %s28, %s31
      %p37 = scmp.eq.s32.totalorder %s18, 0
      %p38 = por %p36, %p37
      %p39 = scmp.ne.s32.totalorder %s28, %s31
      %p40 = scmp.eq.s32.totalorder %s23, 1
      %p41 = por %p39, %p40
      %p42 = scmp.ne.s32.totalorder %s31, %s32
      %p43 = scmp.eq.s32.totalorder %s23, 0
      %p44 = por %p42, %p43
      %p45 = scmp.ne.s32.totalorder %s31, %s32
      %p46 = scmp.eq.s32.totalorder %s24, 1
      %p47 = por %p45, %p46
      %p49 = scmp.ne.s32.totalorder %s32, %s48
      %p50 = scmp.eq.s32.totalorder %s24, 0
      %p51 = por %p49, %p50
      %s52 = ssub.s32 %s18, %s25
      %p53 = scmp.eq.s32.totalorder %s52, 0
      %s55 = sadd.s32 %s54, 1
      %s56 = scalar_select %p53, %s54, %s55
      %p59 = pneg %p53
      %p60 = scmp.eq.s32.totalorder %s18, 1
      %p61 = por %p59, %p60
      %p62 = scmp.ne.s32.totalorder %s54, %s57
      %p63 = scmp.eq.s32.totalorder %s18, 0
      %p64 = por %p62, %p63
      %p65 = scmp.ne.s32.totalorder %s54, %s57
      %p66 = scmp.eq.s32.totalorder %s23, 1
      %p67 = por %p65, %p66
      %p68 = scmp.ne.s32.totalorder %s57, %s58
      %p69 = scmp.eq.s32.totalorder %s23, 0
      %p70 = por %p68, %p69
      %p71 = scmp.ne.s32.totalorder %s57, %s58
      %p72 = scmp.eq.s32.totalorder %s24, 1
      %p73 = por %p71, %p72
      %p75 = scmp.ne.s32.totalorder %s58, %s74
      %p76 = scmp.eq.s32.totalorder %s24, 0
      %p77 = por %p75, %p76
      %s79 = sadd.s32 %s78, 1
      %p82 = scmp.eq.s32.totalorder %s18, 1
      %p83 = scmp.ne.s32.totalorder %s78, %s80
      %p84 = scmp.eq.s32.totalorder %s18, 0
      %p85 = por %p83, %p84
      %p86 = scmp.ne.s32.totalorder %s78, %s80
      %p87 = scmp.eq.s32.totalorder %s23, 1
      %p88 = por %p86, %p87
      %p89 = scmp.ne.s32.totalorder %s80, %s81
      %p90 = scmp.eq.s32.totalorder %s23, 0
      %p91 = por %p89, %p90
      %p92 = scmp.ne.s32.totalorder %s80, %s81
      %p93 = scmp.eq.s32.totalorder %s24, 1
      %p94 = por %p92, %p93
      %p96 = scmp.ne.s32.totalorder %s81, %s95
      %p97 = scmp.eq.s32.totalorder %s24, 0
      %p98 = por %p96, %p97
      %s100 = sadd.s32 %s99, 1
      %p103 = scmp.eq.s32.totalorder %s18, 1
      %p104 = scmp.ne.s32.totalorder %s99, %s101
      %p105 = scmp.eq.s32.totalorder %s18, 0
      %p106 = por %p104, %p105
      %p107 = scmp.ne.s32.totalorder %s99, %s101
      %p108 = scmp.eq.s32.totalorder %s23, 1
      %p109 = por %p107, %p108
      %p110 = scmp.ne.s32.totalorder %s101, %s102
      %p111 = scmp.eq.s32.totalorder %s23, 0
      %p112 = por %p110, %p111
      %p113 = scmp.ne.s32.totalorder %s101, %s102
      %p114 = scmp.eq.s32.totalorder %s24, 1
      %p115 = por %p113, %p114
      %p117 = scmp.ne.s32.totalorder %s102, %s116
      %p118 = scmp.eq.s32.totalorder %s24, 0
      %p119 = por %p117, %p118
      %s120 = ssub.s32 %s18, %s25
      %p121 = scmp.eq.s32.totalorder %s120, 0
      %s123 = sadd.s32 %s122, 1
      %s124 = scalar_select %p121, %s122, %s123
      %p127 = pneg %p121
      %p128 = scmp.eq.s32.totalorder %s18, 1
      %p129 = por %p127, %p128
      %p130 = scmp.ne.s32.totalorder %s122, %s125
      %p131 = scmp.eq.s32.totalorder %s18, 0
      %p132 = por %p130, %p131
      %p133 = scmp.ne.s32.totalorder %s122, %s125
      %p134 = scmp.eq.s32.totalorder %s23, 1
      %p135 = por %p133, %p134
      %p136 = scmp.ne.s32.totalorder %s125, %s126
      %p137 = scmp.eq.s32.totalorder %s23, 0
      %p138 = por %p136, %p137
      %p139 = scmp.ne.s32.totalorder %s125, %s126
      %p140 = scmp.eq.s32.totalorder %s24, 1
      %p141 = por %p139, %p140
      %p143 = scmp.ne.s32.totalorder %s126, %s142
      %p144 = scmp.eq.s32.totalorder %s24, 0
      %p145 = por %p143, %p144
      %s146 = ssub.s32 %s18, %s25
      %p147 = scmp.eq.s32.totalorder %s146, 0
      %s149 = sadd.s32 %s148, 1
      %s150 = scalar_select %p147, %s148, %s149
      %p153 = pneg %p147
      %p154 = scmp.eq.s32.totalorder %s18, 1
      %p155 = por %p153, %p154
      %p156 = scmp.ne.s32.totalorder %s148, %s151
      %p157 = scmp.eq.s32.totalorder %s18, 0
      %p158 = por %p156, %p157
      %p159 = scmp.ne.s32.totalorder %s148, %s151
      %p160 = scmp.eq.s32.totalorder %s23, 1
      %p161 = por %p159, %p160
      %p162 = scmp.ne.s32.totalorder %s151, %s152
      %p163 = scmp.eq.s32.totalorder %s23, 0
      %p164 = por %p162, %p163
      %p165 = scmp.ne.s32.totalorder %s151, %s152
      %p166 = scmp.eq.s32.totalorder %s24, 1
      %p167 = por %p165, %p166
      %p169 = scmp.ne.s32.totalorder %s152, %s168
      %p170 = scmp.eq.s32.totalorder %s24, 0
      %p171 = por %p169, %p170
      %s172 = ssub.s32 %s18, %s25
      %p173 = scmp.eq.s32.totalorder %s172, 0
      %s175 = sadd.s32 %s174, 1
      %s176 = scalar_select %p173, %s174, %s175
      %p179 = pneg %p173
      %p180 = scmp.eq.s32.totalorder %s18, 1
      %p181 = por %p179, %p180
      %p182 = scmp.ne.s32.totalorder %s174, %s177
      %p183 = scmp.eq.s32.totalorder %s18, 0
      %p184 = por %p182, %p183
      %p185 = scmp.ne.s32.totalorder %s174, %s177
      %p186 = scmp.eq.s32.totalorder %s23, 1
      %p187 = por %p185, %p186
      %p188 = scmp.ne.s32.totalorder %s177, %s178
      %p189 = scmp.eq.s32.totalorder %s23, 0
      %p190 = por %p188, %p189
      %p191 = scmp.ne.s32.totalorder %s177, %s178
      %p192 = scmp.eq.s32.totalorder %s24, 1
      %p193 = por %p191, %p192
      %p195 = scmp.ne.s32.totalorder %s178, %s194
      %p196 = scmp.eq.s32.totalorder %s24, 0
      %p197 = por %p195, %p196
      %p198 = scmp.le.s32.totalorder 1, %s18
      %p199 = scmp.lt.s32.totalorder %s18, 3
      %p200 = pnand %p198, %p199
      %p201 = pneg %p200
      // Predicated region
      $region9: #{set_decoder_forward.1} parent=5 // pred_check
        _
      $region10: #{set_decoder_forward.1} parent=5 // pred_check_branch
        %203 = sbr.rel (%p200) target = $region12
      $region11: #{set_decoder_forward.1} parent=5 // pred_region
        %s204 = ssub.s32 %s18, 1
        // Predicated region
        $region13: #{set_decoder_forward.1} parent=11 // pred_check
          %p205 = pneg %p91
        $region14: #{set_decoder_forward.1} parent=11 // pred_check_branch
          %207 = sbr.rel (%p205) target = $region16
        $region15: #{set_decoder_forward.1} parent=11 // pred_region
          %s209 = ssub.s32 17664, 17664
          %210 = vsyncadd [#allocation3], %s209
          %s211 = sshll.u32 [#allocation2], 4
          %s212 = int_to_ptr.vmem [resolvable:$true] %s211
          %217 = dma.hbm_to_vmem [thread:$0]  %s2, 17664, %s212, [#allocation3], 256, 256, 16
        $region16: #{set_decoder_forward.1} parent=11 // pred_fallthru
          _
        // Predicated region
        $region17: #{set_decoder_forward.1} parent=11 // pred_check
          %p218 = pneg %p112
        $region18: #{set_decoder_forward.1} parent=11 // pred_check_branch
          %220 = sbr.rel (%p218) target = $region20
        $region19: #{set_decoder_forward.1} parent=11 // pred_region
          %s222 = ssub.s32 1536, 1536
          %223 = vsyncadd [#allocation6], %s222
          %s224 = sshll.u32 [#allocation5], 4
          %s225 = int_to_ptr.vmem [resolvable:$true] %s224
          %230 = dma.hbm_to_vmem [thread:$0]  %s3, 1536, %s225, [#allocation6], 256, 256, 16
        $region20: #{set_decoder_forward.1} parent=11 // pred_fallthru
          _
      $region12: #{set_decoder_forward.1} parent=5 // pred_fallthru
        _
      %p231 = scmp.lt.s32.totalorder %s18, 2
      // Predicated region
      $region21: #{set_decoder_forward.1} parent=5 // pred_check
        %p232 = pneg %p231
      $region22: #{set_decoder_forward.1} parent=5 // pred_check_branch
        %234 = sbr.rel (%p232) target = $region24
      $region23: #{set_decoder_forward.1} parent=5 // pred_region
        // Predicated region
        $region25: #{set_decoder_forward.1} parent=23 // pred_check
          %p235 = pneg %p38
        $region26: #{set_decoder_forward.1} parent=23 // pred_check_branch
          %237 = sbr.rel (%p235) target = $region28
        $region27: #{set_decoder_forward.1} parent=23 // pred_region
          %p238 = scmp.lt.s32.totalorder %s18, 1
          %s239 = scalar_select %p238, %s18, 1
          %s240 = smul.addr %s239, 2
          %s241 = smul.addr %s240, 8
          %s242 = scalar_lea.vmem %s0, %s241
        $region28: #{set_decoder_forward.1} parent=23 // pred_fallthru
          _
        // Predicated region
        $region29: #{set_decoder_forward.1} parent=23 // pred_check
          %p243 = pneg %p64
        $region30: #{set_decoder_forward.1} parent=23 // pred_check_branch
          %245 = sbr.rel (%p243) target = $region32
        $region31: #{set_decoder_forward.1} parent=23 // pred_region
          %p246 = scmp.lt.s32.totalorder %s18, 1
          %s247 = scalar_select %p246, %s18, 1
          %s248 = smul.addr %s247, 2
          %s249 = smul.addr %s248, 8
          %s250 = scalar_lea.vmem %s1, %s249
        $region32: #{set_decoder_forward.1} parent=23 // pred_fallthru
          _
      $region24: #{set_decoder_forward.1} parent=5 // pred_fallthru
        _
      %p251 = scmp.le.s32.totalorder 1, %s18
      %p252 = scmp.lt.s32.totalorder %s18, 3
      %p253 = pnand %p251, %p252
      %p254 = pneg %p253
      // Predicated region
      $region33: #{set_decoder_forward.1} parent=5 // pred_check
        _
      $region34: #{set_decoder_forward.1} parent=5 // pred_check_branch
        %256 = sbr.rel (%p253) target = $region36
      $region35: #{set_decoder_forward.1} parent=5 // pred_region
        %s257 = ssub.s32 %s18, 1
        // Predicated region
        $region37: #{set_decoder_forward.1} parent=35 // pred_check
          %p258 = pneg %p91
        $region38: #{set_decoder_forward.1} parent=35 // pred_check_branch
          %260 = sbr.rel (%p258) target = $region40
        $region39: #{set_decoder_forward.1} parent=35 // pred_region
          %261 = dma.done [#allocation3], 17664
        $region40: #{set_decoder_forward.1} parent=35 // pred_fallthru
          _
        // Predicated region
        $region41: #{set_decoder_forward.1} parent=35 // pred_check
          %p262 = pneg %p112
        $region42: #{set_decoder_forward.1} parent=35 // pred_check_branch
          %264 = sbr.rel (%p262) target = $region44
        $region43: #{set_decoder_forward.1} parent=35 // pred_region
          %265 = dma.done [#allocation6], 1536
        $region44: #{set_decoder_forward.1} parent=35 // pred_fallthru
          _
        %p266 = scmp.lt.s32.totalorder %s23, 1
        %s267 = scalar_select %p266, %s23, 1
        %s268 = smul.addr %s267, 2
        %s269 = smul.addr %s268, 8
        %s270 = scalar_lea.vmem %s0, %s269
        %p271 = pneg %p44
        %p272 = pneg %p41
        %p273 = scmp.lt.s32.totalorder %s23, 1
        %s274 = scalar_select %p273, %s23, 1
        %s275 = smul.addr %s274, 2
        %s276 = smul.addr %s275, 8
        %s277 = scalar_lea.vmem %s1, %s276
        %p278 = pneg %p70
        %p279 = pneg %p67
        %p280 = pneg %p91
        %p281 = pneg %p88
        %p282 = pneg %p112
        %p283 = pneg %p109
        %p284 = pneg %p138
        %p285 = pneg %p135
        %s286 = sand.u32 %s125, 1
        %s287 = scalar_lea.sflag [#allocation4], %s286
        %s288 = sand.u32 %s125, 1
        %s289 = smul.addr %s288, 16
        %s290 = scalar_lea.vmem [#allocation7], %s289
        %p291 = pneg %p164
        %p292 = pneg %p161
        %p293 = scmp.lt.s32.totalorder %s23, 1
        %s294 = scalar_select %p293, %s23, 1
        %s295 = smul.addr %s294, 2
        %s296 = smul.addr %s295, 8
        %s297 = scalar_lea.vmem %s5, %s296
        %p298 = pneg %p190
        %p299 = pneg %p187
        %p300 = scmp.lt.s32.totalorder %s23, 1
        %s301 = scalar_select %p300, %s23, 1
        %s302 = smul.addr %s301, 2
        %s303 = smul.addr %s302, 8
        %s304 = scalar_lea.vmem %s6, %s303
        %p305 = scmp.lt.s32.totalorder %s23, 1
        %s306 = scalar_select %p305, %s23, 1
        %s307 = smul.addr %s306, 2
        %s308 = smul.addr %s307, 8
        %s309 = scalar_lea.vmem %s0, %s308
        %p310 = scmp.lt.s32.totalorder %s23, 1
        %s311 = scalar_select %p310, %s23, 1
        %s312 = smul.addr %s311, 2
        %s313 = smul.addr %s312, 8
        %s314 = scalar_lea.vmem %s1, %s313
        %p315 = scmp.lt.s32.totalorder %s23, 1
        %s316 = scalar_select %p315, %s23, 1
        %s317 = smul.addr %s316, 2
        %s318 = smul.addr %s317, 8
        %s319 = scalar_lea.vmem %s5, %s318
        %p320 = scmp.lt.s32.totalorder %s23, 1
        %s321 = scalar_select %p320, %s23, 1
        %s322 = smul.addr %s321, 2
        %s323 = smul.addr %s322, 8
        %s324 = scalar_lea.vmem %s6, %s323
        %v325 = vld [vmem:[%s314] sm:$0xff]
        %v326 = vld [vmem:[%s314 + $0x8] sm:$0xff]
        %v327 = vld [vmem:[%s309] sm:$0xff]
        %v328 = vld [vmem:[%s309 + $0x8] sm:$0xff]
        %v329 = vld [vmem:[#allocation5] sm:$0xff]
        %v330 = vld [vmem:[#allocation5 + $0x10] sm:$0xff]
        %v331 = vld [vmem:[#allocation5 + $0x20] ss:$0 sm:$0xff]
        %v332 = vld [vmem:[#allocation5 + $0x21] ss:$0 sm:$0xff]
        %vm333 = vcmask 261120
        %v334 = vsel %vm333, %v329, 0.0
        %335 = vadd.xlane.f32.xlu0 %v334
        %v336 = vpop.xlane.xlu0 %335
        %v337 = vsel %vm333, %v330, 0.0
        %338 = vadd.xlane.f32.xlu0 %v337
        %v339 = vpop.xlane.xlu0 %338
        %v340 = vrcp.pop 32.0
        %v341 = vmul.f32 %v336, %v340
        %v342 = vmul.f32 %v339, %v340
        %v343 = vsub.f32 %v329, %v341
        %v344 = vsub.f32 %v330, %v342
        %v345 = vmul.f32 %v343, %v343
        %v346 = vmul.f32 %v344, %v344
        %v347 = vsel %vm333, %v345, 0.0
        %348 = vadd.xlane.f32.xlu0 %v347
        %v349 = vpop.xlane.xlu0 %348
        %v350 = vsel %vm333, %v346, 0.0
        %351 = vadd.xlane.f32.xlu0 %v350
        %v352 = vpop.xlane.xlu0 %351
        %v353 = vmul.f32 %v349, %v340
        %v354 = vmul.f32 %v352, %v340
        %v355 = vadd.f32 %v353, 1e-12
        %v356 = vadd.f32 %v354, 1e-12
        %v357 = vrsqrt.pop %v355
        %v358 = vrsqrt.pop %v356
        %v359 = vmul.f32 %v343, %v357
        %v360 = vmul.f32 %v344, %v358
        %v361 = vmul.f32 %v359, %v331
        %v362 = vmul.f32 %v360, %v331
        %v363 = vadd.f32 %v361, %v332
        %v364 = vadd.f32 %v362, %v332
        %v365 = vld [vmem:[#allocation2] sm:$0xff]
        %v366 = vld [vmem:[#allocation2 + $0x10] sm:$0xff]
        %v367 = vld [vmem:[#allocation2 + $0x20] sm:$0xff]
        %v368 = vld [vmem:[#allocation2 + $0x30] sm:$0xff]
        %v369 = vld [vmem:[#allocation5 + $0x22] ss:$0 sm:$0xff]
        %v371 = vsel %vm333, %v363, 0
        %v374 = vsel %vm333, %v364, 0
        %376 = vmatprep.subr.mxu0 0.0
        %377 = vmatpush1.msra.mxu0 0.0
        %378 = vmatprep.subr.mxu0 0.0
        %379 = vmatpush1.msra.mxu0 0.0
        %380 = vmatprep.subr.mxu0 0.0
        %381 = vmatpush1.msra.mxu0 0.0
        %382 = vmatprep.subr.mxu0 0.0
        %383 = vmatpush1.msra.mxu0 0.0
        %384 = vmatprep.subr.mxu0 0.0
        %385 = vmatpush1.msra.mxu0 0.0
        %386 = vmatprep.subr.mxu0 0.0
        %387 = vmatpush1.msra.mxu0 0.0
        %388 = vmatprep.subr.mxu0 0.0
        %389 = vmatpush1.msra.mxu0 0.0
        %390 = vmatprep.subr.mxu0 0.0
        %391 = vmatpush1.msra.mxu0 0.0
        %392 = vmatprep.subr.mxu0 0.0
        %393 = vmatpush1.msra.mxu0 0.0
        %394 = vmatprep.subr.mxu0 0.0
        %395 = vmatpush1.msra.mxu0 0.0
        %396 = vmatprep.subr.mxu0 0.0
        %397 = vmatpush1.msra.mxu0 0.0
        %398 = vmatprep.subr.mxu0 0.0
        %399 = vmatpush1.msra.mxu0 0.0
        %400 = vmatprep.subr.mxu0 0.0
        %401 = vmatpush1.msra.mxu0 %v368
        %402 = vmatprep.subr.mxu0 0.0
        %403 = vmatpush1.msra.mxu0 %v367
        %404 = vmatprep.subr.mxu0 0.0
        %405 = vmatpush1.msra.mxu0 %v366
        %406 = vmatprep.subr.mxu0 0.0
        %407 = vmatpush1.msra.mxu0 %v365
        %408 = vmatprep.subr.mxu0 0.0
        %409 = vmatpush2.msra.mxu0 0.0
        %410 = vmatprep.subr.mxu0 0.0
        %411 = vmatpush2.msra.mxu0 0.0
        %412 = vmatprep.subr.mxu0 0.0
        %413 = vmatpush2.msra.mxu0 0.0
        %414 = vmatprep.subr.mxu0 0.0
        %415 = vmatpush2.msra.mxu0 0.0
        %416 = vmatprep.subr.mxu0 0.0
        %417 = vmatpush2.msra.mxu0 0.0
        %418 = vmatprep.subr.mxu0 0.0
        %419 = vmatpush2.msra.mxu0 0.0
        %420 = vmatprep.subr.mxu0 0.0
        %421 = vmatpush2.msra.mxu0 0.0
        %422 = vmatprep.subr.mxu0 0.0
        %423 = vmatpush2.msra.mxu0 0.0
        %424 = vmatprep.subr.mxu0 0.0
        %425 = vmatpush2.msra.mxu0 0.0
        %426 = vmatprep.subr.mxu0 0.0
        %427 = vmatpush2.msra.mxu0 0.0
        %428 = vmatprep.subr.mxu0 0.0
        %429 = vmatpush2.msra.mxu0 0.0
        %430 = vmatprep.subr.mxu0 0.0
        %431 = vmatpush2.msra.mxu0 0.0
        %432 = vmatprep.subr.mxu0 0.0
        %433 = vmatpush2.msra.mxu0 0.0
        %434 = vmatprep.subr.mxu0 0.0
        %435 = vmatpush2.msra.mxu0 0.0
        %436 = vmatprep.subr.mxu0 0.0
        %437 = vmatpush2.msra.mxu0 0.0
        %438 = vmatprep.subr.mxu0 0.0
        %439 = vmatpush2.msra.mxu0 0.0
        %440 = vmatprep.mubr.f32.mxu0 0.0
        %441 = vmatmul.mubr.f32.gmra.mxu0 %v371
        %v442 = vpop.f32.mrf.mxu0
        %v443 = vadd.f32 %v369, %v442
        %v444 = vpop.f32.mrf.mxu0
        %445 = vmatprep.mubr.f32.mxu0 0.0
        %446 = vmatmul.mubr.f32.gmra.mxu0 %v374
        %v447 = vpop.f32.mrf.mxu0
        %v448 = vadd.f32 %v369, %v447
        %v449 = vpop.f32.mrf.mxu0
        %450 = vdwg.mxu0
        %453 = vrot.lane.b32.xlu0 %v443, 96
        %v454 = vpop.permute.xlu0 %453
        %455 = vrot.lane.b32.xlu0 %v448, 96
        %v456 = vpop.permute.xlu0 %455
        %vm457 = vcmask 64512
        %v458 = vsel %vm457, %v443, 0
        %v460 = vsel %vm457, %v448, 0
        %v462 = vsel %vm457, %v454, 0
        %v464 = vsel %vm457, %v456, 0
        %466 = vmatprep.subr.mxu0 0.0
        %467 = vmatpush1.xpose.msra.mxu0 0.0
        %468 = vmatprep.subr.mxu0 0.0
        %469 = vmatpush1.xpose.msra.mxu0 0.0
        %470 = vmatprep.subr.mxu0 0.0
        %471 = vmatpush1.xpose.msra.mxu0 0.0
        %472 = vmatprep.subr.mxu0 0.0
        %473 = vmatpush1.xpose.msra.mxu0 0.0
        %474 = vmatprep.subr.mxu0 0.0
        %475 = vmatpush1.xpose.msra.mxu0 0.0
        %476 = vmatprep.subr.mxu0 0.0
        %477 = vmatpush1.xpose.msra.mxu0 0.0
        %478 = vmatprep.subr.mxu0 0.0
        %479 = vmatpush1.xpose.msra.mxu0 0.0
        %480 = vmatprep.subr.mxu0 0.0
        %481 = vmatpush1.xpose.msra.mxu0 0.0
        %482 = vmatprep.subr.mxu0 0.0
        %483 = vmatpush1.xpose.msra.mxu0 0.0
        %484 = vmatprep.subr.mxu0 0.0
        %485 = vmatpush1.xpose.msra.mxu0 0.0
        %486 = vmatprep.subr.mxu0 0.0
        %487 = vmatpush1.xpose.msra.mxu0 0.0
        %488 = vmatprep.subr.mxu0 0.0
        %489 = vmatpush1.xpose.msra.mxu0 0.0
        %490 = vmatprep.subr.mxu0 0.0
        %491 = vmatpush1.xpose.msra.mxu0 0.0
        %492 = vmatprep.subr.mxu0 0.0
        %493 = vmatpush1.xpose.msra.mxu0 0.0
        %494 = vmatprep.subr.mxu0 0.0
        %495 = vmatpush1.xpose.msra.mxu0 %v464
        %496 = vmatprep.subr.mxu0 0.0
        %497 = vmatpush1.xpose.msra.mxu0 %v462
        %498 = vmatprep.subr.mxu0 0.0
        %499 = vmatpush2.xpose.msra.mxu0 0.0
        %500 = vmatprep.subr.mxu0 0.0
        %501 = vmatpush2.xpose.msra.mxu0 0.0
        %502 = vmatprep.subr.mxu0 0.0
        %503 = vmatpush2.xpose.msra.mxu0 0.0
        %504 = vmatprep.subr.mxu0 0.0
        %505 = vmatpush2.xpose.msra.mxu0 0.0
        %506 = vmatprep.subr.mxu0 0.0
        %507 = vmatpush2.xpose.msra.mxu0 0.0
        %508 = vmatprep.subr.mxu0 0.0
        %509 = vmatpush2.xpose.msra.mxu0 0.0
        %510 = vmatprep.subr.mxu0 0.0
        %511 = vmatpush2.xpose.msra.mxu0 0.0
        %512 = vmatprep.subr.mxu0 0.0
        %513 = vmatpush2.xpose.msra.mxu0 0.0
        %514 = vmatprep.subr.mxu0 0.0
        %515 = vmatpush2.xpose.msra.mxu0 0.0
        %516 = vmatprep.subr.mxu0 0.0
        %517 = vmatpush2.xpose.msra.mxu0 0.0
        %518 = vmatprep.subr.mxu0 0.0
        %519 = vmatpush2.xpose.msra.mxu0 0.0
        %520 = vmatprep.subr.mxu0 0.0
        %521 = vmatpush2.xpose.msra.mxu0 0.0
        %522 = vmatprep.subr.mxu0 0.0
        %523 = vmatpush2.xpose.msra.mxu0 0.0
        %524 = vmatprep.subr.mxu0 0.0
        %525 = vmatpush2.xpose.msra.mxu0 0.0
        %526 = vmatprep.subr.mxu0 0.0
        %527 = vmatpush2.xpose.msra.mxu0 0.0
        %528 = vmatprep.subr.mxu0 0.0
        %529 = vmatpush2.xpose.msra.mxu0 0.0
        %530 = vmatprep.mubr.f32.mxu0 0.0
        %531 = vmatmul.mubr.f32.gmra.mxu0 %v458
        %v532 = vpop.f32.mrf.mxu0
        %v533 = vadd.f32 0.0, %v532
        %v534 = vpop.f32.mrf.mxu0
        %535 = vmatprep.mubr.f32.mxu0 0.0
        %536 = vmatmul.mubr.f32.gmra.mxu0 %v460
        %v537 = vpop.f32.mrf.mxu0
        %v538 = vadd.f32 0.0, %v537
        %v539 = vpop.f32.mrf.mxu0
        %540 = vdwg.mxu0
        %v541 = vmul.f32 %v533, 0.35355338
        %v542 = vmul.f32 %v538, 0.35355338
        %vm543 = vcmask 130048
        %v544 = vsel %vm543, %v541, -inf
        %545 = vmax.xlane.f32.xlu0 %v544
        %v546 = vpop.xlane.xlu0 %545
        %v547 = vsel %vm543, %v542, -inf
        %548 = vmax.xlane.f32.xlu0 %v547
        %v549 = vpop.xlane.xlu0 %548
        %v550 = vsub.f32 %v541, %v546
        %v551 = vsub.f32 %v542, %v549
        %v552 = vmul.f32 %v550, 1.442695
        %v553 = vpow.pop %v552
        %v554 = vmul.f32 %v551, 1.442695
        %v555 = vpow.pop %v554
        %v556 = vsel %vm543, %v553, 0.0
        %557 = vadd.xlane.f32.xlu0 %v556
        %v558 = vpop.xlane.xlu0 %557
        %v559 = vsel %vm543, %v555, 0.0
        %560 = vadd.xlane.f32.xlu0 %v559
        %v561 = vpop.xlane.xlu0 %560
        %v562 = vrcp.pop %v558
        %v563 = vmul.f32 %v553, %v562
        %v564 = vrcp.pop %v561
        %v565 = vmul.f32 %v555, %v564
        %566 = vrot.lane.b32.xlu0 %v443, 64
        %v567 = vpop.permute.xlu0 %566
        %568 = vrot.lane.b32.xlu0 %v448, 64
        %v569 = vpop.permute.xlu0 %568
        %v573 = vsel %vm543, %v563, 0
        %v576 = vsel %vm543, %v565, 0
        %578 = vmatprep.subr.mxu0 0.0
        %579 = vmatpush1.msra.mxu0 0.0
        %580 = vmatprep.subr.mxu0 0.0
        %581 = vmatpush1.msra.mxu0 0.0
        %582 = vmatprep.subr.mxu0 0.0
        %583 = vmatpush1.msra.mxu0 0.0
        %584 = vmatprep.subr.mxu0 0.0
        %585 = vmatpush1.msra.mxu0 0.0
        %586 = vmatprep.subr.mxu0 0.0
        %587 = vmatpush1.msra.mxu0 0.0
        %588 = vmatprep.subr.mxu0 0.0
        %589 = vmatpush1.msra.mxu0 0.0
        %590 = vmatprep.subr.mxu0 0.0
        %591 = vmatpush1.msra.mxu0 0.0
        %592 = vmatprep.subr.mxu0 0.0
        %593 = vmatpush1.msra.mxu0 0.0
        %594 = vmatprep.subr.mxu0 0.0
        %595 = vmatpush1.msra.mxu0 0.0
        %596 = vmatprep.subr.mxu0 0.0
        %597 = vmatpush1.msra.mxu0 0.0
        %598 = vmatprep.subr.mxu0 0.0
        %599 = vmatpush1.msra.mxu0 0.0
        %600 = vmatprep.subr.mxu0 0.0
        %601 = vmatpush1.msra.mxu0 0.0
        %602 = vmatprep.subr.mxu0 0.0
        %603 = vmatpush1.msra.mxu0 0.0
        %604 = vmatprep.subr.mxu0 0.0
        %605 = vmatpush1.msra.mxu0 0.0
        %606 = vmatprep.subr.mxu0 0.0
        %607 = vmatpush1.msra.mxu0 %v569
        %608 = vmatprep.subr.mxu0 0.0
        %609 = vmatpush1.msra.mxu0 %v567
        %610 = vmatprep.subr.mxu0 0.0
        %611 = vmatpush2.msra.mxu0 0.0
        %612 = vmatprep.subr.mxu0 0.0
        %613 = vmatpush2.msra.mxu0 0.0
        %614 = vmatprep.subr.mxu0 0.0
        %615 = vmatpush2.msra.mxu0 0.0
        %616 = vmatprep.subr.mxu0 0.0
        %617 = vmatpush2.msra.mxu0 0.0
        %618 = vmatprep.subr.mxu0 0.0
        %619 = vmatpush2.msra.mxu0 0.0
        %620 = vmatprep.subr.mxu0 0.0
        %621 = vmatpush2.msra.mxu0 0.0
        %622 = vmatprep.subr.mxu0 0.0
        %623 = vmatpush2.msra.mxu0 0.0
        %624 = vmatprep.subr.mxu0 0.0
        %625 = vmatpush2.msra.mxu0 0.0
        %626 = vmatprep.subr.mxu0 0.0
        %627 = vmatpush2.msra.mxu0 0.0
        %628 = vmatprep.subr.mxu0 0.0
        %629 = vmatpush2.msra.mxu0 0.0
        %630 = vmatprep.subr.mxu0 0.0
        %631 = vmatpush2.msra.mxu0 0.0
        %632 = vmatprep.subr.mxu0 0.0
        %633 = vmatpush2.msra.mxu0 0.0
        %634 = vmatprep.subr.mxu0 0.0
        %635 = vmatpush2.msra.mxu0 0.0
        %636 = vmatprep.subr.mxu0 0.0
        %637 = vmatpush2.msra.mxu0 0.0
        %638 = vmatprep.subr.mxu0 0.0
        %639 = vmatpush2.msra.mxu0 0.0
        %640 = vmatprep.subr.mxu0 0.0
        %641 = vmatpush2.msra.mxu0 0.0
        %642 = vmatprep.mubr.f32.mxu0 0.0
        %643 = vmatmul.mubr.f32.gmra.mxu0 %v573
        %v644 = vpop.f32.mrf.mxu0
        %v645 = vadd.f32 0.0, %v644
        %v646 = vpop.f32.mrf.mxu0
        %647 = vmatprep.mubr.f32.mxu0 0.0
        %648 = vmatmul.mubr.f32.gmra.mxu0 %v576
        %v649 = vpop.f32.mrf.mxu0
        %v650 = vadd.f32 0.0, %v649
        %v651 = vpop.f32.mrf.mxu0
        %652 = vdwg.mxu0
        %653 = vrot.lane.b32.xlu0 %v443, 120
        %v654 = vpop.permute.xlu0 %653
        %655 = vrot.lane.b32.xlu0 %v448, 120
        %v656 = vpop.permute.xlu0 %655
        %657 = vrot.lane.b32.xlu0 %v443, 88
        %v658 = vpop.permute.xlu0 %657
        %659 = vrot.lane.b32.xlu0 %v448, 88
        %v660 = vpop.permute.xlu0 %659
        %v661 = vsel %vm457, %v654, 0
        %v663 = vsel %vm457, %v656, 0
        %v665 = vsel %vm457, %v658, 0
        %v667 = vsel %vm457, %v660, 0
        %669 = vmatprep.subr.mxu0 0.0
        %670 = vmatpush1.xpose.msra.mxu0 0.0
        %671 = vmatprep.subr.mxu0 0.0
        %672 = vmatpush1.xpose.msra.mxu0 0.0
        %673 = vmatprep.subr.mxu0 0.0
        %674 = vmatpush1.xpose.msra.mxu0 0.0
        %675 = vmatprep.subr.mxu0 0.0
        %676 = vmatpush1.xpose.msra.mxu0 0.0
        %677 = vmatprep.subr.mxu0 0.0
        %678 = vmatpush1.xpose.msra.mxu0 0.0
        %679 = vmatprep.subr.mxu0 0.0
        %680 = vmatpush1.xpose.msra.mxu0 0.0
        %681 = vmatprep.subr.mxu0 0.0
        %682 = vmatpush1.xpose.msra.mxu0 0.0
        %683 = vmatprep.subr.mxu0 0.0
        %684 = vmatpush1.xpose.msra.mxu0 0.0
        %685 = vmatprep.subr.mxu0 0.0
        %686 = vmatpush1.xpose.msra.mxu0 0.0
        %687 = vmatprep.subr.mxu0 0.0
        %688 = vmatpush1.xpose.msra.mxu0 0.0
        %689 = vmatprep.subr.mxu0 0.0
        %690 = vmatpush1.xpose.msra.mxu0 0.0
        %691 = vmatprep.subr.mxu0 0.0
        %692 = vmatpush1.xpose.msra.mxu0 0.0
        %693 = vmatprep.subr.mxu0 0.0
        %694 = vmatpush1.xpose.msra.mxu0 0.0
        %695 = vmatprep.subr.mxu0 0.0
        %696 = vmatpush1.xpose.msra.mxu0 0.0
        %697 = vmatprep.subr.mxu0 0.0
        %698 = vmatpush1.xpose.msra.mxu0 %v667
        %699 = vmatprep.subr.mxu0 0.0
        %700 = vmatpush1.xpose.msra.mxu0 %v665
        %701 = vmatprep.subr.mxu0 0.0
        %702 = vmatpush2.xpose.msra.mxu0 0.0
        %703 = vmatprep.subr.mxu0 0.0
        %704 = vmatpush2.xpose.msra.mxu0 0.0
        %705 = vmatprep.subr.mxu0 0.0
        %706 = vmatpush2.xpose.msra.mxu0 0.0
        %707 = vmatprep.subr.mxu0 0.0
        %708 = vmatpush2.xpose.msra.mxu0 0.0
        %709 = vmatprep.subr.mxu0 0.0
        %710 = vmatpush2.xpose.msra.mxu0 0.0
        %711 = vmatprep.subr.mxu0 0.0
        %712 = vmatpush2.xpose.msra.mxu0 0.0
        %713 = vmatprep.subr.mxu0 0.0
        %714 = vmatpush2.xpose.msra.mxu0 0.0
        %715 = vmatprep.subr.mxu0 0.0
        %716 = vmatpush2.xpose.msra.mxu0 0.0
        %717 = vmatprep.subr.mxu0 0.0
        %718 = vmatpush2.xpose.msra.mxu0 0.0
        %719 = vmatprep.subr.mxu0 0.0
        %720 = vmatpush2.xpose.msra.mxu0 0.0
        %721 = vmatprep.subr.mxu0 0.0
        %722 = vmatpush2.xpose.msra.mxu0 0.0
        %723 = vmatprep.subr.mxu0 0.0
        %724 = vmatpush2.xpose.msra.mxu0 0.0
        %725 = vmatprep.subr.mxu0 0.0
        %726 = vmatpush2.xpose.msra.mxu0 0.0
        %727 = vmatprep.subr.mxu0 0.0
        %728 = vmatpush2.xpose.msra.mxu0 0.0
        %729 = vmatprep.subr.mxu0 0.0
        %730 = vmatpush2.xpose.msra.mxu0 0.0
        %731 = vmatprep.subr.mxu0 0.0
        %732 = vmatpush2.xpose.msra.mxu0 0.0
        %733 = vmatprep.mubr.f32.mxu0 0.0
        %734 = vmatmul.mubr.f32.gmra.mxu0 %v661
        %v735 = vpop.f32.mrf.mxu0
        %v736 = vadd.f32 0.0, %v735
        %v737 = vpop.f32.mrf.mxu0
        %738 = vmatprep.mubr.f32.mxu0 0.0
        %739 = vmatmul.mubr.f32.gmra.mxu0 %v663
        %v740 = vpop.f32.mrf.mxu0
        %v741 = vadd.f32 0.0, %v740
        %v742 = vpop.f32.mrf.mxu0
        %743 = vdwg.mxu0
        %v744 = vmul.f32 %v736, 0.35355338
        %v745 = vmul.f32 %v741, 0.35355338
        %v746 = vsel %vm543, %v744, -inf
        %747 = vmax.xlane.f32.xlu0 %v746
        %v748 = vpop.xlane.xlu0 %747
        %v749 = vsel %vm543, %v745, -inf
        %750 = vmax.xlane.f32.xlu0 %v749
        %v751 = vpop.xlane.xlu0 %750
        %v752 = vsub.f32 %v744, %v748
        %v753 = vsub.f32 %v745, %v751
        %v754 = vmul.f32 %v752, 1.442695
        %v755 = vpow.pop %v754
        %v756 = vmul.f32 %v753, 1.442695
        %v757 = vpow.pop %v756
        %v758 = vsel %vm543, %v755, 0.0
        %759 = vadd.xlane.f32.xlu0 %v758
        %v760 = vpop.xlane.xlu0 %759
        %v761 = vsel %vm543, %v757, 0.0
        %762 = vadd.xlane.f32.xlu0 %v761
        %v763 = vpop.xlane.xlu0 %762
        %v764 = vrcp.pop %v760
        %v765 = vmul.f32 %v755, %v764
        %v766 = vrcp.pop %v763
        %v767 = vmul.f32 %v757, %v766
        %768 = vrot.lane.b32.xlu0 %v443, 56
        %v769 = vpop.permute.xlu0 %768
        %770 = vrot.lane.b32.xlu0 %v448, 56
        %v771 = vpop.permute.xlu0 %770
        %v775 = vsel %vm543, %v765, 0
        %v778 = vsel %vm543, %v767, 0
        %780 = vmatprep.subr.mxu0 0.0
        %781 = vmatpush1.msra.mxu0 0.0
        %782 = vmatprep.subr.mxu0 0.0
        %783 = vmatpush1.msra.mxu0 0.0
        %784 = vmatprep.subr.mxu0 0.0
        %785 = vmatpush1.msra.mxu0 0.0
        %786 = vmatprep.subr.mxu0 0.0
        %787 = vmatpush1.msra.mxu0 0.0
        %788 = vmatprep.subr.mxu0 0.0
        %789 = vmatpush1.msra.mxu0 0.0
        %790 = vmatprep.subr.mxu0 0.0
        %791 = vmatpush1.msra.mxu0 0.0
        %792 = vmatprep.subr.mxu0 0.0
        %793 = vmatpush1.msra.mxu0 0.0
        %794 = vmatprep.subr.mxu0 0.0
        %795 = vmatpush1.msra.mxu0 0.0
        %796 = vmatprep.subr.mxu0 0.0
        %797 = vmatpush1.msra.mxu0 0.0
        %798 = vmatprep.subr.mxu0 0.0
        %799 = vmatpush1.msra.mxu0 0.0
        %800 = vmatprep.subr.mxu0 0.0
        %801 = vmatpush1.msra.mxu0 0.0
        %802 = vmatprep.subr.mxu0 0.0
        %803 = vmatpush1.msra.mxu0 0.0
        %804 = vmatprep.subr.mxu0 0.0
        %805 = vmatpush1.msra.mxu0 0.0
        %806 = vmatprep.subr.mxu0 0.0
        %807 = vmatpush1.msra.mxu0 0.0
        %808 = vmatprep.subr.mxu0 0.0
        %809 = vmatpush1.msra.mxu0 %v771
        %810 = vmatprep.subr.mxu0 0.0
        %811 = vmatpush1.msra.mxu0 %v769
        %812 = vmatprep.subr.mxu0 0.0
        %813 = vmatpush2.msra.mxu0 0.0
        %814 = vmatprep.subr.mxu0 0.0
        %815 = vmatpush2.msra.mxu0 0.0
        %816 = vmatprep.subr.mxu0 0.0
        %817 = vmatpush2.msra.mxu0 0.0
        %818 = vmatprep.subr.mxu0 0.0
        %819 = vmatpush2.msra.mxu0 0.0
        %820 = vmatprep.subr.mxu0 0.0
        %821 = vmatpush2.msra.mxu0 0.0
        %822 = vmatprep.subr.mxu0 0.0
        %823 = vmatpush2.msra.mxu0 0.0
        %824 = vmatprep.subr.mxu0 0.0
        %825 = vmatpush2.msra.mxu0 0.0
        %826 = vmatprep.subr.mxu0 0.0
        %827 = vmatpush2.msra.mxu0 0.0
        %828 = vmatprep.subr.mxu0 0.0
        %829 = vmatpush2.msra.mxu0 0.0
        %830 = vmatprep.subr.mxu0 0.0
        %831 = vmatpush2.msra.mxu0 0.0
        %832 = vmatprep.subr.mxu0 0.0
        %833 = vmatpush2.msra.mxu0 0.0
        %834 = vmatprep.subr.mxu0 0.0
        %835 = vmatpush2.msra.mxu0 0.0
        %836 = vmatprep.subr.mxu0 0.0
        %837 = vmatpush2.msra.mxu0 0.0
        %838 = vmatprep.subr.mxu0 0.0
        %839 = vmatpush2.msra.mxu0 0.0
        %840 = vmatprep.subr.mxu0 0.0
        %841 = vmatpush2.msra.mxu0 0.0
        %842 = vmatprep.subr.mxu0 0.0
        %843 = vmatpush2.msra.mxu0 0.0
        %844 = vmatprep.mubr.f32.mxu0 0.0
        %845 = vmatmul.mubr.f32.gmra.mxu0 %v775
        %v846 = vpop.f32.mrf.mxu0
        %v847 = vadd.f32 0.0, %v846
        %v848 = vpop.f32.mrf.mxu0
        %849 = vmatprep.mubr.f32.mxu0 0.0
        %850 = vmatmul.mubr.f32.gmra.mxu0 %v778
        %v851 = vpop.f32.mrf.mxu0
        %v852 = vadd.f32 0.0, %v851
        %v853 = vpop.f32.mrf.mxu0
        %854 = vdwg.mxu0
        %855 = vrot.lane.b32.xlu0 %v443, 112
        %v856 = vpop.permute.xlu0 %855
        %857 = vrot.lane.b32.xlu0 %v448, 112
        %v858 = vpop.permute.xlu0 %857
        %859 = vrot.lane.b32.xlu0 %v443, 80
        %v860 = vpop.permute.xlu0 %859
        %861 = vrot.lane.b32.xlu0 %v448, 80
        %v862 = vpop.permute.xlu0 %861
        %v863 = vsel %vm457, %v856, 0
        %v865 = vsel %vm457, %v858, 0
        %v867 = vsel %vm457, %v860, 0
        %v869 = vsel %vm457, %v862, 0
        %871 = vmatprep.subr.mxu0 0.0
        %872 = vmatpush1.xpose.msra.mxu0 0.0
        %873 = vmatprep.subr.mxu0 0.0
        %874 = vmatpush1.xpose.msra.mxu0 0.0
        %875 = vmatprep.subr.mxu0 0.0
        %876 = vmatpush1.xpose.msra.mxu0 0.0
        %877 = vmatprep.subr.mxu0 0.0
        %878 = vmatpush1.xpose.msra.mxu0 0.0
        %879 = vmatprep.subr.mxu0 0.0
        %880 = vmatpush1.xpose.msra.mxu0 0.0
        %881 = vmatprep.subr.mxu0 0.0
        %882 = vmatpush1.xpose.msra.mxu0 0.0
        %883 = vmatprep.subr.mxu0 0.0
        %884 = vmatpush1.xpose.msra.mxu0 0.0
        %885 = vmatprep.subr.mxu0 0.0
        %886 = vmatpush1.xpose.msra.mxu0 0.0
        %887 = vmatprep.subr.mxu0 0.0
        %888 = vmatpush1.xpose.msra.mxu0 0.0
        %889 = vmatprep.subr.mxu0 0.0
        %890 = vmatpush1.xpose.msra.mxu0 0.0
        %891 = vmatprep.subr.mxu0 0.0
        %892 = vmatpush1.xpose.msra.mxu0 0.0
        %893 = vmatprep.subr.mxu0 0.0
        %894 = vmatpush1.xpose.msra.mxu0 0.0
        %895 = vmatprep.subr.mxu0 0.0
        %896 = vmatpush1.xpose.msra.mxu0 0.0
        %897 = vmatprep.subr.mxu0 0.0
        %898 = vmatpush1.xpose.msra.mxu0 0.0
        %899 = vmatprep.subr.mxu0 0.0
        %900 = vmatpush1.xpose.msra.mxu0 %v869
        %901 = vmatprep.subr.mxu0 0.0
        %902 = vmatpush1.xpose.msra.mxu0 %v867
        %903 = vmatprep.subr.mxu0 0.0
        %904 = vmatpush2.xpose.msra.mxu0 0.0
        %905 = vmatprep.subr.mxu0 0.0
        %906 = vmatpush2.xpose.msra.mxu0 0.0
        %907 = vmatprep.subr.mxu0 0.0
        %908 = vmatpush2.xpose.msra.mxu0 0.0
        %909 = vmatprep.subr.mxu0 0.0
        %910 = vmatpush2.xpose.msra.mxu0 0.0
        %911 = vmatprep.subr.mxu0 0.0
        %912 = vmatpush2.xpose.msra.mxu0 0.0
        %913 = vmatprep.subr.mxu0 0.0
        %914 = vmatpush2.xpose.msra.mxu0 0.0
        %915 = vmatprep.subr.mxu0 0.0
        %916 = vmatpush2.xpose.msra.mxu0 0.0
        %917 = vmatprep.subr.mxu0 0.0
        %918 = vmatpush2.xpose.msra.mxu0 0.0
        %919 = vmatprep.subr.mxu0 0.0
        %920 = vmatpush2.xpose.msra.mxu0 0.0
        %921 = vmatprep.subr.mxu0 0.0
        %922 = vmatpush2.xpose.msra.mxu0 0.0
        %923 = vmatprep.subr.mxu0 0.0
        %924 = vmatpush2.xpose.msra.mxu0 0.0
        %925 = vmatprep.subr.mxu0 0.0
        %926 = vmatpush2.xpose.msra.mxu0 0.0
        %927 = vmatprep.subr.mxu0 0.0
        %928 = vmatpush2.xpose.msra.mxu0 0.0
        %929 = vmatprep.subr.mxu0 0.0
        %930 = vmatpush2.xpose.msra.mxu0 0.0
        %931 = vmatprep.subr.mxu0 0.0
        %932 = vmatpush2.xpose.msra.mxu0 0.0
        %933 = vmatprep.subr.mxu0 0.0
        %934 = vmatpush2.xpose.msra.mxu0 0.0
        %935 = vmatprep.mubr.f32.mxu0 0.0
        %936 = vmatmul.mubr.f32.gmra.mxu0 %v863
        %v937 = vpop.f32.mrf.mxu0
        %v938 = vadd.f32 0.0, %v937
        %v939 = vpop.f32.mrf.mxu0
        %940 = vmatprep.mubr.f32.mxu0 0.0
        %941 = vmatmul.mubr.f32.gmra.mxu0 %v865
        %v942 = vpop.f32.mrf.mxu0
        %v943 = vadd.f32 0.0, %v942
        %v944 = vpop.f32.mrf.mxu0
        %945 = vdwg.mxu0
        %v946 = vmul.f32 %v938, 0.35355338
        %v947 = vmul.f32 %v943, 0.35355338
        %v948 = vsel %vm543, %v946, -inf
        %949 = vmax.xlane.f32.xlu0 %v948
        %v950 = vpop.xlane.xlu0 %949
        %v951 = vsel %vm543, %v947, -inf
        %952 = vmax.xlane.f32.xlu0 %v951
        %v953 = vpop.xlane.xlu0 %952
        %v954 = vsub.f32 %v946, %v950
        %v955 = vsub.f32 %v947, %v953
        %v956 = vmul.f32 %v954, 1.442695
        %v957 = vpow.pop %v956
        %v958 = vmul.f32 %v955, 1.442695
        %v959 = vpow.pop %v958
        %v960 = vsel %vm543, %v957, 0.0
        %961 = vadd.xlane.f32.xlu0 %v960
        %v962 = vpop.xlane.xlu0 %961
        %v963 = vsel %vm543, %v959, 0.0
        %964 = vadd.xlane.f32.xlu0 %v963
        %v965 = vpop.xlane.xlu0 %964
        %v966 = vrcp.pop %v962
        %v967 = vmul.f32 %v957, %v966
        %v968 = vrcp.pop %v965
        %v969 = vmul.f32 %v959, %v968
        %970 = vrot.lane.b32.xlu0 %v443, 48
        %v971 = vpop.permute.xlu0 %970
        %972 = vrot.lane.b32.xlu0 %v448, 48
        %v973 = vpop.permute.xlu0 %972
        %v977 = vsel %vm543, %v967, 0
        %v980 = vsel %vm543, %v969, 0
        %982 = vmatprep.subr.mxu0 0.0
        %983 = vmatpush1.msra.mxu0 0.0
        %984 = vmatprep.subr.mxu0 0.0
        %985 = vmatpush1.msra.mxu0 0.0
        %986 = vmatprep.subr.mxu0 0.0
        %987 = vmatpush1.msra.mxu0 0.0
        %988 = vmatprep.subr.mxu0 0.0
        %989 = vmatpush1.msra.mxu0 0.0
        %990 = vmatprep.subr.mxu0 0.0
        %991 = vmatpush1.msra.mxu0 0.0
        %992 = vmatprep.subr.mxu0 0.0
        %993 = vmatpush1.msra.mxu0 0.0
        %994 = vmatprep.subr.mxu0 0.0
        %995 = vmatpush1.msra.mxu0 0.0
        %996 = vmatprep.subr.mxu0 0.0
        %997 = vmatpush1.msra.mxu0 0.0
        %998 = vmatprep.subr.mxu0 0.0
        %999 = vmatpush1.msra.mxu0 0.0
        %1000 = vmatprep.subr.mxu0 0.0
        %1001 = vmatpush1.msra.mxu0 0.0
        %1002 = vmatprep.subr.mxu0 0.0
        %1003 = vmatpush1.msra.mxu0 0.0
        %1004 = vmatprep.subr.mxu0 0.0
        %1005 = vmatpush1.msra.mxu0 0.0
        %1006 = vmatprep.subr.mxu0 0.0
        %1007 = vmatpush1.msra.mxu0 0.0
        %1008 = vmatprep.subr.mxu0 0.0
        %1009 = vmatpush1.msra.mxu0 0.0
        %1010 = vmatprep.subr.mxu0 0.0
        %1011 = vmatpush1.msra.mxu0 %v973
        %1012 = vmatprep.subr.mxu0 0.0
        %1013 = vmatpush1.msra.mxu0 %v971
        %1014 = vmatprep.subr.mxu0 0.0
        %1015 = vmatpush2.msra.mxu0 0.0
        %1016 = vmatprep.subr.mxu0 0.0
        %1017 = vmatpush2.msra.mxu0 0.0
        %1018 = vmatprep.subr.mxu0 0.0
        %1019 = vmatpush2.msra.mxu0 0.0
        %1020 = vmatprep.subr.mxu0 0.0
        %1021 = vmatpush2.msra.mxu0 0.0
        %1022 = vmatprep.subr.mxu0 0.0
        %1023 = vmatpush2.msra.mxu0 0.0
        %1024 = vmatprep.subr.mxu0 0.0
        %1025 = vmatpush2.msra.mxu0 0.0
        %1026 = vmatprep.subr.mxu0 0.0
        %1027 = vmatpush2.msra.mxu0 0.0
        %1028 = vmatprep.subr.mxu0 0.0
        %1029 = vmatpush2.msra.mxu0 0.0
        %1030 = vmatprep.subr.mxu0 0.0
        %1031 = vmatpush2.msra.mxu0 0.0
        %1032 = vmatprep.subr.mxu0 0.0
        %1033 = vmatpush2.msra.mxu0 0.0
        %1034 = vmatprep.subr.mxu0 0.0
        %1035 = vmatpush2.msra.mxu0 0.0
        %1036 = vmatprep.subr.mxu0 0.0
        %1037 = vmatpush2.msra.mxu0 0.0
        %1038 = vmatprep.subr.mxu0 0.0
        %1039 = vmatpush2.msra.mxu0 0.0
        %1040 = vmatprep.subr.mxu0 0.0
        %1041 = vmatpush2.msra.mxu0 0.0
        %1042 = vmatprep.subr.mxu0 0.0
        %1043 = vmatpush2.msra.mxu0 0.0
        %1044 = vmatprep.subr.mxu0 0.0
        %1045 = vmatpush2.msra.mxu0 0.0
        %1046 = vmatprep.mubr.f32.mxu0 0.0
        %1047 = vmatmul.mubr.f32.gmra.mxu0 %v977
        %v1048 = vpop.f32.mrf.mxu0
        %v1049 = vadd.f32 0.0, %v1048
        %v1050 = vpop.f32.mrf.mxu0
        %1051 = vmatprep.mubr.f32.mxu0 0.0
        %1052 = vmatmul.mubr.f32.gmra.mxu0 %v980
        %v1053 = vpop.f32.mrf.mxu0
        %v1054 = vadd.f32 0.0, %v1053
        %v1055 = vpop.f32.mrf.mxu0
        %1056 = vdwg.mxu0
        %1057 = vrot.lane.b32.xlu0 %v443, 104
        %v1058 = vpop.permute.xlu0 %1057
        %1059 = vrot.lane.b32.xlu0 %v448, 104
        %v1060 = vpop.permute.xlu0 %1059
        %1061 = vrot.lane.b32.xlu0 %v443, 72
        %v1062 = vpop.permute.xlu0 %1061
        %1063 = vrot.lane.b32.xlu0 %v448, 72
        %v1064 = vpop.permute.xlu0 %1063
        %v1065 = vsel %vm457, %v1058, 0
        %v1067 = vsel %vm457, %v1060, 0
        %v1069 = vsel %vm457, %v1062, 0
        %v1071 = vsel %vm457, %v1064, 0
        %1073 = vmatprep.subr.mxu0 0.0
        %1074 = vmatpush1.xpose.msra.mxu0 0.0
        %1075 = vmatprep.subr.mxu0 0.0
        %1076 = vmatpush1.xpose.msra.mxu0 0.0
        %1077 = vmatprep.subr.mxu0 0.0
        %1078 = vmatpush1.xpose.msra.mxu0 0.0
        %1079 = vmatprep.subr.mxu0 0.0
        %1080 = vmatpush1.xpose.msra.mxu0 0.0
        %1081 = vmatprep.subr.mxu0 0.0
        %1082 = vmatpush1.xpose.msra.mxu0 0.0
        %1083 = vmatprep.subr.mxu0 0.0
        %1084 = vmatpush1.xpose.msra.mxu0 0.0
        %1085 = vmatprep.subr.mxu0 0.0
        %1086 = vmatpush1.xpose.msra.mxu0 0.0
        %1087 = vmatprep.subr.mxu0 0.0
        %1088 = vmatpush1.xpose.msra.mxu0 0.0
        %1089 = vmatprep.subr.mxu0 0.0
        %1090 = vmatpush1.xpose.msra.mxu0 0.0
        %1091 = vmatprep.subr.mxu0 0.0
        %1092 = vmatpush1.xpose.msra.mxu0 0.0
        %1093 = vmatprep.subr.mxu0 0.0
        %1094 = vmatpush1.xpose.msra.mxu0 0.0
        %1095 = vmatprep.subr.mxu0 0.0
        %1096 = vmatpush1.xpose.msra.mxu0 0.0
        %1097 = vmatprep.subr.mxu0 0.0
        %1098 = vmatpush1.xpose.msra.mxu0 0.0
        %1099 = vmatprep.subr.mxu0 0.0
        %1100 = vmatpush1.xpose.msra.mxu0 0.0
        %1101 = vmatprep.subr.mxu0 0.0
        %1102 = vmatpush1.xpose.msra.mxu0 %v1071
        %1103 = vmatprep.subr.mxu0 0.0
        %1104 = vmatpush1.xpose.msra.mxu0 %v1069
        %1105 = vmatprep.subr.mxu0 0.0
        %1106 = vmatpush2.xpose.msra.mxu0 0.0
        %1107 = vmatprep.subr.mxu0 0.0
        %1108 = vmatpush2.xpose.msra.mxu0 0.0
        %1109 = vmatprep.subr.mxu0 0.0
        %1110 = vmatpush2.xpose.msra.mxu0 0.0
        %1111 = vmatprep.subr.mxu0 0.0
        %1112 = vmatpush2.xpose.msra.mxu0 0.0
        %1113 = vmatprep.subr.mxu0 0.0
        %1114 = vmatpush2.xpose.msra.mxu0 0.0
        %1115 = vmatprep.subr.mxu0 0.0
        %1116 = vmatpush2.xpose.msra.mxu0 0.0
        %1117 = vmatprep.subr.mxu0 0.0
        %1118 = vmatpush2.xpose.msra.mxu0 0.0
        %1119 = vmatprep.subr.mxu0 0.0
        %1120 = vmatpush2.xpose.msra.mxu0 0.0
        %1121 = vmatprep.subr.mxu0 0.0
        %1122 = vmatpush2.xpose.msra.mxu0 0.0
        %1123 = vmatprep.subr.mxu0 0.0
        %1124 = vmatpush2.xpose.msra.mxu0 0.0
        %1125 = vmatprep.subr.mxu0 0.0
        %1126 = vmatpush2.xpose.msra.mxu0 0.0
        %1127 = vmatprep.subr.mxu0 0.0
        %1128 = vmatpush2.xpose.msra.mxu0 0.0
        %1129 = vmatprep.subr.mxu0 0.0
        %1130 = vmatpush2.xpose.msra.mxu0 0.0
        %1131 = vmatprep.subr.mxu0 0.0
        %1132 = vmatpush2.xpose.msra.mxu0 0.0
        %1133 = vmatprep.subr.mxu0 0.0
        %1134 = vmatpush2.xpose.msra.mxu0 0.0
        %1135 = vmatprep.subr.mxu0 0.0
        %1136 = vmatpush2.xpose.msra.mxu0 0.0
        %1137 = vmatprep.mubr.f32.mxu0 0.0
        %1138 = vmatmul.mubr.f32.gmra.mxu0 %v1065
        %v1139 = vpop.f32.mrf.mxu0
        %v1140 = vadd.f32 0.0, %v1139
        %v1141 = vpop.f32.mrf.mxu0
        %1142 = vmatprep.mubr.f32.mxu0 0.0
        %1143 = vmatmul.mubr.f32.gmra.mxu0 %v1067
        %v1144 = vpop.f32.mrf.mxu0
        %v1145 = vadd.f32 0.0, %v1144
        %v1146 = vpop.f32.mrf.mxu0
        %1147 = vdwg.mxu0
        %v1148 = vmul.f32 %v1140, 0.35355338
        %v1149 = vmul.f32 %v1145, 0.35355338
        %v1150 = vsel %vm543, %v1148, -inf
        %1151 = vmax.xlane.f32.xlu0 %v1150
        %v1152 = vpop.xlane.xlu0 %1151
        %v1153 = vsel %vm543, %v1149, -inf
        %1154 = vmax.xlane.f32.xlu0 %v1153
        %v1155 = vpop.xlane.xlu0 %1154
        %v1156 = vsub.f32 %v1148, %v1152
        %v1157 = vsub.f32 %v1149, %v1155
        %v1158 = vmul.f32 %v1156, 1.442695
        %v1159 = vpow.pop %v1158
        %v1160 = vmul.f32 %v1157, 1.442695
        %v1161 = vpow.pop %v1160
        %v1162 = vsel %vm543, %v1159, 0.0
        %1163 = vadd.xlane.f32.xlu0 %v1162
        %v1164 = vpop.xlane.xlu0 %1163
        %v1165 = vsel %vm543, %v1161, 0.0
        %1166 = vadd.xlane.f32.xlu0 %v1165
        %v1167 = vpop.xlane.xlu0 %1166
        %v1168 = vrcp.pop %v1164
        %v1169 = vmul.f32 %v1159, %v1168
        %v1170 = vrcp.pop %v1167
        %v1171 = vmul.f32 %v1161, %v1170
        %1172 = vrot.lane.b32.xlu0 %v443, 40
        %v1173 = vpop.permute.xlu0 %1172
        %1174 = vrot.lane.b32.xlu0 %v448, 40
        %v1175 = vpop.permute.xlu0 %1174
        %v1179 = vsel %vm543, %v1169, 0
        %v1182 = vsel %vm543, %v1171, 0
        %1184 = vmatprep.subr.mxu0 0.0
        %1185 = vmatpush1.msra.mxu0 0.0
        %1186 = vmatprep.subr.mxu0 0.0
        %1187 = vmatpush1.msra.mxu0 0.0
        %1188 = vmatprep.subr.mxu0 0.0
        %1189 = vmatpush1.msra.mxu0 0.0
        %1190 = vmatprep.subr.mxu0 0.0
        %1191 = vmatpush1.msra.mxu0 0.0
        %1192 = vmatprep.subr.mxu0 0.0
        %1193 = vmatpush1.msra.mxu0 0.0
        %1194 = vmatprep.subr.mxu0 0.0
        %1195 = vmatpush1.msra.mxu0 0.0
        %1196 = vmatprep.subr.mxu0 0.0
        %1197 = vmatpush1.msra.mxu0 0.0
        %1198 = vmatprep.subr.mxu0 0.0
        %1199 = vmatpush1.msra.mxu0 0.0
        %1200 = vmatprep.subr.mxu0 0.0
        %1201 = vmatpush1.msra.mxu0 0.0
        %1202 = vmatprep.subr.mxu0 0.0
        %1203 = vmatpush1.msra.mxu0 0.0
        %1204 = vmatprep.subr.mxu0 0.0
        %1205 = vmatpush1.msra.mxu0 0.0
        %1206 = vmatprep.subr.mxu0 0.0
        %1207 = vmatpush1.msra.mxu0 0.0
        %1208 = vmatprep.subr.mxu0 0.0
        %1209 = vmatpush1.msra.mxu0 0.0
        %1210 = vmatprep.subr.mxu0 0.0
        %1211 = vmatpush1.msra.mxu0 0.0
        %1212 = vmatprep.subr.mxu0 0.0
        %1213 = vmatpush1.msra.mxu0 %v1175
        %1214 = vmatprep.subr.mxu0 0.0
        %1215 = vmatpush1.msra.mxu0 %v1173
        %1216 = vmatprep.subr.mxu0 0.0
        %1217 = vmatpush2.msra.mxu0 0.0
        %1218 = vmatprep.subr.mxu0 0.0
        %1219 = vmatpush2.msra.mxu0 0.0
        %1220 = vmatprep.subr.mxu0 0.0
        %1221 = vmatpush2.msra.mxu0 0.0
        %1222 = vmatprep.subr.mxu0 0.0
        %1223 = vmatpush2.msra.mxu0 0.0
        %1224 = vmatprep.subr.mxu0 0.0
        %1225 = vmatpush2.msra.mxu0 0.0
        %1226 = vmatprep.subr.mxu0 0.0
        %1227 = vmatpush2.msra.mxu0 0.0
        %1228 = vmatprep.subr.mxu0 0.0
        %1229 = vmatpush2.msra.mxu0 0.0
        %1230 = vmatprep.subr.mxu0 0.0
        %1231 = vmatpush2.msra.mxu0 0.0
        %1232 = vmatprep.subr.mxu0 0.0
        %1233 = vmatpush2.msra.mxu0 0.0
        %1234 = vmatprep.subr.mxu0 0.0
        %1235 = vmatpush2.msra.mxu0 0.0
        %1236 = vmatprep.subr.mxu0 0.0
        %1237 = vmatpush2.msra.mxu0 0.0
        %1238 = vmatprep.subr.mxu0 0.0
        %1239 = vmatpush2.msra.mxu0 0.0
        %1240 = vmatprep.subr.mxu0 0.0
        %1241 = vmatpush2.msra.mxu0 0.0
        %1242 = vmatprep.subr.mxu0 0.0
        %1243 = vmatpush2.msra.mxu0 0.0
        %1244 = vmatprep.subr.mxu0 0.0
        %1245 = vmatpush2.msra.mxu0 0.0
        %1246 = vmatprep.subr.mxu0 0.0
        %1247 = vmatpush2.msra.mxu0 0.0
        %1248 = vmatprep.mubr.f32.mxu0 0.0
        %1249 = vmatmul.mubr.f32.gmra.mxu0 %v1179
        %v1250 = vpop.f32.mrf.mxu0
        %v1251 = vadd.f32 0.0, %v1250
        %v1252 = vpop.f32.mrf.mxu0
        %1253 = vmatprep.mubr.f32.mxu0 0.0
        %1254 = vmatmul.mubr.f32.gmra.mxu0 %v1182
        %v1255 = vpop.f32.mrf.mxu0
        %v1256 = vadd.f32 0.0, %v1255
        %v1257 = vpop.f32.mrf.mxu0
        %1258 = vdwg.mxu0
        %1261 = vrot.lane.b32.xlu0 %v847, 8
        %v1262 = vpop.permute.xlu0 %1261
        %1263 = vrot.lane.b32.xlu0 %v852, 8
        %v1264 = vpop.permute.xlu0 %1263
        %1269 = vrot.lane.b32.xlu0 %v1049, 16
        %v1270 = vpop.permute.xlu0 %1269
        %1271 = vrot.lane.b32.xlu0 %v1054, 16
        %v1272 = vpop.permute.xlu0 %1271
        %1277 = vrot.lane.b32.xlu0 %v1251, 24
        %v1278 = vpop.permute.xlu0 %1277
        %1279 = vrot.lane.b32.xlu0 %v1256, 24
        %v1280 = vpop.permute.xlu0 %1279
        %v1283 = vsel %vm457, %v645, %v1262
        %v1284 = vsel %vm457, %v650, %v1264
        %v1285 = vsel %vm543, %v1283, %v1270
        %v1286 = vsel %vm543, %v1284, %v1272
        %vm1287 = vcmask 195584
        %v1288 = vsel %vm1287, %v1285, %v1278
        %v1289 = vsel %vm1287, %v1286, %v1280
        %v1290 = vld [vmem:[#allocation2 + $0x100] sm:$0xff]
        %v1291 = vld [vmem:[#allocation2 + $0x110] sm:$0xff]
        %v1292 = vld [vmem:[#allocation2 + $0x120] sm:$0xff]
        %v1293 = vld [vmem:[#allocation2 + $0x130] sm:$0xff]
        %v1294 = vld [vmem:[#allocation5 + $0x23] ss:$0 sm:$0xff]
        %v1296 = vsel %vm333, %v1288, 0
        %v1299 = vsel %vm333, %v1289, 0
        %1301 = vmatprep.subr.mxu0 0.0
        %1302 = vmatpush1.msra.mxu0 0.0
        %1303 = vmatprep.subr.mxu0 0.0
        %1304 = vmatpush1.msra.mxu0 0.0
        %1305 = vmatprep.subr.mxu0 0.0
        %1306 = vmatpush1.msra.mxu0 0.0
        %1307 = vmatprep.subr.mxu0 0.0
        %1308 = vmatpush1.msra.mxu0 0.0
        %1309 = vmatprep.subr.mxu0 0.0
        %1310 = vmatpush1.msra.mxu0 0.0
        %1311 = vmatprep.subr.mxu0 0.0
        %1312 = vmatpush1.msra.mxu0 0.0
        %1313 = vmatprep.subr.mxu0 0.0
        %1314 = vmatpush1.msra.mxu0 0.0
        %1315 = vmatprep.subr.mxu0 0.0
        %1316 = vmatpush1.msra.mxu0 0.0
        %1317 = vmatprep.subr.mxu0 0.0
        %1318 = vmatpush1.msra.mxu0 0.0
        %1319 = vmatprep.subr.mxu0 0.0
        %1320 = vmatpush1.msra.mxu0 0.0
        %1321 = vmatprep.subr.mxu0 0.0
        %1322 = vmatpush1.msra.mxu0 0.0
        %1323 = vmatprep.subr.mxu0 0.0
        %1324 = vmatpush1.msra.mxu0 0.0
        %1325 = vmatprep.subr.mxu0 0.0
        %1326 = vmatpush1.msra.mxu0 %v1293
        %1327 = vmatprep.subr.mxu0 0.0
        %1328 = vmatpush1.msra.mxu0 %v1292
        %1329 = vmatprep.subr.mxu0 0.0
        %1330 = vmatpush1.msra.mxu0 %v1291
        %1331 = vmatprep.subr.mxu0 0.0
        %1332 = vmatpush1.msra.mxu0 %v1290
        %1333 = vmatprep.subr.mxu0 0.0
        %1334 = vmatpush2.msra.mxu0 0.0
        %1335 = vmatprep.subr.mxu0 0.0
        %1336 = vmatpush2.msra.mxu0 0.0
        %1337 = vmatprep.subr.mxu0 0.0
        %1338 = vmatpush2.msra.mxu0 0.0
        %1339 = vmatprep.subr.mxu0 0.0
        %1340 = vmatpush2.msra.mxu0 0.0
        %1341 = vmatprep.subr.mxu0 0.0
        %1342 = vmatpush2.msra.mxu0 0.0
        %1343 = vmatprep.subr.mxu0 0.0
        %1344 = vmatpush2.msra.mxu0 0.0
        %1345 = vmatprep.subr.mxu0 0.0
        %1346 = vmatpush2.msra.mxu0 0.0
        %1347 = vmatprep.subr.mxu0 0.0
        %1348 = vmatpush2.msra.mxu0 0.0
        %1349 = vmatprep.subr.mxu0 0.0
        %1350 = vmatpush2.msra.mxu0 0.0
        %1351 = vmatprep.subr.mxu0 0.0
        %1352 = vmatpush2.msra.mxu0 0.0
        %1353 = vmatprep.subr.mxu0 0.0
        %1354 = vmatpush2.msra.mxu0 0.0
        %1355 = vmatprep.subr.mxu0 0.0
        %1356 = vmatpush2.msra.mxu0 0.0
        %1357 = vmatprep.subr.mxu0 0.0
        %1358 = vmatpush2.msra.mxu0 0.0
        %1359 = vmatprep.subr.mxu0 0.0
        %1360 = vmatpush2.msra.mxu0 0.0
        %1361 = vmatprep.subr.mxu0 0.0
        %1362 = vmatpush2.msra.mxu0 0.0
        %1363 = vmatprep.subr.mxu0 0.0
        %1364 = vmatpush2.msra.mxu0 0.0
        %1365 = vmatprep.mubr.f32.mxu0 0.0
        %1366 = vmatmul.mubr.f32.gmra.mxu0 %v1296
        %v1367 = vpop.f32.mrf.mxu0
        %v1368 = vadd.f32 %v1294, %v1367
        %v1369 = vpop.f32.mrf.mxu0
        %1370 = vmatprep.mubr.f32.mxu0 0.0
        %1371 = vmatmul.mubr.f32.gmra.mxu0 %v1299
        %v1372 = vpop.f32.mrf.mxu0
        %v1373 = vadd.f32 %v1294, %v1372
        %v1374 = vpop.f32.mrf.mxu0
        %1375 = vdwg.mxu0
        %v1376 = vadd.f32 %v1368, %v363
        %v1377 = vadd.f32 %v1373, %v364
        %v1378 = vld [vmem:[#allocation5 + $0x24] ss:$0 sm:$0xff]
        %v1379 = vld [vmem:[#allocation5 + $0x25] ss:$0 sm:$0xff]
        %v1380 = vsel %vm333, %v1376, 0.0
        %1381 = vadd.xlane.f32.xlu0 %v1380
        %v1382 = vpop.xlane.xlu0 %1381
        %v1383 = vsel %vm333, %v1377, 0.0
        %1384 = vadd.xlane.f32.xlu0 %v1383
        %v1385 = vpop.xlane.xlu0 %1384
        %v1386 = vmul.f32 %v1382, %v340
        %v1387 = vmul.f32 %v1385, %v340
        %v1388 = vsub.f32 %v1376, %v1386
        %v1389 = vsub.f32 %v1377, %v1387
        %v1390 = vmul.f32 %v1388, %v1388
        %v1391 = vmul.f32 %v1389, %v1389
        %v1392 = vsel %vm333, %v1390, 0.0
        %1393 = vadd.xlane.f32.xlu0 %v1392
        %v1394 = vpop.xlane.xlu0 %1393
        %v1395 = vsel %vm333, %v1391, 0.0
        %1396 = vadd.xlane.f32.xlu0 %v1395
        %v1397 = vpop.xlane.xlu0 %1396
        %v1398 = vmul.f32 %v1394, %v340
        %v1399 = vmul.f32 %v1397, %v340
        %v1400 = vadd.f32 %v1398, 1e-12
        %v1401 = vadd.f32 %v1399, 1e-12
        %v1402 = vrsqrt.pop %v1400
        %v1403 = vrsqrt.pop %v1401
        %v1404 = vmul.f32 %v1388, %v1402
        %v1405 = vmul.f32 %v1389, %v1403
        %v1406 = vmul.f32 %v1404, %v1378
        %v1407 = vmul.f32 %v1405, %v1378
        %v1408 = vadd.f32 %v1406, %v1379
        %v1409 = vadd.f32 %v1407, %v1379
        %v1410 = vld [vmem:[#allocation2 + $0x40] sm:$0xff]
        %v1411 = vld [vmem:[#allocation2 + $0x50] sm:$0xff]
        %v1412 = vld [vmem:[#allocation2 + $0x60] sm:$0xff]
        %v1413 = vld [vmem:[#allocation2 + $0x70] sm:$0xff]
        %v1414 = vld [vmem:[#allocation5 + $0x26] ss:$0 sm:$0xff]
        %v1416 = vsel %vm333, %v1408, 0
        %v1419 = vsel %vm333, %v1409, 0
        %1421 = vmatprep.subr.mxu0 0.0
        %1422 = vmatpush1.msra.mxu0 0.0
        %1423 = vmatprep.subr.mxu0 0.0
        %1424 = vmatpush1.msra.mxu0 0.0
        %1425 = vmatprep.subr.mxu0 0.0
        %1426 = vmatpush1.msra.mxu0 0.0
        %1427 = vmatprep.subr.mxu0 0.0
        %1428 = vmatpush1.msra.mxu0 0.0
        %1429 = vmatprep.subr.mxu0 0.0
        %1430 = vmatpush1.msra.mxu0 0.0
        %1431 = vmatprep.subr.mxu0 0.0
        %1432 = vmatpush1.msra.mxu0 0.0
        %1433 = vmatprep.subr.mxu0 0.0
        %1434 = vmatpush1.msra.mxu0 0.0
        %1435 = vmatprep.subr.mxu0 0.0
        %1436 = vmatpush1.msra.mxu0 0.0
        %1437 = vmatprep.subr.mxu0 0.0
        %1438 = vmatpush1.msra.mxu0 0.0
        %1439 = vmatprep.subr.mxu0 0.0
        %1440 = vmatpush1.msra.mxu0 0.0
        %1441 = vmatprep.subr.mxu0 0.0
        %1442 = vmatpush1.msra.mxu0 0.0
        %1443 = vmatprep.subr.mxu0 0.0
        %1444 = vmatpush1.msra.mxu0 0.0
        %1445 = vmatprep.subr.mxu0 0.0
        %1446 = vmatpush1.msra.mxu0 %v1413
        %1447 = vmatprep.subr.mxu0 0.0
        %1448 = vmatpush1.msra.mxu0 %v1412
        %1449 = vmatprep.subr.mxu0 0.0
        %1450 = vmatpush1.msra.mxu0 %v1411
        %1451 = vmatprep.subr.mxu0 0.0
        %1452 = vmatpush1.msra.mxu0 %v1410
        %1453 = vmatprep.subr.mxu0 0.0
        %1454 = vmatpush2.msra.mxu0 0.0
        %1455 = vmatprep.subr.mxu0 0.0
        %1456 = vmatpush2.msra.mxu0 0.0
        %1457 = vmatprep.subr.mxu0 0.0
        %1458 = vmatpush2.msra.mxu0 0.0
        %1459 = vmatprep.subr.mxu0 0.0
        %1460 = vmatpush2.msra.mxu0 0.0
        %1461 = vmatprep.subr.mxu0 0.0
        %1462 = vmatpush2.msra.mxu0 0.0
        %1463 = vmatprep.subr.mxu0 0.0
        %1464 = vmatpush2.msra.mxu0 0.0
        %1465 = vmatprep.subr.mxu0 0.0
        %1466 = vmatpush2.msra.mxu0 0.0
        %1467 = vmatprep.subr.mxu0 0.0
        %1468 = vmatpush2.msra.mxu0 0.0
        %1469 = vmatprep.subr.mxu0 0.0
        %1470 = vmatpush2.msra.mxu0 0.0
        %1471 = vmatprep.subr.mxu0 0.0
        %1472 = vmatpush2.msra.mxu0 0.0
        %1473 = vmatprep.subr.mxu0 0.0
        %1474 = vmatpush2.msra.mxu0 0.0
        %1475 = vmatprep.subr.mxu0 0.0
        %1476 = vmatpush2.msra.mxu0 0.0
        %1477 = vmatprep.subr.mxu0 0.0
        %1478 = vmatpush2.msra.mxu0 0.0
        %1479 = vmatprep.subr.mxu0 0.0
        %1480 = vmatpush2.msra.mxu0 0.0
        %1481 = vmatprep.subr.mxu0 0.0
        %1482 = vmatpush2.msra.mxu0 0.0
        %1483 = vmatprep.subr.mxu0 0.0
        %1484 = vmatpush2.msra.mxu0 0.0
        %1485 = vmatprep.mubr.f32.mxu0 0.0
        %1486 = vmatmul.mubr.f32.gmra.mxu0 %v1416
        %v1487 = vpop.f32.mrf.mxu0
        %v1488 = vadd.f32 %v1414, %v1487
        %v1489 = vpop.f32.mrf.mxu0
        %1490 = vmatprep.mubr.f32.mxu0 0.0
        %1491 = vmatmul.mubr.f32.gmra.mxu0 %v1419
        %v1492 = vpop.f32.mrf.mxu0
        %v1493 = vadd.f32 %v1414, %v1492
        %v1494 = vpop.f32.mrf.mxu0
        %1495 = vdwg.mxu0
        %1500 = vrot.lane.b32.xlu0 %v1410, 96
        %v1501 = vpop.permute.xlu0 %1500
        %1502 = vrot.lane.b32.xlu0 %v1411, 96
        %v1503 = vpop.permute.xlu0 %1502
        %1504 = vrot.lane.b32.xlu0 %v1412, 96
        %v1505 = vpop.permute.xlu0 %1504
        %1506 = vrot.lane.b32.xlu0 %v1413, 96
        %v1507 = vpop.permute.xlu0 %1506
        %1513 = vrot.lane.b32.xlu0 %v1414, 96
        %v1514 = vpop.permute.xlu0 %1513
        %v1517 = vsel %vm333, %v325, 0
        %v1520 = vsel %vm333, %v326, 0
        %1522 = vmatprep.subr.mxu0 0.0
        %1523 = vmatpush1.msra.mxu0 0.0
        %1524 = vmatprep.subr.mxu0 0.0
        %1525 = vmatpush1.msra.mxu0 0.0
        %1526 = vmatprep.subr.mxu0 0.0
        %1527 = vmatpush1.msra.mxu0 0.0
        %1528 = vmatprep.subr.mxu0 0.0
        %1529 = vmatpush1.msra.mxu0 0.0
        %1530 = vmatprep.subr.mxu0 0.0
        %1531 = vmatpush1.msra.mxu0 0.0
        %1532 = vmatprep.subr.mxu0 0.0
        %1533 = vmatpush1.msra.mxu0 0.0
        %1534 = vmatprep.subr.mxu0 0.0
        %1535 = vmatpush1.msra.mxu0 0.0
        %1536 = vmatprep.subr.mxu0 0.0
        %1537 = vmatpush1.msra.mxu0 0.0
        %1538 = vmatprep.subr.mxu0 0.0
        %1539 = vmatpush1.msra.mxu0 0.0
        %1540 = vmatprep.subr.mxu0 0.0
        %1541 = vmatpush1.msra.mxu0 0.0
        %1542 = vmatprep.subr.mxu0 0.0
        %1543 = vmatpush1.msra.mxu0 0.0
        %1544 = vmatprep.subr.mxu0 0.0
        %1545 = vmatpush1.msra.mxu0 0.0
        %1546 = vmatprep.subr.mxu0 0.0
        %1547 = vmatpush1.msra.mxu0 %v1507
        %1548 = vmatprep.subr.mxu0 0.0
        %1549 = vmatpush1.msra.mxu0 %v1505
        %1550 = vmatprep.subr.mxu0 0.0
        %1551 = vmatpush1.msra.mxu0 %v1503
        %1552 = vmatprep.subr.mxu0 0.0
        %1553 = vmatpush1.msra.mxu0 %v1501
        %1554 = vmatprep.subr.mxu0 0.0
        %1555 = vmatpush2.msra.mxu0 0.0
        %1556 = vmatprep.subr.mxu0 0.0
        %1557 = vmatpush2.msra.mxu0 0.0
        %1558 = vmatprep.subr.mxu0 0.0
        %1559 = vmatpush2.msra.mxu0 0.0
        %1560 = vmatprep.subr.mxu0 0.0
        %1561 = vmatpush2.msra.mxu0 0.0
        %1562 = vmatprep.subr.mxu0 0.0
        %1563 = vmatpush2.msra.mxu0 0.0
        %1564 = vmatprep.subr.mxu0 0.0
        %1565 = vmatpush2.msra.mxu0 0.0
        %1566 = vmatprep.subr.mxu0 0.0
        %1567 = vmatpush2.msra.mxu0 0.0
        %1568 = vmatprep.subr.mxu0 0.0
        %1569 = vmatpush2.msra.mxu0 0.0
        %1570 = vmatprep.subr.mxu0 0.0
        %1571 = vmatpush2.msra.mxu0 0.0
        %1572 = vmatprep.subr.mxu0 0.0
        %1573 = vmatpush2.msra.mxu0 0.0
        %1574 = vmatprep.subr.mxu0 0.0
        %1575 = vmatpush2.msra.mxu0 0.0
        %1576 = vmatprep.subr.mxu0 0.0
        %1577 = vmatpush2.msra.mxu0 0.0
        %1578 = vmatprep.subr.mxu0 0.0
        %1579 = vmatpush2.msra.mxu0 0.0
        %1580 = vmatprep.subr.mxu0 0.0
        %1581 = vmatpush2.msra.mxu0 0.0
        %1582 = vmatprep.subr.mxu0 0.0
        %1583 = vmatpush2.msra.mxu0 0.0
        %1584 = vmatprep.subr.mxu0 0.0
        %1585 = vmatpush2.msra.mxu0 0.0
        %1586 = vmatprep.mubr.f32.mxu0 0.0
        %1587 = vmatmul.mubr.f32.gmra.mxu0 %v1517
        %v1588 = vpop.f32.mrf.mxu0
        %v1589 = vadd.f32 %v1514, %v1588
        %v1590 = vpop.f32.mrf.mxu0
        %1591 = vmatprep.mubr.f32.mxu0 0.0
        %1592 = vmatmul.mubr.f32.gmra.mxu0 %v1520
        %v1593 = vpop.f32.mrf.mxu0
        %v1594 = vadd.f32 %v1514, %v1593
        %v1595 = vpop.f32.mrf.mxu0
        %1596 = vdwg.mxu0
        %v1598 = vsel %vm457, %v1488, 0
        %v1601 = vsel %vm457, %v1493, 0
        %v1604 = vsel %vm457, %v1589, 0
        %v1607 = vsel %vm457, %v1594, 0
        %1609 = vmatprep.subr.mxu0 0.0
        %1610 = vmatpush1.xpose.msra.mxu0 0.0
        %1611 = vmatprep.subr.mxu0 0.0
        %1612 = vmatpush1.xpose.msra.mxu0 0.0
        %1613 = vmatprep.subr.mxu0 0.0
        %1614 = vmatpush1.xpose.msra.mxu0 0.0
        %1615 = vmatprep.subr.mxu0 0.0
        %1616 = vmatpush1.xpose.msra.mxu0 0.0
        %1617 = vmatprep.subr.mxu0 0.0
        %1618 = vmatpush1.xpose.msra.mxu0 0.0
        %1619 = vmatprep.subr.mxu0 0.0
        %1620 = vmatpush1.xpose.msra.mxu0 0.0
        %1621 = vmatprep.subr.mxu0 0.0
        %1622 = vmatpush1.xpose.msra.mxu0 0.0
        %1623 = vmatprep.subr.mxu0 0.0
        %1624 = vmatpush1.xpose.msra.mxu0 0.0
        %1625 = vmatprep.subr.mxu0 0.0
        %1626 = vmatpush1.xpose.msra.mxu0 0.0
        %1627 = vmatprep.subr.mxu0 0.0
        %1628 = vmatpush1.xpose.msra.mxu0 0.0
        %1629 = vmatprep.subr.mxu0 0.0
        %1630 = vmatpush1.xpose.msra.mxu0 0.0
        %1631 = vmatprep.subr.mxu0 0.0
        %1632 = vmatpush1.xpose.msra.mxu0 0.0
        %1633 = vmatprep.subr.mxu0 0.0
        %1634 = vmatpush1.xpose.msra.mxu0 0.0
        %1635 = vmatprep.subr.mxu0 0.0
        %1636 = vmatpush1.xpose.msra.mxu0 0.0
        %1637 = vmatprep.subr.mxu0 0.0
        %1638 = vmatpush1.xpose.msra.mxu0 %v1607
        %1639 = vmatprep.subr.mxu0 0.0
        %1640 = vmatpush1.xpose.msra.mxu0 %v1604
        %1641 = vmatprep.subr.mxu0 0.0
        %1642 = vmatpush2.xpose.msra.mxu0 0.0
        %1643 = vmatprep.subr.mxu0 0.0
        %1644 = vmatpush2.xpose.msra.mxu0 0.0
        %1645 = vmatprep.subr.mxu0 0.0
        %1646 = vmatpush2.xpose.msra.mxu0 0.0
        %1647 = vmatprep.subr.mxu0 0.0
        %1648 = vmatpush2.xpose.msra.mxu0 0.0
        %1649 = vmatprep.subr.mxu0 0.0
        %1650 = vmatpush2.xpose.msra.mxu0 0.0
        %1651 = vmatprep.subr.mxu0 0.0
        %1652 = vmatpush2.xpose.msra.mxu0 0.0
        %1653 = vmatprep.subr.mxu0 0.0
        %1654 = vmatpush2.xpose.msra.mxu0 0.0
        %1655 = vmatprep.subr.mxu0 0.0
        %1656 = vmatpush2.xpose.msra.mxu0 0.0
        %1657 = vmatprep.subr.mxu0 0.0
        %1658 = vmatpush2.xpose.msra.mxu0 0.0
        %1659 = vmatprep.subr.mxu0 0.0
        %1660 = vmatpush2.xpose.msra.mxu0 0.0
        %1661 = vmatprep.subr.mxu0 0.0
        %1662 = vmatpush2.xpose.msra.mxu0 0.0
        %1663 = vmatprep.subr.mxu0 0.0
        %1664 = vmatpush2.xpose.msra.mxu0 0.0
        %1665 = vmatprep.subr.mxu0 0.0
        %1666 = vmatpush2.xpose.msra.mxu0 0.0
        %1667 = vmatprep.subr.mxu0 0.0
        %1668 = vmatpush2.xpose.msra.mxu0 0.0
        %1669 = vmatprep.subr.mxu0 0.0
        %1670 = vmatpush2.xpose.msra.mxu0 0.0
        %1671 = vmatprep.subr.mxu0 0.0
        %1672 = vmatpush2.xpose.msra.mxu0 0.0
        %1673 = vmatprep.mubr.f32.mxu0 0.0
        %1674 = vmatmul.mubr.f32.gmra.mxu0 %v1598
        %v1675 = vpop.f32.mrf.mxu0
        %v1676 = vadd.f32 0.0, %v1675
        %v1677 = vpop.f32.mrf.mxu0
        %1678 = vmatprep.mubr.f32.mxu0 0.0
        %1679 = vmatmul.mubr.f32.gmra.mxu0 %v1601
        %v1680 = vpop.f32.mrf.mxu0
        %v1681 = vadd.f32 0.0, %v1680
        %v1682 = vpop.f32.mrf.mxu0
        %1683 = vdwg.mxu0
        %v1684 = vmul.f32 %v1676, 0.35355338
        %v1685 = vmul.f32 %v1681, 0.35355338
        %v1686 = vadd.f32 %v1684, %v327
        %v1687 = vadd.f32 %v1685, %v328
        %v1688 = vsel %vm543, %v1686, -inf
        %1689 = vmax.xlane.f32.xlu0 %v1688
        %v1690 = vpop.xlane.xlu0 %1689
        %v1691 = vsel %vm543, %v1687, -inf
        %1692 = vmax.xlane.f32.xlu0 %v1691
        %v1693 = vpop.xlane.xlu0 %1692
        %v1694 = vsub.f32 %v1686, %v1690
        %v1695 = vsub.f32 %v1687, %v1693
        %v1696 = vmul.f32 %v1694, 1.442695
        %v1697 = vpow.pop %v1696
        %v1698 = vmul.f32 %v1695, 1.442695
        %v1699 = vpow.pop %v1698
        %v1700 = vsel %vm543, %v1697, 0.0
        %1701 = vadd.xlane.f32.xlu0 %v1700
        %v1702 = vpop.xlane.xlu0 %1701
        %v1703 = vsel %vm543, %v1699, 0.0
        %1704 = vadd.xlane.f32.xlu0 %v1703
        %v1705 = vpop.xlane.xlu0 %1704
        %v1706 = vrcp.pop %v1702
        %v1707 = vmul.f32 %v1697, %v1706
        %v1708 = vrcp.pop %v1705
        %v1709 = vmul.f32 %v1699, %v1708
        %1710 = vrot.lane.b32.xlu0 %v1589, 96
        %v1711 = vpop.permute.xlu0 %1710
        %1712 = vrot.lane.b32.xlu0 %v1594, 96
        %v1713 = vpop.permute.xlu0 %1712
        %v1717 = vsel %vm543, %v1707, 0
        %v1720 = vsel %vm543, %v1709, 0
        %1722 = vmatprep.subr.mxu0 0.0
        %1723 = vmatpush1.msra.mxu0 0.0
        %1724 = vmatprep.subr.mxu0 0.0
        %1725 = vmatpush1.msra.mxu0 0.0
        %1726 = vmatprep.subr.mxu0 0.0
        %1727 = vmatpush1.msra.mxu0 0.0
        %1728 = vmatprep.subr.mxu0 0.0
        %1729 = vmatpush1.msra.mxu0 0.0
        %1730 = vmatprep.subr.mxu0 0.0
        %1731 = vmatpush1.msra.mxu0 0.0
        %1732 = vmatprep.subr.mxu0 0.0
        %1733 = vmatpush1.msra.mxu0 0.0
        %1734 = vmatprep.subr.mxu0 0.0
        %1735 = vmatpush1.msra.mxu0 0.0
        %1736 = vmatprep.subr.mxu0 0.0
        %1737 = vmatpush1.msra.mxu0 0.0
        %1738 = vmatprep.subr.mxu0 0.0
        %1739 = vmatpush1.msra.mxu0 0.0
        %1740 = vmatprep.subr.mxu0 0.0
        %1741 = vmatpush1.msra.mxu0 0.0
        %1742 = vmatprep.subr.mxu0 0.0
        %1743 = vmatpush1.msra.mxu0 0.0
        %1744 = vmatprep.subr.mxu0 0.0
        %1745 = vmatpush1.msra.mxu0 0.0
        %1746 = vmatprep.subr.mxu0 0.0
        %1747 = vmatpush1.msra.mxu0 0.0
        %1748 = vmatprep.subr.mxu0 0.0
        %1749 = vmatpush1.msra.mxu0 0.0
        %1750 = vmatprep.subr.mxu0 0.0
        %1751 = vmatpush1.msra.mxu0 %v1713
        %1752 = vmatprep.subr.mxu0 0.0
        %1753 = vmatpush1.msra.mxu0 %v1711
        %1754 = vmatprep.subr.mxu0 0.0
        %1755 = vmatpush2.msra.mxu0 0.0
        %1756 = vmatprep.subr.mxu0 0.0
        %1757 = vmatpush2.msra.mxu0 0.0
        %1758 = vmatprep.subr.mxu0 0.0
        %1759 = vmatpush2.msra.mxu0 0.0
        %1760 = vmatprep.subr.mxu0 0.0
        %1761 = vmatpush2.msra.mxu0 0.0
        %1762 = vmatprep.subr.mxu0 0.0
        %1763 = vmatpush2.msra.mxu0 0.0
        %1764 = vmatprep.subr.mxu0 0.0
        %1765 = vmatpush2.msra.mxu0 0.0
        %1766 = vmatprep.subr.mxu0 0.0
        %1767 = vmatpush2.msra.mxu0 0.0
        %1768 = vmatprep.subr.mxu0 0.0
        %1769 = vmatpush2.msra.mxu0 0.0
        %1770 = vmatprep.subr.mxu0 0.0
        %1771 = vmatpush2.msra.mxu0 0.0
        %1772 = vmatprep.subr.mxu0 0.0
        %1773 = vmatpush2.msra.mxu0 0.0
        %1774 = vmatprep.subr.mxu0 0.0
        %1775 = vmatpush2.msra.mxu0 0.0
        %1776 = vmatprep.subr.mxu0 0.0
        %1777 = vmatpush2.msra.mxu0 0.0
        %1778 = vmatprep.subr.mxu0 0.0
        %1779 = vmatpush2.msra.mxu0 0.0
        %1780 = vmatprep.subr.mxu0 0.0
        %1781 = vmatpush2.msra.mxu0 0.0
        %1782 = vmatprep.subr.mxu0 0.0
        %1783 = vmatpush2.msra.mxu0 0.0
        %1784 = vmatprep.subr.mxu0 0.0
        %1785 = vmatpush2.msra.mxu0 0.0
        %1786 = vmatprep.mubr.f32.mxu0 0.0
        %1787 = vmatmul.mubr.f32.gmra.mxu0 %v1717
        %v1788 = vpop.f32.mrf.mxu0
        %v1789 = vadd.f32 0.0, %v1788
        %v1790 = vpop.f32.mrf.mxu0
        %1791 = vmatprep.mubr.f32.mxu0 0.0
        %1792 = vmatmul.mubr.f32.gmra.mxu0 %v1720
        %v1793 = vpop.f32.mrf.mxu0
        %v1794 = vadd.f32 0.0, %v1793
        %v1795 = vpop.f32.mrf.mxu0
        %1796 = vdwg.mxu0
        %1797 = vrot.lane.b32.xlu0 %v1488, 120
        %v1798 = vpop.permute.xlu0 %1797
        %1799 = vrot.lane.b32.xlu0 %v1493, 120
        %v1800 = vpop.permute.xlu0 %1799
        %1801 = vrot.lane.b32.xlu0 %v1589, 120
        %v1802 = vpop.permute.xlu0 %1801
        %1803 = vrot.lane.b32.xlu0 %v1594, 120
        %v1804 = vpop.permute.xlu0 %1803
        %v1805 = vsel %vm457, %v1798, 0
        %v1807 = vsel %vm457, %v1800, 0
        %v1809 = vsel %vm457, %v1802, 0
        %v1811 = vsel %vm457, %v1804, 0
        %1813 = vmatprep.subr.mxu0 0.0
        %1814 = vmatpush1.xpose.msra.mxu0 0.0
        %1815 = vmatprep.subr.mxu0 0.0
        %1816 = vmatpush1.xpose.msra.mxu0 0.0
        %1817 = vmatprep.subr.mxu0 0.0
        %1818 = vmatpush1.xpose.msra.mxu0 0.0
        %1819 = vmatprep.subr.mxu0 0.0
        %1820 = vmatpush1.xpose.msra.mxu0 0.0
        %1821 = vmatprep.subr.mxu0 0.0
        %1822 = vmatpush1.xpose.msra.mxu0 0.0
        %1823 = vmatprep.subr.mxu0 0.0
        %1824 = vmatpush1.xpose.msra.mxu0 0.0
        %1825 = vmatprep.subr.mxu0 0.0
        %1826 = vmatpush1.xpose.msra.mxu0 0.0
        %1827 = vmatprep.subr.mxu0 0.0
        %1828 = vmatpush1.xpose.msra.mxu0 0.0
        %1829 = vmatprep.subr.mxu0 0.0
        %1830 = vmatpush1.xpose.msra.mxu0 0.0
        %1831 = vmatprep.subr.mxu0 0.0
        %1832 = vmatpush1.xpose.msra.mxu0 0.0
        %1833 = vmatprep.subr.mxu0 0.0
        %1834 = vmatpush1.xpose.msra.mxu0 0.0
        %1835 = vmatprep.subr.mxu0 0.0
        %1836 = vmatpush1.xpose.msra.mxu0 0.0
        %1837 = vmatprep.subr.mxu0 0.0
        %1838 = vmatpush1.xpose.msra.mxu0 0.0
        %1839 = vmatprep.subr.mxu0 0.0
        %1840 = vmatpush1.xpose.msra.mxu0 0.0
        %1841 = vmatprep.subr.mxu0 0.0
        %1842 = vmatpush1.xpose.msra.mxu0 %v1811
        %1843 = vmatprep.subr.mxu0 0.0
        %1844 = vmatpush1.xpose.msra.mxu0 %v1809
        %1845 = vmatprep.subr.mxu0 0.0
        %1846 = vmatpush2.xpose.msra.mxu0 0.0
        %1847 = vmatprep.subr.mxu0 0.0
        %1848 = vmatpush2.xpose.msra.mxu0 0.0
        %1849 = vmatprep.subr.mxu0 0.0
        %1850 = vmatpush2.xpose.msra.mxu0 0.0
        %1851 = vmatprep.subr.mxu0 0.0
        %1852 = vmatpush2.xpose.msra.mxu0 0.0
        %1853 = vmatprep.subr.mxu0 0.0
        %1854 = vmatpush2.xpose.msra.mxu0 0.0
        %1855 = vmatprep.subr.mxu0 0.0
        %1856 = vmatpush2.xpose.msra.mxu0 0.0
        %1857 = vmatprep.subr.mxu0 0.0
        %1858 = vmatpush2.xpose.msra.mxu0 0.0
        %1859 = vmatprep.subr.mxu0 0.0
        %1860 = vmatpush2.xpose.msra.mxu0 0.0
        %1861 = vmatprep.subr.mxu0 0.0
        %1862 = vmatpush2.xpose.msra.mxu0 0.0
        %1863 = vmatprep.subr.mxu0 0.0
        %1864 = vmatpush2.xpose.msra.mxu0 0.0
        %1865 = vmatprep.subr.mxu0 0.0
        %1866 = vmatpush2.xpose.msra.mxu0 0.0
        %1867 = vmatprep.subr.mxu0 0.0
        %1868 = vmatpush2.xpose.msra.mxu0 0.0
        %1869 = vmatprep.subr.mxu0 0.0
        %1870 = vmatpush2.xpose.msra.mxu0 0.0
        %1871 = vmatprep.subr.mxu0 0.0
        %1872 = vmatpush2.xpose.msra.mxu0 0.0
        %1873 = vmatprep.subr.mxu0 0.0
        %1874 = vmatpush2.xpose.msra.mxu0 0.0
        %1875 = vmatprep.subr.mxu0 0.0
        %1876 = vmatpush2.xpose.msra.mxu0 0.0
        %1877 = vmatprep.mubr.f32.mxu0 0.0
        %1878 = vmatmul.mubr.f32.gmra.mxu0 %v1805
        %v1879 = vpop.f32.mrf.mxu0
        %v1880 = vadd.f32 0.0, %v1879
        %v1881 = vpop.f32.mrf.mxu0
        %1882 = vmatprep.mubr.f32.mxu0 0.0
        %1883 = vmatmul.mubr.f32.gmra.mxu0 %v1807
        %v1884 = vpop.f32.mrf.mxu0
        %v1885 = vadd.f32 0.0, %v1884
        %v1886 = vpop.f32.mrf.mxu0
        %1887 = vdwg.mxu0
        %v1888 = vmul.f32 %v1880, 0.35355338
        %v1889 = vmul.f32 %v1885, 0.35355338
        %v1890 = vadd.f32 %v1888, %v327
        %v1891 = vadd.f32 %v1889, %v328
        %v1892 = vsel %vm543, %v1890, -inf
        %1893 = vmax.xlane.f32.xlu0 %v1892
        %v1894 = vpop.xlane.xlu0 %1893
        %v1895 = vsel %vm543, %v1891, -inf
        %1896 = vmax.xlane.f32.xlu0 %v1895
        %v1897 = vpop.xlane.xlu0 %1896
        %v1898 = vsub.f32 %v1890, %v1894
        %v1899 = vsub.f32 %v1891, %v1897
        %v1900 = vmul.f32 %v1898, 1.442695
        %v1901 = vpow.pop %v1900
        %v1902 = vmul.f32 %v1899, 1.442695
        %v1903 = vpow.pop %v1902
        %v1904 = vsel %vm543, %v1901, 0.0
        %1905 = vadd.xlane.f32.xlu0 %v1904
        %v1906 = vpop.xlane.xlu0 %1905
        %v1907 = vsel %vm543, %v1903, 0.0
        %1908 = vadd.xlane.f32.xlu0 %v1907
        %v1909 = vpop.xlane.xlu0 %1908
        %v1910 = vrcp.pop %v1906
        %v1911 = vmul.f32 %v1901, %v1910
        %v1912 = vrcp.pop %v1909
        %v1913 = vmul.f32 %v1903, %v1912
        %1914 = vrot.lane.b32.xlu0 %v1589, 88
        %v1915 = vpop.permute.xlu0 %1914
        %1916 = vrot.lane.b32.xlu0 %v1594, 88
        %v1917 = vpop.permute.xlu0 %1916
        %v1921 = vsel %vm543, %v1911, 0
        %v1924 = vsel %vm543, %v1913, 0
        %1926 = vmatprep.subr.mxu0 0.0
        %1927 = vmatpush1.msra.mxu0 0.0
        %1928 = vmatprep.subr.mxu0 0.0
        %1929 = vmatpush1.msra.mxu0 0.0
        %1930 = vmatprep.subr.mxu0 0.0
        %1931 = vmatpush1.msra.mxu0 0.0
        %1932 = vmatprep.subr.mxu0 0.0
        %1933 = vmatpush1.msra.mxu0 0.0
        %1934 = vmatprep.subr.mxu0 0.0
        %1935 = vmatpush1.msra.mxu0 0.0
        %1936 = vmatprep.subr.mxu0 0.0
        %1937 = vmatpush1.msra.mxu0 0.0
        %1938 = vmatprep.subr.mxu0 0.0
        %1939 = vmatpush1.msra.mxu0 0.0
        %1940 = vmatprep.subr.mxu0 0.0
        %1941 = vmatpush1.msra.mxu0 0.0
        %1942 = vmatprep.subr.mxu0 0.0
        %1943 = vmatpush1.msra.mxu0 0.0
        %1944 = vmatprep.subr.mxu0 0.0
        %1945 = vmatpush1.msra.mxu0 0.0
        %1946 = vmatprep.subr.mxu0 0.0
        %1947 = vmatpush1.msra.mxu0 0.0
        %1948 = vmatprep.subr.mxu0 0.0
        %1949 = vmatpush1.msra.mxu0 0.0
        %1950 = vmatprep.subr.mxu0 0.0
        %1951 = vmatpush1.msra.mxu0 0.0
        %1952 = vmatprep.subr.mxu0 0.0
        %1953 = vmatpush1.msra.mxu0 0.0
        %1954 = vmatprep.subr.mxu0 0.0
        %1955 = vmatpush1.msra.mxu0 %v1917
        %1956 = vmatprep.subr.mxu0 0.0
        %1957 = vmatpush1.msra.mxu0 %v1915
        %1958 = vmatprep.subr.mxu0 0.0
        %1959 = vmatpush2.msra.mxu0 0.0
        %1960 = vmatprep.subr.mxu0 0.0
        %1961 = vmatpush2.msra.mxu0 0.0
        %1962 = vmatprep.subr.mxu0 0.0
        %1963 = vmatpush2.msra.mxu0 0.0
        %1964 = vmatprep.subr.mxu0 0.0
        %1965 = vmatpush2.msra.mxu0 0.0
        %1966 = vmatprep.subr.mxu0 0.0
        %1967 = vmatpush2.msra.mxu0 0.0
        %1968 = vmatprep.subr.mxu0 0.0
        %1969 = vmatpush2.msra.mxu0 0.0
        %1970 = vmatprep.subr.mxu0 0.0
        %1971 = vmatpush2.msra.mxu0 0.0
        %1972 = vmatprep.subr.mxu0 0.0
        %1973 = vmatpush2.msra.mxu0 0.0
        %1974 = vmatprep.subr.mxu0 0.0
        %1975 = vmatpush2.msra.mxu0 0.0
        %1976 = vmatprep.subr.mxu0 0.0
        %1977 = vmatpush2.msra.mxu0 0.0
        %1978 = vmatprep.subr.mxu0 0.0
        %1979 = vmatpush2.msra.mxu0 0.0
        %1980 = vmatprep.subr.mxu0 0.0
        %1981 = vmatpush2.msra.mxu0 0.0
        %1982 = vmatprep.subr.mxu0 0.0
        %1983 = vmatpush2.msra.mxu0 0.0
        %1984 = vmatprep.subr.mxu0 0.0
        %1985 = vmatpush2.msra.mxu0 0.0
        %1986 = vmatprep.subr.mxu0 0.0
        %1987 = vmatpush2.msra.mxu0 0.0
        %1988 = vmatprep.subr.mxu0 0.0
        %1989 = vmatpush2.msra.mxu0 0.0
        %1990 = vmatprep.mubr.f32.mxu0 0.0
        %1991 = vmatmul.mubr.f32.gmra.mxu0 %v1921
        %v1992 = vpop.f32.mrf.mxu0
        %v1993 = vadd.f32 0.0, %v1992
        %v1994 = vpop.f32.mrf.mxu0
        %1995 = vmatprep.mubr.f32.mxu0 0.0
        %1996 = vmatmul.mubr.f32.gmra.mxu0 %v1924
        %v1997 = vpop.f32.mrf.mxu0
        %v1998 = vadd.f32 0.0, %v1997
        %v1999 = vpop.f32.mrf.mxu0
        %2000 = vdwg.mxu0
        %2001 = vrot.lane.b32.xlu0 %v1488, 112
        %v2002 = vpop.permute.xlu0 %2001
        %2003 = vrot.lane.b32.xlu0 %v1493, 112
        %v2004 = vpop.permute.xlu0 %2003
        %2005 = vrot.lane.b32.xlu0 %v1589, 112
        %v2006 = vpop.permute.xlu0 %2005
        %2007 = vrot.lane.b32.xlu0 %v1594, 112
        %v2008 = vpop.permute.xlu0 %2007
        %v2009 = vsel %vm457, %v2002, 0
        %v2011 = vsel %vm457, %v2004, 0
        %v2013 = vsel %vm457, %v2006, 0
        %v2015 = vsel %vm457, %v2008, 0
        %2017 = vmatprep.subr.mxu0 0.0
        %2018 = vmatpush1.xpose.msra.mxu0 0.0
        %2019 = vmatprep.subr.mxu0 0.0
        %2020 = vmatpush1.xpose.msra.mxu0 0.0
        %2021 = vmatprep.subr.mxu0 0.0
        %2022 = vmatpush1.xpose.msra.mxu0 0.0
        %2023 = vmatprep.subr.mxu0 0.0
        %2024 = vmatpush1.xpose.msra.mxu0 0.0
        %2025 = vmatprep.subr.mxu0 0.0
        %2026 = vmatpush1.xpose.msra.mxu0 0.0
        %2027 = vmatprep.subr.mxu0 0.0
        %2028 = vmatpush1.xpose.msra.mxu0 0.0
        %2029 = vmatprep.subr.mxu0 0.0
        %2030 = vmatpush1.xpose.msra.mxu0 0.0
        %2031 = vmatprep.subr.mxu0 0.0
        %2032 = vmatpush1.xpose.msra.mxu0 0.0
        %2033 = vmatprep.subr.mxu0 0.0
        %2034 = vmatpush1.xpose.msra.mxu0 0.0
        %2035 = vmatprep.subr.mxu0 0.0
        %2036 = vmatpush1.xpose.msra.mxu0 0.0
        %2037 = vmatprep.subr.mxu0 0.0
        %2038 = vmatpush1.xpose.msra.mxu0 0.0
        %2039 = vmatprep.subr.mxu0 0.0
        %2040 = vmatpush1.xpose.msra.mxu0 0.0
        %2041 = vmatprep.subr.mxu0 0.0
        %2042 = vmatpush1.xpose.msra.mxu0 0.0
        %2043 = vmatprep.subr.mxu0 0.0
        %2044 = vmatpush1.xpose.msra.mxu0 0.0
        %2045 = vmatprep.subr.mxu0 0.0
        %2046 = vmatpush1.xpose.msra.mxu0 %v2015
        %2047 = vmatprep.subr.mxu0 0.0
        %2048 = vmatpush1.xpose.msra.mxu0 %v2013
        %2049 = vmatprep.subr.mxu0 0.0
        %2050 = vmatpush2.xpose.msra.mxu0 0.0
        %2051 = vmatprep.subr.mxu0 0.0
        %2052 = vmatpush2.xpose.msra.mxu0 0.0
        %2053 = vmatprep.subr.mxu0 0.0
        %2054 = vmatpush2.xpose.msra.mxu0 0.0
        %2055 = vmatprep.subr.mxu0 0.0
        %2056 = vmatpush2.xpose.msra.mxu0 0.0
        %2057 = vmatprep.subr.mxu0 0.0
        %2058 = vmatpush2.xpose.msra.mxu0 0.0
        %2059 = vmatprep.subr.mxu0 0.0
        %2060 = vmatpush2.xpose.msra.mxu0 0.0
        %2061 = vmatprep.subr.mxu0 0.0
        %2062 = vmatpush2.xpose.msra.mxu0 0.0
        %2063 = vmatprep.subr.mxu0 0.0
        %2064 = vmatpush2.xpose.msra.mxu0 0.0
        %2065 = vmatprep.subr.mxu0 0.0
        %2066 = vmatpush2.xpose.msra.mxu0 0.0
        %2067 = vmatprep.subr.mxu0 0.0
        %2068 = vmatpush2.xpose.msra.mxu0 0.0
        %2069 = vmatprep.subr.mxu0 0.0
        %2070 = vmatpush2.xpose.msra.mxu0 0.0
        %2071 = vmatprep.subr.mxu0 0.0
        %2072 = vmatpush2.xpose.msra.mxu0 0.0
        %2073 = vmatprep.subr.mxu0 0.0
        %2074 = vmatpush2.xpose.msra.mxu0 0.0
        %2075 = vmatprep.subr.mxu0 0.0
        %2076 = vmatpush2.xpose.msra.mxu0 0.0
        %2077 = vmatprep.subr.mxu0 0.0
        %2078 = vmatpush2.xpose.msra.mxu0 0.0
        %2079 = vmatprep.subr.mxu0 0.0
        %2080 = vmatpush2.xpose.msra.mxu0 0.0
        %2081 = vmatprep.mubr.f32.mxu0 0.0
        %2082 = vmatmul.mubr.f32.gmra.mxu0 %v2009
        %v2083 = vpop.f32.mrf.mxu0
        %v2084 = vadd.f32 0.0, %v2083
        %v2085 = vpop.f32.mrf.mxu0
        %2086 = vmatprep.mubr.f32.mxu0 0.0
        %2087 = vmatmul.mubr.f32.gmra.mxu0 %v2011
        %v2088 = vpop.f32.mrf.mxu0
        %v2089 = vadd.f32 0.0, %v2088
        %v2090 = vpop.f32.mrf.mxu0
        %2091 = vdwg.mxu0
        %v2092 = vmul.f32 %v2084, 0.35355338
        %v2093 = vmul.f32 %v2089, 0.35355338
        %v2094 = vadd.f32 %v2092, %v327
        %v2095 = vadd.f32 %v2093, %v328
        %v2096 = vsel %vm543, %v2094, -inf
        %2097 = vmax.xlane.f32.xlu0 %v2096
        %v2098 = vpop.xlane.xlu0 %2097
        %v2099 = vsel %vm543, %v2095, -inf
        %2100 = vmax.xlane.f32.xlu0 %v2099
        %v2101 = vpop.xlane.xlu0 %2100
        %v2102 = vsub.f32 %v2094, %v2098
        %v2103 = vsub.f32 %v2095, %v2101
        %v2104 = vmul.f32 %v2102, 1.442695
        %v2105 = vpow.pop %v2104
        %v2106 = vmul.f32 %v2103, 1.442695
        %v2107 = vpow.pop %v2106
        %v2108 = vsel %vm543, %v2105, 0.0
        %2109 = vadd.xlane.f32.xlu0 %v2108
        %v2110 = vpop.xlane.xlu0 %2109
        %v2111 = vsel %vm543, %v2107, 0.0
        %2112 = vadd.xlane.f32.xlu0 %v2111
        %v2113 = vpop.xlane.xlu0 %2112
        %v2114 = vrcp.pop %v2110
        %v2115 = vmul.f32 %v2105, %v2114
        %v2116 = vrcp.pop %v2113
        %v2117 = vmul.f32 %v2107, %v2116
        %2118 = vrot.lane.b32.xlu0 %v1589, 80
        %v2119 = vpop.permute.xlu0 %2118
        %2120 = vrot.lane.b32.xlu0 %v1594, 80
        %v2121 = vpop.permute.xlu0 %2120
        %v2125 = vsel %vm543, %v2115, 0
        %v2128 = vsel %vm543, %v2117, 0
        %2130 = vmatprep.subr.mxu0 0.0
        %2131 = vmatpush1.msra.mxu0 0.0
        %2132 = vmatprep.subr.mxu0 0.0
        %2133 = vmatpush1.msra.mxu0 0.0
        %2134 = vmatprep.subr.mxu0 0.0
        %2135 = vmatpush1.msra.mxu0 0.0
        %2136 = vmatprep.subr.mxu0 0.0
        %2137 = vmatpush1.msra.mxu0 0.0
        %2138 = vmatprep.subr.mxu0 0.0
        %2139 = vmatpush1.msra.mxu0 0.0
        %2140 = vmatprep.subr.mxu0 0.0
        %2141 = vmatpush1.msra.mxu0 0.0
        %2142 = vmatprep.subr.mxu0 0.0
        %2143 = vmatpush1.msra.mxu0 0.0
        %2144 = vmatprep.subr.mxu0 0.0
        %2145 = vmatpush1.msra.mxu0 0.0
        %2146 = vmatprep.subr.mxu0 0.0
        %2147 = vmatpush1.msra.mxu0 0.0
        %2148 = vmatprep.subr.mxu0 0.0
        %2149 = vmatpush1.msra.mxu0 0.0
        %2150 = vmatprep.subr.mxu0 0.0
        %2151 = vmatpush1.msra.mxu0 0.0
        %2152 = vmatprep.subr.mxu0 0.0
        %2153 = vmatpush1.msra.mxu0 0.0
        %2154 = vmatprep.subr.mxu0 0.0
        %2155 = vmatpush1.msra.mxu0 0.0
        %2156 = vmatprep.subr.mxu0 0.0
        %2157 = vmatpush1.msra.mxu0 0.0
        %2158 = vmatprep.subr.mxu0 0.0
        %2159 = vmatpush1.msra.mxu0 %v2121
        %2160 = vmatprep.subr.mxu0 0.0
        %2161 = vmatpush1.msra.mxu0 %v2119
        %2162 = vmatprep.subr.mxu0 0.0
        %2163 = vmatpush2.msra.mxu0 0.0
        %2164 = vmatprep.subr.mxu0 0.0
        %2165 = vmatpush2.msra.mxu0 0.0
        %2166 = vmatprep.subr.mxu0 0.0
        %2167 = vmatpush2.msra.mxu0 0.0
        %2168 = vmatprep.subr.mxu0 0.0
        %2169 = vmatpush2.msra.mxu0 0.0
        %2170 = vmatprep.subr.mxu0 0.0
        %2171 = vmatpush2.msra.mxu0 0.0
        %2172 = vmatprep.subr.mxu0 0.0
        %2173 = vmatpush2.msra.mxu0 0.0
        %2174 = vmatprep.subr.mxu0 0.0
        %2175 = vmatpush2.msra.mxu0 0.0
        %2176 = vmatprep.subr.mxu0 0.0
        %2177 = vmatpush2.msra.mxu0 0.0
        %2178 = vmatprep.subr.mxu0 0.0
        %2179 = vmatpush2.msra.mxu0 0.0
        %2180 = vmatprep.subr.mxu0 0.0
        %2181 = vmatpush2.msra.mxu0 0.0
        %2182 = vmatprep.subr.mxu0 0.0
        %2183 = vmatpush2.msra.mxu0 0.0
        %2184 = vmatprep.subr.mxu0 0.0
        %2185 = vmatpush2.msra.mxu0 0.0
        %2186 = vmatprep.subr.mxu0 0.0
        %2187 = vmatpush2.msra.mxu0 0.0
        %2188 = vmatprep.subr.mxu0 0.0
        %2189 = vmatpush2.msra.mxu0 0.0
        %2190 = vmatprep.subr.mxu0 0.0
        %2191 = vmatpush2.msra.mxu0 0.0
        %2192 = vmatprep.subr.mxu0 0.0
        %2193 = vmatpush2.msra.mxu0 0.0
        %2194 = vmatprep.mubr.f32.mxu0 0.0
        %2195 = vmatmul.mubr.f32.gmra.mxu0 %v2125
        %v2196 = vpop.f32.mrf.mxu0
        %v2197 = vadd.f32 0.0, %v2196
        %v2198 = vpop.f32.mrf.mxu0
        %2199 = vmatprep.mubr.f32.mxu0 0.0
        %2200 = vmatmul.mubr.f32.gmra.mxu0 %v2128
        %v2201 = vpop.f32.mrf.mxu0
        %v2202 = vadd.f32 0.0, %v2201
        %v2203 = vpop.f32.mrf.mxu0
        %2204 = vdwg.mxu0
        %2205 = vrot.lane.b32.xlu0 %v1488, 104
        %v2206 = vpop.permute.xlu0 %2205
        %2207 = vrot.lane.b32.xlu0 %v1493, 104
        %v2208 = vpop.permute.xlu0 %2207
        %2209 = vrot.lane.b32.xlu0 %v1589, 104
        %v2210 = vpop.permute.xlu0 %2209
        %2211 = vrot.lane.b32.xlu0 %v1594, 104
        %v2212 = vpop.permute.xlu0 %2211
        %v2213 = vsel %vm457, %v2206, 0
        %v2215 = vsel %vm457, %v2208, 0
        %v2217 = vsel %vm457, %v2210, 0
        %v2219 = vsel %vm457, %v2212, 0
        %2221 = vmatprep.subr.mxu0 0.0
        %2222 = vmatpush1.xpose.msra.mxu0 0.0
        %2223 = vmatprep.subr.mxu0 0.0
        %2224 = vmatpush1.xpose.msra.mxu0 0.0
        %2225 = vmatprep.subr.mxu0 0.0
        %2226 = vmatpush1.xpose.msra.mxu0 0.0
        %2227 = vmatprep.subr.mxu0 0.0
        %2228 = vmatpush1.xpose.msra.mxu0 0.0
        %2229 = vmatprep.subr.mxu0 0.0
        %2230 = vmatpush1.xpose.msra.mxu0 0.0
        %2231 = vmatprep.subr.mxu0 0.0
        %2232 = vmatpush1.xpose.msra.mxu0 0.0
        %2233 = vmatprep.subr.mxu0 0.0
        %2234 = vmatpush1.xpose.msra.mxu0 0.0
        %2235 = vmatprep.subr.mxu0 0.0
        %2236 = vmatpush1.xpose.msra.mxu0 0.0
        %2237 = vmatprep.subr.mxu0 0.0
        %2238 = vmatpush1.xpose.msra.mxu0 0.0
        %2239 = vmatprep.subr.mxu0 0.0
        %2240 = vmatpush1.xpose.msra.mxu0 0.0
        %2241 = vmatprep.subr.mxu0 0.0
        %2242 = vmatpush1.xpose.msra.mxu0 0.0
        %2243 = vmatprep.subr.mxu0 0.0
        %2244 = vmatpush1.xpose.msra.mxu0 0.0
        %2245 = vmatprep.subr.mxu0 0.0
        %2246 = vmatpush1.xpose.msra.mxu0 0.0
        %2247 = vmatprep.subr.mxu0 0.0
        %2248 = vmatpush1.xpose.msra.mxu0 0.0
        %2249 = vmatprep.subr.mxu0 0.0
        %2250 = vmatpush1.xpose.msra.mxu0 %v2219
        %2251 = vmatprep.subr.mxu0 0.0
        %2252 = vmatpush1.xpose.msra.mxu0 %v2217
        %2253 = vmatprep.subr.mxu0 0.0
        %2254 = vmatpush2.xpose.msra.mxu0 0.0
        %2255 = vmatprep.subr.mxu0 0.0
        %2256 = vmatpush2.xpose.msra.mxu0 0.0
        %2257 = vmatprep.subr.mxu0 0.0
        %2258 = vmatpush2.xpose.msra.mxu0 0.0
        %2259 = vmatprep.subr.mxu0 0.0
        %2260 = vmatpush2.xpose.msra.mxu0 0.0
        %2261 = vmatprep.subr.mxu0 0.0
        %2262 = vmatpush2.xpose.msra.mxu0 0.0
        %2263 = vmatprep.subr.mxu0 0.0
        %2264 = vmatpush2.xpose.msra.mxu0 0.0
        %2265 = vmatprep.subr.mxu0 0.0
        %2266 = vmatpush2.xpose.msra.mxu0 0.0
        %2267 = vmatprep.subr.mxu0 0.0
        %2268 = vmatpush2.xpose.msra.mxu0 0.0
        %2269 = vmatprep.subr.mxu0 0.0
        %2270 = vmatpush2.xpose.msra.mxu0 0.0
        %2271 = vmatprep.subr.mxu0 0.0
        %2272 = vmatpush2.xpose.msra.mxu0 0.0
        %2273 = vmatprep.subr.mxu0 0.0
        %2274 = vmatpush2.xpose.msra.mxu0 0.0
        %2275 = vmatprep.subr.mxu0 0.0
        %2276 = vmatpush2.xpose.msra.mxu0 0.0
        %2277 = vmatprep.subr.mxu0 0.0
        %2278 = vmatpush2.xpose.msra.mxu0 0.0
        %2279 = vmatprep.subr.mxu0 0.0
        %2280 = vmatpush2.xpose.msra.mxu0 0.0
        %2281 = vmatprep.subr.mxu0 0.0
        %2282 = vmatpush2.xpose.msra.mxu0 0.0
        %2283 = vmatprep.subr.mxu0 0.0
        %2284 = vmatpush2.xpose.msra.mxu0 0.0
        %2285 = vmatprep.mubr.f32.mxu0 0.0
        %2286 = vmatmul.mubr.f32.gmra.mxu0 %v2213
        %v2287 = vpop.f32.mrf.mxu0
        %v2288 = vadd.f32 0.0, %v2287
        %v2289 = vpop.f32.mrf.mxu0
        %2290 = vmatprep.mubr.f32.mxu0 0.0
        %2291 = vmatmul.mubr.f32.gmra.mxu0 %v2215
        %v2292 = vpop.f32.mrf.mxu0
        %v2293 = vadd.f32 0.0, %v2292
        %v2294 = vpop.f32.mrf.mxu0
        %2295 = vdwg.mxu0
        %v2296 = vmul.f32 %v2288, 0.35355338
        %v2297 = vmul.f32 %v2293, 0.35355338
        %v2298 = vadd.f32 %v2296, %v327
        %v2299 = vadd.f32 %v2297, %v328
        %v2300 = vsel %vm543, %v2298, -inf
        %2301 = vmax.xlane.f32.xlu0 %v2300
        %v2302 = vpop.xlane.xlu0 %2301
        %v2303 = vsel %vm543, %v2299, -inf
        %2304 = vmax.xlane.f32.xlu0 %v2303
        %v2305 = vpop.xlane.xlu0 %2304
        %v2306 = vsub.f32 %v2298, %v2302
        %v2307 = vsub.f32 %v2299, %v2305
        %v2308 = vmul.f32 %v2306, 1.442695
        %v2309 = vpow.pop %v2308
        %v2310 = vmul.f32 %v2307, 1.442695
        %v2311 = vpow.pop %v2310
        %v2312 = vsel %vm543, %v2309, 0.0
        %2313 = vadd.xlane.f32.xlu0 %v2312
        %v2314 = vpop.xlane.xlu0 %2313
        %v2315 = vsel %vm543, %v2311, 0.0
        %2316 = vadd.xlane.f32.xlu0 %v2315
        %v2317 = vpop.xlane.xlu0 %2316
        %v2318 = vrcp.pop %v2314
        %v2319 = vmul.f32 %v2309, %v2318
        %v2320 = vrcp.pop %v2317
        %v2321 = vmul.f32 %v2311, %v2320
        %2322 = vrot.lane.b32.xlu0 %v1589, 72
        %v2323 = vpop.permute.xlu0 %2322
        %2324 = vrot.lane.b32.xlu0 %v1594, 72
        %v2325 = vpop.permute.xlu0 %2324
        %v2329 = vsel %vm543, %v2319, 0
        %v2332 = vsel %vm543, %v2321, 0
        %2334 = vmatprep.subr.mxu0 0.0
        %2335 = vmatpush1.msra.mxu0 0.0
        %2336 = vmatprep.subr.mxu0 0.0
        %2337 = vmatpush1.msra.mxu0 0.0
        %2338 = vmatprep.subr.mxu0 0.0
        %2339 = vmatpush1.msra.mxu0 0.0
        %2340 = vmatprep.subr.mxu0 0.0
        %2341 = vmatpush1.msra.mxu0 0.0
        %2342 = vmatprep.subr.mxu0 0.0
        %2343 = vmatpush1.msra.mxu0 0.0
        %2344 = vmatprep.subr.mxu0 0.0
        %2345 = vmatpush1.msra.mxu0 0.0
        %2346 = vmatprep.subr.mxu0 0.0
        %2347 = vmatpush1.msra.mxu0 0.0
        %2348 = vmatprep.subr.mxu0 0.0
        %2349 = vmatpush1.msra.mxu0 0.0
        %2350 = vmatprep.subr.mxu0 0.0
        %2351 = vmatpush1.msra.mxu0 0.0
        %2352 = vmatprep.subr.mxu0 0.0
        %2353 = vmatpush1.msra.mxu0 0.0
        %2354 = vmatprep.subr.mxu0 0.0
        %2355 = vmatpush1.msra.mxu0 0.0
        %2356 = vmatprep.subr.mxu0 0.0
        %2357 = vmatpush1.msra.mxu0 0.0
        %2358 = vmatprep.subr.mxu0 0.0
        %2359 = vmatpush1.msra.mxu0 0.0
        %2360 = vmatprep.subr.mxu0 0.0
        %2361 = vmatpush1.msra.mxu0 0.0
        %2362 = vmatprep.subr.mxu0 0.0
        %2363 = vmatpush1.msra.mxu0 %v2325
        %2364 = vmatprep.subr.mxu0 0.0
        %2365 = vmatpush1.msra.mxu0 %v2323
        %2366 = vmatprep.subr.mxu0 0.0
        %2367 = vmatpush2.msra.mxu0 0.0
        %2368 = vmatprep.subr.mxu0 0.0
        %2369 = vmatpush2.msra.mxu0 0.0
        %2370 = vmatprep.subr.mxu0 0.0
        %2371 = vmatpush2.msra.mxu0 0.0
        %2372 = vmatprep.subr.mxu0 0.0
        %2373 = vmatpush2.msra.mxu0 0.0
        %2374 = vmatprep.subr.mxu0 0.0
        %2375 = vmatpush2.msra.mxu0 0.0
        %2376 = vmatprep.subr.mxu0 0.0
        %2377 = vmatpush2.msra.mxu0 0.0
        %2378 = vmatprep.subr.mxu0 0.0
        %2379 = vmatpush2.msra.mxu0 0.0
        %2380 = vmatprep.subr.mxu0 0.0
        %2381 = vmatpush2.msra.mxu0 0.0
        %2382 = vmatprep.subr.mxu0 0.0
        %2383 = vmatpush2.msra.mxu0 0.0
        %2384 = vmatprep.subr.mxu0 0.0
        %2385 = vmatpush2.msra.mxu0 0.0
        %2386 = vmatprep.subr.mxu0 0.0
        %2387 = vmatpush2.msra.mxu0 0.0
        %2388 = vmatprep.subr.mxu0 0.0
        %2389 = vmatpush2.msra.mxu0 0.0
        %2390 = vmatprep.subr.mxu0 0.0
        %2391 = vmatpush2.msra.mxu0 0.0
        %2392 = vmatprep.subr.mxu0 0.0
        %2393 = vmatpush2.msra.mxu0 0.0
        %2394 = vmatprep.subr.mxu0 0.0
        %2395 = vmatpush2.msra.mxu0 0.0
        %2396 = vmatprep.subr.mxu0 0.0
        %2397 = vmatpush2.msra.mxu0 0.0
        %2398 = vmatprep.mubr.f32.mxu0 0.0
        %2399 = vmatmul.mubr.f32.gmra.mxu0 %v2329
        %v2400 = vpop.f32.mrf.mxu0
        %v2401 = vadd.f32 0.0, %v2400
        %v2402 = vpop.f32.mrf.mxu0
        %2403 = vmatprep.mubr.f32.mxu0 0.0
        %2404 = vmatmul.mubr.f32.gmra.mxu0 %v2332
        %v2405 = vpop.f32.mrf.mxu0
        %v2406 = vadd.f32 0.0, %v2405
        %v2407 = vpop.f32.mrf.mxu0
        %2408 = vdwg.mxu0
        %2411 = vrot.lane.b32.xlu0 %v1993, 8
        %v2412 = vpop.permute.xlu0 %2411
        %2413 = vrot.lane.b32.xlu0 %v1998, 8
        %v2414 = vpop.permute.xlu0 %2413
        %2419 = vrot.lane.b32.xlu0 %v2197, 16
        %v2420 = vpop.permute.xlu0 %2419
        %2421 = vrot.lane.b32.xlu0 %v2202, 16
        %v2422 = vpop.permute.xlu0 %2421
        %2427 = vrot.lane.b32.xlu0 %v2401, 24
        %v2428 = vpop.permute.xlu0 %2427
        %2429 = vrot.lane.b32.xlu0 %v2406, 24
        %v2430 = vpop.permute.xlu0 %2429
        %v2433 = vsel %vm457, %v1789, %v2412
        %v2434 = vsel %vm457, %v1794, %v2414
        %v2435 = vsel %vm543, %v2433, %v2420
        %v2436 = vsel %vm543, %v2434, %v2422
        %v2437 = vsel %vm1287, %v2435, %v2428
        %v2438 = vsel %vm1287, %v2436, %v2430
        %v2439 = vld [vmem:[#allocation2 + $0x140] sm:$0xff]
        %v2440 = vld [vmem:[#allocation2 + $0x150] sm:$0xff]
        %v2441 = vld [vmem:[#allocation2 + $0x160] sm:$0xff]
        %v2442 = vld [vmem:[#allocation2 + $0x170] sm:$0xff]
        %v2443 = vld [vmem:[#allocation5 + $0x27] ss:$0 sm:$0xff]
        %v2445 = vsel %vm333, %v2437, 0
        %v2448 = vsel %vm333, %v2438, 0
        %2450 = vmatprep.subr.mxu0 0.0
        %2451 = vmatpush1.msra.mxu0 0.0
        %2452 = vmatprep.subr.mxu0 0.0
        %2453 = vmatpush1.msra.mxu0 0.0
        %2454 = vmatprep.subr.mxu0 0.0
        %2455 = vmatpush1.msra.mxu0 0.0
        %2456 = vmatprep.subr.mxu0 0.0
        %2457 = vmatpush1.msra.mxu0 0.0
        %2458 = vmatprep.subr.mxu0 0.0
        %2459 = vmatpush1.msra.mxu0 0.0
        %2460 = vmatprep.subr.mxu0 0.0
        %2461 = vmatpush1.msra.mxu0 0.0
        %2462 = vmatprep.subr.mxu0 0.0
        %2463 = vmatpush1.msra.mxu0 0.0
        %2464 = vmatprep.subr.mxu0 0.0
        %2465 = vmatpush1.msra.mxu0 0.0
        %2466 = vmatprep.subr.mxu0 0.0
        %2467 = vmatpush1.msra.mxu0 0.0
        %2468 = vmatprep.subr.mxu0 0.0
        %2469 = vmatpush1.msra.mxu0 0.0
        %2470 = vmatprep.subr.mxu0 0.0
        %2471 = vmatpush1.msra.mxu0 0.0
        %2472 = vmatprep.subr.mxu0 0.0
        %2473 = vmatpush1.msra.mxu0 0.0
        %2474 = vmatprep.subr.mxu0 0.0
        %2475 = vmatpush1.msra.mxu0 %v2442
        %2476 = vmatprep.subr.mxu0 0.0
        %2477 = vmatpush1.msra.mxu0 %v2441
        %2478 = vmatprep.subr.mxu0 0.0
        %2479 = vmatpush1.msra.mxu0 %v2440
        %2480 = vmatprep.subr.mxu0 0.0
        %2481 = vmatpush1.msra.mxu0 %v2439
        %2482 = vmatprep.subr.mxu0 0.0
        %2483 = vmatpush2.msra.mxu0 0.0
        %2484 = vmatprep.subr.mxu0 0.0
        %2485 = vmatpush2.msra.mxu0 0.0
        %2486 = vmatprep.subr.mxu0 0.0
        %2487 = vmatpush2.msra.mxu0 0.0
        %2488 = vmatprep.subr.mxu0 0.0
        %2489 = vmatpush2.msra.mxu0 0.0
        %2490 = vmatprep.subr.mxu0 0.0
        %2491 = vmatpush2.msra.mxu0 0.0
        %2492 = vmatprep.subr.mxu0 0.0
        %2493 = vmatpush2.msra.mxu0 0.0
        %2494 = vmatprep.subr.mxu0 0.0
        %2495 = vmatpush2.msra.mxu0 0.0
        %2496 = vmatprep.subr.mxu0 0.0
        %2497 = vmatpush2.msra.mxu0 0.0
        %2498 = vmatprep.subr.mxu0 0.0
        %2499 = vmatpush2.msra.mxu0 0.0
        %2500 = vmatprep.subr.mxu0 0.0
        %2501 = vmatpush2.msra.mxu0 0.0
        %2502 = vmatprep.subr.mxu0 0.0
        %2503 = vmatpush2.msra.mxu0 0.0
        %2504 = vmatprep.subr.mxu0 0.0
        %2505 = vmatpush2.msra.mxu0 0.0
        %2506 = vmatprep.subr.mxu0 0.0
        %2507 = vmatpush2.msra.mxu0 0.0
        %2508 = vmatprep.subr.mxu0 0.0
        %2509 = vmatpush2.msra.mxu0 0.0
        %2510 = vmatprep.subr.mxu0 0.0
        %2511 = vmatpush2.msra.mxu0 0.0
        %2512 = vmatprep.subr.mxu0 0.0
        %2513 = vmatpush2.msra.mxu0 0.0
        %2514 = vmatprep.mubr.f32.mxu0 0.0
        %2515 = vmatmul.mubr.f32.gmra.mxu0 %v2445
        %v2516 = vpop.f32.mrf.mxu0
        %v2517 = vadd.f32 %v2443, %v2516
        %v2518 = vpop.f32.mrf.mxu0
        %2519 = vmatprep.mubr.f32.mxu0 0.0
        %2520 = vmatmul.mubr.f32.gmra.mxu0 %v2448
        %v2521 = vpop.f32.mrf.mxu0
        %v2522 = vadd.f32 %v2443, %v2521
        %v2523 = vpop.f32.mrf.mxu0
        %2524 = vdwg.mxu0
        %v2525 = vadd.f32 %v2517, %v1408
        %v2526 = vadd.f32 %v2522, %v1409
        %v2527 = vld [vmem:[#allocation5 + $0x30] ss:$0 sm:$0xff]
        %v2528 = vld [vmem:[#allocation5 + $0x31] ss:$0 sm:$0xff]
        %v2529 = vsel %vm333, %v2525, 0.0
        %2530 = vadd.xlane.f32.xlu0 %v2529
        %v2531 = vpop.xlane.xlu0 %2530
        %v2532 = vsel %vm333, %v2526, 0.0
        %2533 = vadd.xlane.f32.xlu0 %v2532
        %v2534 = vpop.xlane.xlu0 %2533
        %v2535 = vmul.f32 %v2531, %v340
        %v2536 = vmul.f32 %v2534, %v340
        %v2537 = vsub.f32 %v2525, %v2535
        %v2538 = vsub.f32 %v2526, %v2536
        %v2539 = vmul.f32 %v2537, %v2537
        %v2540 = vmul.f32 %v2538, %v2538
        %v2541 = vsel %vm333, %v2539, 0.0
        %2542 = vadd.xlane.f32.xlu0 %v2541
        %v2543 = vpop.xlane.xlu0 %2542
        %v2544 = vsel %vm333, %v2540, 0.0
        %2545 = vadd.xlane.f32.xlu0 %v2544
        %v2546 = vpop.xlane.xlu0 %2545
        %v2547 = vmul.f32 %v2543, %v340
        %v2548 = vmul.f32 %v2546, %v340
        %v2549 = vadd.f32 %v2547, 1e-12
        %v2550 = vadd.f32 %v2548, 1e-12
        %v2551 = vrsqrt.pop %v2549
        %v2552 = vrsqrt.pop %v2550
        %v2553 = vmul.f32 %v2537, %v2551
        %v2554 = vmul.f32 %v2538, %v2552
        %v2555 = vmul.f32 %v2553, %v2527
        %v2556 = vmul.f32 %v2554, %v2527
        %v2557 = vadd.f32 %v2555, %v2528
        %v2558 = vadd.f32 %v2556, %v2528
        %v2559 = vld [vmem:[#allocation2 + $0x200] sm:$0xff]
        %v2560 = vld [vmem:[#allocation2 + $0x210] sm:$0xff]
        %v2561 = vld [vmem:[#allocation2 + $0x220] sm:$0xff]
        %v2562 = vld [vmem:[#allocation2 + $0x230] sm:$0xff]
        %v2563 = vld [vmem:[#allocation5 + $0x42] ss:$0 sm:$0xff]
        %v2565 = vsel %vm333, %v2557, 0
        %v2568 = vsel %vm333, %v2558, 0
        %2570 = vmatprep.subr.mxu0 0.0
        %2571 = vmatpush1.msra.mxu0 0.0
        %2572 = vmatprep.subr.mxu0 0.0
        %2573 = vmatpush1.msra.mxu0 0.0
        %2574 = vmatprep.subr.mxu0 0.0
        %2575 = vmatpush1.msra.mxu0 0.0
        %2576 = vmatprep.subr.mxu0 0.0
        %2577 = vmatpush1.msra.mxu0 0.0
        %2578 = vmatprep.subr.mxu0 0.0
        %2579 = vmatpush1.msra.mxu0 0.0
        %2580 = vmatprep.subr.mxu0 0.0
        %2581 = vmatpush1.msra.mxu0 0.0
        %2582 = vmatprep.subr.mxu0 0.0
        %2583 = vmatpush1.msra.mxu0 0.0
        %2584 = vmatprep.subr.mxu0 0.0
        %2585 = vmatpush1.msra.mxu0 0.0
        %2586 = vmatprep.subr.mxu0 0.0
        %2587 = vmatpush1.msra.mxu0 0.0
        %2588 = vmatprep.subr.mxu0 0.0
        %2589 = vmatpush1.msra.mxu0 0.0
        %2590 = vmatprep.subr.mxu0 0.0
        %2591 = vmatpush1.msra.mxu0 0.0
        %2592 = vmatprep.subr.mxu0 0.0
        %2593 = vmatpush1.msra.mxu0 0.0
        %2594 = vmatprep.subr.mxu0 0.0
        %2595 = vmatpush1.msra.mxu0 %v2562
        %2596 = vmatprep.subr.mxu0 0.0
        %2597 = vmatpush1.msra.mxu0 %v2561
        %2598 = vmatprep.subr.mxu0 0.0
        %2599 = vmatpush1.msra.mxu0 %v2560
        %2600 = vmatprep.subr.mxu0 0.0
        %2601 = vmatpush1.msra.mxu0 %v2559
        %2602 = vmatprep.subr.mxu0 0.0
        %2603 = vmatpush2.msra.mxu0 0.0
        %2604 = vmatprep.subr.mxu0 0.0
        %2605 = vmatpush2.msra.mxu0 0.0
        %2606 = vmatprep.subr.mxu0 0.0
        %2607 = vmatpush2.msra.mxu0 0.0
        %2608 = vmatprep.subr.mxu0 0.0
        %2609 = vmatpush2.msra.mxu0 0.0
        %2610 = vmatprep.subr.mxu0 0.0
        %2611 = vmatpush2.msra.mxu0 0.0
        %2612 = vmatprep.subr.mxu0 0.0
        %2613 = vmatpush2.msra.mxu0 0.0
        %2614 = vmatprep.subr.mxu0 0.0
        %2615 = vmatpush2.msra.mxu0 0.0
        %2616 = vmatprep.subr.mxu0 0.0
        %2617 = vmatpush2.msra.mxu0 0.0
        %2618 = vmatprep.subr.mxu0 0.0
        %2619 = vmatpush2.msra.mxu0 0.0
        %2620 = vmatprep.subr.mxu0 0.0
        %2621 = vmatpush2.msra.mxu0 0.0
        %2622 = vmatprep.subr.mxu0 0.0
        %2623 = vmatpush2.msra.mxu0 0.0
        %2624 = vmatprep.subr.mxu0 0.0
        %2625 = vmatpush2.msra.mxu0 0.0
        %2626 = vmatprep.subr.mxu0 0.0
        %2627 = vmatpush2.msra.mxu0 0.0
        %2628 = vmatprep.subr.mxu0 0.0
        %2629 = vmatpush2.msra.mxu0 0.0
        %2630 = vmatprep.subr.mxu0 0.0
        %2631 = vmatpush2.msra.mxu0 0.0
        %2632 = vmatprep.subr.mxu0 0.0
        %2633 = vmatpush2.msra.mxu0 0.0
        %2634 = vmatprep.mubr.f32.mxu0 0.0
        %2635 = vmatmul.mubr.f32.gmra.mxu0 %v2565
        %v2636 = vpop.f32.mrf.mxu0
        %v2637 = vadd.f32 %v2563, %v2636
        %v2638 = vpop.f32.mrf.mxu0
        %2639 = vmatprep.mubr.f32.mxu0 0.0
        %2640 = vmatmul.mubr.f32.gmra.mxu0 %v2568
        %v2641 = vpop.f32.mrf.mxu0
        %v2642 = vadd.f32 %v2563, %v2641
        %v2643 = vpop.f32.mrf.mxu0
        %2644 = vdwg.mxu0
        %v2645 = vmul.f32 %v2637, 0.5
        %v2646 = vmul.f32 %v2642, 0.5
        %v2647 = vmul.f32 %v2637, 0.70710677
        %v2648 = vmul.f32 %v2642, 0.70710677
        %v2649 = vand.u32 2147483647, %v2647
        %v2650 = vand.u32 2147483647, %v2648
        %v2651 = vmul.f32 %v2649, 0.3275911
        %v2652 = vmul.f32 %v2650, 0.3275911
        %v2653 = vadd.f32 %v2651, 1.0
        %v2654 = vadd.f32 %v2652, 1.0
        %v2655 = vrcp.pop %v2653
        %v2656 = vmul.f32 1.0, %v2655
        %v2657 = vrcp.pop %v2654
        %v2658 = vmul.f32 1.0, %v2657
        %v2659 = vmul.f32 %v2656, 1.0614054
        %v2660 = vmul.f32 %v2658, 1.0614054
        %v2661 = vadd.f32 %v2659, -1.4531521
        %v2662 = vadd.f32 %v2660, -1.4531521
        %v2663 = vmul.f32 %v2656, %v2661
        %v2664 = vmul.f32 %v2658, %v2662
        %v2665 = vadd.f32 %v2663, 1.4214138
        %v2666 = vadd.f32 %v2664, 1.4214138
        %v2667 = vmul.f32 %v2656, %v2665
        %v2668 = vmul.f32 %v2658, %v2666
        %v2669 = vadd.f32 %v2667, -0.28449672
        %v2670 = vadd.f32 %v2668, -0.28449672
        %v2671 = vmul.f32 %v2656, %v2669
        %v2672 = vmul.f32 %v2658, %v2670
        %v2673 = vadd.f32 %v2671, 0.2548296
        %v2674 = vadd.f32 %v2672, 0.2548296
        %v2675 = vmul.f32 %v2656, %v2673
        %v2676 = vmul.f32 %v2658, %v2674
        %v2677 = vsub.f32 0.0, %v2649
        %v2678 = vsub.f32 0.0, %v2650
        %v2679 = vmul.f32 %v2677, %v2649
        %v2680 = vmul.f32 %v2678, %v2650
        %v2681 = vmul.f32 %v2679, 1.442695
        %v2682 = vpow.pop %v2681
        %v2683 = vmul.f32 %v2680, 1.442695
        %v2684 = vpow.pop %v2683
        %v2685 = vmul.f32 %v2675, %v2682
        %v2686 = vmul.f32 %v2676, %v2684
        %v2687 = vsub.f32 1.0, %v2685
        %v2688 = vsub.f32 1.0, %v2686
        %vm2689 = vcmp.lt.f32.partialorder %v2647, 0.0
        %vm2690 = vcmp.lt.f32.partialorder %v2648, 0.0
        %v2691 = vsub.f32 0.0, %v2687
        %v2692 = vsub.f32 0.0, %v2688
        %v2693 = vsel %vm2689, %v2691, %v2687
        %v2694 = vsel %vm2690, %v2692, %v2688
        %v2695 = vadd.f32 %v2693, 1.0
        %v2696 = vadd.f32 %v2694, 1.0
        %v2697 = vmul.f32 %v2645, %v2695
        %v2698 = vmul.f32 %v2646, %v2696
        %v2699 = vld [vmem:[#allocation2 + $0x280] sm:$0xff]
        %v2700 = vld [vmem:[#allocation2 + $0x290] sm:$0xff]
        %v2701 = vld [vmem:[#allocation2 + $0x2a0] sm:$0xff]
        %v2702 = vld [vmem:[#allocation2 + $0x2b0] sm:$0xff]
        %v2703 = vld [vmem:[#allocation2 + $0x2c0] sm:$0xff]
        %v2704 = vld [vmem:[#allocation2 + $0x2d0] sm:$0xff]
        %v2705 = vld [vmem:[#allocation2 + $0x2e0] sm:$0xff]
        %v2706 = vld [vmem:[#allocation2 + $0x2f0] sm:$0xff]
        %v2707 = vld [vmem:[#allocation5 + $0x43] ss:$0 sm:$0xff]
        %vm2708 = vcmask 523264
        %v2710 = vsel %vm2708, %v2697, 0
        %v2713 = vsel %vm2708, %v2698, 0
        %2715 = vmatprep.subr.mxu0 0.0
        %2716 = vmatpush1.msra.mxu0 0.0
        %2717 = vmatprep.subr.mxu0 0.0
        %2718 = vmatpush1.msra.mxu0 0.0
        %2719 = vmatprep.subr.mxu0 0.0
        %2720 = vmatpush1.msra.mxu0 0.0
        %2721 = vmatprep.subr.mxu0 0.0
        %2722 = vmatpush1.msra.mxu0 0.0
        %2723 = vmatprep.subr.mxu0 0.0
        %2724 = vmatpush1.msra.mxu0 0.0
        %2725 = vmatprep.subr.mxu0 0.0
        %2726 = vmatpush1.msra.mxu0 0.0
        %2727 = vmatprep.subr.mxu0 0.0
        %2728 = vmatpush1.msra.mxu0 0.0
        %2729 = vmatprep.subr.mxu0 0.0
        %2730 = vmatpush1.msra.mxu0 0.0
        %2731 = vmatprep.subr.mxu0 0.0
        %2732 = vmatpush1.msra.mxu0 %v2706
        %2733 = vmatprep.subr.mxu0 0.0
        %2734 = vmatpush1.msra.mxu0 %v2705
        %2735 = vmatprep.subr.mxu0 0.0
        %2736 = vmatpush1.msra.mxu0 %v2704
        %2737 = vmatprep.subr.mxu0 0.0
        %2738 = vmatpush1.msra.mxu0 %v2703
        %2739 = vmatprep.subr.mxu0 0.0
        %2740 = vmatpush1.msra.mxu0 %v2702
        %2741 = vmatprep.subr.mxu0 0.0
        %2742 = vmatpush1.msra.mxu0 %v2701
        %2743 = vmatprep.subr.mxu0 0.0
        %2744 = vmatpush1.msra.mxu0 %v2700
        %2745 = vmatprep.subr.mxu0 0.0
        %2746 = vmatpush1.msra.mxu0 %v2699
        %2747 = vmatprep.subr.mxu0 0.0
        %2748 = vmatpush2.msra.mxu0 0.0
        %2749 = vmatprep.subr.mxu0 0.0
        %2750 = vmatpush2.msra.mxu0 0.0
        %2751 = vmatprep.subr.mxu0 0.0
        %2752 = vmatpush2.msra.mxu0 0.0
        %2753 = vmatprep.subr.mxu0 0.0
        %2754 = vmatpush2.msra.mxu0 0.0
        %2755 = vmatprep.subr.mxu0 0.0
        %2756 = vmatpush2.msra.mxu0 0.0
        %2757 = vmatprep.subr.mxu0 0.0
        %2758 = vmatpush2.msra.mxu0 0.0
        %2759 = vmatprep.subr.mxu0 0.0
        %2760 = vmatpush2.msra.mxu0 0.0
        %2761 = vmatprep.subr.mxu0 0.0
        %2762 = vmatpush2.msra.mxu0 0.0
        %2763 = vmatprep.subr.mxu0 0.0
        %2764 = vmatpush2.msra.mxu0 0.0
        %2765 = vmatprep.subr.mxu0 0.0
        %2766 = vmatpush2.msra.mxu0 0.0
        %2767 = vmatprep.subr.mxu0 0.0
        %2768 = vmatpush2.msra.mxu0 0.0
        %2769 = vmatprep.subr.mxu0 0.0
        %2770 = vmatpush2.msra.mxu0 0.0
        %2771 = vmatprep.subr.mxu0 0.0
        %2772 = vmatpush2.msra.mxu0 0.0
        %2773 = vmatprep.subr.mxu0 0.0
        %2774 = vmatpush2.msra.mxu0 0.0
        %2775 = vmatprep.subr.mxu0 0.0
        %2776 = vmatpush2.msra.mxu0 0.0
        %2777 = vmatprep.subr.mxu0 0.0
        %2778 = vmatpush2.msra.mxu0 0.0
        %2779 = vmatprep.mubr.f32.mxu0 0.0
        %2780 = vmatmul.mubr.f32.gmra.mxu0 %v2710
        %v2781 = vpop.f32.mrf.mxu0
        %v2782 = vadd.f32 %v2707, %v2781
        %v2783 = vpop.f32.mrf.mxu0
        %2784 = vmatprep.mubr.f32.mxu0 0.0
        %2785 = vmatmul.mubr.f32.gmra.mxu0 %v2713
        %v2786 = vpop.f32.mrf.mxu0
        %v2787 = vadd.f32 %v2707, %v2786
        %v2788 = vpop.f32.mrf.mxu0
        %2789 = vdwg.mxu0
        %v2790 = vadd.f32 %v2782, %v2557
        %v2791 = vadd.f32 %v2787, %v2558
        %v2792 = vld [vmem:[#allocation5 + $0x44] ss:$0 sm:$0xff]
        %v2793 = vld [vmem:[#allocation5 + $0x45] ss:$0 sm:$0xff]
        %v2794 = vsel %vm333, %v2790, 0.0
        %2795 = vadd.xlane.f32.xlu0 %v2794
        %v2796 = vpop.xlane.xlu0 %2795
        %v2797 = vsel %vm333, %v2791, 0.0
        %2798 = vadd.xlane.f32.xlu0 %v2797
        %v2799 = vpop.xlane.xlu0 %2798
        %v2800 = vmul.f32 %v2796, %v340
        %v2801 = vmul.f32 %v2799, %v340
        %v2802 = vsub.f32 %v2790, %v2800
        %v2803 = vsub.f32 %v2791, %v2801
        %v2804 = vmul.f32 %v2802, %v2802
        %v2805 = vmul.f32 %v2803, %v2803
        %v2806 = vsel %vm333, %v2804, 0.0
        %2807 = vadd.xlane.f32.xlu0 %v2806
        %v2808 = vpop.xlane.xlu0 %2807
        %v2809 = vsel %vm333, %v2805, 0.0
        %2810 = vadd.xlane.f32.xlu0 %v2809
        %v2811 = vpop.xlane.xlu0 %2810
        %v2812 = vmul.f32 %v2808, %v340
        %v2813 = vmul.f32 %v2811, %v340
        %v2814 = vadd.f32 %v2812, 1e-12
        %v2815 = vadd.f32 %v2813, 1e-12
        %v2816 = vrsqrt.pop %v2814
        %v2817 = vrsqrt.pop %v2815
        %v2818 = vmul.f32 %v2802, %v2816
        %v2819 = vmul.f32 %v2803, %v2817
        %v2820 = vmul.f32 %v2818, %v2792
        %v2821 = vmul.f32 %v2819, %v2792
        %v2822 = vadd.f32 %v2820, %v2793
        %v2823 = vadd.f32 %v2821, %v2793
        %v2824 = vld [vmem:[#allocation2 + $0x80] sm:$0xff]
        %v2825 = vld [vmem:[#allocation2 + $0x90] sm:$0xff]
        %v2826 = vld [vmem:[#allocation2 + $0xa0] sm:$0xff]
        %v2827 = vld [vmem:[#allocation2 + $0xb0] sm:$0xff]
        %v2828 = vld [vmem:[#allocation5 + $0x32] ss:$0 sm:$0xff]
        %v2830 = vsel %vm333, %v2822, 0
        %v2833 = vsel %vm333, %v2823, 0
        %2835 = vmatprep.subr.mxu0 0.0
        %2836 = vmatpush1.msra.mxu0 0.0
        %2837 = vmatprep.subr.mxu0 0.0
        %2838 = vmatpush1.msra.mxu0 0.0
        %2839 = vmatprep.subr.mxu0 0.0
        %2840 = vmatpush1.msra.mxu0 0.0
        %2841 = vmatprep.subr.mxu0 0.0
        %2842 = vmatpush1.msra.mxu0 0.0
        %2843 = vmatprep.subr.mxu0 0.0
        %2844 = vmatpush1.msra.mxu0 0.0
        %2845 = vmatprep.subr.mxu0 0.0
        %2846 = vmatpush1.msra.mxu0 0.0
        %2847 = vmatprep.subr.mxu0 0.0
        %2848 = vmatpush1.msra.mxu0 0.0
        %2849 = vmatprep.subr.mxu0 0.0
        %2850 = vmatpush1.msra.mxu0 0.0
        %2851 = vmatprep.subr.mxu0 0.0
        %2852 = vmatpush1.msra.mxu0 0.0
        %2853 = vmatprep.subr.mxu0 0.0
        %2854 = vmatpush1.msra.mxu0 0.0
        %2855 = vmatprep.subr.mxu0 0.0
        %2856 = vmatpush1.msra.mxu0 0.0
        %2857 = vmatprep.subr.mxu0 0.0
        %2858 = vmatpush1.msra.mxu0 0.0
        %2859 = vmatprep.subr.mxu0 0.0
        %2860 = vmatpush1.msra.mxu0 %v2827
        %2861 = vmatprep.subr.mxu0 0.0
        %2862 = vmatpush1.msra.mxu0 %v2826
        %2863 = vmatprep.subr.mxu0 0.0
        %2864 = vmatpush1.msra.mxu0 %v2825
        %2865 = vmatprep.subr.mxu0 0.0
        %2866 = vmatpush1.msra.mxu0 %v2824
        %2867 = vmatprep.subr.mxu0 0.0
        %2868 = vmatpush2.msra.mxu0 0.0
        %2869 = vmatprep.subr.mxu0 0.0
        %2870 = vmatpush2.msra.mxu0 0.0
        %2871 = vmatprep.subr.mxu0 0.0
        %2872 = vmatpush2.msra.mxu0 0.0
        %2873 = vmatprep.subr.mxu0 0.0
        %2874 = vmatpush2.msra.mxu0 0.0
        %2875 = vmatprep.subr.mxu0 0.0
        %2876 = vmatpush2.msra.mxu0 0.0
        %2877 = vmatprep.subr.mxu0 0.0
        %2878 = vmatpush2.msra.mxu0 0.0
        %2879 = vmatprep.subr.mxu0 0.0
        %2880 = vmatpush2.msra.mxu0 0.0
        %2881 = vmatprep.subr.mxu0 0.0
        %2882 = vmatpush2.msra.mxu0 0.0
        %2883 = vmatprep.subr.mxu0 0.0
        %2884 = vmatpush2.msra.mxu0 0.0
        %2885 = vmatprep.subr.mxu0 0.0
        %2886 = vmatpush2.msra.mxu0 0.0
        %2887 = vmatprep.subr.mxu0 0.0
        %2888 = vmatpush2.msra.mxu0 0.0
        %2889 = vmatprep.subr.mxu0 0.0
        %2890 = vmatpush2.msra.mxu0 0.0
        %2891 = vmatprep.subr.mxu0 0.0
        %2892 = vmatpush2.msra.mxu0 0.0
        %2893 = vmatprep.subr.mxu0 0.0
        %2894 = vmatpush2.msra.mxu0 0.0
        %2895 = vmatprep.subr.mxu0 0.0
        %2896 = vmatpush2.msra.mxu0 0.0
        %2897 = vmatprep.subr.mxu0 0.0
        %2898 = vmatpush2.msra.mxu0 0.0
        %2899 = vmatprep.mubr.f32.mxu0 0.0
        %2900 = vmatmul.mubr.f32.gmra.mxu0 %v2830
        %v2901 = vpop.f32.mrf.mxu0
        %v2902 = vadd.f32 %v2828, %v2901
        %v2903 = vpop.f32.mrf.mxu0
        %2904 = vmatprep.mubr.f32.mxu0 0.0
        %2905 = vmatmul.mubr.f32.gmra.mxu0 %v2833
        %v2906 = vpop.f32.mrf.mxu0
        %v2907 = vadd.f32 %v2828, %v2906
        %v2908 = vpop.f32.mrf.mxu0
        %2909 = vdwg.mxu0
        %2912 = vrot.lane.b32.xlu0 %v2902, 96
        %v2913 = vpop.permute.xlu0 %2912
        %2914 = vrot.lane.b32.xlu0 %v2907, 96
        %v2915 = vpop.permute.xlu0 %2914
        %v2916 = vsel %vm457, %v2902, 0
        %v2918 = vsel %vm457, %v2907, 0
        %v2920 = vsel %vm457, %v2913, 0
        %v2922 = vsel %vm457, %v2915, 0
        %2924 = vmatprep.subr.mxu0 0.0
        %2925 = vmatpush1.xpose.msra.mxu0 0.0
        %2926 = vmatprep.subr.mxu0 0.0
        %2927 = vmatpush1.xpose.msra.mxu0 0.0
        %2928 = vmatprep.subr.mxu0 0.0
        %2929 = vmatpush1.xpose.msra.mxu0 0.0
        %2930 = vmatprep.subr.mxu0 0.0
        %2931 = vmatpush1.xpose.msra.mxu0 0.0
        %2932 = vmatprep.subr.mxu0 0.0
        %2933 = vmatpush1.xpose.msra.mxu0 0.0
        %2934 = vmatprep.subr.mxu0 0.0
        %2935 = vmatpush1.xpose.msra.mxu0 0.0
        %2936 = vmatprep.subr.mxu0 0.0
        %2937 = vmatpush1.xpose.msra.mxu0 0.0
        %2938 = vmatprep.subr.mxu0 0.0
        %2939 = vmatpush1.xpose.msra.mxu0 0.0
        %2940 = vmatprep.subr.mxu0 0.0
        %2941 = vmatpush1.xpose.msra.mxu0 0.0
        %2942 = vmatprep.subr.mxu0 0.0
        %2943 = vmatpush1.xpose.msra.mxu0 0.0
        %2944 = vmatprep.subr.mxu0 0.0
        %2945 = vmatpush1.xpose.msra.mxu0 0.0
        %2946 = vmatprep.subr.mxu0 0.0
        %2947 = vmatpush1.xpose.msra.mxu0 0.0
        %2948 = vmatprep.subr.mxu0 0.0
        %2949 = vmatpush1.xpose.msra.mxu0 0.0
        %2950 = vmatprep.subr.mxu0 0.0
        %2951 = vmatpush1.xpose.msra.mxu0 0.0
        %2952 = vmatprep.subr.mxu0 0.0
        %2953 = vmatpush1.xpose.msra.mxu0 %v2922
        %2954 = vmatprep.subr.mxu0 0.0
        %2955 = vmatpush1.xpose.msra.mxu0 %v2920
        %2956 = vmatprep.subr.mxu0 0.0
        %2957 = vmatpush2.xpose.msra.mxu0 0.0
        %2958 = vmatprep.subr.mxu0 0.0
        %2959 = vmatpush2.xpose.msra.mxu0 0.0
        %2960 = vmatprep.subr.mxu0 0.0
        %2961 = vmatpush2.xpose.msra.mxu0 0.0
        %2962 = vmatprep.subr.mxu0 0.0
        %2963 = vmatpush2.xpose.msra.mxu0 0.0
        %2964 = vmatprep.subr.mxu0 0.0
        %2965 = vmatpush2.xpose.msra.mxu0 0.0
        %2966 = vmatprep.subr.mxu0 0.0
        %2967 = vmatpush2.xpose.msra.mxu0 0.0
        %2968 = vmatprep.subr.mxu0 0.0
        %2969 = vmatpush2.xpose.msra.mxu0 0.0
        %2970 = vmatprep.subr.mxu0 0.0
        %2971 = vmatpush2.xpose.msra.mxu0 0.0
        %2972 = vmatprep.subr.mxu0 0.0
        %2973 = vmatpush2.xpose.msra.mxu0 0.0
        %2974 = vmatprep.subr.mxu0 0.0
        %2975 = vmatpush2.xpose.msra.mxu0 0.0
        %2976 = vmatprep.subr.mxu0 0.0
        %2977 = vmatpush2.xpose.msra.mxu0 0.0
        %2978 = vmatprep.subr.mxu0 0.0
        %2979 = vmatpush2.xpose.msra.mxu0 0.0
        %2980 = vmatprep.subr.mxu0 0.0
        %2981 = vmatpush2.xpose.msra.mxu0 0.0
        %2982 = vmatprep.subr.mxu0 0.0
        %2983 = vmatpush2.xpose.msra.mxu0 0.0
        %2984 = vmatprep.subr.mxu0 0.0
        %2985 = vmatpush2.xpose.msra.mxu0 0.0
        %2986 = vmatprep.subr.mxu0 0.0
        %2987 = vmatpush2.xpose.msra.mxu0 0.0
        %2988 = vmatprep.mubr.f32.mxu0 0.0
        %2989 = vmatmul.mubr.f32.gmra.mxu0 %v2916
        %v2990 = vpop.f32.mrf.mxu0
        %v2991 = vadd.f32 0.0, %v2990
        %v2992 = vpop.f32.mrf.mxu0
        %2993 = vmatprep.mubr.f32.mxu0 0.0
        %2994 = vmatmul.mubr.f32.gmra.mxu0 %v2918
        %v2995 = vpop.f32.mrf.mxu0
        %v2996 = vadd.f32 0.0, %v2995
        %v2997 = vpop.f32.mrf.mxu0
        %2998 = vdwg.mxu0
        %v2999 = vmul.f32 %v2991, 0.35355338
        %v3000 = vmul.f32 %v2996, 0.35355338
        %v3001 = vsel %vm543, %v2999, -inf
        %3002 = vmax.xlane.f32.xlu0 %v3001
        %v3003 = vpop.xlane.xlu0 %3002
        %v3004 = vsel %vm543, %v3000, -inf
        %3005 = vmax.xlane.f32.xlu0 %v3004
        %v3006 = vpop.xlane.xlu0 %3005
        %v3007 = vsub.f32 %v2999, %v3003
        %v3008 = vsub.f32 %v3000, %v3006
        %v3009 = vmul.f32 %v3007, 1.442695
        %v3010 = vpow.pop %v3009
        %v3011 = vmul.f32 %v3008, 1.442695
        %v3012 = vpow.pop %v3011
        %v3013 = vsel %vm543, %v3010, 0.0
        %3014 = vadd.xlane.f32.xlu0 %v3013
        %v3015 = vpop.xlane.xlu0 %3014
        %v3016 = vsel %vm543, %v3012, 0.0
        %3017 = vadd.xlane.f32.xlu0 %v3016
        %v3018 = vpop.xlane.xlu0 %3017
        %v3019 = vrcp.pop %v3015
        %v3020 = vmul.f32 %v3010, %v3019
        %v3021 = vrcp.pop %v3018
        %v3022 = vmul.f32 %v3012, %v3021
        %3023 = vrot.lane.b32.xlu0 %v2902, 64
        %v3024 = vpop.permute.xlu0 %3023
        %3025 = vrot.lane.b32.xlu0 %v2907, 64
        %v3026 = vpop.permute.xlu0 %3025
        %v3030 = vsel %vm543, %v3020, 0
        %v3033 = vsel %vm543, %v3022, 0
        %3035 = vmatprep.subr.mxu0 0.0
        %3036 = vmatpush1.msra.mxu0 0.0
        %3037 = vmatprep.subr.mxu0 0.0
        %3038 = vmatpush1.msra.mxu0 0.0
        %3039 = vmatprep.subr.mxu0 0.0
        %3040 = vmatpush1.msra.mxu0 0.0
        %3041 = vmatprep.subr.mxu0 0.0
        %3042 = vmatpush1.msra.mxu0 0.0
        %3043 = vmatprep.subr.mxu0 0.0
        %3044 = vmatpush1.msra.mxu0 0.0
        %3045 = vmatprep.subr.mxu0 0.0
        %3046 = vmatpush1.msra.mxu0 0.0
        %3047 = vmatprep.subr.mxu0 0.0
        %3048 = vmatpush1.msra.mxu0 0.0
        %3049 = vmatprep.subr.mxu0 0.0
        %3050 = vmatpush1.msra.mxu0 0.0
        %3051 = vmatprep.subr.mxu0 0.0
        %3052 = vmatpush1.msra.mxu0 0.0
        %3053 = vmatprep.subr.mxu0 0.0
        %3054 = vmatpush1.msra.mxu0 0.0
        %3055 = vmatprep.subr.mxu0 0.0
        %3056 = vmatpush1.msra.mxu0 0.0
        %3057 = vmatprep.subr.mxu0 0.0
        %3058 = vmatpush1.msra.mxu0 0.0
        %3059 = vmatprep.subr.mxu0 0.0
        %3060 = vmatpush1.msra.mxu0 0.0
        %3061 = vmatprep.subr.mxu0 0.0
        %3062 = vmatpush1.msra.mxu0 0.0
        %3063 = vmatprep.subr.mxu0 0.0
        %3064 = vmatpush1.msra.mxu0 %v3026
        %3065 = vmatprep.subr.mxu0 0.0
        %3066 = vmatpush1.msra.mxu0 %v3024
        %3067 = vmatprep.subr.mxu0 0.0
        %3068 = vmatpush2.msra.mxu0 0.0
        %3069 = vmatprep.subr.mxu0 0.0
        %3070 = vmatpush2.msra.mxu0 0.0
        %3071 = vmatprep.subr.mxu0 0.0
        %3072 = vmatpush2.msra.mxu0 0.0
        %3073 = vmatprep.subr.mxu0 0.0
        %3074 = vmatpush2.msra.mxu0 0.0
        %3075 = vmatprep.subr.mxu0 0.0
        %3076 = vmatpush2.msra.mxu0 0.0
        %3077 = vmatprep.subr.mxu0 0.0
        %3078 = vmatpush2.msra.mxu0 0.0
        %3079 = vmatprep.subr.mxu0 0.0
        %3080 = vmatpush2.msra.mxu0 0.0
        %3081 = vmatprep.subr.mxu0 0.0
        %3082 = vmatpush2.msra.mxu0 0.0
        %3083 = vmatprep.subr.mxu0 0.0
        %3084 = vmatpush2.msra.mxu0 0.0
        %3085 = vmatprep.subr.mxu0 0.0
        %3086 = vmatpush2.msra.mxu0 0.0
        %3087 = vmatprep.subr.mxu0 0.0
        %3088 = vmatpush2.msra.mxu0 0.0
        %3089 = vmatprep.subr.mxu0 0.0
        %3090 = vmatpush2.msra.mxu0 0.0
        %3091 = vmatprep.subr.mxu0 0.0
        %3092 = vmatpush2.msra.mxu0 0.0
        %3093 = vmatprep.subr.mxu0 0.0
        %3094 = vmatpush2.msra.mxu0 0.0
        %3095 = vmatprep.subr.mxu0 0.0
        %3096 = vmatpush2.msra.mxu0 0.0
        %3097 = vmatprep.subr.mxu0 0.0
        %3098 = vmatpush2.msra.mxu0 0.0
        %3099 = vmatprep.mubr.f32.mxu0 0.0
        %3100 = vmatmul.mubr.f32.gmra.mxu0 %v3030
        %v3101 = vpop.f32.mrf.mxu0
        %v3102 = vadd.f32 0.0, %v3101
        %v3103 = vpop.f32.mrf.mxu0
        %3104 = vmatprep.mubr.f32.mxu0 0.0
        %3105 = vmatmul.mubr.f32.gmra.mxu0 %v3033
        %v3106 = vpop.f32.mrf.mxu0
        %v3107 = vadd.f32 0.0, %v3106
        %v3108 = vpop.f32.mrf.mxu0
        %3109 = vdwg.mxu0
        %3110 = vrot.lane.b32.xlu0 %v2902, 120
        %v3111 = vpop.permute.xlu0 %3110
        %3112 = vrot.lane.b32.xlu0 %v2907, 120
        %v3113 = vpop.permute.xlu0 %3112
        %3114 = vrot.lane.b32.xlu0 %v2902, 88
        %v3115 = vpop.permute.xlu0 %3114
        %3116 = vrot.lane.b32.xlu0 %v2907, 88
        %v3117 = vpop.permute.xlu0 %3116
        %v3118 = vsel %vm457, %v3111, 0
        %v3120 = vsel %vm457, %v3113, 0
        %v3122 = vsel %vm457, %v3115, 0
        %v3124 = vsel %vm457, %v3117, 0
        %3126 = vmatprep.subr.mxu0 0.0
        %3127 = vmatpush1.xpose.msra.mxu0 0.0
        %3128 = vmatprep.subr.mxu0 0.0
        %3129 = vmatpush1.xpose.msra.mxu0 0.0
        %3130 = vmatprep.subr.mxu0 0.0
        %3131 = vmatpush1.xpose.msra.mxu0 0.0
        %3132 = vmatprep.subr.mxu0 0.0
        %3133 = vmatpush1.xpose.msra.mxu0 0.0
        %3134 = vmatprep.subr.mxu0 0.0
        %3135 = vmatpush1.xpose.msra.mxu0 0.0
        %3136 = vmatprep.subr.mxu0 0.0
        %3137 = vmatpush1.xpose.msra.mxu0 0.0
        %3138 = vmatprep.subr.mxu0 0.0
        %3139 = vmatpush1.xpose.msra.mxu0 0.0
        %3140 = vmatprep.subr.mxu0 0.0
        %3141 = vmatpush1.xpose.msra.mxu0 0.0
        %3142 = vmatprep.subr.mxu0 0.0
        %3143 = vmatpush1.xpose.msra.mxu0 0.0
        %3144 = vmatprep.subr.mxu0 0.0
        %3145 = vmatpush1.xpose.msra.mxu0 0.0
        %3146 = vmatprep.subr.mxu0 0.0
        %3147 = vmatpush1.xpose.msra.mxu0 0.0
        %3148 = vmatprep.subr.mxu0 0.0
        %3149 = vmatpush1.xpose.msra.mxu0 0.0
        %3150 = vmatprep.subr.mxu0 0.0
        %3151 = vmatpush1.xpose.msra.mxu0 0.0
        %3152 = vmatprep.subr.mxu0 0.0
        %3153 = vmatpush1.xpose.msra.mxu0 0.0
        %3154 = vmatprep.subr.mxu0 0.0
        %3155 = vmatpush1.xpose.msra.mxu0 %v3124
        %3156 = vmatprep.subr.mxu0 0.0
        %3157 = vmatpush1.xpose.msra.mxu0 %v3122
        %3158 = vmatprep.subr.mxu0 0.0
        %3159 = vmatpush2.xpose.msra.mxu0 0.0
        %3160 = vmatprep.subr.mxu0 0.0
        %3161 = vmatpush2.xpose.msra.mxu0 0.0
        %3162 = vmatprep.subr.mxu0 0.0
        %3163 = vmatpush2.xpose.msra.mxu0 0.0
        %3164 = vmatprep.subr.mxu0 0.0
        %3165 = vmatpush2.xpose.msra.mxu0 0.0
        %3166 = vmatprep.subr.mxu0 0.0
        %3167 = vmatpush2.xpose.msra.mxu0 0.0
        %3168 = vmatprep.subr.mxu0 0.0
        %3169 = vmatpush2.xpose.msra.mxu0 0.0
        %3170 = vmatprep.subr.mxu0 0.0
        %3171 = vmatpush2.xpose.msra.mxu0 0.0
        %3172 = vmatprep.subr.mxu0 0.0
        %3173 = vmatpush2.xpose.msra.mxu0 0.0
        %3174 = vmatprep.subr.mxu0 0.0
        %3175 = vmatpush2.xpose.msra.mxu0 0.0
        %3176 = vmatprep.subr.mxu0 0.0
        %3177 = vmatpush2.xpose.msra.mxu0 0.0
        %3178 = vmatprep.subr.mxu0 0.0
        %3179 = vmatpush2.xpose.msra.mxu0 0.0
        %3180 = vmatprep.subr.mxu0 0.0
        %3181 = vmatpush2.xpose.msra.mxu0 0.0
        %3182 = vmatprep.subr.mxu0 0.0
        %3183 = vmatpush2.xpose.msra.mxu0 0.0
        %3184 = vmatprep.subr.mxu0 0.0
        %3185 = vmatpush2.xpose.msra.mxu0 0.0
        %3186 = vmatprep.subr.mxu0 0.0
        %3187 = vmatpush2.xpose.msra.mxu0 0.0
        %3188 = vmatprep.subr.mxu0 0.0
        %3189 = vmatpush2.xpose.msra.mxu0 0.0
        %3190 = vmatprep.mubr.f32.mxu0 0.0
        %3191 = vmatmul.mubr.f32.gmra.mxu0 %v3118
        %v3192 = vpop.f32.mrf.mxu0
        %v3193 = vadd.f32 0.0, %v3192
        %v3194 = vpop.f32.mrf.mxu0
        %3195 = vmatprep.mubr.f32.mxu0 0.0
        %3196 = vmatmul.mubr.f32.gmra.mxu0 %v3120
        %v3197 = vpop.f32.mrf.mxu0
        %v3198 = vadd.f32 0.0, %v3197
        %v3199 = vpop.f32.mrf.mxu0
        %3200 = vdwg.mxu0
        %v3201 = vmul.f32 %v3193, 0.35355338
        %v3202 = vmul.f32 %v3198, 0.35355338
        %v3203 = vsel %vm543, %v3201, -inf
        %3204 = vmax.xlane.f32.xlu0 %v3203
        %v3205 = vpop.xlane.xlu0 %3204
        %v3206 = vsel %vm543, %v3202, -inf
        %3207 = vmax.xlane.f32.xlu0 %v3206
        %v3208 = vpop.xlane.xlu0 %3207
        %v3209 = vsub.f32 %v3201, %v3205
        %v3210 = vsub.f32 %v3202, %v3208
        %v3211 = vmul.f32 %v3209, 1.442695
        %v3212 = vpow.pop %v3211
        %v3213 = vmul.f32 %v3210, 1.442695
        %v3214 = vpow.pop %v3213
        %v3215 = vsel %vm543, %v3212, 0.0
        %3216 = vadd.xlane.f32.xlu0 %v3215
        %v3217 = vpop.xlane.xlu0 %3216
        %v3218 = vsel %vm543, %v3214, 0.0
        %3219 = vadd.xlane.f32.xlu0 %v3218
        %v3220 = vpop.xlane.xlu0 %3219
        %v3221 = vrcp.pop %v3217
        %v3222 = vmul.f32 %v3212, %v3221
        %v3223 = vrcp.pop %v3220
        %v3224 = vmul.f32 %v3214, %v3223
        %3225 = vrot.lane.b32.xlu0 %v2902, 56
        %v3226 = vpop.permute.xlu0 %3225
        %3227 = vrot.lane.b32.xlu0 %v2907, 56
        %v3228 = vpop.permute.xlu0 %3227
        %v3232 = vsel %vm543, %v3222, 0
        %v3235 = vsel %vm543, %v3224, 0
        %3237 = vmatprep.subr.mxu0 0.0
        %3238 = vmatpush1.msra.mxu0 0.0
        %3239 = vmatprep.subr.mxu0 0.0
        %3240 = vmatpush1.msra.mxu0 0.0
        %3241 = vmatprep.subr.mxu0 0.0
        %3242 = vmatpush1.msra.mxu0 0.0
        %3243 = vmatprep.subr.mxu0 0.0
        %3244 = vmatpush1.msra.mxu0 0.0
        %3245 = vmatprep.subr.mxu0 0.0
        %3246 = vmatpush1.msra.mxu0 0.0
        %3247 = vmatprep.subr.mxu0 0.0
        %3248 = vmatpush1.msra.mxu0 0.0
        %3249 = vmatprep.subr.mxu0 0.0
        %3250 = vmatpush1.msra.mxu0 0.0
        %3251 = vmatprep.subr.mxu0 0.0
        %3252 = vmatpush1.msra.mxu0 0.0
        %3253 = vmatprep.subr.mxu0 0.0
        %3254 = vmatpush1.msra.mxu0 0.0
        %3255 = vmatprep.subr.mxu0 0.0
        %3256 = vmatpush1.msra.mxu0 0.0
        %3257 = vmatprep.subr.mxu0 0.0
        %3258 = vmatpush1.msra.mxu0 0.0
        %3259 = vmatprep.subr.mxu0 0.0
        %3260 = vmatpush1.msra.mxu0 0.0
        %3261 = vmatprep.subr.mxu0 0.0
        %3262 = vmatpush1.msra.mxu0 0.0
        %3263 = vmatprep.subr.mxu0 0.0
        %3264 = vmatpush1.msra.mxu0 0.0
        %3265 = vmatprep.subr.mxu0 0.0
        %3266 = vmatpush1.msra.mxu0 %v3228
        %3267 = vmatprep.subr.mxu0 0.0
        %3268 = vmatpush1.msra.mxu0 %v3226
        %3269 = vmatprep.subr.mxu0 0.0
        %3270 = vmatpush2.msra.mxu0 0.0
        %3271 = vmatprep.subr.mxu0 0.0
        %3272 = vmatpush2.msra.mxu0 0.0
        %3273 = vmatprep.subr.mxu0 0.0
        %3274 = vmatpush2.msra.mxu0 0.0
        %3275 = vmatprep.subr.mxu0 0.0
        %3276 = vmatpush2.msra.mxu0 0.0
        %3277 = vmatprep.subr.mxu0 0.0
        %3278 = vmatpush2.msra.mxu0 0.0
        %3279 = vmatprep.subr.mxu0 0.0
        %3280 = vmatpush2.msra.mxu0 0.0
        %3281 = vmatprep.subr.mxu0 0.0
        %3282 = vmatpush2.msra.mxu0 0.0
        %3283 = vmatprep.subr.mxu0 0.0
        %3284 = vmatpush2.msra.mxu0 0.0
        %3285 = vmatprep.subr.mxu0 0.0
        %3286 = vmatpush2.msra.mxu0 0.0
        %3287 = vmatprep.subr.mxu0 0.0
        %3288 = vmatpush2.msra.mxu0 0.0
        %3289 = vmatprep.subr.mxu0 0.0
        %3290 = vmatpush2.msra.mxu0 0.0
        %3291 = vmatprep.subr.mxu0 0.0
        %3292 = vmatpush2.msra.mxu0 0.0
        %3293 = vmatprep.subr.mxu0 0.0
        %3294 = vmatpush2.msra.mxu0 0.0
        %3295 = vmatprep.subr.mxu0 0.0
        %3296 = vmatpush2.msra.mxu0 0.0
        %3297 = vmatprep.subr.mxu0 0.0
        %3298 = vmatpush2.msra.mxu0 0.0
        %3299 = vmatprep.subr.mxu0 0.0
        %3300 = vmatpush2.msra.mxu0 0.0
        %3301 = vmatprep.mubr.f32.mxu0 0.0
        %3302 = vmatmul.mubr.f32.gmra.mxu0 %v3232
        %v3303 = vpop.f32.mrf.mxu0
        %v3304 = vadd.f32 0.0, %v3303
        %v3305 = vpop.f32.mrf.mxu0
        %3306 = vmatprep.mubr.f32.mxu0 0.0
        %3307 = vmatmul.mubr.f32.gmra.mxu0 %v3235
        %v3308 = vpop.f32.mrf.mxu0
        %v3309 = vadd.f32 0.0, %v3308
        %v3310 = vpop.f32.mrf.mxu0
        %3311 = vdwg.mxu0
        %3312 = vrot.lane.b32.xlu0 %v2902, 112
        %v3313 = vpop.permute.xlu0 %3312
        %3314 = vrot.lane.b32.xlu0 %v2907, 112
        %v3315 = vpop.permute.xlu0 %3314
        %3316 = vrot.lane.b32.xlu0 %v2902, 80
        %v3317 = vpop.permute.xlu0 %3316
        %3318 = vrot.lane.b32.xlu0 %v2907, 80
        %v3319 = vpop.permute.xlu0 %3318
        %v3320 = vsel %vm457, %v3313, 0
        %v3322 = vsel %vm457, %v3315, 0
        %v3324 = vsel %vm457, %v3317, 0
        %v3326 = vsel %vm457, %v3319, 0
        %3328 = vmatprep.subr.mxu0 0.0
        %3329 = vmatpush1.xpose.msra.mxu0 0.0
        %3330 = vmatprep.subr.mxu0 0.0
        %3331 = vmatpush1.xpose.msra.mxu0 0.0
        %3332 = vmatprep.subr.mxu0 0.0
        %3333 = vmatpush1.xpose.msra.mxu0 0.0
        %3334 = vmatprep.subr.mxu0 0.0
        %3335 = vmatpush1.xpose.msra.mxu0 0.0
        %3336 = vmatprep.subr.mxu0 0.0
        %3337 = vmatpush1.xpose.msra.mxu0 0.0
        %3338 = vmatprep.subr.mxu0 0.0
        %3339 = vmatpush1.xpose.msra.mxu0 0.0
        %3340 = vmatprep.subr.mxu0 0.0
        %3341 = vmatpush1.xpose.msra.mxu0 0.0
        %3342 = vmatprep.subr.mxu0 0.0
        %3343 = vmatpush1.xpose.msra.mxu0 0.0
        %3344 = vmatprep.subr.mxu0 0.0
        %3345 = vmatpush1.xpose.msra.mxu0 0.0
        %3346 = vmatprep.subr.mxu0 0.0
        %3347 = vmatpush1.xpose.msra.mxu0 0.0
        %3348 = vmatprep.subr.mxu0 0.0
        %3349 = vmatpush1.xpose.msra.mxu0 0.0
        %3350 = vmatprep.subr.mxu0 0.0
        %3351 = vmatpush1.xpose.msra.mxu0 0.0
        %3352 = vmatprep.subr.mxu0 0.0
        %3353 = vmatpush1.xpose.msra.mxu0 0.0
        %3354 = vmatprep.subr.mxu0 0.0
        %3355 = vmatpush1.xpose.msra.mxu0 0.0
        %3356 = vmatprep.subr.mxu0 0.0
        %3357 = vmatpush1.xpose.msra.mxu0 %v3326
        %3358 = vmatprep.subr.mxu0 0.0
        %3359 = vmatpush1.xpose.msra.mxu0 %v3324
        %3360 = vmatprep.subr.mxu0 0.0
        %3361 = vmatpush2.xpose.msra.mxu0 0.0
        %3362 = vmatprep.subr.mxu0 0.0
        %3363 = vmatpush2.xpose.msra.mxu0 0.0
        %3364 = vmatprep.subr.mxu0 0.0
        %3365 = vmatpush2.xpose.msra.mxu0 0.0
        %3366 = vmatprep.subr.mxu0 0.0
        %3367 = vmatpush2.xpose.msra.mxu0 0.0
        %3368 = vmatprep.subr.mxu0 0.0
        %3369 = vmatpush2.xpose.msra.mxu0 0.0
        %3370 = vmatprep.subr.mxu0 0.0
        %3371 = vmatpush2.xpose.msra.mxu0 0.0
        %3372 = vmatprep.subr.mxu0 0.0
        %3373 = vmatpush2.xpose.msra.mxu0 0.0
        %3374 = vmatprep.subr.mxu0 0.0
        %3375 = vmatpush2.xpose.msra.mxu0 0.0
        %3376 = vmatprep.subr.mxu0 0.0
        %3377 = vmatpush2.xpose.msra.mxu0 0.0
        %3378 = vmatprep.subr.mxu0 0.0
        %3379 = vmatpush2.xpose.msra.mxu0 0.0
        %3380 = vmatprep.subr.mxu0 0.0
        %3381 = vmatpush2.xpose.msra.mxu0 0.0
        %3382 = vmatprep.subr.mxu0 0.0
        %3383 = vmatpush2.xpose.msra.mxu0 0.0
        %3384 = vmatprep.subr.mxu0 0.0
        %3385 = vmatpush2.xpose.msra.mxu0 0.0
        %3386 = vmatprep.subr.mxu0 0.0
        %3387 = vmatpush2.xpose.msra.mxu0 0.0
        %3388 = vmatprep.subr.mxu0 0.0
        %3389 = vmatpush2.xpose.msra.mxu0 0.0
        %3390 = vmatprep.subr.mxu0 0.0
        %3391 = vmatpush2.xpose.msra.mxu0 0.0
        %3392 = vmatprep.mubr.f32.mxu0 0.0
        %3393 = vmatmul.mubr.f32.gmra.mxu0 %v3320
        %v3394 = vpop.f32.mrf.mxu0
        %v3395 = vadd.f32 0.0, %v3394
        %v3396 = vpop.f32.mrf.mxu0
        %3397 = vmatprep.mubr.f32.mxu0 0.0
        %3398 = vmatmul.mubr.f32.gmra.mxu0 %v3322
        %v3399 = vpop.f32.mrf.mxu0
        %v3400 = vadd.f32 0.0, %v3399
        %v3401 = vpop.f32.mrf.mxu0
        %3402 = vdwg.mxu0
        %v3403 = vmul.f32 %v3395, 0.35355338
        %v3404 = vmul.f32 %v3400, 0.35355338
        %v3405 = vsel %vm543, %v3403, -inf
        %3406 = vmax.xlane.f32.xlu0 %v3405
        %v3407 = vpop.xlane.xlu0 %3406
        %v3408 = vsel %vm543, %v3404, -inf
        %3409 = vmax.xlane.f32.xlu0 %v3408
        %v3410 = vpop.xlane.xlu0 %3409
        %v3411 = vsub.f32 %v3403, %v3407
        %v3412 = vsub.f32 %v3404, %v3410
        %v3413 = vmul.f32 %v3411, 1.442695
        %v3414 = vpow.pop %v3413
        %v3415 = vmul.f32 %v3412, 1.442695
        %v3416 = vpow.pop %v3415
        %v3417 = vsel %vm543, %v3414, 0.0
        %3418 = vadd.xlane.f32.xlu0 %v3417
        %v3419 = vpop.xlane.xlu0 %3418
        %v3420 = vsel %vm543, %v3416, 0.0
        %3421 = vadd.xlane.f32.xlu0 %v3420
        %v3422 = vpop.xlane.xlu0 %3421
        %v3423 = vrcp.pop %v3419
        %v3424 = vmul.f32 %v3414, %v3423
        %v3425 = vrcp.pop %v3422
        %v3426 = vmul.f32 %v3416, %v3425
        %3427 = vrot.lane.b32.xlu0 %v2902, 48
        %v3428 = vpop.permute.xlu0 %3427
        %3429 = vrot.lane.b32.xlu0 %v2907, 48
        %v3430 = vpop.permute.xlu0 %3429
        %v3434 = vsel %vm543, %v3424, 0
        %v3437 = vsel %vm543, %v3426, 0
        %3439 = vmatprep.subr.mxu0 0.0
        %3440 = vmatpush1.msra.mxu0 0.0
        %3441 = vmatprep.subr.mxu0 0.0
        %3442 = vmatpush1.msra.mxu0 0.0
        %3443 = vmatprep.subr.mxu0 0.0
        %3444 = vmatpush1.msra.mxu0 0.0
        %3445 = vmatprep.subr.mxu0 0.0
        %3446 = vmatpush1.msra.mxu0 0.0
        %3447 = vmatprep.subr.mxu0 0.0
        %3448 = vmatpush1.msra.mxu0 0.0
        %3449 = vmatprep.subr.mxu0 0.0
        %3450 = vmatpush1.msra.mxu0 0.0
        %3451 = vmatprep.subr.mxu0 0.0
        %3452 = vmatpush1.msra.mxu0 0.0
        %3453 = vmatprep.subr.mxu0 0.0
        %3454 = vmatpush1.msra.mxu0 0.0
        %3455 = vmatprep.subr.mxu0 0.0
        %3456 = vmatpush1.msra.mxu0 0.0
        %3457 = vmatprep.subr.mxu0 0.0
        %3458 = vmatpush1.msra.mxu0 0.0
        %3459 = vmatprep.subr.mxu0 0.0
        %3460 = vmatpush1.msra.mxu0 0.0
        %3461 = vmatprep.subr.mxu0 0.0
        %3462 = vmatpush1.msra.mxu0 0.0
        %3463 = vmatprep.subr.mxu0 0.0
        %3464 = vmatpush1.msra.mxu0 0.0
        %3465 = vmatprep.subr.mxu0 0.0
        %3466 = vmatpush1.msra.mxu0 0.0
        %3467 = vmatprep.subr.mxu0 0.0
        %3468 = vmatpush1.msra.mxu0 %v3430
        %3469 = vmatprep.subr.mxu0 0.0
        %3470 = vmatpush1.msra.mxu0 %v3428
        %3471 = vmatprep.subr.mxu0 0.0
        %3472 = vmatpush2.msra.mxu0 0.0
        %3473 = vmatprep.subr.mxu0 0.0
        %3474 = vmatpush2.msra.mxu0 0.0
        %3475 = vmatprep.subr.mxu0 0.0
        %3476 = vmatpush2.msra.mxu0 0.0
        %3477 = vmatprep.subr.mxu0 0.0
        %3478 = vmatpush2.msra.mxu0 0.0
        %3479 = vmatprep.subr.mxu0 0.0
        %3480 = vmatpush2.msra.mxu0 0.0
        %3481 = vmatprep.subr.mxu0 0.0
        %3482 = vmatpush2.msra.mxu0 0.0
        %3483 = vmatprep.subr.mxu0 0.0
        %3484 = vmatpush2.msra.mxu0 0.0
        %3485 = vmatprep.subr.mxu0 0.0
        %3486 = vmatpush2.msra.mxu0 0.0
        %3487 = vmatprep.subr.mxu0 0.0
        %3488 = vmatpush2.msra.mxu0 0.0
        %3489 = vmatprep.subr.mxu0 0.0
        %3490 = vmatpush2.msra.mxu0 0.0
        %3491 = vmatprep.subr.mxu0 0.0
        %3492 = vmatpush2.msra.mxu0 0.0
        %3493 = vmatprep.subr.mxu0 0.0
        %3494 = vmatpush2.msra.mxu0 0.0
        %3495 = vmatprep.subr.mxu0 0.0
        %3496 = vmatpush2.msra.mxu0 0.0
        %3497 = vmatprep.subr.mxu0 0.0
        %3498 = vmatpush2.msra.mxu0 0.0
        %3499 = vmatprep.subr.mxu0 0.0
        %3500 = vmatpush2.msra.mxu0 0.0
        %3501 = vmatprep.subr.mxu0 0.0
        %3502 = vmatpush2.msra.mxu0 0.0
        %3503 = vmatprep.mubr.f32.mxu0 0.0
        %3504 = vmatmul.mubr.f32.gmra.mxu0 %v3434
        %v3505 = vpop.f32.mrf.mxu0
        %v3506 = vadd.f32 0.0, %v3505
        %v3507 = vpop.f32.mrf.mxu0
        %3508 = vmatprep.mubr.f32.mxu0 0.0
        %3509 = vmatmul.mubr.f32.gmra.mxu0 %v3437
        %v3510 = vpop.f32.mrf.mxu0
        %v3511 = vadd.f32 0.0, %v3510
        %v3512 = vpop.f32.mrf.mxu0
        %3513 = vdwg.mxu0
        %3514 = vrot.lane.b32.xlu0 %v2902, 104
        %v3515 = vpop.permute.xlu0 %3514
        %3516 = vrot.lane.b32.xlu0 %v2907, 104
        %v3517 = vpop.permute.xlu0 %3516
        %3518 = vrot.lane.b32.xlu0 %v2902, 72
        %v3519 = vpop.permute.xlu0 %3518
        %3520 = vrot.lane.b32.xlu0 %v2907, 72
        %v3521 = vpop.permute.xlu0 %3520
        %v3522 = vsel %vm457, %v3515, 0
        %v3524 = vsel %vm457, %v3517, 0
        %v3526 = vsel %vm457, %v3519, 0
        %v3528 = vsel %vm457, %v3521, 0
        %3530 = vmatprep.subr.mxu0 0.0
        %3531 = vmatpush1.xpose.msra.mxu0 0.0
        %3532 = vmatprep.subr.mxu0 0.0
        %3533 = vmatpush1.xpose.msra.mxu0 0.0
        %3534 = vmatprep.subr.mxu0 0.0
        %3535 = vmatpush1.xpose.msra.mxu0 0.0
        %3536 = vmatprep.subr.mxu0 0.0
        %3537 = vmatpush1.xpose.msra.mxu0 0.0
        %3538 = vmatprep.subr.mxu0 0.0
        %3539 = vmatpush1.xpose.msra.mxu0 0.0
        %3540 = vmatprep.subr.mxu0 0.0
        %3541 = vmatpush1.xpose.msra.mxu0 0.0
        %3542 = vmatprep.subr.mxu0 0.0
        %3543 = vmatpush1.xpose.msra.mxu0 0.0
        %3544 = vmatprep.subr.mxu0 0.0
        %3545 = vmatpush1.xpose.msra.mxu0 0.0
        %3546 = vmatprep.subr.mxu0 0.0
        %3547 = vmatpush1.xpose.msra.mxu0 0.0
        %3548 = vmatprep.subr.mxu0 0.0
        %3549 = vmatpush1.xpose.msra.mxu0 0.0
        %3550 = vmatprep.subr.mxu0 0.0
        %3551 = vmatpush1.xpose.msra.mxu0 0.0
        %3552 = vmatprep.subr.mxu0 0.0
        %3553 = vmatpush1.xpose.msra.mxu0 0.0
        %3554 = vmatprep.subr.mxu0 0.0
        %3555 = vmatpush1.xpose.msra.mxu0 0.0
        %3556 = vmatprep.subr.mxu0 0.0
        %3557 = vmatpush1.xpose.msra.mxu0 0.0
        %3558 = vmatprep.subr.mxu0 0.0
        %3559 = vmatpush1.xpose.msra.mxu0 %v3528
        %3560 = vmatprep.subr.mxu0 0.0
        %3561 = vmatpush1.xpose.msra.mxu0 %v3526
        %3562 = vmatprep.subr.mxu0 0.0
        %3563 = vmatpush2.xpose.msra.mxu0 0.0
        %3564 = vmatprep.subr.mxu0 0.0
        %3565 = vmatpush2.xpose.msra.mxu0 0.0
        %3566 = vmatprep.subr.mxu0 0.0
        %3567 = vmatpush2.xpose.msra.mxu0 0.0
        %3568 = vmatprep.subr.mxu0 0.0
        %3569 = vmatpush2.xpose.msra.mxu0 0.0
        %3570 = vmatprep.subr.mxu0 0.0
        %3571 = vmatpush2.xpose.msra.mxu0 0.0
        %3572 = vmatprep.subr.mxu0 0.0
        %3573 = vmatpush2.xpose.msra.mxu0 0.0
        %3574 = vmatprep.subr.mxu0 0.0
        %3575 = vmatpush2.xpose.msra.mxu0 0.0
        %3576 = vmatprep.subr.mxu0 0.0
        %3577 = vmatpush2.xpose.msra.mxu0 0.0
        %3578 = vmatprep.subr.mxu0 0.0
        %3579 = vmatpush2.xpose.msra.mxu0 0.0
        %3580 = vmatprep.subr.mxu0 0.0
        %3581 = vmatpush2.xpose.msra.mxu0 0.0
        %3582 = vmatprep.subr.mxu0 0.0
        %3583 = vmatpush2.xpose.msra.mxu0 0.0
        %3584 = vmatprep.subr.mxu0 0.0
        %3585 = vmatpush2.xpose.msra.mxu0 0.0
        %3586 = vmatprep.subr.mxu0 0.0
        %3587 = vmatpush2.xpose.msra.mxu0 0.0
        %3588 = vmatprep.subr.mxu0 0.0
        %3589 = vmatpush2.xpose.msra.mxu0 0.0
        %3590 = vmatprep.subr.mxu0 0.0
        %3591 = vmatpush2.xpose.msra.mxu0 0.0
        %3592 = vmatprep.subr.mxu0 0.0
        %3593 = vmatpush2.xpose.msra.mxu0 0.0
        %3594 = vmatprep.mubr.f32.mxu0 0.0
        %3595 = vmatmul.mubr.f32.gmra.mxu0 %v3522
        %v3596 = vpop.f32.mrf.mxu0
        %v3597 = vadd.f32 0.0, %v3596
        %v3598 = vpop.f32.mrf.mxu0
        %3599 = vmatprep.mubr.f32.mxu0 0.0
        %3600 = vmatmul.mubr.f32.gmra.mxu0 %v3524
        %v3601 = vpop.f32.mrf.mxu0
        %v3602 = vadd.f32 0.0, %v3601
        %v3603 = vpop.f32.mrf.mxu0
        %3604 = vdwg.mxu0
        %v3605 = vmul.f32 %v3597, 0.35355338
        %v3606 = vmul.f32 %v3602, 0.35355338
        %v3607 = vsel %vm543, %v3605, -inf
        %3608 = vmax.xlane.f32.xlu0 %v3607
        %v3609 = vpop.xlane.xlu0 %3608
        %v3610 = vsel %vm543, %v3606, -inf
        %3611 = vmax.xlane.f32.xlu0 %v3610
        %v3612 = vpop.xlane.xlu0 %3611
        %v3613 = vsub.f32 %v3605, %v3609
        %v3614 = vsub.f32 %v3606, %v3612
        %v3615 = vmul.f32 %v3613, 1.442695
        %v3616 = vpow.pop %v3615
        %v3617 = vmul.f32 %v3614, 1.442695
        %v3618 = vpow.pop %v3617
        %v3619 = vsel %vm543, %v3616, 0.0
        %3620 = vadd.xlane.f32.xlu0 %v3619
        %v3621 = vpop.xlane.xlu0 %3620
        %v3622 = vsel %vm543, %v3618, 0.0
        %3623 = vadd.xlane.f32.xlu0 %v3622
        %v3624 = vpop.xlane.xlu0 %3623
        %v3625 = vrcp.pop %v3621
        %v3626 = vmul.f32 %v3616, %v3625
        %v3627 = vrcp.pop %v3624
        %v3628 = vmul.f32 %v3618, %v3627
        %3629 = vrot.lane.b32.xlu0 %v2902, 40
        %v3630 = vpop.permute.xlu0 %3629
        %3631 = vrot.lane.b32.xlu0 %v2907, 40
        %v3632 = vpop.permute.xlu0 %3631
        %v3636 = vsel %vm543, %v3626, 0
        %v3639 = vsel %vm543, %v3628, 0
        %3641 = vmatprep.subr.mxu0 0.0
        %3642 = vmatpush1.msra.mxu0 0.0
        %3643 = vmatprep.subr.mxu0 0.0
        %3644 = vmatpush1.msra.mxu0 0.0
        %3645 = vmatprep.subr.mxu0 0.0
        %3646 = vmatpush1.msra.mxu0 0.0
        %3647 = vmatprep.subr.mxu0 0.0
        %3648 = vmatpush1.msra.mxu0 0.0
        %3649 = vmatprep.subr.mxu0 0.0
        %3650 = vmatpush1.msra.mxu0 0.0
        %3651 = vmatprep.subr.mxu0 0.0
        %3652 = vmatpush1.msra.mxu0 0.0
        %3653 = vmatprep.subr.mxu0 0.0
        %3654 = vmatpush1.msra.mxu0 0.0
        %3655 = vmatprep.subr.mxu0 0.0
        %3656 = vmatpush1.msra.mxu0 0.0
        %3657 = vmatprep.subr.mxu0 0.0
        %3658 = vmatpush1.msra.mxu0 0.0
        %3659 = vmatprep.subr.mxu0 0.0
        %3660 = vmatpush1.msra.mxu0 0.0
        %3661 = vmatprep.subr.mxu0 0.0
        %3662 = vmatpush1.msra.mxu0 0.0
        %3663 = vmatprep.subr.mxu0 0.0
        %3664 = vmatpush1.msra.mxu0 0.0
        %3665 = vmatprep.subr.mxu0 0.0
        %3666 = vmatpush1.msra.mxu0 0.0
        %3667 = vmatprep.subr.mxu0 0.0
        %3668 = vmatpush1.msra.mxu0 0.0
        %3669 = vmatprep.subr.mxu0 0.0
        %3670 = vmatpush1.msra.mxu0 %v3632
        %3671 = vmatprep.subr.mxu0 0.0
        %3672 = vmatpush1.msra.mxu0 %v3630
        %3673 = vmatprep.subr.mxu0 0.0
        %3674 = vmatpush2.msra.mxu0 0.0
        %3675 = vmatprep.subr.mxu0 0.0
        %3676 = vmatpush2.msra.mxu0 0.0
        %3677 = vmatprep.subr.mxu0 0.0
        %3678 = vmatpush2.msra.mxu0 0.0
        %3679 = vmatprep.subr.mxu0 0.0
        %3680 = vmatpush2.msra.mxu0 0.0
        %3681 = vmatprep.subr.mxu0 0.0
        %3682 = vmatpush2.msra.mxu0 0.0
        %3683 = vmatprep.subr.mxu0 0.0
        %3684 = vmatpush2.msra.mxu0 0.0
        %3685 = vmatprep.subr.mxu0 0.0
        %3686 = vmatpush2.msra.mxu0 0.0
        %3687 = vmatprep.subr.mxu0 0.0
        %3688 = vmatpush2.msra.mxu0 0.0
        %3689 = vmatprep.subr.mxu0 0.0
        %3690 = vmatpush2.msra.mxu0 0.0
        %3691 = vmatprep.subr.mxu0 0.0
        %3692 = vmatpush2.msra.mxu0 0.0
        %3693 = vmatprep.subr.mxu0 0.0
        %3694 = vmatpush2.msra.mxu0 0.0
        %3695 = vmatprep.subr.mxu0 0.0
        %3696 = vmatpush2.msra.mxu0 0.0
        %3697 = vmatprep.subr.mxu0 0.0
        %3698 = vmatpush2.msra.mxu0 0.0
        %3699 = vmatprep.subr.mxu0 0.0
        %3700 = vmatpush2.msra.mxu0 0.0
        %3701 = vmatprep.subr.mxu0 0.0
        %3702 = vmatpush2.msra.mxu0 0.0
        %3703 = vmatprep.subr.mxu0 0.0
        %3704 = vmatpush2.msra.mxu0 0.0
        %3705 = vmatprep.mubr.f32.mxu0 0.0
        %3706 = vmatmul.mubr.f32.gmra.mxu0 %v3636
        %v3707 = vpop.f32.mrf.mxu0
        %v3708 = vadd.f32 0.0, %v3707
        %v3709 = vpop.f32.mrf.mxu0
        %3710 = vmatprep.mubr.f32.mxu0 0.0
        %3711 = vmatmul.mubr.f32.gmra.mxu0 %v3639
        %v3712 = vpop.f32.mrf.mxu0
        %v3713 = vadd.f32 0.0, %v3712
        %v3714 = vpop.f32.mrf.mxu0
        %3715 = vdwg.mxu0
        %3718 = vrot.lane.b32.xlu0 %v3304, 8
        %v3719 = vpop.permute.xlu0 %3718
        %3720 = vrot.lane.b32.xlu0 %v3309, 8
        %v3721 = vpop.permute.xlu0 %3720
        %3726 = vrot.lane.b32.xlu0 %v3506, 16
        %v3727 = vpop.permute.xlu0 %3726
        %3728 = vrot.lane.b32.xlu0 %v3511, 16
        %v3729 = vpop.permute.xlu0 %3728
        %3734 = vrot.lane.b32.xlu0 %v3708, 24
        %v3735 = vpop.permute.xlu0 %3734
        %3736 = vrot.lane.b32.xlu0 %v3713, 24
        %v3737 = vpop.permute.xlu0 %3736
        %v3740 = vsel %vm457, %v3102, %v3719
        %v3741 = vsel %vm457, %v3107, %v3721
        %v3742 = vsel %vm543, %v3740, %v3727
        %v3743 = vsel %vm543, %v3741, %v3729
        %v3744 = vsel %vm1287, %v3742, %v3735
        %v3745 = vsel %vm1287, %v3743, %v3737
        %v3746 = vld [vmem:[#allocation2 + $0x180] sm:$0xff]
        %v3747 = vld [vmem:[#allocation2 + $0x190] sm:$0xff]
        %v3748 = vld [vmem:[#allocation2 + $0x1a0] sm:$0xff]
        %v3749 = vld [vmem:[#allocation2 + $0x1b0] sm:$0xff]
        %v3750 = vld [vmem:[#allocation5 + $0x33] ss:$0 sm:$0xff]
        %v3752 = vsel %vm333, %v3744, 0
        %v3755 = vsel %vm333, %v3745, 0
        %3757 = vmatprep.subr.mxu0 0.0
        %3758 = vmatpush1.msra.mxu0 0.0
        %3759 = vmatprep.subr.mxu0 0.0
        %3760 = vmatpush1.msra.mxu0 0.0
        %3761 = vmatprep.subr.mxu0 0.0
        %3762 = vmatpush1.msra.mxu0 0.0
        %3763 = vmatprep.subr.mxu0 0.0
        %3764 = vmatpush1.msra.mxu0 0.0
        %3765 = vmatprep.subr.mxu0 0.0
        %3766 = vmatpush1.msra.mxu0 0.0
        %3767 = vmatprep.subr.mxu0 0.0
        %3768 = vmatpush1.msra.mxu0 0.0
        %3769 = vmatprep.subr.mxu0 0.0
        %3770 = vmatpush1.msra.mxu0 0.0
        %3771 = vmatprep.subr.mxu0 0.0
        %3772 = vmatpush1.msra.mxu0 0.0
        %3773 = vmatprep.subr.mxu0 0.0
        %3774 = vmatpush1.msra.mxu0 0.0
        %3775 = vmatprep.subr.mxu0 0.0
        %3776 = vmatpush1.msra.mxu0 0.0
        %3777 = vmatprep.subr.mxu0 0.0
        %3778 = vmatpush1.msra.mxu0 0.0
        %3779 = vmatprep.subr.mxu0 0.0
        %3780 = vmatpush1.msra.mxu0 0.0
        %3781 = vmatprep.subr.mxu0 0.0
        %3782 = vmatpush1.msra.mxu0 %v3749
        %3783 = vmatprep.subr.mxu0 0.0
        %3784 = vmatpush1.msra.mxu0 %v3748
        %3785 = vmatprep.subr.mxu0 0.0
        %3786 = vmatpush1.msra.mxu0 %v3747
        %3787 = vmatprep.subr.mxu0 0.0
        %3788 = vmatpush1.msra.mxu0 %v3746
        %3789 = vmatprep.subr.mxu0 0.0
        %3790 = vmatpush2.msra.mxu0 0.0
        %3791 = vmatprep.subr.mxu0 0.0
        %3792 = vmatpush2.msra.mxu0 0.0
        %3793 = vmatprep.subr.mxu0 0.0
        %3794 = vmatpush2.msra.mxu0 0.0
        %3795 = vmatprep.subr.mxu0 0.0
        %3796 = vmatpush2.msra.mxu0 0.0
        %3797 = vmatprep.subr.mxu0 0.0
        %3798 = vmatpush2.msra.mxu0 0.0
        %3799 = vmatprep.subr.mxu0 0.0
        %3800 = vmatpush2.msra.mxu0 0.0
        %3801 = vmatprep.subr.mxu0 0.0
        %3802 = vmatpush2.msra.mxu0 0.0
        %3803 = vmatprep.subr.mxu0 0.0
        %3804 = vmatpush2.msra.mxu0 0.0
        %3805 = vmatprep.subr.mxu0 0.0
        %3806 = vmatpush2.msra.mxu0 0.0
        %3807 = vmatprep.subr.mxu0 0.0
        %3808 = vmatpush2.msra.mxu0 0.0
        %3809 = vmatprep.subr.mxu0 0.0
        %3810 = vmatpush2.msra.mxu0 0.0
        %3811 = vmatprep.subr.mxu0 0.0
        %3812 = vmatpush2.msra.mxu0 0.0
        %3813 = vmatprep.subr.mxu0 0.0
        %3814 = vmatpush2.msra.mxu0 0.0
        %3815 = vmatprep.subr.mxu0 0.0
        %3816 = vmatpush2.msra.mxu0 0.0
        %3817 = vmatprep.subr.mxu0 0.0
        %3818 = vmatpush2.msra.mxu0 0.0
        %3819 = vmatprep.subr.mxu0 0.0
        %3820 = vmatpush2.msra.mxu0 0.0
        %3821 = vmatprep.mubr.f32.mxu0 0.0
        %3822 = vmatmul.mubr.f32.gmra.mxu0 %v3752
        %v3823 = vpop.f32.mrf.mxu0
        %v3824 = vadd.f32 %v3750, %v3823
        %v3825 = vpop.f32.mrf.mxu0
        %3826 = vmatprep.mubr.f32.mxu0 0.0
        %3827 = vmatmul.mubr.f32.gmra.mxu0 %v3755
        %v3828 = vpop.f32.mrf.mxu0
        %v3829 = vadd.f32 %v3750, %v3828
        %v3830 = vpop.f32.mrf.mxu0
        %3831 = vdwg.mxu0
        %v3832 = vadd.f32 %v3824, %v2822
        %v3833 = vadd.f32 %v3829, %v2823
        %v3834 = vld [vmem:[#allocation5 + $0x34] ss:$0 sm:$0xff]
        %v3835 = vld [vmem:[#allocation5 + $0x35] ss:$0 sm:$0xff]
        %v3836 = vsel %vm333, %v3832, 0.0
        %3837 = vadd.xlane.f32.xlu0 %v3836
        %v3838 = vpop.xlane.xlu0 %3837
        %v3839 = vsel %vm333, %v3833, 0.0
        %3840 = vadd.xlane.f32.xlu0 %v3839
        %v3841 = vpop.xlane.xlu0 %3840
        %v3842 = vmul.f32 %v3838, %v340
        %v3843 = vmul.f32 %v3841, %v340
        %v3844 = vsub.f32 %v3832, %v3842
        %v3845 = vsub.f32 %v3833, %v3843
        %v3846 = vmul.f32 %v3844, %v3844
        %v3847 = vmul.f32 %v3845, %v3845
        %v3848 = vsel %vm333, %v3846, 0.0
        %3849 = vadd.xlane.f32.xlu0 %v3848
        %v3850 = vpop.xlane.xlu0 %3849
        %v3851 = vsel %vm333, %v3847, 0.0
        %3852 = vadd.xlane.f32.xlu0 %v3851
        %v3853 = vpop.xlane.xlu0 %3852
        %v3854 = vmul.f32 %v3850, %v340
        %v3855 = vmul.f32 %v3853, %v340
        %v3856 = vadd.f32 %v3854, 1e-12
        %v3857 = vadd.f32 %v3855, 1e-12
        %v3858 = vrsqrt.pop %v3856
        %v3859 = vrsqrt.pop %v3857
        %v3860 = vmul.f32 %v3844, %v3858
        %v3861 = vmul.f32 %v3845, %v3859
        %v3862 = vmul.f32 %v3860, %v3834
        %v3863 = vmul.f32 %v3861, %v3834
        %v3864 = vadd.f32 %v3862, %v3835
        %v3865 = vadd.f32 %v3863, %v3835
        %v3866 = vld [vmem:[#allocation2 + $0xc0] sm:$0xff]
        %v3867 = vld [vmem:[#allocation2 + $0xd0] sm:$0xff]
        %v3868 = vld [vmem:[#allocation2 + $0xe0] sm:$0xff]
        %v3869 = vld [vmem:[#allocation2 + $0xf0] sm:$0xff]
        %v3870 = vld [vmem:[#allocation5 + $0x36] ss:$0 sm:$0xff]
        %v3872 = vsel %vm333, %v3864, 0
        %v3875 = vsel %vm333, %v3865, 0
        %3877 = vmatprep.subr.mxu0 0.0
        %3878 = vmatpush1.msra.mxu0 0.0
        %3879 = vmatprep.subr.mxu0 0.0
        %3880 = vmatpush1.msra.mxu0 0.0
        %3881 = vmatprep.subr.mxu0 0.0
        %3882 = vmatpush1.msra.mxu0 0.0
        %3883 = vmatprep.subr.mxu0 0.0
        %3884 = vmatpush1.msra.mxu0 0.0
        %3885 = vmatprep.subr.mxu0 0.0
        %3886 = vmatpush1.msra.mxu0 0.0
        %3887 = vmatprep.subr.mxu0 0.0
        %3888 = vmatpush1.msra.mxu0 0.0
        %3889 = vmatprep.subr.mxu0 0.0
        %3890 = vmatpush1.msra.mxu0 0.0
        %3891 = vmatprep.subr.mxu0 0.0
        %3892 = vmatpush1.msra.mxu0 0.0
        %3893 = vmatprep.subr.mxu0 0.0
        %3894 = vmatpush1.msra.mxu0 0.0
        %3895 = vmatprep.subr.mxu0 0.0
        %3896 = vmatpush1.msra.mxu0 0.0
        %3897 = vmatprep.subr.mxu0 0.0
        %3898 = vmatpush1.msra.mxu0 0.0
        %3899 = vmatprep.subr.mxu0 0.0
        %3900 = vmatpush1.msra.mxu0 0.0
        %3901 = vmatprep.subr.mxu0 0.0
        %3902 = vmatpush1.msra.mxu0 %v3869
        %3903 = vmatprep.subr.mxu0 0.0
        %3904 = vmatpush1.msra.mxu0 %v3868
        %3905 = vmatprep.subr.mxu0 0.0
        %3906 = vmatpush1.msra.mxu0 %v3867
        %3907 = vmatprep.subr.mxu0 0.0
        %3908 = vmatpush1.msra.mxu0 %v3866
        %3909 = vmatprep.subr.mxu0 0.0
        %3910 = vmatpush2.msra.mxu0 0.0
        %3911 = vmatprep.subr.mxu0 0.0
        %3912 = vmatpush2.msra.mxu0 0.0
        %3913 = vmatprep.subr.mxu0 0.0
        %3914 = vmatpush2.msra.mxu0 0.0
        %3915 = vmatprep.subr.mxu0 0.0
        %3916 = vmatpush2.msra.mxu0 0.0
        %3917 = vmatprep.subr.mxu0 0.0
        %3918 = vmatpush2.msra.mxu0 0.0
        %3919 = vmatprep.subr.mxu0 0.0
        %3920 = vmatpush2.msra.mxu0 0.0
        %3921 = vmatprep.subr.mxu0 0.0
        %3922 = vmatpush2.msra.mxu0 0.0
        %3923 = vmatprep.subr.mxu0 0.0
        %3924 = vmatpush2.msra.mxu0 0.0
        %3925 = vmatprep.subr.mxu0 0.0
        %3926 = vmatpush2.msra.mxu0 0.0
        %3927 = vmatprep.subr.mxu0 0.0
        %3928 = vmatpush2.msra.mxu0 0.0
        %3929 = vmatprep.subr.mxu0 0.0
        %3930 = vmatpush2.msra.mxu0 0.0
        %3931 = vmatprep.subr.mxu0 0.0
        %3932 = vmatpush2.msra.mxu0 0.0
        %3933 = vmatprep.subr.mxu0 0.0
        %3934 = vmatpush2.msra.mxu0 0.0
        %3935 = vmatprep.subr.mxu0 0.0
        %3936 = vmatpush2.msra.mxu0 0.0
        %3937 = vmatprep.subr.mxu0 0.0
        %3938 = vmatpush2.msra.mxu0 0.0
        %3939 = vmatprep.subr.mxu0 0.0
        %3940 = vmatpush2.msra.mxu0 0.0
        %3941 = vmatprep.mubr.f32.mxu0 0.0
        %3942 = vmatmul.mubr.f32.gmra.mxu0 %v3872
        %v3943 = vpop.f32.mrf.mxu0
        %v3944 = vadd.f32 %v3870, %v3943
        %v3945 = vpop.f32.mrf.mxu0
        %3946 = vmatprep.mubr.f32.mxu0 0.0
        %3947 = vmatmul.mubr.f32.gmra.mxu0 %v3875
        %v3948 = vpop.f32.mrf.mxu0
        %v3949 = vadd.f32 %v3870, %v3948
        %v3950 = vpop.f32.mrf.mxu0
        %3951 = vdwg.mxu0
        %3956 = vrot.lane.b32.xlu0 %v3866, 96
        %v3957 = vpop.permute.xlu0 %3956
        %3958 = vrot.lane.b32.xlu0 %v3867, 96
        %v3959 = vpop.permute.xlu0 %3958
        %3960 = vrot.lane.b32.xlu0 %v3868, 96
        %v3961 = vpop.permute.xlu0 %3960
        %3962 = vrot.lane.b32.xlu0 %v3869, 96
        %v3963 = vpop.permute.xlu0 %3962
        %3969 = vrot.lane.b32.xlu0 %v3870, 96
        %v3970 = vpop.permute.xlu0 %3969
        %3972 = vmatprep.subr.mxu0 0.0
        %3973 = vmatpush1.msra.mxu0 0.0
        %3974 = vmatprep.subr.mxu0 0.0
        %3975 = vmatpush1.msra.mxu0 0.0
        %3976 = vmatprep.subr.mxu0 0.0
        %3977 = vmatpush1.msra.mxu0 0.0
        %3978 = vmatprep.subr.mxu0 0.0
        %3979 = vmatpush1.msra.mxu0 0.0
        %3980 = vmatprep.subr.mxu0 0.0
        %3981 = vmatpush1.msra.mxu0 0.0
        %3982 = vmatprep.subr.mxu0 0.0
        %3983 = vmatpush1.msra.mxu0 0.0
        %3984 = vmatprep.subr.mxu0 0.0
        %3985 = vmatpush1.msra.mxu0 0.0
        %3986 = vmatprep.subr.mxu0 0.0
        %3987 = vmatpush1.msra.mxu0 0.0
        %3988 = vmatprep.subr.mxu0 0.0
        %3989 = vmatpush1.msra.mxu0 0.0
        %3990 = vmatprep.subr.mxu0 0.0
        %3991 = vmatpush1.msra.mxu0 0.0
        %3992 = vmatprep.subr.mxu0 0.0
        %3993 = vmatpush1.msra.mxu0 0.0
        %3994 = vmatprep.subr.mxu0 0.0
        %3995 = vmatpush1.msra.mxu0 0.0
        %3996 = vmatprep.subr.mxu0 0.0
        %3997 = vmatpush1.msra.mxu0 %v3963
        %3998 = vmatprep.subr.mxu0 0.0
        %3999 = vmatpush1.msra.mxu0 %v3961
        %4000 = vmatprep.subr.mxu0 0.0
        %4001 = vmatpush1.msra.mxu0 %v3959
        %4002 = vmatprep.subr.mxu0 0.0
        %4003 = vmatpush1.msra.mxu0 %v3957
        %4004 = vmatprep.subr.mxu0 0.0
        %4005 = vmatpush2.msra.mxu0 0.0
        %4006 = vmatprep.subr.mxu0 0.0
        %4007 = vmatpush2.msra.mxu0 0.0
        %4008 = vmatprep.subr.mxu0 0.0
        %4009 = vmatpush2.msra.mxu0 0.0
        %4010 = vmatprep.subr.mxu0 0.0
        %4011 = vmatpush2.msra.mxu0 0.0
        %4012 = vmatprep.subr.mxu0 0.0
        %4013 = vmatpush2.msra.mxu0 0.0
        %4014 = vmatprep.subr.mxu0 0.0
        %4015 = vmatpush2.msra.mxu0 0.0
        %4016 = vmatprep.subr.mxu0 0.0
        %4017 = vmatpush2.msra.mxu0 0.0
        %4018 = vmatprep.subr.mxu0 0.0
        %4019 = vmatpush2.msra.mxu0 0.0
        %4020 = vmatprep.subr.mxu0 0.0
        %4021 = vmatpush2.msra.mxu0 0.0
        %4022 = vmatprep.subr.mxu0 0.0
        %4023 = vmatpush2.msra.mxu0 0.0
        %4024 = vmatprep.subr.mxu0 0.0
        %4025 = vmatpush2.msra.mxu0 0.0
        %4026 = vmatprep.subr.mxu0 0.0
        %4027 = vmatpush2.msra.mxu0 0.0
        %4028 = vmatprep.subr.mxu0 0.0
        %4029 = vmatpush2.msra.mxu0 0.0
        %4030 = vmatprep.subr.mxu0 0.0
        %4031 = vmatpush2.msra.mxu0 0.0
        %4032 = vmatprep.subr.mxu0 0.0
        %4033 = vmatpush2.msra.mxu0 0.0
        %4034 = vmatprep.subr.mxu0 0.0
        %4035 = vmatpush2.msra.mxu0 0.0
        %4036 = vmatprep.mubr.f32.mxu0 0.0
        %4037 = vmatmul.mubr.f32.gmra.mxu0 %v1517
        %v4038 = vpop.f32.mrf.mxu0
        %v4039 = vadd.f32 %v3970, %v4038
        %v4040 = vpop.f32.mrf.mxu0
        %4041 = vmatprep.mubr.f32.mxu0 0.0
        %4042 = vmatmul.mubr.f32.gmra.mxu0 %v1520
        %v4043 = vpop.f32.mrf.mxu0
        %v4044 = vadd.f32 %v3970, %v4043
        %v4045 = vpop.f32.mrf.mxu0
        %4046 = vdwg.mxu0
        %v4048 = vsel %vm457, %v3944, 0
        %v4051 = vsel %vm457, %v3949, 0
        %v4054 = vsel %vm457, %v4039, 0
        %v4057 = vsel %vm457, %v4044, 0
        %4059 = vmatprep.subr.mxu0 0.0
        %4060 = vmatpush1.xpose.msra.mxu0 0.0
        %4061 = vmatprep.subr.mxu0 0.0
        %4062 = vmatpush1.xpose.msra.mxu0 0.0
        %4063 = vmatprep.subr.mxu0 0.0
        %4064 = vmatpush1.xpose.msra.mxu0 0.0
        %4065 = vmatprep.subr.mxu0 0.0
        %4066 = vmatpush1.xpose.msra.mxu0 0.0
        %4067 = vmatprep.subr.mxu0 0.0
        %4068 = vmatpush1.xpose.msra.mxu0 0.0
        %4069 = vmatprep.subr.mxu0 0.0
        %4070 = vmatpush1.xpose.msra.mxu0 0.0
        %4071 = vmatprep.subr.mxu0 0.0
        %4072 = vmatpush1.xpose.msra.mxu0 0.0
        %4073 = vmatprep.subr.mxu0 0.0
        %4074 = vmatpush1.xpose.msra.mxu0 0.0
        %4075 = vmatprep.subr.mxu0 0.0
        %4076 = vmatpush1.xpose.msra.mxu0 0.0
        %4077 = vmatprep.subr.mxu0 0.0
        %4078 = vmatpush1.xpose.msra.mxu0 0.0
        %4079 = vmatprep.subr.mxu0 0.0
        %4080 = vmatpush1.xpose.msra.mxu0 0.0
        %4081 = vmatprep.subr.mxu0 0.0
        %4082 = vmatpush1.xpose.msra.mxu0 0.0
        %4083 = vmatprep.subr.mxu0 0.0
        %4084 = vmatpush1.xpose.msra.mxu0 0.0
        %4085 = vmatprep.subr.mxu0 0.0
        %4086 = vmatpush1.xpose.msra.mxu0 0.0
        %4087 = vmatprep.subr.mxu0 0.0
        %4088 = vmatpush1.xpose.msra.mxu0 %v4057
        %4089 = vmatprep.subr.mxu0 0.0
        %4090 = vmatpush1.xpose.msra.mxu0 %v4054
        %4091 = vmatprep.subr.mxu0 0.0
        %4092 = vmatpush2.xpose.msra.mxu0 0.0
        %4093 = vmatprep.subr.mxu0 0.0
        %4094 = vmatpush2.xpose.msra.mxu0 0.0
        %4095 = vmatprep.subr.mxu0 0.0
        %4096 = vmatpush2.xpose.msra.mxu0 0.0
        %4097 = vmatprep.subr.mxu0 0.0
        %4098 = vmatpush2.xpose.msra.mxu0 0.0
        %4099 = vmatprep.subr.mxu0 0.0
        %4100 = vmatpush2.xpose.msra.mxu0 0.0
        %4101 = vmatprep.subr.mxu0 0.0
        %4102 = vmatpush2.xpose.msra.mxu0 0.0
        %4103 = vmatprep.subr.mxu0 0.0
        %4104 = vmatpush2.xpose.msra.mxu0 0.0
        %4105 = vmatprep.subr.mxu0 0.0
        %4106 = vmatpush2.xpose.msra.mxu0 0.0
        %4107 = vmatprep.subr.mxu0 0.0
        %4108 = vmatpush2.xpose.msra.mxu0 0.0
        %4109 = vmatprep.subr.mxu0 0.0
        %4110 = vmatpush2.xpose.msra.mxu0 0.0
        %4111 = vmatprep.subr.mxu0 0.0
        %4112 = vmatpush2.xpose.msra.mxu0 0.0
        %4113 = vmatprep.subr.mxu0 0.0
        %4114 = vmatpush2.xpose.msra.mxu0 0.0
        %4115 = vmatprep.subr.mxu0 0.0
        %4116 = vmatpush2.xpose.msra.mxu0 0.0
        %4117 = vmatprep.subr.mxu0 0.0
        %4118 = vmatpush2.xpose.msra.mxu0 0.0
        %4119 = vmatprep.subr.mxu0 0.0
        %4120 = vmatpush2.xpose.msra.mxu0 0.0
        %4121 = vmatprep.subr.mxu0 0.0
        %4122 = vmatpush2.xpose.msra.mxu0 0.0
        %4123 = vmatprep.mubr.f32.mxu0 0.0
        %4124 = vmatmul.mubr.f32.gmra.mxu0 %v4048
        %v4125 = vpop.f32.mrf.mxu0
        %v4126 = vadd.f32 0.0, %v4125
        %v4127 = vpop.f32.mrf.mxu0
        %4128 = vmatprep.mubr.f32.mxu0 0.0
        %4129 = vmatmul.mubr.f32.gmra.mxu0 %v4051
        %v4130 = vpop.f32.mrf.mxu0
        %v4131 = vadd.f32 0.0, %v4130
        %v4132 = vpop.f32.mrf.mxu0
        %4133 = vdwg.mxu0
        %v4134 = vmul.f32 %v4126, 0.35355338
        %v4135 = vmul.f32 %v4131, 0.35355338
        %v4136 = vadd.f32 %v4134, %v327
        %v4137 = vadd.f32 %v4135, %v328
        %v4138 = vsel %vm543, %v4136, -inf
        %4139 = vmax.xlane.f32.xlu0 %v4138
        %v4140 = vpop.xlane.xlu0 %4139
        %v4141 = vsel %vm543, %v4137, -inf
        %4142 = vmax.xlane.f32.xlu0 %v4141
        %v4143 = vpop.xlane.xlu0 %4142
        %v4144 = vsub.f32 %v4136, %v4140
        %v4145 = vsub.f32 %v4137, %v4143
        %v4146 = vmul.f32 %v4144, 1.442695
        %v4147 = vpow.pop %v4146
        %v4148 = vmul.f32 %v4145, 1.442695
        %v4149 = vpow.pop %v4148
        %v4150 = vsel %vm543, %v4147, 0.0
        %4151 = vadd.xlane.f32.xlu0 %v4150
        %v4152 = vpop.xlane.xlu0 %4151
        %v4153 = vsel %vm543, %v4149, 0.0
        %4154 = vadd.xlane.f32.xlu0 %v4153
        %v4155 = vpop.xlane.xlu0 %4154
        %v4156 = vrcp.pop %v4152
        %v4157 = vmul.f32 %v4147, %v4156
        %v4158 = vrcp.pop %v4155
        %v4159 = vmul.f32 %v4149, %v4158
        %4160 = vrot.lane.b32.xlu0 %v4039, 96
        %v4161 = vpop.permute.xlu0 %4160
        %4162 = vrot.lane.b32.xlu0 %v4044, 96
        %v4163 = vpop.permute.xlu0 %4162
        %v4167 = vsel %vm543, %v4157, 0
        %v4170 = vsel %vm543, %v4159, 0
        %4172 = vmatprep.subr.mxu0 0.0
        %4173 = vmatpush1.msra.mxu0 0.0
        %4174 = vmatprep.subr.mxu0 0.0
        %4175 = vmatpush1.msra.mxu0 0.0
        %4176 = vmatprep.subr.mxu0 0.0
        %4177 = vmatpush1.msra.mxu0 0.0
        %4178 = vmatprep.subr.mxu0 0.0
        %4179 = vmatpush1.msra.mxu0 0.0
        %4180 = vmatprep.subr.mxu0 0.0
        %4181 = vmatpush1.msra.mxu0 0.0
        %4182 = vmatprep.subr.mxu0 0.0
        %4183 = vmatpush1.msra.mxu0 0.0
        %4184 = vmatprep.subr.mxu0 0.0
        %4185 = vmatpush1.msra.mxu0 0.0
        %4186 = vmatprep.subr.mxu0 0.0
        %4187 = vmatpush1.msra.mxu0 0.0
        %4188 = vmatprep.subr.mxu0 0.0
        %4189 = vmatpush1.msra.mxu0 0.0
        %4190 = vmatprep.subr.mxu0 0.0
        %4191 = vmatpush1.msra.mxu0 0.0
        %4192 = vmatprep.subr.mxu0 0.0
        %4193 = vmatpush1.msra.mxu0 0.0
        %4194 = vmatprep.subr.mxu0 0.0
        %4195 = vmatpush1.msra.mxu0 0.0
        %4196 = vmatprep.subr.mxu0 0.0
        %4197 = vmatpush1.msra.mxu0 0.0
        %4198 = vmatprep.subr.mxu0 0.0
        %4199 = vmatpush1.msra.mxu0 0.0
        %4200 = vmatprep.subr.mxu0 0.0
        %4201 = vmatpush1.msra.mxu0 %v4163
        %4202 = vmatprep.subr.mxu0 0.0
        %4203 = vmatpush1.msra.mxu0 %v4161
        %4204 = vmatprep.subr.mxu0 0.0
        %4205 = vmatpush2.msra.mxu0 0.0
        %4206 = vmatprep.subr.mxu0 0.0
        %4207 = vmatpush2.msra.mxu0 0.0
        %4208 = vmatprep.subr.mxu0 0.0
        %4209 = vmatpush2.msra.mxu0 0.0
        %4210 = vmatprep.subr.mxu0 0.0
        %4211 = vmatpush2.msra.mxu0 0.0
        %4212 = vmatprep.subr.mxu0 0.0
        %4213 = vmatpush2.msra.mxu0 0.0
        %4214 = vmatprep.subr.mxu0 0.0
        %4215 = vmatpush2.msra.mxu0 0.0
        %4216 = vmatprep.subr.mxu0 0.0
        %4217 = vmatpush2.msra.mxu0 0.0
        %4218 = vmatprep.subr.mxu0 0.0
        %4219 = vmatpush2.msra.mxu0 0.0
        %4220 = vmatprep.subr.mxu0 0.0
        %4221 = vmatpush2.msra.mxu0 0.0
        %4222 = vmatprep.subr.mxu0 0.0
        %4223 = vmatpush2.msra.mxu0 0.0
        %4224 = vmatprep.subr.mxu0 0.0
        %4225 = vmatpush2.msra.mxu0 0.0
        %4226 = vmatprep.subr.mxu0 0.0
        %4227 = vmatpush2.msra.mxu0 0.0
        %4228 = vmatprep.subr.mxu0 0.0
        %4229 = vmatpush2.msra.mxu0 0.0
        %4230 = vmatprep.subr.mxu0 0.0
        %4231 = vmatpush2.msra.mxu0 0.0
        %4232 = vmatprep.subr.mxu0 0.0
        %4233 = vmatpush2.msra.mxu0 0.0
        %4234 = vmatprep.subr.mxu0 0.0
        %4235 = vmatpush2.msra.mxu0 0.0
        %4236 = vmatprep.mubr.f32.mxu0 0.0
        %4237 = vmatmul.mubr.f32.gmra.mxu0 %v4167
        %v4238 = vpop.f32.mrf.mxu0
        %v4239 = vadd.f32 0.0, %v4238
        %v4240 = vpop.f32.mrf.mxu0
        %4241 = vmatprep.mubr.f32.mxu0 0.0
        %4242 = vmatmul.mubr.f32.gmra.mxu0 %v4170
        %v4243 = vpop.f32.mrf.mxu0
        %v4244 = vadd.f32 0.0, %v4243
        %v4245 = vpop.f32.mrf.mxu0
        %4246 = vdwg.mxu0
        %4247 = vrot.lane.b32.xlu0 %v3944, 120
        %v4248 = vpop.permute.xlu0 %4247
        %4249 = vrot.lane.b32.xlu0 %v3949, 120
        %v4250 = vpop.permute.xlu0 %4249
        %4251 = vrot.lane.b32.xlu0 %v4039, 120
        %v4252 = vpop.permute.xlu0 %4251
        %4253 = vrot.lane.b32.xlu0 %v4044, 120
        %v4254 = vpop.permute.xlu0 %4253
        %v4255 = vsel %vm457, %v4248, 0
        %v4257 = vsel %vm457, %v4250, 0
        %v4259 = vsel %vm457, %v4252, 0
        %v4261 = vsel %vm457, %v4254, 0
        %4263 = vmatprep.subr.mxu0 0.0
        %4264 = vmatpush1.xpose.msra.mxu0 0.0
        %4265 = vmatprep.subr.mxu0 0.0
        %4266 = vmatpush1.xpose.msra.mxu0 0.0
        %4267 = vmatprep.subr.mxu0 0.0
        %4268 = vmatpush1.xpose.msra.mxu0 0.0
        %4269 = vmatprep.subr.mxu0 0.0
        %4270 = vmatpush1.xpose.msra.mxu0 0.0
        %4271 = vmatprep.subr.mxu0 0.0
        %4272 = vmatpush1.xpose.msra.mxu0 0.0
        %4273 = vmatprep.subr.mxu0 0.0
        %4274 = vmatpush1.xpose.msra.mxu0 0.0
        %4275 = vmatprep.subr.mxu0 0.0
        %4276 = vmatpush1.xpose.msra.mxu0 0.0
        %4277 = vmatprep.subr.mxu0 0.0
        %4278 = vmatpush1.xpose.msra.mxu0 0.0
        %4279 = vmatprep.subr.mxu0 0.0
        %4280 = vmatpush1.xpose.msra.mxu0 0.0
        %4281 = vmatprep.subr.mxu0 0.0
        %4282 = vmatpush1.xpose.msra.mxu0 0.0
        %4283 = vmatprep.subr.mxu0 0.0
        %4284 = vmatpush1.xpose.msra.mxu0 0.0
        %4285 = vmatprep.subr.mxu0 0.0
        %4286 = vmatpush1.xpose.msra.mxu0 0.0
        %4287 = vmatprep.subr.mxu0 0.0
        %4288 = vmatpush1.xpose.msra.mxu0 0.0
        %4289 = vmatprep.subr.mxu0 0.0
        %4290 = vmatpush1.xpose.msra.mxu0 0.0
        %4291 = vmatprep.subr.mxu0 0.0
        %4292 = vmatpush1.xpose.msra.mxu0 %v4261
        %4293 = vmatprep.subr.mxu0 0.0
        %4294 = vmatpush1.xpose.msra.mxu0 %v4259
        %4295 = vmatprep.subr.mxu0 0.0
        %4296 = vmatpush2.xpose.msra.mxu0 0.0
        %4297 = vmatprep.subr.mxu0 0.0
        %4298 = vmatpush2.xpose.msra.mxu0 0.0
        %4299 = vmatprep.subr.mxu0 0.0
        %4300 = vmatpush2.xpose.msra.mxu0 0.0
        %4301 = vmatprep.subr.mxu0 0.0
        %4302 = vmatpush2.xpose.msra.mxu0 0.0
        %4303 = vmatprep.subr.mxu0 0.0
        %4304 = vmatpush2.xpose.msra.mxu0 0.0
        %4305 = vmatprep.subr.mxu0 0.0
        %4306 = vmatpush2.xpose.msra.mxu0 0.0
        %4307 = vmatprep.subr.mxu0 0.0
        %4308 = vmatpush2.xpose.msra.mxu0 0.0
        %4309 = vmatprep.subr.mxu0 0.0
        %4310 = vmatpush2.xpose.msra.mxu0 0.0
        %4311 = vmatprep.subr.mxu0 0.0
        %4312 = vmatpush2.xpose.msra.mxu0 0.0
        %4313 = vmatprep.subr.mxu0 0.0
        %4314 = vmatpush2.xpose.msra.mxu0 0.0
        %4315 = vmatprep.subr.mxu0 0.0
        %4316 = vmatpush2.xpose.msra.mxu0 0.0
        %4317 = vmatprep.subr.mxu0 0.0
        %4318 = vmatpush2.xpose.msra.mxu0 0.0
        %4319 = vmatprep.subr.mxu0 0.0
        %4320 = vmatpush2.xpose.msra.mxu0 0.0
        %4321 = vmatprep.subr.mxu0 0.0
        %4322 = vmatpush2.xpose.msra.mxu0 0.0
        %4323 = vmatprep.subr.mxu0 0.0
        %4324 = vmatpush2.xpose.msra.mxu0 0.0
        %4325 = vmatprep.subr.mxu0 0.0
        %4326 = vmatpush2.xpose.msra.mxu0 0.0
        %4327 = vmatprep.mubr.f32.mxu0 0.0
        %4328 = vmatmul.mubr.f32.gmra.mxu0 %v4255
        %v4329 = vpop.f32.mrf.mxu0
        %v4330 = vadd.f32 0.0, %v4329
        %v4331 = vpop.f32.mrf.mxu0
        %4332 = vmatprep.mubr.f32.mxu0 0.0
        %4333 = vmatmul.mubr.f32.gmra.mxu0 %v4257
        %v4334 = vpop.f32.mrf.mxu0
        %v4335 = vadd.f32 0.0, %v4334
        %v4336 = vpop.f32.mrf.mxu0
        %4337 = vdwg.mxu0
        %v4338 = vmul.f32 %v4330, 0.35355338
        %v4339 = vmul.f32 %v4335, 0.35355338
        %v4340 = vadd.f32 %v4338, %v327
        %v4341 = vadd.f32 %v4339, %v328
        %v4342 = vsel %vm543, %v4340, -inf
        %4343 = vmax.xlane.f32.xlu0 %v4342
        %v4344 = vpop.xlane.xlu0 %4343
        %v4345 = vsel %vm543, %v4341, -inf
        %4346 = vmax.xlane.f32.xlu0 %v4345
        %v4347 = vpop.xlane.xlu0 %4346
        %v4348 = vsub.f32 %v4340, %v4344
        %v4349 = vsub.f32 %v4341, %v4347
        %v4350 = vmul.f32 %v4348, 1.442695
        %v4351 = vpow.pop %v4350
        %v4352 = vmul.f32 %v4349, 1.442695
        %v4353 = vpow.pop %v4352
        %v4354 = vsel %vm543, %v4351, 0.0
        %4355 = vadd.xlane.f32.xlu0 %v4354
        %v4356 = vpop.xlane.xlu0 %4355
        %v4357 = vsel %vm543, %v4353, 0.0
        %4358 = vadd.xlane.f32.xlu0 %v4357
        %v4359 = vpop.xlane.xlu0 %4358
        %v4360 = vrcp.pop %v4356
        %v4361 = vmul.f32 %v4351, %v4360
        %v4362 = vrcp.pop %v4359
        %v4363 = vmul.f32 %v4353, %v4362
        %4364 = vrot.lane.b32.xlu0 %v4039, 88
        %v4365 = vpop.permute.xlu0 %4364
        %4366 = vrot.lane.b32.xlu0 %v4044, 88
        %v4367 = vpop.permute.xlu0 %4366
        %v4371 = vsel %vm543, %v4361, 0
        %v4374 = vsel %vm543, %v4363, 0
        %4376 = vmatprep.subr.mxu0 0.0
        %4377 = vmatpush1.msra.mxu0 0.0
        %4378 = vmatprep.subr.mxu0 0.0
        %4379 = vmatpush1.msra.mxu0 0.0
        %4380 = vmatprep.subr.mxu0 0.0
        %4381 = vmatpush1.msra.mxu0 0.0
        %4382 = vmatprep.subr.mxu0 0.0
        %4383 = vmatpush1.msra.mxu0 0.0
        %4384 = vmatprep.subr.mxu0 0.0
        %4385 = vmatpush1.msra.mxu0 0.0
        %4386 = vmatprep.subr.mxu0 0.0
        %4387 = vmatpush1.msra.mxu0 0.0
        %4388 = vmatprep.subr.mxu0 0.0
        %4389 = vmatpush1.msra.mxu0 0.0
        %4390 = vmatprep.subr.mxu0 0.0
        %4391 = vmatpush1.msra.mxu0 0.0
        %4392 = vmatprep.subr.mxu0 0.0
        %4393 = vmatpush1.msra.mxu0 0.0
        %4394 = vmatprep.subr.mxu0 0.0
        %4395 = vmatpush1.msra.mxu0 0.0
        %4396 = vmatprep.subr.mxu0 0.0
        %4397 = vmatpush1.msra.mxu0 0.0
        %4398 = vmatprep.subr.mxu0 0.0
        %4399 = vmatpush1.msra.mxu0 0.0
        %4400 = vmatprep.subr.mxu0 0.0
        %4401 = vmatpush1.msra.mxu0 0.0
        %4402 = vmatprep.subr.mxu0 0.0
        %4403 = vmatpush1.msra.mxu0 0.0
        %4404 = vmatprep.subr.mxu0 0.0
        %4405 = vmatpush1.msra.mxu0 %v4367
        %4406 = vmatprep.subr.mxu0 0.0
        %4407 = vmatpush1.msra.mxu0 %v4365
        %4408 = vmatprep.subr.mxu0 0.0
        %4409 = vmatpush2.msra.mxu0 0.0
        %4410 = vmatprep.subr.mxu0 0.0
        %4411 = vmatpush2.msra.mxu0 0.0
        %4412 = vmatprep.subr.mxu0 0.0
        %4413 = vmatpush2.msra.mxu0 0.0
        %4414 = vmatprep.subr.mxu0 0.0
        %4415 = vmatpush2.msra.mxu0 0.0
        %4416 = vmatprep.subr.mxu0 0.0
        %4417 = vmatpush2.msra.mxu0 0.0
        %4418 = vmatprep.subr.mxu0 0.0
        %4419 = vmatpush2.msra.mxu0 0.0
        %4420 = vmatprep.subr.mxu0 0.0
        %4421 = vmatpush2.msra.mxu0 0.0
        %4422 = vmatprep.subr.mxu0 0.0
        %4423 = vmatpush2.msra.mxu0 0.0
        %4424 = vmatprep.subr.mxu0 0.0
        %4425 = vmatpush2.msra.mxu0 0.0
        %4426 = vmatprep.subr.mxu0 0.0
        %4427 = vmatpush2.msra.mxu0 0.0
        %4428 = vmatprep.subr.mxu0 0.0
        %4429 = vmatpush2.msra.mxu0 0.0
        %4430 = vmatprep.subr.mxu0 0.0
        %4431 = vmatpush2.msra.mxu0 0.0
        %4432 = vmatprep.subr.mxu0 0.0
        %4433 = vmatpush2.msra.mxu0 0.0
        %4434 = vmatprep.subr.mxu0 0.0
        %4435 = vmatpush2.msra.mxu0 0.0
        %4436 = vmatprep.subr.mxu0 0.0
        %4437 = vmatpush2.msra.mxu0 0.0
        %4438 = vmatprep.subr.mxu0 0.0
        %4439 = vmatpush2.msra.mxu0 0.0
        %4440 = vmatprep.mubr.f32.mxu0 0.0
        %4441 = vmatmul.mubr.f32.gmra.mxu0 %v4371
        %v4442 = vpop.f32.mrf.mxu0
        %v4443 = vadd.f32 0.0, %v4442
        %v4444 = vpop.f32.mrf.mxu0
        %4445 = vmatprep.mubr.f32.mxu0 0.0
        %4446 = vmatmul.mubr.f32.gmra.mxu0 %v4374
        %v4447 = vpop.f32.mrf.mxu0
        %v4448 = vadd.f32 0.0, %v4447
        %v4449 = vpop.f32.mrf.mxu0
        %4450 = vdwg.mxu0
        %4451 = vrot.lane.b32.xlu0 %v3944, 112
        %v4452 = vpop.permute.xlu0 %4451
        %4453 = vrot.lane.b32.xlu0 %v3949, 112
        %v4454 = vpop.permute.xlu0 %4453
        %4455 = vrot.lane.b32.xlu0 %v4039, 112
        %v4456 = vpop.permute.xlu0 %4455
        %4457 = vrot.lane.b32.xlu0 %v4044, 112
        %v4458 = vpop.permute.xlu0 %4457
        %v4459 = vsel %vm457, %v4452, 0
        %v4461 = vsel %vm457, %v4454, 0
        %v4463 = vsel %vm457, %v4456, 0
        %v4465 = vsel %vm457, %v4458, 0
        %4467 = vmatprep.subr.mxu0 0.0
        %4468 = vmatpush1.xpose.msra.mxu0 0.0
        %4469 = vmatprep.subr.mxu0 0.0
        %4470 = vmatpush1.xpose.msra.mxu0 0.0
        %4471 = vmatprep.subr.mxu0 0.0
        %4472 = vmatpush1.xpose.msra.mxu0 0.0
        %4473 = vmatprep.subr.mxu0 0.0
        %4474 = vmatpush1.xpose.msra.mxu0 0.0
        %4475 = vmatprep.subr.mxu0 0.0
        %4476 = vmatpush1.xpose.msra.mxu0 0.0
        %4477 = vmatprep.subr.mxu0 0.0
        %4478 = vmatpush1.xpose.msra.mxu0 0.0
        %4479 = vmatprep.subr.mxu0 0.0
        %4480 = vmatpush1.xpose.msra.mxu0 0.0
        %4481 = vmatprep.subr.mxu0 0.0
        %4482 = vmatpush1.xpose.msra.mxu0 0.0
        %4483 = vmatprep.subr.mxu0 0.0
        %4484 = vmatpush1.xpose.msra.mxu0 0.0
        %4485 = vmatprep.subr.mxu0 0.0
        %4486 = vmatpush1.xpose.msra.mxu0 0.0
        %4487 = vmatprep.subr.mxu0 0.0
        %4488 = vmatpush1.xpose.msra.mxu0 0.0
        %4489 = vmatprep.subr.mxu0 0.0
        %4490 = vmatpush1.xpose.msra.mxu0 0.0
        %4491 = vmatprep.subr.mxu0 0.0
        %4492 = vmatpush1.xpose.msra.mxu0 0.0
        %4493 = vmatprep.subr.mxu0 0.0
        %4494 = vmatpush1.xpose.msra.mxu0 0.0
        %4495 = vmatprep.subr.mxu0 0.0
        %4496 = vmatpush1.xpose.msra.mxu0 %v4465
        %4497 = vmatprep.subr.mxu0 0.0
        %4498 = vmatpush1.xpose.msra.mxu0 %v4463
        %4499 = vmatprep.subr.mxu0 0.0
        %4500 = vmatpush2.xpose.msra.mxu0 0.0
        %4501 = vmatprep.subr.mxu0 0.0
        %4502 = vmatpush2.xpose.msra.mxu0 0.0
        %4503 = vmatprep.subr.mxu0 0.0
        %4504 = vmatpush2.xpose.msra.mxu0 0.0
        %4505 = vmatprep.subr.mxu0 0.0
        %4506 = vmatpush2.xpose.msra.mxu0 0.0
        %4507 = vmatprep.subr.mxu0 0.0
        %4508 = vmatpush2.xpose.msra.mxu0 0.0
        %4509 = vmatprep.subr.mxu0 0.0
        %4510 = vmatpush2.xpose.msra.mxu0 0.0
        %4511 = vmatprep.subr.mxu0 0.0
        %4512 = vmatpush2.xpose.msra.mxu0 0.0
        %4513 = vmatprep.subr.mxu0 0.0
        %4514 = vmatpush2.xpose.msra.mxu0 0.0
        %4515 = vmatprep.subr.mxu0 0.0
        %4516 = vmatpush2.xpose.msra.mxu0 0.0
        %4517 = vmatprep.subr.mxu0 0.0
        %4518 = vmatpush2.xpose.msra.mxu0 0.0
        %4519 = vmatprep.subr.mxu0 0.0
        %4520 = vmatpush2.xpose.msra.mxu0 0.0
        %4521 = vmatprep.subr.mxu0 0.0
        %4522 = vmatpush2.xpose.msra.mxu0 0.0
        %4523 = vmatprep.subr.mxu0 0.0
        %4524 = vmatpush2.xpose.msra.mxu0 0.0
        %4525 = vmatprep.subr.mxu0 0.0
        %4526 = vmatpush2.xpose.msra.mxu0 0.0
        %4527 = vmatprep.subr.mxu0 0.0
        %4528 = vmatpush2.xpose.msra.mxu0 0.0
        %4529 = vmatprep.subr.mxu0 0.0
        %4530 = vmatpush2.xpose.msra.mxu0 0.0
        %4531 = vmatprep.mubr.f32.mxu0 0.0
        %4532 = vmatmul.mubr.f32.gmra.mxu0 %v4459
        %v4533 = vpop.f32.mrf.mxu0
        %v4534 = vadd.f32 0.0, %v4533
        %v4535 = vpop.f32.mrf.mxu0
        %4536 = vmatprep.mubr.f32.mxu0 0.0
        %4537 = vmatmul.mubr.f32.gmra.mxu0 %v4461
        %v4538 = vpop.f32.mrf.mxu0
        %v4539 = vadd.f32 0.0, %v4538
        %v4540 = vpop.f32.mrf.mxu0
        %4541 = vdwg.mxu0
        %v4542 = vmul.f32 %v4534, 0.35355338
        %v4543 = vmul.f32 %v4539, 0.35355338
        %v4544 = vadd.f32 %v4542, %v327
        %v4545 = vadd.f32 %v4543, %v328
        %v4546 = vsel %vm543, %v4544, -inf
        %4547 = vmax.xlane.f32.xlu0 %v4546
        %v4548 = vpop.xlane.xlu0 %4547
        %v4549 = vsel %vm543, %v4545, -inf
        %4550 = vmax.xlane.f32.xlu0 %v4549
        %v4551 = vpop.xlane.xlu0 %4550
        %v4552 = vsub.f32 %v4544, %v4548
        %v4553 = vsub.f32 %v4545, %v4551
        %v4554 = vmul.f32 %v4552, 1.442695
        %v4555 = vpow.pop %v4554
        %v4556 = vmul.f32 %v4553, 1.442695
        %v4557 = vpow.pop %v4556
        %v4558 = vsel %vm543, %v4555, 0.0
        %4559 = vadd.xlane.f32.xlu0 %v4558
        %v4560 = vpop.xlane.xlu0 %4559
        %v4561 = vsel %vm543, %v4557, 0.0
        %4562 = vadd.xlane.f32.xlu0 %v4561
        %v4563 = vpop.xlane.xlu0 %4562
        %v4564 = vrcp.pop %v4560
        %v4565 = vmul.f32 %v4555, %v4564
        %v4566 = vrcp.pop %v4563
        %v4567 = vmul.f32 %v4557, %v4566
        %4568 = vrot.lane.b32.xlu0 %v4039, 80
        %v4569 = vpop.permute.xlu0 %4568
        %4570 = vrot.lane.b32.xlu0 %v4044, 80
        %v4571 = vpop.permute.xlu0 %4570
        %v4575 = vsel %vm543, %v4565, 0
        %v4578 = vsel %vm543, %v4567, 0
        %4580 = vmatprep.subr.mxu0 0.0
        %4581 = vmatpush1.msra.mxu0 0.0
        %4582 = vmatprep.subr.mxu0 0.0
        %4583 = vmatpush1.msra.mxu0 0.0
        %4584 = vmatprep.subr.mxu0 0.0
        %4585 = vmatpush1.msra.mxu0 0.0
        %4586 = vmatprep.subr.mxu0 0.0
        %4587 = vmatpush1.msra.mxu0 0.0
        %4588 = vmatprep.subr.mxu0 0.0
        %4589 = vmatpush1.msra.mxu0 0.0
        %4590 = vmatprep.subr.mxu0 0.0
        %4591 = vmatpush1.msra.mxu0 0.0
        %4592 = vmatprep.subr.mxu0 0.0
        %4593 = vmatpush1.msra.mxu0 0.0
        %4594 = vmatprep.subr.mxu0 0.0
        %4595 = vmatpush1.msra.mxu0 0.0
        %4596 = vmatprep.subr.mxu0 0.0
        %4597 = vmatpush1.msra.mxu0 0.0
        %4598 = vmatprep.subr.mxu0 0.0
        %4599 = vmatpush1.msra.mxu0 0.0
        %4600 = vmatprep.subr.mxu0 0.0
        %4601 = vmatpush1.msra.mxu0 0.0
        %4602 = vmatprep.subr.mxu0 0.0
        %4603 = vmatpush1.msra.mxu0 0.0
        %4604 = vmatprep.subr.mxu0 0.0
        %4605 = vmatpush1.msra.mxu0 0.0
        %4606 = vmatprep.subr.mxu0 0.0
        %4607 = vmatpush1.msra.mxu0 0.0
        %4608 = vmatprep.subr.mxu0 0.0
        %4609 = vmatpush1.msra.mxu0 %v4571
        %4610 = vmatprep.subr.mxu0 0.0
        %4611 = vmatpush1.msra.mxu0 %v4569
        %4612 = vmatprep.subr.mxu0 0.0
        %4613 = vmatpush2.msra.mxu0 0.0
        %4614 = vmatprep.subr.mxu0 0.0
        %4615 = vmatpush2.msra.mxu0 0.0
        %4616 = vmatprep.subr.mxu0 0.0
        %4617 = vmatpush2.msra.mxu0 0.0
        %4618 = vmatprep.subr.mxu0 0.0
        %4619 = vmatpush2.msra.mxu0 0.0
        %4620 = vmatprep.subr.mxu0 0.0
        %4621 = vmatpush2.msra.mxu0 0.0
        %4622 = vmatprep.subr.mxu0 0.0
        %4623 = vmatpush2.msra.mxu0 0.0
        %4624 = vmatprep.subr.mxu0 0.0
        %4625 = vmatpush2.msra.mxu0 0.0
        %4626 = vmatprep.subr.mxu0 0.0
        %4627 = vmatpush2.msra.mxu0 0.0
        %4628 = vmatprep.subr.mxu0 0.0
        %4629 = vmatpush2.msra.mxu0 0.0
        %4630 = vmatprep.subr.mxu0 0.0
        %4631 = vmatpush2.msra.mxu0 0.0
        %4632 = vmatprep.subr.mxu0 0.0
        %4633 = vmatpush2.msra.mxu0 0.0
        %4634 = vmatprep.subr.mxu0 0.0
        %4635 = vmatpush2.msra.mxu0 0.0
        %4636 = vmatprep.subr.mxu0 0.0
        %4637 = vmatpush2.msra.mxu0 0.0
        %4638 = vmatprep.subr.mxu0 0.0
        %4639 = vmatpush2.msra.mxu0 0.0
        %4640 = vmatprep.subr.mxu0 0.0
        %4641 = vmatpush2.msra.mxu0 0.0
        %4642 = vmatprep.subr.mxu0 0.0
        %4643 = vmatpush2.msra.mxu0 0.0
        %4644 = vmatprep.mubr.f32.mxu0 0.0
        %4645 = vmatmul.mubr.f32.gmra.mxu0 %v4575
        %v4646 = vpop.f32.mrf.mxu0
        %v4647 = vadd.f32 0.0, %v4646
        %v4648 = vpop.f32.mrf.mxu0
        %4649 = vmatprep.mubr.f32.mxu0 0.0
        %4650 = vmatmul.mubr.f32.gmra.mxu0 %v4578
        %v4651 = vpop.f32.mrf.mxu0
        %v4652 = vadd.f32 0.0, %v4651
        %v4653 = vpop.f32.mrf.mxu0
        %4654 = vdwg.mxu0
        %4655 = vrot.lane.b32.xlu0 %v3944, 104
        %v4656 = vpop.permute.xlu0 %4655
        %4657 = vrot.lane.b32.xlu0 %v3949, 104
        %v4658 = vpop.permute.xlu0 %4657
        %4659 = vrot.lane.b32.xlu0 %v4039, 104
        %v4660 = vpop.permute.xlu0 %4659
        %4661 = vrot.lane.b32.xlu0 %v4044, 104
        %v4662 = vpop.permute.xlu0 %4661
        %v4663 = vsel %vm457, %v4656, 0
        %v4665 = vsel %vm457, %v4658, 0
        %v4667 = vsel %vm457, %v4660, 0
        %v4669 = vsel %vm457, %v4662, 0
        %4671 = vmatprep.subr.mxu0 0.0
        %4672 = vmatpush1.xpose.msra.mxu0 0.0
        %4673 = vmatprep.subr.mxu0 0.0
        %4674 = vmatpush1.xpose.msra.mxu0 0.0
        %4675 = vmatprep.subr.mxu0 0.0
        %4676 = vmatpush1.xpose.msra.mxu0 0.0
        %4677 = vmatprep.subr.mxu0 0.0
        %4678 = vmatpush1.xpose.msra.mxu0 0.0
        %4679 = vmatprep.subr.mxu0 0.0
        %4680 = vmatpush1.xpose.msra.mxu0 0.0
        %4681 = vmatprep.subr.mxu0 0.0
        %4682 = vmatpush1.xpose.msra.mxu0 0.0
        %4683 = vmatprep.subr.mxu0 0.0
        %4684 = vmatpush1.xpose.msra.mxu0 0.0
        %4685 = vmatprep.subr.mxu0 0.0
        %4686 = vmatpush1.xpose.msra.mxu0 0.0
        %4687 = vmatprep.subr.mxu0 0.0
        %4688 = vmatpush1.xpose.msra.mxu0 0.0
        %4689 = vmatprep.subr.mxu0 0.0
        %4690 = vmatpush1.xpose.msra.mxu0 0.0
        %4691 = vmatprep.subr.mxu0 0.0
        %4692 = vmatpush1.xpose.msra.mxu0 0.0
        %4693 = vmatprep.subr.mxu0 0.0
        %4694 = vmatpush1.xpose.msra.mxu0 0.0
        %4695 = vmatprep.subr.mxu0 0.0
        %4696 = vmatpush1.xpose.msra.mxu0 0.0
        %4697 = vmatprep.subr.mxu0 0.0
        %4698 = vmatpush1.xpose.msra.mxu0 0.0
        %4699 = vmatprep.subr.mxu0 0.0
        %4700 = vmatpush1.xpose.msra.mxu0 %v4669
        %4701 = vmatprep.subr.mxu0 0.0
        %4702 = vmatpush1.xpose.msra.mxu0 %v4667
        %4703 = vmatprep.subr.mxu0 0.0
        %4704 = vmatpush2.xpose.msra.mxu0 0.0
        %4705 = vmatprep.subr.mxu0 0.0
        %4706 = vmatpush2.xpose.msra.mxu0 0.0
        %4707 = vmatprep.subr.mxu0 0.0
        %4708 = vmatpush2.xpose.msra.mxu0 0.0
        %4709 = vmatprep.subr.mxu0 0.0
        %4710 = vmatpush2.xpose.msra.mxu0 0.0
        %4711 = vmatprep.subr.mxu0 0.0
        %4712 = vmatpush2.xpose.msra.mxu0 0.0
        %4713 = vmatprep.subr.mxu0 0.0
        %4714 = vmatpush2.xpose.msra.mxu0 0.0
        %4715 = vmatprep.subr.mxu0 0.0
        %4716 = vmatpush2.xpose.msra.mxu0 0.0
        %4717 = vmatprep.subr.mxu0 0.0
        %4718 = vmatpush2.xpose.msra.mxu0 0.0
        %4719 = vmatprep.subr.mxu0 0.0
        %4720 = vmatpush2.xpose.msra.mxu0 0.0
        %4721 = vmatprep.subr.mxu0 0.0
        %4722 = vmatpush2.xpose.msra.mxu0 0.0
        %4723 = vmatprep.subr.mxu0 0.0
        %4724 = vmatpush2.xpose.msra.mxu0 0.0
        %4725 = vmatprep.subr.mxu0 0.0
        %4726 = vmatpush2.xpose.msra.mxu0 0.0
        %4727 = vmatprep.subr.mxu0 0.0
        %4728 = vmatpush2.xpose.msra.mxu0 0.0
        %4729 = vmatprep.subr.mxu0 0.0
        %4730 = vmatpush2.xpose.msra.mxu0 0.0
        %4731 = vmatprep.subr.mxu0 0.0
        %4732 = vmatpush2.xpose.msra.mxu0 0.0
        %4733 = vmatprep.subr.mxu0 0.0
        %4734 = vmatpush2.xpose.msra.mxu0 0.0
        %4735 = vmatprep.mubr.f32.mxu0 0.0
        %4736 = vmatmul.mubr.f32.gmra.mxu0 %v4663
        %v4737 = vpop.f32.mrf.mxu0
        %v4738 = vadd.f32 0.0, %v4737
        %v4739 = vpop.f32.mrf.mxu0
        %4740 = vmatprep.mubr.f32.mxu0 0.0
        %4741 = vmatmul.mubr.f32.gmra.mxu0 %v4665
        %v4742 = vpop.f32.mrf.mxu0
        %v4743 = vadd.f32 0.0, %v4742
        %v4744 = vpop.f32.mrf.mxu0
        %4745 = vdwg.mxu0
        %v4746 = vmul.f32 %v4738, 0.35355338
        %v4747 = vmul.f32 %v4743, 0.35355338
        %v4748 = vadd.f32 %v4746, %v327
        %v4749 = vadd.f32 %v4747, %v328
        %v4750 = vsel %vm543, %v4748, -inf
        %4751 = vmax.xlane.f32.xlu0 %v4750
        %v4752 = vpop.xlane.xlu0 %4751
        %v4753 = vsel %vm543, %v4749, -inf
        %4754 = vmax.xlane.f32.xlu0 %v4753
        %v4755 = vpop.xlane.xlu0 %4754
        %v4756 = vsub.f32 %v4748, %v4752
        %v4757 = vsub.f32 %v4749, %v4755
        %v4758 = vmul.f32 %v4756, 1.442695
        %v4759 = vpow.pop %v4758
        %v4760 = vmul.f32 %v4757, 1.442695
        %v4761 = vpow.pop %v4760
        %v4762 = vsel %vm543, %v4759, 0.0
        %4763 = vadd.xlane.f32.xlu0 %v4762
        %v4764 = vpop.xlane.xlu0 %4763
        %v4765 = vsel %vm543, %v4761, 0.0
        %4766 = vadd.xlane.f32.xlu0 %v4765
        %v4767 = vpop.xlane.xlu0 %4766
        %v4768 = vrcp.pop %v4764
        %v4769 = vmul.f32 %v4759, %v4768
        %v4770 = vrcp.pop %v4767
        %v4771 = vmul.f32 %v4761, %v4770
        %4772 = vrot.lane.b32.xlu0 %v4039, 72
        %v4773 = vpop.permute.xlu0 %4772
        %4774 = vrot.lane.b32.xlu0 %v4044, 72
        %v4775 = vpop.permute.xlu0 %4774
        %v4779 = vsel %vm543, %v4769, 0
        %v4782 = vsel %vm543, %v4771, 0
        %4784 = vmatprep.subr.mxu0 0.0
        %4785 = vmatpush1.msra.mxu0 0.0
        %4786 = vmatprep.subr.mxu0 0.0
        %4787 = vmatpush1.msra.mxu0 0.0
        %4788 = vmatprep.subr.mxu0 0.0
        %4789 = vmatpush1.msra.mxu0 0.0
        %4790 = vmatprep.subr.mxu0 0.0
        %4791 = vmatpush1.msra.mxu0 0.0
        %4792 = vmatprep.subr.mxu0 0.0
        %4793 = vmatpush1.msra.mxu0 0.0
        %4794 = vmatprep.subr.mxu0 0.0
        %4795 = vmatpush1.msra.mxu0 0.0
        %4796 = vmatprep.subr.mxu0 0.0
        %4797 = vmatpush1.msra.mxu0 0.0
        %4798 = vmatprep.subr.mxu0 0.0
        %4799 = vmatpush1.msra.mxu0 0.0
        %4800 = vmatprep.subr.mxu0 0.0
        %4801 = vmatpush1.msra.mxu0 0.0
        %4802 = vmatprep.subr.mxu0 0.0
        %4803 = vmatpush1.msra.mxu0 0.0
        %4804 = vmatprep.subr.mxu0 0.0
        %4805 = vmatpush1.msra.mxu0 0.0
        %4806 = vmatprep.subr.mxu0 0.0
        %4807 = vmatpush1.msra.mxu0 0.0
        %4808 = vmatprep.subr.mxu0 0.0
        %4809 = vmatpush1.msra.mxu0 0.0
        %4810 = vmatprep.subr.mxu0 0.0
        %4811 = vmatpush1.msra.mxu0 0.0
        %4812 = vmatprep.subr.mxu0 0.0
        %4813 = vmatpush1.msra.mxu0 %v4775
        %4814 = vmatprep.subr.mxu0 0.0
        %4815 = vmatpush1.msra.mxu0 %v4773
        %4816 = vmatprep.subr.mxu0 0.0
        %4817 = vmatpush2.msra.mxu0 0.0
        %4818 = vmatprep.subr.mxu0 0.0
        %4819 = vmatpush2.msra.mxu0 0.0
        %4820 = vmatprep.subr.mxu0 0.0
        %4821 = vmatpush2.msra.mxu0 0.0
        %4822 = vmatprep.subr.mxu0 0.0
        %4823 = vmatpush2.msra.mxu0 0.0
        %4824 = vmatprep.subr.mxu0 0.0
        %4825 = vmatpush2.msra.mxu0 0.0
        %4826 = vmatprep.subr.mxu0 0.0
        %4827 = vmatpush2.msra.mxu0 0.0
        %4828 = vmatprep.subr.mxu0 0.0
        %4829 = vmatpush2.msra.mxu0 0.0
        %4830 = vmatprep.subr.mxu0 0.0
        %4831 = vmatpush2.msra.mxu0 0.0
        %4832 = vmatprep.subr.mxu0 0.0
        %4833 = vmatpush2.msra.mxu0 0.0
        %4834 = vmatprep.subr.mxu0 0.0
        %4835 = vmatpush2.msra.mxu0 0.0
        %4836 = vmatprep.subr.mxu0 0.0
        %4837 = vmatpush2.msra.mxu0 0.0
        %4838 = vmatprep.subr.mxu0 0.0
        %4839 = vmatpush2.msra.mxu0 0.0
        %4840 = vmatprep.subr.mxu0 0.0
        %4841 = vmatpush2.msra.mxu0 0.0
        %4842 = vmatprep.subr.mxu0 0.0
        %4843 = vmatpush2.msra.mxu0 0.0
        %4844 = vmatprep.subr.mxu0 0.0
        %4845 = vmatpush2.msra.mxu0 0.0
        %4846 = vmatprep.subr.mxu0 0.0
        %4847 = vmatpush2.msra.mxu0 0.0
        %4848 = vmatprep.mubr.f32.mxu0 0.0
        %4849 = vmatmul.mubr.f32.gmra.mxu0 %v4779
        %v4850 = vpop.f32.mrf.mxu0
        %v4851 = vadd.f32 0.0, %v4850
        %v4852 = vpop.f32.mrf.mxu0
        %4853 = vmatprep.mubr.f32.mxu0 0.0
        %4854 = vmatmul.mubr.f32.gmra.mxu0 %v4782
        %v4855 = vpop.f32.mrf.mxu0
        %v4856 = vadd.f32 0.0, %v4855
        %v4857 = vpop.f32.mrf.mxu0
        %4858 = vdwg.mxu0
        %4861 = vrot.lane.b32.xlu0 %v4443, 8
        %v4862 = vpop.permute.xlu0 %4861
        %4863 = vrot.lane.b32.xlu0 %v4448, 8
        %v4864 = vpop.permute.xlu0 %4863
        %4869 = vrot.lane.b32.xlu0 %v4647, 16
        %v4870 = vpop.permute.xlu0 %4869
        %4871 = vrot.lane.b32.xlu0 %v4652, 16
        %v4872 = vpop.permute.xlu0 %4871
        %4877 = vrot.lane.b32.xlu0 %v4851, 24
        %v4878 = vpop.permute.xlu0 %4877
        %4879 = vrot.lane.b32.xlu0 %v4856, 24
        %v4880 = vpop.permute.xlu0 %4879
        %v4883 = vsel %vm457, %v4239, %v4862
        %v4884 = vsel %vm457, %v4244, %v4864
        %v4885 = vsel %vm543, %v4883, %v4870
        %v4886 = vsel %vm543, %v4884, %v4872
        %v4887 = vsel %vm1287, %v4885, %v4878
        %v4888 = vsel %vm1287, %v4886, %v4880
        %v4889 = vld [vmem:[#allocation2 + $0x1c0] sm:$0xff]
        %v4890 = vld [vmem:[#allocation2 + $0x1d0] sm:$0xff]
        %v4891 = vld [vmem:[#allocation2 + $0x1e0] sm:$0xff]
        %v4892 = vld [vmem:[#allocation2 + $0x1f0] sm:$0xff]
        %v4893 = vld [vmem:[#allocation5 + $0x37] ss:$0 sm:$0xff]
        %v4895 = vsel %vm333, %v4887, 0
        %v4898 = vsel %vm333, %v4888, 0
        %4900 = vmatprep.subr.mxu0 0.0
        %4901 = vmatpush1.msra.mxu0 0.0
        %4902 = vmatprep.subr.mxu0 0.0
        %4903 = vmatpush1.msra.mxu0 0.0
        %4904 = vmatprep.subr.mxu0 0.0
        %4905 = vmatpush1.msra.mxu0 0.0
        %4906 = vmatprep.subr.mxu0 0.0
        %4907 = vmatpush1.msra.mxu0 0.0
        %4908 = vmatprep.subr.mxu0 0.0
        %4909 = vmatpush1.msra.mxu0 0.0
        %4910 = vmatprep.subr.mxu0 0.0
        %4911 = vmatpush1.msra.mxu0 0.0
        %4912 = vmatprep.subr.mxu0 0.0
        %4913 = vmatpush1.msra.mxu0 0.0
        %4914 = vmatprep.subr.mxu0 0.0
        %4915 = vmatpush1.msra.mxu0 0.0
        %4916 = vmatprep.subr.mxu0 0.0
        %4917 = vmatpush1.msra.mxu0 0.0
        %4918 = vmatprep.subr.mxu0 0.0
        %4919 = vmatpush1.msra.mxu0 0.0
        %4920 = vmatprep.subr.mxu0 0.0
        %4921 = vmatpush1.msra.mxu0 0.0
        %4922 = vmatprep.subr.mxu0 0.0
        %4923 = vmatpush1.msra.mxu0 0.0
        %4924 = vmatprep.subr.mxu0 0.0
        %4925 = vmatpush1.msra.mxu0 %v4892
        %4926 = vmatprep.subr.mxu0 0.0
        %4927 = vmatpush1.msra.mxu0 %v4891
        %4928 = vmatprep.subr.mxu0 0.0
        %4929 = vmatpush1.msra.mxu0 %v4890
        %4930 = vmatprep.subr.mxu0 0.0
        %4931 = vmatpush1.msra.mxu0 %v4889
        %4932 = vmatprep.subr.mxu0 0.0
        %4933 = vmatpush2.msra.mxu0 0.0
        %4934 = vmatprep.subr.mxu0 0.0
        %4935 = vmatpush2.msra.mxu0 0.0
        %4936 = vmatprep.subr.mxu0 0.0
        %4937 = vmatpush2.msra.mxu0 0.0
        %4938 = vmatprep.subr.mxu0 0.0
        %4939 = vmatpush2.msra.mxu0 0.0
        %4940 = vmatprep.subr.mxu0 0.0
        %4941 = vmatpush2.msra.mxu0 0.0
        %4942 = vmatprep.subr.mxu0 0.0
        %4943 = vmatpush2.msra.mxu0 0.0
        %4944 = vmatprep.subr.mxu0 0.0
        %4945 = vmatpush2.msra.mxu0 0.0
        %4946 = vmatprep.subr.mxu0 0.0
        %4947 = vmatpush2.msra.mxu0 0.0
        %4948 = vmatprep.subr.mxu0 0.0
        %4949 = vmatpush2.msra.mxu0 0.0
        %4950 = vmatprep.subr.mxu0 0.0
        %4951 = vmatpush2.msra.mxu0 0.0
        %4952 = vmatprep.subr.mxu0 0.0
        %4953 = vmatpush2.msra.mxu0 0.0
        %4954 = vmatprep.subr.mxu0 0.0
        %4955 = vmatpush2.msra.mxu0 0.0
        %4956 = vmatprep.subr.mxu0 0.0
        %4957 = vmatpush2.msra.mxu0 0.0
        %4958 = vmatprep.subr.mxu0 0.0
        %4959 = vmatpush2.msra.mxu0 0.0
        %4960 = vmatprep.subr.mxu0 0.0
        %4961 = vmatpush2.msra.mxu0 0.0
        %4962 = vmatprep.subr.mxu0 0.0
        %4963 = vmatpush2.msra.mxu0 0.0
        %4964 = vmatprep.mubr.f32.mxu0 0.0
        %4965 = vmatmul.mubr.f32.gmra.mxu0 %v4895
        %v4966 = vpop.f32.mrf.mxu0
        %v4967 = vadd.f32 %v4893, %v4966
        %v4968 = vpop.f32.mrf.mxu0
        %4969 = vmatprep.mubr.f32.mxu0 0.0
        %4970 = vmatmul.mubr.f32.gmra.mxu0 %v4898
        %v4971 = vpop.f32.mrf.mxu0
        %v4972 = vadd.f32 %v4893, %v4971
        %v4973 = vpop.f32.mrf.mxu0
        %4974 = vdwg.mxu0
        %v4975 = vadd.f32 %v4967, %v3864
        %v4976 = vadd.f32 %v4972, %v3865
        %v4977 = vld [vmem:[#allocation5 + $0x40] ss:$0 sm:$0xff]
        %v4978 = vld [vmem:[#allocation5 + $0x41] ss:$0 sm:$0xff]
        %v4979 = vsel %vm333, %v4975, 0.0
        %4980 = vadd.xlane.f32.xlu0 %v4979
        %v4981 = vpop.xlane.xlu0 %4980
        %v4982 = vsel %vm333, %v4976, 0.0
        %4983 = vadd.xlane.f32.xlu0 %v4982
        %v4984 = vpop.xlane.xlu0 %4983
        %v4985 = vmul.f32 %v4981, %v340
        %v4986 = vmul.f32 %v4984, %v340
        %v4987 = vsub.f32 %v4975, %v4985
        %v4988 = vsub.f32 %v4976, %v4986
        %v4989 = vmul.f32 %v4987, %v4987
        %v4990 = vmul.f32 %v4988, %v4988
        %v4991 = vsel %vm333, %v4989, 0.0
        %4992 = vadd.xlane.f32.xlu0 %v4991
        %v4993 = vpop.xlane.xlu0 %4992
        %v4994 = vsel %vm333, %v4990, 0.0
        %4995 = vadd.xlane.f32.xlu0 %v4994
        %v4996 = vpop.xlane.xlu0 %4995
        %v4997 = vmul.f32 %v4993, %v340
        %v4998 = vmul.f32 %v4996, %v340
        %v4999 = vadd.f32 %v4997, 1e-12
        %v5000 = vadd.f32 %v4998, 1e-12
        %v5001 = vrsqrt.pop %v4999
        %v5002 = vrsqrt.pop %v5000
        %v5003 = vmul.f32 %v4987, %v5001
        %v5004 = vmul.f32 %v4988, %v5002
        %v5005 = vmul.f32 %v5003, %v4977
        %v5006 = vmul.f32 %v5004, %v4977
        %v5007 = vadd.f32 %v5005, %v4978
        %v5008 = vadd.f32 %v5006, %v4978
        %v5009 = vld [vmem:[#allocation2 + $0x240] sm:$0xff]
        %v5010 = vld [vmem:[#allocation2 + $0x250] sm:$0xff]
        %v5011 = vld [vmem:[#allocation2 + $0x260] sm:$0xff]
        %v5012 = vld [vmem:[#allocation2 + $0x270] sm:$0xff]
        %v5013 = vld [vmem:[#allocation5 + $0x46] ss:$0 sm:$0xff]
        %v5015 = vsel %vm333, %v5007, 0
        %v5018 = vsel %vm333, %v5008, 0
        %5020 = vmatprep.subr.mxu0 0.0
        %5021 = vmatpush1.msra.mxu0 0.0
        %5022 = vmatprep.subr.mxu0 0.0
        %5023 = vmatpush1.msra.mxu0 0.0
        %5024 = vmatprep.subr.mxu0 0.0
        %5025 = vmatpush1.msra.mxu0 0.0
        %5026 = vmatprep.subr.mxu0 0.0
        %5027 = vmatpush1.msra.mxu0 0.0
        %5028 = vmatprep.subr.mxu0 0.0
        %5029 = vmatpush1.msra.mxu0 0.0
        %5030 = vmatprep.subr.mxu0 0.0
        %5031 = vmatpush1.msra.mxu0 0.0
        %5032 = vmatprep.subr.mxu0 0.0
        %5033 = vmatpush1.msra.mxu0 0.0
        %5034 = vmatprep.subr.mxu0 0.0
        %5035 = vmatpush1.msra.mxu0 0.0
        %5036 = vmatprep.subr.mxu0 0.0
        %5037 = vmatpush1.msra.mxu0 0.0
        %5038 = vmatprep.subr.mxu0 0.0
        %5039 = vmatpush1.msra.mxu0 0.0
        %5040 = vmatprep.subr.mxu0 0.0
        %5041 = vmatpush1.msra.mxu0 0.0
        %5042 = vmatprep.subr.mxu0 0.0
        %5043 = vmatpush1.msra.mxu0 0.0
        %5044 = vmatprep.subr.mxu0 0.0
        %5045 = vmatpush1.msra.mxu0 %v5012
        %5046 = vmatprep.subr.mxu0 0.0
        %5047 = vmatpush1.msra.mxu0 %v5011
        %5048 = vmatprep.subr.mxu0 0.0
        %5049 = vmatpush1.msra.mxu0 %v5010
        %5050 = vmatprep.subr.mxu0 0.0
        %5051 = vmatpush1.msra.mxu0 %v5009
        %5052 = vmatprep.subr.mxu0 0.0
        %5053 = vmatpush2.msra.mxu0 0.0
        %5054 = vmatprep.subr.mxu0 0.0
        %5055 = vmatpush2.msra.mxu0 0.0
        %5056 = vmatprep.subr.mxu0 0.0
        %5057 = vmatpush2.msra.mxu0 0.0
        %5058 = vmatprep.subr.mxu0 0.0
        %5059 = vmatpush2.msra.mxu0 0.0
        %5060 = vmatprep.subr.mxu0 0.0
        %5061 = vmatpush2.msra.mxu0 0.0
        %5062 = vmatprep.subr.mxu0 0.0
        %5063 = vmatpush2.msra.mxu0 0.0
        %5064 = vmatprep.subr.mxu0 0.0
        %5065 = vmatpush2.msra.mxu0 0.0
        %5066 = vmatprep.subr.mxu0 0.0
        %5067 = vmatpush2.msra.mxu0 0.0
        %5068 = vmatprep.subr.mxu0 0.0
        %5069 = vmatpush2.msra.mxu0 0.0
        %5070 = vmatprep.subr.mxu0 0.0
        %5071 = vmatpush2.msra.mxu0 0.0
        %5072 = vmatprep.subr.mxu0 0.0
        %5073 = vmatpush2.msra.mxu0 0.0
        %5074 = vmatprep.subr.mxu0 0.0
        %5075 = vmatpush2.msra.mxu0 0.0
        %5076 = vmatprep.subr.mxu0 0.0
        %5077 = vmatpush2.msra.mxu0 0.0
        %5078 = vmatprep.subr.mxu0 0.0
        %5079 = vmatpush2.msra.mxu0 0.0
        %5080 = vmatprep.subr.mxu0 0.0
        %5081 = vmatpush2.msra.mxu0 0.0
        %5082 = vmatprep.subr.mxu0 0.0
        %5083 = vmatpush2.msra.mxu0 0.0
        %5084 = vmatprep.mubr.f32.mxu0 0.0
        %5085 = vmatmul.mubr.f32.gmra.mxu0 %v5015
        %v5086 = vpop.f32.mrf.mxu0
        %v5087 = vadd.f32 %v5013, %v5086
        %v5088 = vpop.f32.mrf.mxu0
        %5089 = vmatprep.mubr.f32.mxu0 0.0
        %5090 = vmatmul.mubr.f32.gmra.mxu0 %v5018
        %v5091 = vpop.f32.mrf.mxu0
        %v5092 = vadd.f32 %v5013, %v5091
        %v5093 = vpop.f32.mrf.mxu0
        %5094 = vdwg.mxu0
        %v5095 = vmul.f32 %v5087, 0.5
        %v5096 = vmul.f32 %v5092, 0.5
        %v5097 = vmul.f32 %v5087, 0.70710677
        %v5098 = vmul.f32 %v5092, 0.70710677
        %v5099 = vand.u32 2147483647, %v5097
        %v5100 = vand.u32 2147483647, %v5098
        %v5101 = vmul.f32 %v5099, 0.3275911
        %v5102 = vmul.f32 %v5100, 0.3275911
        %v5103 = vadd.f32 %v5101, 1.0
        %v5104 = vadd.f32 %v5102, 1.0
        %v5105 = vrcp.pop %v5103
        %v5106 = vmul.f32 1.0, %v5105
        %v5107 = vrcp.pop %v5104
        %v5108 = vmul.f32 1.0, %v5107
        %v5109 = vmul.f32 %v5106, 1.0614054
        %v5110 = vmul.f32 %v5108, 1.0614054
        %v5111 = vadd.f32 %v5109, -1.4531521
        %v5112 = vadd.f32 %v5110, -1.4531521
        %v5113 = vmul.f32 %v5106, %v5111
        %v5114 = vmul.f32 %v5108, %v5112
        %v5115 = vadd.f32 %v5113, 1.4214138
        %v5116 = vadd.f32 %v5114, 1.4214138
        %v5117 = vmul.f32 %v5106, %v5115
        %v5118 = vmul.f32 %v5108, %v5116
        %v5119 = vadd.f32 %v5117, -0.28449672
        %v5120 = vadd.f32 %v5118, -0.28449672
        %v5121 = vmul.f32 %v5106, %v5119
        %v5122 = vmul.f32 %v5108, %v5120
        %v5123 = vadd.f32 %v5121, 0.2548296
        %v5124 = vadd.f32 %v5122, 0.2548296
        %v5125 = vmul.f32 %v5106, %v5123
        %v5126 = vmul.f32 %v5108, %v5124
        %v5127 = vsub.f32 0.0, %v5099
        %v5128 = vsub.f32 0.0, %v5100
        %v5129 = vmul.f32 %v5127, %v5099
        %v5130 = vmul.f32 %v5128, %v5100
        %v5131 = vmul.f32 %v5129, 1.442695
        %v5132 = vpow.pop %v5131
        %v5133 = vmul.f32 %v5130, 1.442695
        %v5134 = vpow.pop %v5133
        %v5135 = vmul.f32 %v5125, %v5132
        %v5136 = vmul.f32 %v5126, %v5134
        %v5137 = vsub.f32 1.0, %v5135
        %v5138 = vsub.f32 1.0, %v5136
        %vm5139 = vcmp.lt.f32.partialorder %v5097, 0.0
        %vm5140 = vcmp.lt.f32.partialorder %v5098, 0.0
        %v5141 = vsub.f32 0.0, %v5137
        %v5142 = vsub.f32 0.0, %v5138
        %v5143 = vsel %vm5139, %v5141, %v5137
        %v5144 = vsel %vm5140, %v5142, %v5138
        %v5145 = vadd.f32 %v5143, 1.0
        %v5146 = vadd.f32 %v5144, 1.0
        %v5147 = vmul.f32 %v5095, %v5145
        %v5148 = vmul.f32 %v5096, %v5146
        %v5149 = vld [vmem:[#allocation2 + $0x300] sm:$0xff]
        %v5150 = vld [vmem:[#allocation2 + $0x310] sm:$0xff]
        %v5151 = vld [vmem:[#allocation2 + $0x320] sm:$0xff]
        %v5152 = vld [vmem:[#allocation2 + $0x330] sm:$0xff]
        %v5153 = vld [vmem:[#allocation2 + $0x340] sm:$0xff]
        %v5154 = vld [vmem:[#allocation2 + $0x350] sm:$0xff]
        %v5155 = vld [vmem:[#allocation2 + $0x360] sm:$0xff]
        %v5156 = vld [vmem:[#allocation2 + $0x370] sm:$0xff]
        %v5157 = vld [vmem:[#allocation5 + $0x47] ss:$0 sm:$0xff]
        %v5159 = vsel %vm2708, %v5147, 0
        %v5162 = vsel %vm2708, %v5148, 0
        %5164 = vmatprep.subr.mxu0 0.0
        %5165 = vmatpush1.msra.mxu0 0.0
        %5166 = vmatprep.subr.mxu0 0.0
        %5167 = vmatpush1.msra.mxu0 0.0
        %5168 = vmatprep.subr.mxu0 0.0
        %5169 = vmatpush1.msra.mxu0 0.0
        %5170 = vmatprep.subr.mxu0 0.0
        %5171 = vmatpush1.msra.mxu0 0.0
        %5172 = vmatprep.subr.mxu0 0.0
        %5173 = vmatpush1.msra.mxu0 0.0
        %5174 = vmatprep.subr.mxu0 0.0
        %5175 = vmatpush1.msra.mxu0 0.0
        %5176 = vmatprep.subr.mxu0 0.0
        %5177 = vmatpush1.msra.mxu0 0.0
        %5178 = vmatprep.subr.mxu0 0.0
        %5179 = vmatpush1.msra.mxu0 0.0
        %5180 = vmatprep.subr.mxu0 0.0
        %5181 = vmatpush1.msra.mxu0 %v5156
        %5182 = vmatprep.subr.mxu0 0.0
        %5183 = vmatpush1.msra.mxu0 %v5155
        %5184 = vmatprep.subr.mxu0 0.0
        %5185 = vmatpush1.msra.mxu0 %v5154
        %5186 = vmatprep.subr.mxu0 0.0
        %5187 = vmatpush1.msra.mxu0 %v5153
        %5188 = vmatprep.subr.mxu0 0.0
        %5189 = vmatpush1.msra.mxu0 %v5152
        %5190 = vmatprep.subr.mxu0 0.0
        %5191 = vmatpush1.msra.mxu0 %v5151
        %5192 = vmatprep.subr.mxu0 0.0
        %5193 = vmatpush1.msra.mxu0 %v5150
        %5194 = vmatprep.subr.mxu0 0.0
        %5195 = vmatpush1.msra.mxu0 %v5149
        %5196 = vmatprep.subr.mxu0 0.0
        %5197 = vmatpush2.msra.mxu0 0.0
        %5198 = vmatprep.subr.mxu0 0.0
        %5199 = vmatpush2.msra.mxu0 0.0
        %5200 = vmatprep.subr.mxu0 0.0
        %5201 = vmatpush2.msra.mxu0 0.0
        %5202 = vmatprep.subr.mxu0 0.0
        %5203 = vmatpush2.msra.mxu0 0.0
        %5204 = vmatprep.subr.mxu0 0.0
        %5205 = vmatpush2.msra.mxu0 0.0
        %5206 = vmatprep.subr.mxu0 0.0
        %5207 = vmatpush2.msra.mxu0 0.0
        %5208 = vmatprep.subr.mxu0 0.0
        %5209 = vmatpush2.msra.mxu0 0.0
        %5210 = vmatprep.subr.mxu0 0.0
        %5211 = vmatpush2.msra.mxu0 0.0
        %5212 = vmatprep.subr.mxu0 0.0
        %5213 = vmatpush2.msra.mxu0 0.0
        %5214 = vmatprep.subr.mxu0 0.0
        %5215 = vmatpush2.msra.mxu0 0.0
        %5216 = vmatprep.subr.mxu0 0.0
        %5217 = vmatpush2.msra.mxu0 0.0
        %5218 = vmatprep.subr.mxu0 0.0
        %5219 = vmatpush2.msra.mxu0 0.0
        %5220 = vmatprep.subr.mxu0 0.0
        %5221 = vmatpush2.msra.mxu0 0.0
        %5222 = vmatprep.subr.mxu0 0.0
        %5223 = vmatpush2.msra.mxu0 0.0
        %5224 = vmatprep.subr.mxu0 0.0
        %5225 = vmatpush2.msra.mxu0 0.0
        %5226 = vmatprep.subr.mxu0 0.0
        %5227 = vmatpush2.msra.mxu0 0.0
        %5228 = vmatprep.mubr.f32.mxu0 0.0
        %5229 = vmatmul.mubr.f32.gmra.mxu0 %v5159
        %v5230 = vpop.f32.mrf.mxu0
        %v5231 = vadd.f32 %v5157, %v5230
        %v5232 = vpop.f32.mrf.mxu0
        %5233 = vmatprep.mubr.f32.mxu0 0.0
        %5234 = vmatmul.mubr.f32.gmra.mxu0 %v5162
        %v5235 = vpop.f32.mrf.mxu0
        %v5236 = vadd.f32 %v5157, %v5235
        %v5237 = vpop.f32.mrf.mxu0
        %5238 = vdwg.mxu0
        %v5239 = vadd.f32 %v5231, %v5007
        %v5240 = vadd.f32 %v5236, %v5008
        %v5241 = vld [vmem:[#allocation5 + $0x50] ss:$0 sm:$0xff]
        %v5242 = vld [vmem:[#allocation5 + $0x51] ss:$0 sm:$0xff]
        %v5243 = vsel %vm333, %v5239, 0.0
        %5244 = vadd.xlane.f32.xlu0 %v5243
        %v5245 = vpop.xlane.xlu0 %5244
        %v5246 = vsel %vm333, %v5240, 0.0
        %5247 = vadd.xlane.f32.xlu0 %v5246
        %v5248 = vpop.xlane.xlu0 %5247
        %v5249 = vmul.f32 %v5245, %v340
        %v5250 = vmul.f32 %v5248, %v340
        %v5251 = vsub.f32 %v5239, %v5249
        %v5252 = vsub.f32 %v5240, %v5250
        %v5253 = vmul.f32 %v5251, %v5251
        %v5254 = vmul.f32 %v5252, %v5252
        %v5255 = vsel %vm333, %v5253, 0.0
        %5256 = vadd.xlane.f32.xlu0 %v5255
        %v5257 = vpop.xlane.xlu0 %5256
        %v5258 = vsel %vm333, %v5254, 0.0
        %5259 = vadd.xlane.f32.xlu0 %v5258
        %v5260 = vpop.xlane.xlu0 %5259
        %v5261 = vmul.f32 %v5257, %v340
        %v5262 = vmul.f32 %v5260, %v340
        %v5263 = vadd.f32 %v5261, 1e-12
        %v5264 = vadd.f32 %v5262, 1e-12
        %v5265 = vrsqrt.pop %v5263
        %v5266 = vrsqrt.pop %v5264
        %v5267 = vmul.f32 %v5251, %v5265
        %v5268 = vmul.f32 %v5252, %v5266
        %v5269 = vmul.f32 %v5267, %v5241
        %v5270 = vmul.f32 %v5268, %v5241
        %v5271 = vadd.f32 %v5269, %v5242
        %v5272 = vadd.f32 %v5270, %v5242
        %5273 = vst.msk [vmem:[%s290] sm:$0xff] %vm333, %v5271
        %5274 = vst.msk [vmem:[%s290 + $0x8] sm:$0xff] %vm333, %v5272
        %v5275 = vld [vmem:[#allocation2 + $0x380] sm:$0xff]
        %v5276 = vld [vmem:[#allocation2 + $0x390] sm:$0xff]
        %v5277 = vld [vmem:[#allocation2 + $0x3a0] sm:$0xff]
        %v5278 = vld [vmem:[#allocation2 + $0x3b0] sm:$0xff]
        %v5279 = vld [vmem:[#allocation5 + $0x52] ss:$0 sm:$0xff]
        %v5281 = vsel %vm333, %v5271, 0
        %v5284 = vsel %vm333, %v5272, 0
        %5286 = vmatprep.subr.mxu0 0.0
        %5287 = vmatpush1.msra.mxu0 0.0
        %5288 = vmatprep.subr.mxu0 0.0
        %5289 = vmatpush1.msra.mxu0 0.0
        %5290 = vmatprep.subr.mxu0 0.0
        %5291 = vmatpush1.msra.mxu0 0.0
        %5292 = vmatprep.subr.mxu0 0.0
        %5293 = vmatpush1.msra.mxu0 0.0
        %5294 = vmatprep.subr.mxu0 0.0
        %5295 = vmatpush1.msra.mxu0 0.0
        %5296 = vmatprep.subr.mxu0 0.0
        %5297 = vmatpush1.msra.mxu0 0.0
        %5298 = vmatprep.subr.mxu0 0.0
        %5299 = vmatpush1.msra.mxu0 0.0
        %5300 = vmatprep.subr.mxu0 0.0
        %5301 = vmatpush1.msra.mxu0 0.0
        %5302 = vmatprep.subr.mxu0 0.0
        %5303 = vmatpush1.msra.mxu0 0.0
        %5304 = vmatprep.subr.mxu0 0.0
        %5305 = vmatpush1.msra.mxu0 0.0
        %5306 = vmatprep.subr.mxu0 0.0
        %5307 = vmatpush1.msra.mxu0 0.0
        %5308 = vmatprep.subr.mxu0 0.0
        %5309 = vmatpush1.msra.mxu0 0.0
        %5310 = vmatprep.subr.mxu0 0.0
        %5311 = vmatpush1.msra.mxu0 %v5278
        %5312 = vmatprep.subr.mxu0 0.0
        %5313 = vmatpush1.msra.mxu0 %v5277
        %5314 = vmatprep.subr.mxu0 0.0
        %5315 = vmatpush1.msra.mxu0 %v5276
        %5316 = vmatprep.subr.mxu0 0.0
        %5317 = vmatpush1.msra.mxu0 %v5275
        %5318 = vmatprep.subr.mxu0 0.0
        %5319 = vmatpush2.msra.mxu0 0.0
        %5320 = vmatprep.subr.mxu0 0.0
        %5321 = vmatpush2.msra.mxu0 0.0
        %5322 = vmatprep.subr.mxu0 0.0
        %5323 = vmatpush2.msra.mxu0 0.0
        %5324 = vmatprep.subr.mxu0 0.0
        %5325 = vmatpush2.msra.mxu0 0.0
        %5326 = vmatprep.subr.mxu0 0.0
        %5327 = vmatpush2.msra.mxu0 0.0
        %5328 = vmatprep.subr.mxu0 0.0
        %5329 = vmatpush2.msra.mxu0 0.0
        %5330 = vmatprep.subr.mxu0 0.0
        %5331 = vmatpush2.msra.mxu0 0.0
        %5332 = vmatprep.subr.mxu0 0.0
        %5333 = vmatpush2.msra.mxu0 0.0
        %5334 = vmatprep.subr.mxu0 0.0
        %5335 = vmatpush2.msra.mxu0 0.0
        %5336 = vmatprep.subr.mxu0 0.0
        %5337 = vmatpush2.msra.mxu0 0.0
        %5338 = vmatprep.subr.mxu0 0.0
        %5339 = vmatpush2.msra.mxu0 0.0
        %5340 = vmatprep.subr.mxu0 0.0
        %5341 = vmatpush2.msra.mxu0 0.0
        %5342 = vmatprep.subr.mxu0 0.0
        %5343 = vmatpush2.msra.mxu0 0.0
        %5344 = vmatprep.subr.mxu0 0.0
        %5345 = vmatpush2.msra.mxu0 0.0
        %5346 = vmatprep.subr.mxu0 0.0
        %5347 = vmatpush2.msra.mxu0 0.0
        %5348 = vmatprep.subr.mxu0 0.0
        %5349 = vmatpush2.msra.mxu0 0.0
        %5350 = vmatprep.mubr.f32.mxu0 0.0
        %5351 = vmatmul.mubr.f32.gmra.mxu0 %v5281
        %v5352 = vpop.f32.mrf.mxu0
        %v5353 = vadd.f32 %v5279, %v5352
        %v5354 = vpop.f32.mrf.mxu0
        %5355 = vmatprep.mubr.f32.mxu0 0.0
        %5356 = vmatmul.mubr.f32.gmra.mxu0 %v5284
        %v5357 = vpop.f32.mrf.mxu0
        %v5358 = vadd.f32 %v5279, %v5357
        %v5359 = vpop.f32.mrf.mxu0
        %5360 = vdwg.mxu0
        %5361 = vst [vmem:[%s319] sm:$0xff] %v5353
        %5362 = vst [vmem:[%s319 + $0x8] sm:$0xff] %v5358
        %v5363 = vld [vmem:[#allocation2 + $0x3c0] sm:$0xff]
        %v5364 = vld [vmem:[#allocation2 + $0x3c8] sm:$0xff]
        %v5365 = vld [vmem:[#allocation2 + $0x3d0] sm:$0xff]
        %v5366 = vld [vmem:[#allocation2 + $0x3d8] sm:$0xff]
        %v5367 = vld [vmem:[#allocation2 + $0x3e0] sm:$0xff]
        %v5368 = vld [vmem:[#allocation2 + $0x3e8] sm:$0xff]
        %v5369 = vld [vmem:[#allocation2 + $0x3f0] sm:$0xff]
        %v5370 = vld [vmem:[#allocation2 + $0x3f8] sm:$0xff]
        %s5371 = scalar_lea.vmem [#allocation5], 83
        %v5372 = vld [vmem:[%s5371] ss:$8 sm:$0x3]
        %v5374 = vlaneseq
        %v5375 = vshrl.u32 %v5374, 7
        %v5376 = vsub.s32 0, %v5375
        %v5377 = vrot.slane %v5372, %v5376
        %v5378 = vlaneseq
        %v5379 = vshrl.u32 %v5378, 7
        %v5380 = vsub.s32 1, %v5379
        %v5381 = vrot.slane %v5372, %v5380
        %5384 = vmatprep.subr.mxu0 0.0
        %5385 = vmatpush1.msra.mxu0 0.0
        %5386 = vmatprep.subr.mxu0 0.0
        %5387 = vmatpush1.msra.mxu0 0.0
        %5388 = vmatprep.subr.mxu0 0.0
        %5389 = vmatpush1.msra.mxu0 0.0
        %5390 = vmatprep.subr.mxu0 0.0
        %5391 = vmatpush1.msra.mxu0 0.0
        %5392 = vmatprep.subr.mxu0 0.0
        %5393 = vmatpush1.msra.mxu0 0.0
        %5394 = vmatprep.subr.mxu0 0.0
        %5395 = vmatpush1.msra.mxu0 0.0
        %5396 = vmatprep.subr.mxu0 0.0
        %5397 = vmatpush1.msra.mxu0 0.0
        %5398 = vmatprep.subr.mxu0 0.0
        %5399 = vmatpush1.msra.mxu0 0.0
        %5400 = vmatprep.subr.mxu0 0.0
        %5401 = vmatpush1.msra.mxu0 0.0
        %5402 = vmatprep.subr.mxu0 0.0
        %5403 = vmatpush1.msra.mxu0 0.0
        %5404 = vmatprep.subr.mxu0 0.0
        %5405 = vmatpush1.msra.mxu0 0.0
        %5406 = vmatprep.subr.mxu0 0.0
        %5407 = vmatpush1.msra.mxu0 0.0
        %5408 = vmatprep.subr.mxu0 %v5370
        %5409 = vmatpush1.msra.mxu0 %v5369
        %5410 = vmatprep.subr.mxu0 %v5368
        %5411 = vmatpush1.msra.mxu0 %v5367
        %5412 = vmatprep.subr.mxu0 %v5366
        %5413 = vmatpush1.msra.mxu0 %v5365
        %5414 = vmatprep.subr.mxu0 %v5364
        %5415 = vmatpush1.msra.mxu0 %v5363
        %5416 = vmatprep.subr.mxu0 0.0
        %5417 = vmatpush2.msra.mxu0 0.0
        %5418 = vmatprep.subr.mxu0 0.0
        %5419 = vmatpush2.msra.mxu0 0.0
        %5420 = vmatprep.subr.mxu0 0.0
        %5421 = vmatpush2.msra.mxu0 0.0
        %5422 = vmatprep.subr.mxu0 0.0
        %5423 = vmatpush2.msra.mxu0 0.0
        %5424 = vmatprep.subr.mxu0 0.0
        %5425 = vmatpush2.msra.mxu0 0.0
        %5426 = vmatprep.subr.mxu0 0.0
        %5427 = vmatpush2.msra.mxu0 0.0
        %5428 = vmatprep.subr.mxu0 0.0
        %5429 = vmatpush2.msra.mxu0 0.0
        %5430 = vmatprep.subr.mxu0 0.0
        %5431 = vmatpush2.msra.mxu0 0.0
        %5432 = vmatprep.subr.mxu0 0.0
        %5433 = vmatpush2.msra.mxu0 0.0
        %5434 = vmatprep.subr.mxu0 0.0
        %5435 = vmatpush2.msra.mxu0 0.0
        %5436 = vmatprep.subr.mxu0 0.0
        %5437 = vmatpush2.msra.mxu0 0.0
        %5438 = vmatprep.subr.mxu0 0.0
        %5439 = vmatpush2.msra.mxu0 0.0
        %5440 = vmatprep.subr.mxu0 0.0
        %5441 = vmatpush2.msra.mxu0 0.0
        %5442 = vmatprep.subr.mxu0 0.0
        %5443 = vmatpush2.msra.mxu0 0.0
        %5444 = vmatprep.subr.mxu0 0.0
        %5445 = vmatpush2.msra.mxu0 0.0
        %5446 = vmatprep.subr.mxu0 0.0
        %5447 = vmatpush2.msra.mxu0 0.0
        %5448 = vmatprep.mubr.f32.mxu0 0.0
        %5449 = vmatmul.mubr.f32.gmra.mxu0 %v5281
        %v5450 = vpop.f32.mrf.mxu0
        %v5451 = vadd.f32 %v5377, %v5450
        %v5452 = vpop.f32.mrf.mxu0
        %v5453 = vadd.f32 %v5381, %v5452
        %5454 = vmatprep.mubr.f32.mxu0 0.0
        %5455 = vmatmul.mubr.f32.gmra.mxu0 %v5284
        %v5456 = vpop.f32.mrf.mxu0
        %v5457 = vadd.f32 %v5377, %v5456
        %v5458 = vpop.f32.mrf.mxu0
        %v5459 = vadd.f32 %v5381, %v5458
        %5460 = vdwg.mxu0
        %v5461 = vld [vmem:[#allocation2 + $0x400] sm:$0xff]
        %v5462 = vld [vmem:[#allocation2 + $0x408] sm:$0xff]
        %v5463 = vld [vmem:[#allocation2 + $0x410] sm:$0xff]
        %v5464 = vld [vmem:[#allocation2 + $0x418] sm:$0xff]
        %v5465 = vld [vmem:[#allocation2 + $0x420] sm:$0xff]
        %v5466 = vld [vmem:[#allocation2 + $0x428] sm:$0xff]
        %v5467 = vld [vmem:[#allocation2 + $0x430] sm:$0xff]
        %v5468 = vld [vmem:[#allocation2 + $0x438] sm:$0xff]
        %s5469 = scalar_lea.vmem [#allocation5], 84
        %v5470 = vld [vmem:[%s5469] ss:$8 sm:$0x3]
        %v5472 = vlaneseq
        %v5473 = vshrl.u32 %v5472, 7
        %v5474 = vsub.s32 0, %v5473
        %v5475 = vrot.slane %v5470, %v5474
        %v5476 = vlaneseq
        %v5477 = vshrl.u32 %v5476, 7
        %v5478 = vsub.s32 1, %v5477
        %v5479 = vrot.slane %v5470, %v5478
        %5482 = vmatprep.subr.mxu0 0.0
        %5483 = vmatpush1.msra.mxu0 0.0
        %5484 = vmatprep.subr.mxu0 0.0
        %5485 = vmatpush1.msra.mxu0 0.0
        %5486 = vmatprep.subr.mxu0 0.0
        %5487 = vmatpush1.msra.mxu0 0.0
        %5488 = vmatprep.subr.mxu0 0.0
        %5489 = vmatpush1.msra.mxu0 0.0
        %5490 = vmatprep.subr.mxu0 0.0
        %5491 = vmatpush1.msra.mxu0 0.0
        %5492 = vmatprep.subr.mxu0 0.0
        %5493 = vmatpush1.msra.mxu0 0.0
        %5494 = vmatprep.subr.mxu0 0.0
        %5495 = vmatpush1.msra.mxu0 0.0
        %5496 = vmatprep.subr.mxu0 0.0
        %5497 = vmatpush1.msra.mxu0 0.0
        %5498 = vmatprep.subr.mxu0 0.0
        %5499 = vmatpush1.msra.mxu0 0.0
        %5500 = vmatprep.subr.mxu0 0.0
        %5501 = vmatpush1.msra.mxu0 0.0
        %5502 = vmatprep.subr.mxu0 0.0
        %5503 = vmatpush1.msra.mxu0 0.0
        %5504 = vmatprep.subr.mxu0 0.0
        %5505 = vmatpush1.msra.mxu0 0.0
        %5506 = vmatprep.subr.mxu0 %v5468
        %5507 = vmatpush1.msra.mxu0 %v5467
        %5508 = vmatprep.subr.mxu0 %v5466
        %5509 = vmatpush1.msra.mxu0 %v5465
        %5510 = vmatprep.subr.mxu0 %v5464
        %5511 = vmatpush1.msra.mxu0 %v5463
        %5512 = vmatprep.subr.mxu0 %v5462
        %5513 = vmatpush1.msra.mxu0 %v5461
        %5514 = vmatprep.subr.mxu0 0.0
        %5515 = vmatpush2.msra.mxu0 0.0
        %5516 = vmatprep.subr.mxu0 0.0
        %5517 = vmatpush2.msra.mxu0 0.0
        %5518 = vmatprep.subr.mxu0 0.0
        %5519 = vmatpush2.msra.mxu0 0.0
        %5520 = vmatprep.subr.mxu0 0.0
        %5521 = vmatpush2.msra.mxu0 0.0
        %5522 = vmatprep.subr.mxu0 0.0
        %5523 = vmatpush2.msra.mxu0 0.0
        %5524 = vmatprep.subr.mxu0 0.0
        %5525 = vmatpush2.msra.mxu0 0.0
        %5526 = vmatprep.subr.mxu0 0.0
        %5527 = vmatpush2.msra.mxu0 0.0
        %5528 = vmatprep.subr.mxu0 0.0
        %5529 = vmatpush2.msra.mxu0 0.0
        %5530 = vmatprep.subr.mxu0 0.0
        %5531 = vmatpush2.msra.mxu0 0.0
        %5532 = vmatprep.subr.mxu0 0.0
        %5533 = vmatpush2.msra.mxu0 0.0
        %5534 = vmatprep.subr.mxu0 0.0
        %5535 = vmatpush2.msra.mxu0 0.0
        %5536 = vmatprep.subr.mxu0 0.0
        %5537 = vmatpush2.msra.mxu0 0.0
        %5538 = vmatprep.subr.mxu0 0.0
        %5539 = vmatpush2.msra.mxu0 0.0
        %5540 = vmatprep.subr.mxu0 0.0
        %5541 = vmatpush2.msra.mxu0 0.0
        %5542 = vmatprep.subr.mxu0 0.0
        %5543 = vmatpush2.msra.mxu0 0.0
        %5544 = vmatprep.subr.mxu0 0.0
        %5545 = vmatpush2.msra.mxu0 0.0
        %5546 = vmatprep.mubr.f32.mxu0 0.0
        %5547 = vmatmul.mubr.f32.gmra.mxu0 %v1517
        %v5548 = vpop.f32.mrf.mxu0
        %v5549 = vadd.f32 %v5475, %v5548
        %v5550 = vpop.f32.mrf.mxu0
        %v5551 = vadd.f32 %v5479, %v5550
        %5552 = vmatprep.mubr.f32.mxu0 0.0
        %5553 = vmatmul.mubr.f32.gmra.mxu0 %v1520
        %v5554 = vpop.f32.mrf.mxu0
        %v5555 = vadd.f32 %v5475, %v5554
        %v5556 = vpop.f32.mrf.mxu0
        %v5557 = vadd.f32 %v5479, %v5556
        %5558 = vdwg.mxu0
        %v5563 = vcombine.low %v5451, %v5453
        %v5564 = vcombine.high %v5451, %v5453
        %v5566 = vunpack.c.l.s4 1966171168
        %v5567 = vunpack.c.0.s8 %v5566
        %v5568 = vlaneseq
        %v5569 = vshrl.u32 %v5568, 7
        %v5570 = vsub.s32 %v5567, %v5569
        %v5571 = vrot.slane %v5563, %v5570
        %v5573 = vunpack.c.l.s4 1966171168
        %v5574 = vunpack.c.0.s8 %v5573
        %v5575 = vlaneseq
        %v5576 = vshrl.u32 %v5575, 7
        %v5577 = vsub.s32 %v5574, %v5576
        %v5578 = vrot.slane %v5564, %v5577
        %v5579 = vcombine.high %v5571, %v5571
        %v5580 = vcombine.high %v5578, %v5578
        %v5582 = vunpack.c.l.s4 1966171168
        %v5583 = vunpack.c.0.s8 %v5582
        %v5584 = vlaneseq
        %v5585 = vshrl.u32 %v5584, 7
        %v5586 = vsub.s32 %v5583, %v5585
        %v5587 = vrot.slane %v5571, %v5586
        %v5589 = vunpack.c.l.s4 1966171168
        %v5590 = vunpack.c.0.s8 %v5589
        %v5591 = vlaneseq
        %v5592 = vshrl.u32 %v5591, 7
        %v5593 = vsub.s32 %v5590, %v5592
        %v5594 = vrot.slane %v5578, %v5593
        %v5596 = vunpack.c.l.s4 1966171168
        %v5597 = vunpack.c.0.s8 %v5596
        %v5598 = vlaneseq
        %v5599 = vshrl.u32 %v5598, 7
        %v5600 = vsub.s32 %v5597, %v5599
        %v5601 = vrot.slane %v5579, %v5600
        %v5603 = vunpack.c.l.s4 1966171168
        %v5604 = vunpack.c.0.s8 %v5603
        %v5605 = vlaneseq
        %v5606 = vshrl.u32 %v5605, 7
        %v5607 = vsub.s32 %v5604, %v5606
        %v5608 = vrot.slane %v5580, %v5607
        %v5609 = vcombine.high %v5587, %v5587
        %v5610 = vcombine.high %v5594, %v5594
        %v5611 = vcombine.high %v5601, %v5601
        %v5612 = vcombine.high %v5608, %v5608
        %v5613 = vcombine.low %v5457, %v5459
        %v5614 = vcombine.high %v5457, %v5459
        %v5616 = vunpack.c.l.s4 1966171168
        %v5617 = vunpack.c.0.s8 %v5616
        %v5618 = vlaneseq
        %v5619 = vshrl.u32 %v5618, 7
        %v5620 = vsub.s32 %v5617, %v5619
        %v5621 = vrot.slane %v5613, %v5620
        %v5623 = vunpack.c.l.s4 1966171168
        %v5624 = vunpack.c.0.s8 %v5623
        %v5625 = vlaneseq
        %v5626 = vshrl.u32 %v5625, 7
        %v5627 = vsub.s32 %v5624, %v5626
        %v5628 = vrot.slane %v5614, %v5627
        %v5629 = vcombine.high %v5621, %v5621
        %v5630 = vcombine.high %v5628, %v5628
        %v5632 = vunpack.c.l.s4 1966171168
        %v5633 = vunpack.c.0.s8 %v5632
        %v5634 = vlaneseq
        %v5635 = vshrl.u32 %v5634, 7
        %v5636 = vsub.s32 %v5633, %v5635
        %v5637 = vrot.slane %v5621, %v5636
        %v5639 = vunpack.c.l.s4 1966171168
        %v5640 = vunpack.c.0.s8 %v5639
        %v5641 = vlaneseq
        %v5642 = vshrl.u32 %v5641, 7
        %v5643 = vsub.s32 %v5640, %v5642
        %v5644 = vrot.slane %v5628, %v5643
        %v5646 = vunpack.c.l.s4 1966171168
        %v5647 = vunpack.c.0.s8 %v5646
        %v5648 = vlaneseq
        %v5649 = vshrl.u32 %v5648, 7
        %v5650 = vsub.s32 %v5647, %v5649
        %v5651 = vrot.slane %v5629, %v5650
        %v5653 = vunpack.c.l.s4 1966171168
        %v5654 = vunpack.c.0.s8 %v5653
        %v5655 = vlaneseq
        %v5656 = vshrl.u32 %v5655, 7
        %v5657 = vsub.s32 %v5654, %v5656
        %v5658 = vrot.slane %v5630, %v5657
        %v5659 = vcombine.high %v5637, %v5637
        %v5660 = vcombine.high %v5644, %v5644
        %v5661 = vcombine.high %v5651, %v5651
        %v5662 = vcombine.high %v5658, %v5658
        %v5663 = vlaneseq
        %v5664 = vshrl.u32 %v5663, 7
        %v5665 = vsub.s32 0, %v5664
        %v5666 = vrot.slane %v5587, %v5665
        %v5667 = vlaneseq
        %v5668 = vshrl.u32 %v5667, 7
        %v5669 = vsub.s32 1, %v5668
        %v5670 = vrot.slane %v5587, %v5669
        %v5671 = vlaneseq
        %v5672 = vshrl.u32 %v5671, 7
        %v5673 = vsub.s32 0, %v5672
        %v5674 = vrot.slane %v5601, %v5673
        %v5675 = vlaneseq
        %v5676 = vshrl.u32 %v5675, 7
        %v5677 = vsub.s32 1, %v5676
        %v5678 = vrot.slane %v5601, %v5677
        %v5679 = vlaneseq
        %v5680 = vshrl.u32 %v5679, 7
        %v5681 = vsub.s32 0, %v5680
        %v5682 = vrot.slane %v5609, %v5681
        %v5683 = vlaneseq
        %v5684 = vshrl.u32 %v5683, 7
        %v5685 = vsub.s32 1, %v5684
        %v5686 = vrot.slane %v5609, %v5685
        %v5687 = vlaneseq
        %v5688 = vshrl.u32 %v5687, 7
        %v5689 = vsub.s32 0, %v5688
        %v5690 = vrot.slane %v5611, %v5689
        %v5691 = vlaneseq
        %v5692 = vshrl.u32 %v5691, 7
        %v5693 = vsub.s32 1, %v5692
        %v5694 = vrot.slane %v5611, %v5693
        %v5695 = vlaneseq
        %v5696 = vshrl.u32 %v5695, 7
        %v5697 = vsub.s32 0, %v5696
        %v5698 = vrot.slane %v5594, %v5697
        %v5699 = vlaneseq
        %v5700 = vshrl.u32 %v5699, 7
        %v5701 = vsub.s32 1, %v5700
        %v5702 = vrot.slane %v5594, %v5701
        %v5703 = vlaneseq
        %v5704 = vshrl.u32 %v5703, 7
        %v5705 = vsub.s32 0, %v5704
        %v5706 = vrot.slane %v5608, %v5705
        %v5707 = vlaneseq
        %v5708 = vshrl.u32 %v5707, 7
        %v5709 = vsub.s32 1, %v5708
        %v5710 = vrot.slane %v5608, %v5709
        %v5711 = vlaneseq
        %v5712 = vshrl.u32 %v5711, 7
        %v5713 = vsub.s32 0, %v5712
        %v5714 = vrot.slane %v5610, %v5713
        %v5715 = vlaneseq
        %v5716 = vshrl.u32 %v5715, 7
        %v5717 = vsub.s32 1, %v5716
        %v5718 = vrot.slane %v5610, %v5717
        %v5719 = vlaneseq
        %v5720 = vshrl.u32 %v5719, 7
        %v5721 = vsub.s32 0, %v5720
        %v5722 = vrot.slane %v5612, %v5721
        %v5723 = vlaneseq
        %v5724 = vshrl.u32 %v5723, 7
        %v5725 = vsub.s32 1, %v5724
        %v5726 = vrot.slane %v5612, %v5725
        %v5727 = vlaneseq
        %v5728 = vshrl.u32 %v5727, 7
        %v5729 = vsub.s32 0, %v5728
        %v5730 = vrot.slane %v5637, %v5729
        %v5731 = vlaneseq
        %v5732 = vshrl.u32 %v5731, 7
        %v5733 = vsub.s32 1, %v5732
        %v5734 = vrot.slane %v5637, %v5733
        %v5735 = vlaneseq
        %v5736 = vshrl.u32 %v5735, 7
        %v5737 = vsub.s32 0, %v5736
        %v5738 = vrot.slane %v5651, %v5737
        %v5739 = vlaneseq
        %v5740 = vshrl.u32 %v5739, 7
        %v5741 = vsub.s32 1, %v5740
        %v5742 = vrot.slane %v5651, %v5741
        %v5743 = vlaneseq
        %v5744 = vshrl.u32 %v5743, 7
        %v5745 = vsub.s32 0, %v5744
        %v5746 = vrot.slane %v5659, %v5745
        %v5747 = vlaneseq
        %v5748 = vshrl.u32 %v5747, 7
        %v5749 = vsub.s32 1, %v5748
        %v5750 = vrot.slane %v5659, %v5749
        %v5751 = vlaneseq
        %v5752 = vshrl.u32 %v5751, 7
        %v5753 = vsub.s32 0, %v5752
        %v5754 = vrot.slane %v5661, %v5753
        %v5755 = vlaneseq
        %v5756 = vshrl.u32 %v5755, 7
        %v5757 = vsub.s32 1, %v5756
        %v5758 = vrot.slane %v5661, %v5757
        %v5759 = vlaneseq
        %v5760 = vshrl.u32 %v5759, 7
        %v5761 = vsub.s32 0, %v5760
        %v5762 = vrot.slane %v5644, %v5761
        %v5763 = vlaneseq
        %v5764 = vshrl.u32 %v5763, 7
        %v5765 = vsub.s32 1, %v5764
        %v5766 = vrot.slane %v5644, %v5765
        %v5767 = vlaneseq
        %v5768 = vshrl.u32 %v5767, 7
        %v5769 = vsub.s32 0, %v5768
        %v5770 = vrot.slane %v5658, %v5769
        %v5771 = vlaneseq
        %v5772 = vshrl.u32 %v5771, 7
        %v5773 = vsub.s32 1, %v5772
        %v5774 = vrot.slane %v5658, %v5773
        %v5775 = vlaneseq
        %v5776 = vshrl.u32 %v5775, 7
        %v5777 = vsub.s32 0, %v5776
        %v5778 = vrot.slane %v5660, %v5777
        %v5779 = vlaneseq
        %v5780 = vshrl.u32 %v5779, 7
        %v5781 = vsub.s32 1, %v5780
        %v5782 = vrot.slane %v5660, %v5781
        %v5783 = vlaneseq
        %v5784 = vshrl.u32 %v5783, 7
        %v5785 = vsub.s32 0, %v5784
        %v5786 = vrot.slane %v5662, %v5785
        %v5787 = vlaneseq
        %v5788 = vshrl.u32 %v5787, 7
        %v5789 = vsub.s32 1, %v5788
        %v5790 = vrot.slane %v5662, %v5789
        %v5823 = vadd.f32 %v5666, %v5549
        %v5824 = vadd.f32 %v5670, %v5551
        %v5825 = vadd.f32 %v5666, %v5555
        %v5826 = vadd.f32 %v5670, %v5557
        %v5827 = vadd.f32 %v5674, %v5549
        %v5828 = vadd.f32 %v5678, %v5551
        %v5829 = vadd.f32 %v5674, %v5555
        %v5830 = vadd.f32 %v5678, %v5557
        %v5831 = vadd.f32 %v5682, %v5549
        %v5832 = vadd.f32 %v5686, %v5551
        %v5833 = vadd.f32 %v5682, %v5555
        %v5834 = vadd.f32 %v5686, %v5557
        %v5835 = vadd.f32 %v5690, %v5549
        %v5836 = vadd.f32 %v5694, %v5551
        %v5837 = vadd.f32 %v5690, %v5555
        %v5838 = vadd.f32 %v5694, %v5557
        %v5839 = vadd.f32 %v5698, %v5549
        %v5840 = vadd.f32 %v5702, %v5551
        %v5841 = vadd.f32 %v5698, %v5555
        %v5842 = vadd.f32 %v5702, %v5557
        %v5843 = vadd.f32 %v5706, %v5549
        %v5844 = vadd.f32 %v5710, %v5551
        %v5845 = vadd.f32 %v5706, %v5555
        %v5846 = vadd.f32 %v5710, %v5557
        %v5847 = vadd.f32 %v5714, %v5549
        %v5848 = vadd.f32 %v5718, %v5551
        %v5849 = vadd.f32 %v5714, %v5555
        %v5850 = vadd.f32 %v5718, %v5557
        %v5851 = vadd.f32 %v5722, %v5549
        %v5852 = vadd.f32 %v5726, %v5551
        %v5853 = vadd.f32 %v5722, %v5555
        %v5854 = vadd.f32 %v5726, %v5557
        %v5855 = vadd.f32 %v5730, %v5549
        %v5856 = vadd.f32 %v5734, %v5551
        %v5857 = vadd.f32 %v5730, %v5555
        %v5858 = vadd.f32 %v5734, %v5557
        %v5859 = vadd.f32 %v5738, %v5549
        %v5860 = vadd.f32 %v5742, %v5551
        %v5861 = vadd.f32 %v5738, %v5555
        %v5862 = vadd.f32 %v5742, %v5557
        %v5863 = vadd.f32 %v5746, %v5549
        %v5864 = vadd.f32 %v5750, %v5551
        %v5865 = vadd.f32 %v5746, %v5555
        %v5866 = vadd.f32 %v5750, %v5557
        %v5867 = vadd.f32 %v5754, %v5549
        %v5868 = vadd.f32 %v5758, %v5551
        %v5869 = vadd.f32 %v5754, %v5555
        %v5870 = vadd.f32 %v5758, %v5557
        %v5871 = vadd.f32 %v5762, %v5549
        %v5872 = vadd.f32 %v5766, %v5551
        %v5873 = vadd.f32 %v5762, %v5555
        %v5874 = vadd.f32 %v5766, %v5557
        %v5875 = vadd.f32 %v5770, %v5549
        %v5876 = vadd.f32 %v5774, %v5551
        %v5877 = vadd.f32 %v5770, %v5555
        %v5878 = vadd.f32 %v5774, %v5557
        %v5879 = vadd.f32 %v5778, %v5549
        %v5880 = vadd.f32 %v5782, %v5551
        %v5881 = vadd.f32 %v5778, %v5555
        %v5882 = vadd.f32 %v5782, %v5557
        %v5883 = vadd.f32 %v5786, %v5549
        %v5884 = vadd.f32 %v5790, %v5551
        %v5885 = vadd.f32 %v5786, %v5555
        %v5886 = vadd.f32 %v5790, %v5557
        %v5887 = vtanh.pop %v5823
        %v5888 = vtanh.pop %v5824
        %v5889 = vtanh.pop %v5825
        %v5890 = vtanh.pop %v5826
        %v5891 = vtanh.pop %v5827
        %v5892 = vtanh.pop %v5828
        %v5893 = vtanh.pop %v5829
        %v5894 = vtanh.pop %v5830
        %v5895 = vtanh.pop %v5831
        %v5896 = vtanh.pop %v5832
        %v5897 = vtanh.pop %v5833
        %v5898 = vtanh.pop %v5834
        %v5899 = vtanh.pop %v5835
        %v5900 = vtanh.pop %v5836
        %v5901 = vtanh.pop %v5837
        %v5902 = vtanh.pop %v5838
        %v5903 = vtanh.pop %v5839
        %v5904 = vtanh.pop %v5840
        %v5905 = vtanh.pop %v5841
        %v5906 = vtanh.pop %v5842
        %v5907 = vtanh.pop %v5843
        %v5908 = vtanh.pop %v5844
        %v5909 = vtanh.pop %v5845
        %v5910 = vtanh.pop %v5846
        %v5911 = vtanh.pop %v5847
        %v5912 = vtanh.pop %v5848
        %v5913 = vtanh.pop %v5849
        %v5914 = vtanh.pop %v5850
        %v5915 = vtanh.pop %v5851
        %v5916 = vtanh.pop %v5852
        %v5917 = vtanh.pop %v5853
        %v5918 = vtanh.pop %v5854
        %v5919 = vtanh.pop %v5855
        %v5920 = vtanh.pop %v5856
        %v5921 = vtanh.pop %v5857
        %v5922 = vtanh.pop %v5858
        %v5923 = vtanh.pop %v5859
        %v5924 = vtanh.pop %v5860
        %v5925 = vtanh.pop %v5861
        %v5926 = vtanh.pop %v5862
        %v5927 = vtanh.pop %v5863
        %v5928 = vtanh.pop %v5864
        %v5929 = vtanh.pop %v5865
        %v5930 = vtanh.pop %v5866
        %v5931 = vtanh.pop %v5867
        %v5932 = vtanh.pop %v5868
        %v5933 = vtanh.pop %v5869
        %v5934 = vtanh.pop %v5870
        %v5935 = vtanh.pop %v5871
        %v5936 = vtanh.pop %v5872
        %v5937 = vtanh.pop %v5873
        %v5938 = vtanh.pop %v5874
        %v5939 = vtanh.pop %v5875
        %v5940 = vtanh.pop %v5876
        %v5941 = vtanh.pop %v5877
        %v5942 = vtanh.pop %v5878
        %v5943 = vtanh.pop %v5879
        %v5944 = vtanh.pop %v5880
        %v5945 = vtanh.pop %v5881
        %v5946 = vtanh.pop %v5882
        %v5947 = vtanh.pop %v5883
        %v5948 = vtanh.pop %v5884
        %v5949 = vtanh.pop %v5885
        %v5950 = vtanh.pop %v5886
        %v5951 = vld [vmem:[#allocation2 + $0x440] sm:$0xff]
        %v5952 = vld [vmem:[#allocation2 + $0x448] sm:$0xff]
        %5953 = vmatprep.subr.mxu0 %v5918
        %5954 = vmatpush1.xpose.msra.mxu0 %v5917
        %5955 = vmatprep.subr.mxu0 %v5916
        %5956 = vmatpush1.xpose.msra.mxu0 %v5915
        %5957 = vmatprep.subr.mxu0 %v5914
        %5958 = vmatpush1.xpose.msra.mxu0 %v5913
        %5959 = vmatprep.subr.mxu0 %v5912
        %5960 = vmatpush1.xpose.msra.mxu0 %v5911
        %5961 = vmatprep.subr.mxu0 %v5910
        %5962 = vmatpush1.xpose.msra.mxu0 %v5909
        %5963 = vmatprep.subr.mxu0 %v5908
        %5964 = vmatpush1.xpose.msra.mxu0 %v5907
        %5965 = vmatprep.subr.mxu0 %v5906
        %5966 = vmatpush1.xpose.msra.mxu0 %v5905
        %5967 = vmatprep.subr.mxu0 %v5904
        %5968 = vmatpush1.xpose.msra.mxu0 %v5903
        %5969 = vmatprep.subr.mxu0 %v5902
        %5970 = vmatpush1.xpose.msra.mxu0 %v5901
        %5971 = vmatprep.subr.mxu0 %v5900
        %5972 = vmatpush1.xpose.msra.mxu0 %v5899
        %5973 = vmatprep.subr.mxu0 %v5898
        %5974 = vmatpush1.xpose.msra.mxu0 %v5897
        %5975 = vmatprep.subr.mxu0 %v5896
        %5976 = vmatpush1.xpose.msra.mxu0 %v5895
        %5977 = vmatprep.subr.mxu0 %v5894
        %5978 = vmatpush1.xpose.msra.mxu0 %v5893
        %5979 = vmatprep.subr.mxu0 %v5892
        %5980 = vmatpush1.xpose.msra.mxu0 %v5891
        %5981 = vmatprep.subr.mxu0 %v5890
        %5982 = vmatpush1.xpose.msra.mxu0 %v5889
        %5983 = vmatprep.subr.mxu0 %v5888
        %5984 = vmatpush1.xpose.msra.mxu0 %v5887
        %5985 = vmatprep.subr.mxu0 %v5950
        %5986 = vmatpush2.xpose.msra.mxu0 %v5949
        %5987 = vmatprep.subr.mxu0 %v5948
        %5988 = vmatpush2.xpose.msra.mxu0 %v5947
        %5989 = vmatprep.subr.mxu0 %v5946
        %5990 = vmatpush2.xpose.msra.mxu0 %v5945
        %5991 = vmatprep.subr.mxu0 %v5944
        %5992 = vmatpush2.xpose.msra.mxu0 %v5943
        %5993 = vmatprep.subr.mxu0 %v5942
        %5994 = vmatpush2.xpose.msra.mxu0 %v5941
        %5995 = vmatprep.subr.mxu0 %v5940
        %5996 = vmatpush2.xpose.msra.mxu0 %v5939
        %5997 = vmatprep.subr.mxu0 %v5938
        %5998 = vmatpush2.xpose.msra.mxu0 %v5937
        %5999 = vmatprep.subr.mxu0 %v5936
        %6000 = vmatpush2.xpose.msra.mxu0 %v5935
        %6001 = vmatprep.subr.mxu0 %v5934
        %6002 = vmatpush2.xpose.msra.mxu0 %v5933
        %6003 = vmatprep.subr.mxu0 %v5932
        %6004 = vmatpush2.xpose.msra.mxu0 %v5931
        %6005 = vmatprep.subr.mxu0 %v5930
        %6006 = vmatpush2.xpose.msra.mxu0 %v5929
        %6007 = vmatprep.subr.mxu0 %v5928
        %6008 = vmatpush2.xpose.msra.mxu0 %v5927
        %6009 = vmatprep.subr.mxu0 %v5926
        %6010 = vmatpush2.xpose.msra.mxu0 %v5925
        %6011 = vmatprep.subr.mxu0 %v5924
        %6012 = vmatpush2.xpose.msra.mxu0 %v5923
        %6013 = vmatprep.subr.mxu0 %v5922
        %6014 = vmatpush2.xpose.msra.mxu0 %v5921
        %6015 = vmatprep.subr.mxu0 %v5920
        %6016 = vmatpush2.xpose.msra.mxu0 %v5919
        %6017 = vmatprep.mubr.f32.mxu0 %v5952
        %6018 = vmatmul.mubr.f32.gmra.mxu0 %v5951
        %v6019 = vpop.f32.mrf.mxu0
        %v6020 = vadd.f32 0.0, %v6019
        %v6021 = vpop.f32.mrf.mxu0
        %v6022 = vadd.f32 0.0, %v6021
        %6023 = vdwg.mxu0
        %6024 = vst [vmem:[%s324] sm:$0xff] %v6020
        %6025 = vst [vmem:[%s324 + $0x8] sm:$0xff] %v6022
        %s6026 = sand.u32 %s125, 1
        %s6027 = scalar_lea.sflag [#allocation4], %s6026
        %s6028 = sand.u32 %s125, 1
        %s6029 = smul.addr %s6028, 16
        %s6030 = scalar_lea.vmem [#allocation7], %s6029
        %p6031 = scmp.lt.s32.totalorder %s23, 1
        %s6032 = scalar_select %p6031, %s23, 1
        %s6033 = smul.addr %s6032, 2
        %s6034 = smul.addr %s6033, 8
        %s6035 = scalar_lea.vmem %s5, %s6034
        %p6036 = scmp.lt.s32.totalorder %s23, 1
        %s6037 = scalar_select %p6036, %s23, 1
        %s6038 = smul.addr %s6037, 2
        %s6039 = smul.addr %s6038, 8
        %s6040 = scalar_lea.vmem %s6, %s6039
        // Predicated region
        $region45: #{set_decoder_forward.1} parent=35 // pred_check
          %p6041 = pneg %p135
        $region46: #{set_decoder_forward.1} parent=35 // pred_check_branch
          %6043 = sbr.rel (%p6041) target = $region48
        $region47: #{set_decoder_forward.1} parent=35 // pred_region
          %s6045 = ssub.s32 256, 256
          %6046 = vsyncadd %s6027, %s6045
          %s6047 = smul.addr %s23, 2
          %s6048 = smul.addr %s6047, 128
          %s6049 = scalar_lea.hbm %s4, %s6048
          %s6050 = sshll.u32 %s6030, 4
          %s6051 = int_to_ptr.vmem [resolvable:$true] %s6050
          %6056 = dma.vmem_to_hbm [thread:$0]  %s6051, 256, %s6049, %s6027, 128, 128, 8
        $region48: #{set_decoder_forward.1} parent=35 // pred_fallthru
          _
        // Predicated region
        $region49: #{set_decoder_forward.1} parent=35 // pred_check
          %p6057 = pneg %p161
        $region50: #{set_decoder_forward.1} parent=35 // pred_check_branch
          %6059 = sbr.rel (%p6057) target = $region52
        $region51: #{set_decoder_forward.1} parent=35 // pred_region
          _
        $region52: #{set_decoder_forward.1} parent=35 // pred_fallthru
          _
        // Predicated region
        $region53: #{set_decoder_forward.1} parent=35 // pred_check
          %p6060 = pneg %p187
        $region54: #{set_decoder_forward.1} parent=35 // pred_check_branch
          %6062 = sbr.rel (%p6060) target = $region56
        $region55: #{set_decoder_forward.1} parent=35 // pred_region
          _
        $region56: #{set_decoder_forward.1} parent=35 // pred_fallthru
          _
      $region36: #{set_decoder_forward.1} parent=5 // pred_fallthru
        _
      %p6063 = scmp.le.s32.totalorder 2, %s18
      // Predicated region
      $region57: #{set_decoder_forward.1} parent=5 // pred_check
        %p6064 = pneg %p6063
      $region58: #{set_decoder_forward.1} parent=5 // pred_check_branch
        %6066 = sbr.rel (%p6064) target = $region60
      $region59: #{set_decoder_forward.1} parent=5 // pred_region
        %s6067 = ssub.s32 %s18, 2
        // Predicated region
        $region61: #{set_decoder_forward.1} parent=59 // pred_check
          %p6068 = pneg %p141
        $region62: #{set_decoder_forward.1} parent=59 // pred_check_branch
          %6070 = sbr.rel (%p6068) target = $region64
        $region63: #{set_decoder_forward.1} parent=59 // pred_region
          %s6071 = sand.u32 %s126, 1
          %s6072 = scalar_lea.sflag [#allocation4], %s6071
          %s6073 = sand.u32 %s126, 1
          %s6074 = smul.addr %s6073, 16
          %s6075 = scalar_lea.vmem [#allocation7], %s6074
          %6076 = dma.done %s6072, 256
        $region64: #{set_decoder_forward.1} parent=59 // pred_fallthru
          _
        // Predicated region
        $region65: #{set_decoder_forward.1} parent=59 // pred_check
          %p6077 = pneg %p167
        $region66: #{set_decoder_forward.1} parent=59 // pred_check_branch
          %6079 = sbr.rel (%p6077) target = $region68
        $region67: #{set_decoder_forward.1} parent=59 // pred_region
          %p6080 = scmp.lt.s32.totalorder %s24, 1
          %s6081 = scalar_select %p6080, %s24, 1
          %s6082 = smul.addr %s6081, 2
          %s6083 = smul.addr %s6082, 8
          %s6084 = scalar_lea.vmem %s5, %s6083
        $region68: #{set_decoder_forward.1} parent=59 // pred_fallthru
          _
        // Predicated region
        $region69: #{set_decoder_forward.1} parent=59 // pred_check
          %p6085 = pneg %p193
        $region70: #{set_decoder_forward.1} parent=59 // pred_check_branch
          %6087 = sbr.rel (%p6085) target = $region72
        $region71: #{set_decoder_forward.1} parent=59 // pred_region
          %p6088 = scmp.lt.s32.totalorder %s24, 1
          %s6089 = scalar_select %p6088, %s24, 1
          %s6090 = smul.addr %s6089, 2
          %s6091 = smul.addr %s6090, 8
          %s6092 = scalar_lea.vmem %s6, %s6091
        $region72: #{set_decoder_forward.1} parent=59 // pred_fallthru
          _
      $region60: #{set_decoder_forward.1} parent=5 // pred_fallthru
        _
    $region6: #{set_decoder_forward.1} parent=1 // loop_footer
      %s22 = sadd.s32 1, %s18
    $region7: #{set_decoder_forward.1} parent=1 // loop_footer_branch
      %17 = sbr.rel target = $region3
    $region8: #{set_decoder_forward.1} parent=1 // loop_exit
      _
    %6093 = vsyncpa [#allocation3], 1
    %s6094 = scalar_lea.sflag [#allocation3], 1
    %6095 = vsyncpa %s6094, 1
    %6096 = vsyncpa [#allocation6], 1
    %6097 = vsyncpa [#allocation4], 1
    %s6098 = scalar_lea.sflag [#allocation4], 1
    %6099 = vsyncpa %s6098, 1

</llo_original>
